<compile_context>
chip_gen: v7x
topology: tpu7x:2x2x1
jax: 0.10.0
libtpu: 0.0.40
codegen_flags: <defaults>
</compile_context>

<pallas_src>
import numpy as np

import jax
import jax.numpy as jnp
from jax.experimental import pallas as pl
from jax.experimental.pallas import tpu as pltpu

# ----- synthetic cfg (small shapes) -----
LATENT_DIM = 8            # cfg.LatentDim  (noise dim)
CONDITION_DIM = 8         # cfg.ConditionDim
GEN_INPUT_DIM = 4         # cfg.GenInputDim
TEXT_EMBED_DIM = 16       # text-embedding dim fed to ConditioningAugment
NGF8 = GEN_INPUT_DIM * 8  # self.input = 32
H0 = 4                    # spatial size of the fc1 output (4x4)
BN_EPS = 1e-5
BATCH = 2
IMG_CH = 3
IMG_RES = 64              # 4 -> 8 -> 16 -> 32 -> 64
CMAX = NGF8 // 2          # max conv-stage channel count (16), padding size for BN consts

# per-stage (Cin, Cout, spatial_in) for up1..up4
UP_STAGES = [(NGF8, NGF8 // 2, 4), (NGF8 // 2, NGF8 // 4, 8),
             (NGF8 // 4, NGF8 // 8, 16), (NGF8 // 8, NGF8 // 16, 32)]


def _vmem():
    # tiny model: every operand is a whole-array VMEM block (no grid)
    return pl.BlockSpec(memory_space=pltpu.MemorySpace.VMEM)


# ---------------------------------------------------------------------------
# The single fused kernel
#
# Folded activation layout used between stages:
#   x[(n*H + h), (w*C + c)]  ==  feature_map[n, c, h, w]      (always 128 lanes)
# (the fc1 output slab uses (h*N + n) row order; the permutation is baked into P1)
# ---------------------------------------------------------------------------
def _generator_kernel(
    txt_ref, noise_ref, eps_ref,
    ca_w_ref, ca_b_ref, fc1_w_ref, fc1_gb_ref,
    p1_ref, p2_ref, p3_ref, p4_ref,
    up_a_ref, bn_gb_ref, bn_sel_ref, bn_selt_ref,
    pimg_ref, aimg_ref,
    img_ref, stats_ref,
):
    f32 = jnp.float32
    bf16 = jnp.bfloat16

    # ---- ConditioningAugment: relu(txt @ W + b), reparameterize (kept f32) ----
    h = jnp.dot(txt_ref[...], ca_w_ref[...], preferred_element_type=f32) + ca_b_ref[...]
    h = jnp.maximum(h, 0.0)
    stats_ref[...] = h                                   # packed [mu | logvar]
    mu = h[:, :CONDITION_DIM]
    logvar = h[:, CONDITION_DIM:]
    cond = mu + eps_ref[...] * jnp.exp(0.5 * logvar)
    xin = jnp.concatenate([noise_ref[...], cond], axis=1)          # (N, LD+CD)

    # ---- fc1 (no bias): one (N,16)@(16,512) matmul + BN1d + ReLU ----
    y = jnp.dot(xin, fc1_w_ref[...], preferred_element_type=f32)   # (N, 512), cols (h,w,c)
    m = jnp.mean(y, axis=0, keepdims=True)                         # batch stats (train mode)
    v = jnp.mean(y * y, axis=0, keepdims=True) - m * m
    gb = fc1_gb_ref[...]                                           # (2, 512): gamma / beta
    y = (y - m) * jax.lax.rsqrt(v + BN_EPS) * gb[0:1, :] + gb[1:2, :]
    y = jnp.maximum(y, 0.0)
    # fold to an (H0*N, 128) slab with rows in (h, n) order; the (h,n)->(n,h)
    # permutation is pre-baked into the stage-1 row-gather matrix P1.
    x = jnp.concatenate([y[:, hh * 128:(hh + 1) * 128] for hh in range(H0)],
                        axis=0).astype(bf16)

    # ---- up1..up4: {nearest-2x upsample + pad + conv3x3 + BN2d + ReLU} ----
    p_refs = (p1_ref, p2_ref, p3_ref, p4_ref)
    for i, (_cin, _cout, w_in) in enumerate(UP_STAGES):
        w_out = 2 * w_in
        m_out = BATCH * w_out
        # y = sum_dy (P_dy @ x) @ A_dy   -- all k=128 bf16 MXU matmuls, no concat temp
        y = None
        for dy in range(3):
            g = jnp.dot(p_refs[i][dy], x, preferred_element_type=f32)   # (m_out, 128)
            part = jnp.dot(g.astype(bf16), up_a_ref[3 * i + dy],
                           preferred_element_type=f32)                  # (m_out, 128)
            y = part if y is None else y + part

        # BatchNorm2d, training mode, single pass.  Per-channel stats extracted
        # and broadcast with tiny MXU matmuls (XLU stays free); 1/count is folded
        # into bn_sel; padded channels give exact zeros end-to-end.
        ones = jnp.ones((1, m_out), f32)
        mean = jnp.dot(jnp.dot(ones, y, preferred_element_type=f32),
                       bn_sel_ref[i], preferred_element_type=f32)        # (1, CMAX) = E[x]
        ex2 = jnp.dot(jnp.dot(ones, y * y, preferred_element_type=f32),
                      bn_sel_ref[i], preferred_element_type=f32)         # (1, CMAX) = E[x^2]
        var = ex2 - mean * mean
        gbc = bn_gb_ref[i]                                               # (2, CMAX)
        scale = gbc[0:1] * jax.lax.rsqrt(var + BN_EPS)
        shift = gbc[1:2] - mean * scale
        aff = jnp.dot(jnp.concatenate([scale, shift], axis=0),
                      bn_selt_ref[i], preferred_element_type=f32)        # (2, 128)
        x = jnp.maximum(y * aff[0:1] + aff[1:2], 0.0).astype(bf16)

    # ---- image1: conv3x3 (no bias) + tanh; lane-dense (c, w) output slab ----
    y = None
    for dy in range(3):
        g = jnp.dot(pimg_ref[dy], x, preferred_element_type=f32)         # (128, 128)
        part = jnp.dot(g.astype(bf16), aimg_ref[dy],
                       preferred_element_type=f32)                       # (128, 192)
        y = part if y is None else y + part
    img_ref[...] = jnp.tanh(y)                     # (N*64, 3*64); reorder done in wrapper


# ---------------------------------------------------------------------------
# One-time parameter folding (PyTorch layouts -> lane-dense kernel layouts)
# ---------------------------------------------------------------------------
def _row_select(batch, h_in, upsample, in_hn=False):
    """0/1 matrices P[dy] mapping output rows (n, i) to input rows.
    They encode nearest-2x row upsampling (if `upsample`), the 1-row zero pad and
    the dy in {-1,0,+1} shift of the 3x3 conv.  `in_hn` means the *input* slab
    rows are ordered (h, n) instead of (n, h) (used to absorb the fc1 reorder)."""
    h_out = 2 * h_in if upsample else h_in
    P = np.zeros((3, batch * h_out, batch * h_in), np.float32)
    for dy in range(3):
        for n in range(batch):
            for i in range(h_out):
                src = i + dy - 1
                if 0 <= src < h_out:
                    k = src // 2 if upsample else src
                    col = k * batch + n if in_hn else n * h_in + k
                    P[dy, n * h_out + i, col] = 1.0
    return P


def _col_select(w_in, upsample):
    """0/1 structure S[dx, j, wi]: conv output column j, tap dx reads input column
    wi (after nearest-2x W upsampling if `upsample` and 1-col zero pad)."""
    w_out = 2 * w_in if upsample else w_in
    S = np.zeros((3, w_out, w_in), np.float32)
    for dx in range(3):
        for j in range(w_out):
            jj = j + dx - 1
            if 0 <= jj < w_out:
                wi = jj // 2 if upsample else jj
                S[dx, j, wi] = 1.0
    return S


def fold_params(p):
    """Pre-fold PyTorch-layout parameters for the kernel (done once, host-side)."""
    din = LATENT_DIM + CONDITION_DIM
    f = {}
    # ConditioningAugment Linear (kept f32)
    f["ca_w"] = jnp.asarray(p["ca_w"]).T                       # (T, 2*CD)
    f["ca_b"] = p["ca_b"][None, :]                             # (1, 2*CD)
    # fc1 Linear fused: rows ordered (c, h, w) -> columns ordered (h, w, c)
    w4 = p["fc1_w"].reshape(NGF8, H0, H0, din)                 # (c, h, w, d)
    f["fc1_w"] = jnp.transpose(w4, (3, 1, 2, 0)).reshape(din, H0 * H0 * NGF8)  # (16, 512)
    g = jnp.transpose(p["fc1_gamma"].reshape(NGF8, H0, H0), (1, 2, 0)).reshape(-1)
    b = jnp.transpose(p["fc1_beta"].reshape(NGF8, H0, H0), (1, 2, 0)).reshape(-1)
    f["fc1_gb"] = jnp.stack([g, b], axis=0)                    # (2, 512)

    # up1..up4: per-dy folded conv weights + packed BN constants
    a_all, gb_all, sel_all, selt_all = [], [], [], []
    for i, (cin, cout, w_in) in enumerate(UP_STAGES):
        w_out = 2 * w_in
        w4 = jnp.transpose(p[f"up{i+1}_w"], (2, 3, 1, 0))      # (dy, dx, cin, cout)
        S = jnp.asarray(_col_select(w_in, True))               # (3, w_out, w_in)
        A = jnp.einsum("xjw,yxio->ywijo", S, w4)               # (dy, wi, ci, j, co)
        a_all.append(A.reshape(3, w_in * cin, w_out * cout))   # (3, 128, 128)
        f[f"up{i+1}_P"] = jnp.asarray(
            _row_select(BATCH, w_in, True, in_hn=(i == 0))).astype(jnp.bfloat16)
        # packed BN constants, zero-padded to CMAX channels (padding stays exactly 0)
        gbc = np.zeros((2, CMAX), np.float32)
        gbc[0, :cout] = np.asarray(p[f"up{i+1}_gamma"])
        gbc[1, :cout] = np.asarray(p[f"up{i+1}_beta"])
        gb_all.append(gbc)
        cnt = float(BATCH * w_out * w_out)                     # N * H_out * W_out
        sel = np.zeros((w_out * cout, CMAX), np.float32)
        sel[:, :cout] = np.tile(np.eye(cout, dtype=np.float32) / cnt, (w_out, 1))
        sel_all.append(sel)                                    # (128, CMAX), 1/cnt folded in
        selt = np.zeros((CMAX, w_out * cout), np.float32)
        selt[:cout, :] = np.tile(np.eye(cout, dtype=np.float32), (w_out, 1)).T
        selt_all.append(selt)                                  # (CMAX, 128)
    f["up_A"] = jnp.concatenate(a_all, axis=0).astype(jnp.bfloat16)   # (12, 128, 128)
    f["bn_gb"] = jnp.asarray(np.stack(gb_all))                 # (4, 2, CMAX)
    f["bn_sel"] = jnp.asarray(np.stack(sel_all))               # (4, 128, CMAX)
    f["bn_selT"] = jnp.asarray(np.stack(selt_all))             # (4, CMAX, 128)

    # image1: channel-planar output lanes (c, w), per-dy split
    cin = NGF8 // 16
    w4 = jnp.transpose(p["img_w"], (2, 3, 1, 0))               # (dy, dx, cin, 3)
    S = jnp.asarray(_col_select(IMG_RES, False))               # (3, 64, 64)
    A = jnp.einsum("xjw,yxio->ywioj", S, w4)                   # (dy, wi, ci, co, j)
    f["img_A"] = A.reshape(3, IMG_RES * cin, IMG_CH * IMG_RES).astype(jnp.bfloat16)  # (3,128,192)
    f["img_P"] = jnp.asarray(_row_select(BATCH, IMG_RES, False)).astype(jnp.bfloat16)  # (3,128,128)
    return f


# ---------------------------------------------------------------------------
# Forward pass (mirrors STAGE1_Generator.forward) -- a single pallas_call
# ---------------------------------------------------------------------------
@jax.jit
def stage1_generator_forward(folded, txt_embed, noise, eps):
    inputs = [
        txt_embed, noise, eps,
        folded["ca_w"], folded["ca_b"], folded["fc1_w"], folded["fc1_gb"],
        folded["up1_P"], folded["up2_P"], folded["up3_P"], folded["up4_P"],
        folded["up_A"], folded["bn_gb"], folded["bn_sel"], folded["bn_selT"],
        folded["img_P"], folded["img_A"],
    ]
    out_shape = (
        jax.ShapeDtypeStruct((BATCH * IMG_RES, IMG_CH * IMG_RES), jnp.float32),  # (N*64, 3*64)
        jax.ShapeDtypeStruct((BATCH, 2 * CONDITION_DIM), jnp.float32),           # [mu | logvar]
    )
    img_slab, stats = pl.pallas_call(
        _generator_kernel,
        out_shape=out_shape,
        in_specs=[_vmem() for _ in inputs],          # built from inputs -> always matches
        out_specs=(_vmem(), _vmem()),
    )(*inputs)
    # rows = (n, h), lanes = (c, w)  ->  (N, C, H, W)
    generated_image = img_slab.reshape(BATCH, IMG_RES, IMG_CH, IMG_RES).transpose(0, 2, 1, 3)
    mu = stats[:, :CONDITION_DIM]
    logvar = stats[:, CONDITION_DIM:]
    return None, generated_image, mu, logvar


# ---------------------------------------------------------------------------
# Synthetic parameters (PyTorch layouts) and a plain-XLA reference for checking
# ---------------------------------------------------------------------------
def init_params(key):
    ks = iter(jax.random.split(key, 20))
    p = {}
    p["ca_w"] = 0.05 * jax.random.normal(next(ks), (2 * CONDITION_DIM, TEXT_EMBED_DIM), jnp.float32)
    p["ca_b"] = 0.05 * jax.random.normal(next(ks), (2 * CONDITION_DIM,), jnp.float32)
    p["fc1_w"] = 0.05 * jax.random.normal(
        next(ks), (NGF8 * H0 * H0, LATENT_DIM + CONDITION_DIM), jnp.float32)
    p["fc1_gamma"] = 1.0 + 0.05 * jax.random.normal(next(ks), (NGF8 * H0 * H0,), jnp.float32)
    p["fc1_beta"] = 0.05 * jax.random.normal(next(ks), (NGF8 * H0 * H0,), jnp.float32)
    for i, (cin, cout, _) in enumerate(UP_STAGES):
        p[f"up{i+1}_w"] = 0.05 * jax.random.normal(next(ks), (cout, cin, 3, 3), jnp.float32)
        p[f"up{i+1}_gamma"] = 1.0 + 0.05 * jax.random.normal(next(ks), (cout,), jnp.float32)
        p[f"up{i+1}_beta"] = 0.05 * jax.random.normal(next(ks), (cout,), jnp.float32)
    p["img_w"] = 0.05 * jax.random.normal(next(ks), (IMG_CH, NGF8 // 16, 3, 3), jnp.float32)
    return p


@jax.jit
def reference_forward(p, txt_embed, noise, eps):
    """Straightforward XLA implementation with identical semantics."""
    h = jax.nn.relu(txt_embed @ p["ca_w"].T + p["ca_b"][None, :])
    mu = h[:, :CONDITION_DIM]
    logvar = h[:, CONDITION_DIM:]
    cond = mu + eps * jnp.exp(0.5 * logvar)
    x = jnp.concatenate([noise, cond], axis=1)
    y = x @ p["fc1_w"].T
    m = jnp.mean(y, axis=0, keepdims=True)
    v = jnp.mean((y - m) ** 2, axis=0, keepdims=True)
    y = jax.nn.relu((y - m) / jnp.sqrt(v + BN_EPS) * p["fc1_gamma"][None, :] + p["fc1_beta"][None, :])
    x = y.reshape(BATCH, NGF8, H0, H0)                        # NCHW
    for i in range(1, 5):
        x = jnp.repeat(jnp.repeat(x, 2, axis=2), 2, axis=3)   # nearest 2x
        x = jax.lax.conv_general_dilated(
            x, p[f"up{i}_w"], window_strides=(1, 1), padding=((1, 1), (1, 1)),
            dimension_numbers=("NCHW", "OIHW", "NCHW"))
        m = jnp.mean(x, axis=(0, 2, 3), keepdims=True)
        v = jnp.mean((x - m) ** 2, axis=(0, 2, 3), keepdims=True)
        x = (x - m) / jnp.sqrt(v + BN_EPS)
        x = x * p[f"up{i}_gamma"][None, :, None, None] + p[f"up{i}_beta"][None, :, None, None]
        x = jax.nn.relu(x)
    x = jax.lax.conv_general_dilated(
        x, p["img_w"], window_strides=(1, 1), padding=((1, 1), (1, 1)),
        dimension_numbers=("NCHW", "OIHW", "NCHW"))
    return jnp.tanh(x), mu, logvar


# ---------------------------------------------------------------------------
if __name__ == "__main__":
    key = jax.random.PRNGKey(0)
    k_param, k_txt, k_noise, k_eps = jax.random.split(key, 4)

    params = init_params(k_param)
    folded = fold_params(params)          # one-time weight preprocessing

    txt_embed = jax.random.normal(k_txt, (BATCH, TEXT_EMBED_DIM), jnp.float32)
    noise = jax.random.normal(k_noise, (BATCH, LATENT_DIM), jnp.float32)
    eps = jax.random.normal(k_eps, (BATCH, CONDITION_DIM), jnp.float32)

    _, img, mu, logvar = stage1_generator_forward(folded, txt_embed, noise, eps)
    jax.block_until_ready((img, mu, logvar))

    assert img.shape == (BATCH, IMG_CH, IMG_RES, IMG_RES), img.shape
    assert mu.shape == (BATCH, CONDITION_DIM) and logvar.shape == (BATCH, CONDITION_DIM)
    assert bool(jnp.all(jnp.isfinite(img)))

    # Validate against the plain-XLA reference.  Tolerances account for bf16
    # MXU inputs in the conv stack (the XLA reference itself runs the MXU at
    # default reduced precision, so both sides are ~bf16-level on TPU).
    r_img, r_mu, r_logvar = reference_forward(params, txt_embed, noise, eps)
    assert float(jnp.max(jnp.abs(mu - r_mu))) < 1e-2
    assert float(jnp.max(jnp.abs(logvar - r_logvar))) < 1e-2
    assert float(jnp.max(jnp.abs(img - r_img))) < 1e-1
    assert float(jnp.mean(jnp.abs(img - r_img))) < 1e-2

    print("KERNEL_OK")
</pallas_src>

<mosaic_0001>
module attributes {stable_mosaic.version = 11 : i64} {
  func.func @_generator_kernel(%arg0: memref<2x16xf32, #tpu.memory_space<vmem>>, %arg1: memref<2x8xf32, #tpu.memory_space<vmem>>, %arg2: memref<2x8xf32, #tpu.memory_space<vmem>>, %arg3: memref<16x16xf32, #tpu.memory_space<vmem>>, %arg4: memref<1x16xf32, #tpu.memory_space<vmem>>, %arg5: memref<16x512xf32, #tpu.memory_space<vmem>>, %arg6: memref<2x512xf32, #tpu.memory_space<vmem>>, %arg7: memref<3x16x8xbf16, #tpu.memory_space<vmem>>, %arg8: memref<3x32x16xbf16, #tpu.memory_space<vmem>>, %arg9: memref<3x64x32xbf16, #tpu.memory_space<vmem>>, %arg10: memref<3x128x64xbf16, #tpu.memory_space<vmem>>, %arg11: memref<12x128x128xbf16, #tpu.memory_space<vmem>>, %arg12: memref<4x2x16xf32, #tpu.memory_space<vmem>>, %arg13: memref<4x128x16xf32, #tpu.memory_space<vmem>>, %arg14: memref<4x16x128xf32, #tpu.memory_space<vmem>>, %arg15: memref<3x128x128xbf16, #tpu.memory_space<vmem>>, %arg16: memref<3x128x192xbf16, #tpu.memory_space<vmem>>, %arg17: memref<128x192xf32, #tpu.memory_space<vmem>>, %arg18: memref<2x16xf32, #tpu.memory_space<vmem>>) attributes {dimension_semantics = [], scalar_prefetch = 0 : i64, scratch_operands = 0 : i64, tpu.core_type = #tpu.core_type<tc>} {
    %c0 = arith.constant 0 : index
    %c0_0 = arith.constant 0 : index
    %0 = vector.load %arg0[%c0, %c0_0] : memref<2x16xf32, #tpu.memory_space<vmem>>, vector<2x16xf32>
    %c0_1 = arith.constant 0 : index
    %c0_2 = arith.constant 0 : index
    %1 = vector.load %arg3[%c0_1, %c0_2] : memref<16x16xf32, #tpu.memory_space<vmem>>, vector<16x16xf32>
    %cst = arith.constant dense<0.000000e+00> : vector<2x16xf32>
    %2 = tpu.matmul %0, %1, %cst {dimension_numbers = #tpu.dot_dimension_numbers<[1], [0], [0], [1], [0, 0, 1, 1], [], []>} : vector<2x16xf32>, vector<16x16xf32>, vector<2x16xf32> -> vector<2x16xf32>
    %c0_3 = arith.constant 0 : index
    %c0_4 = arith.constant 0 : index
    %3 = vector.load %arg4[%c0_3, %c0_4] : memref<1x16xf32, #tpu.memory_space<vmem>>, vector<1x16xf32>
    %4 = vector.broadcast %3 : vector<1x16xf32> to vector<2x16xf32>
    %5 = arith.addf %2, %4 : vector<2x16xf32>
    %cst_5 = arith.constant 0.000000e+00 : f32
    %6 = vector.broadcast %cst_5 : f32 to vector<2x16xf32>
    %7 = arith.maximumf %5, %6 : vector<2x16xf32>
    %c0_6 = arith.constant 0 : index
    %c0_7 = arith.constant 0 : index
    %8 = vector.load %arg18[%c0_6, %c0_7] : memref<2x16xf32, #tpu.memory_space<vmem>>, vector<2x16xf32>
    tpu.vector_store %arg18[%c0_6, %c0_7], %7 {strides = array<i32>} : memref<2x16xf32, #tpu.memory_space<vmem>>, vector<2x16xf32>,
    %9 = vector.extract_strided_slice %7 {offsets = [0, 0], sizes = [2, 8], strides = [1, 1]} : vector<2x16xf32> to vector<2x8xf32>
    %10 = vector.extract_strided_slice %7 {offsets = [0, 8], sizes = [2, 8], strides = [1, 1]} : vector<2x16xf32> to vector<2x8xf32>
    %c0_8 = arith.constant 0 : index
    %c0_9 = arith.constant 0 : index
    %11 = vector.load %arg2[%c0_8, %c0_9] : memref<2x8xf32, #tpu.memory_space<vmem>>, vector<2x8xf32>
    %cst_10 = arith.constant 5.000000e-01 : f32
    %12 = vector.broadcast %cst_10 : f32 to vector<2x8xf32>
    %13 = arith.mulf %12, %10 : vector<2x8xf32>
    %14 = math.exp %13 : vector<2x8xf32>
    %15 = arith.mulf %11, %14 : vector<2x8xf32>
    %16 = arith.addf %9, %15 : vector<2x8xf32>
    %c0_11 = arith.constant 0 : index
    %c0_12 = arith.constant 0 : index
    %17 = vector.load %arg1[%c0_11, %c0_12] : memref<2x8xf32, #tpu.memory_space<vmem>>, vector<2x8xf32>
    %18 = tpu.concatenate %17, %16 in 1 : vector<2x8xf32>, vector<2x8xf32> -> vector<2x16xf32>
    %c0_13 = arith.constant 0 : index
    %c0_14 = arith.constant 0 : index
    %19 = vector.load %arg5[%c0_13, %c0_14] : memref<16x512xf32, #tpu.memory_space<vmem>>, vector<16x512xf32>
    %cst_15 = arith.constant dense<0.000000e+00> : vector<2x512xf32>
    %20 = tpu.matmul %18, %19, %cst_15 {dimension_numbers = #tpu.dot_dimension_numbers<[1], [0], [0], [1], [0, 0, 1, 1], [], []>} : vector<2x16xf32>, vector<16x512xf32>, vector<2x512xf32> -> vector<2x512xf32>
    %cst_16 = arith.constant dense<0.000000e+00> : vector<512xf32>
    %21 = vector.multi_reduction <add>, %20, %cst_16 [0] : vector<2x512xf32> to vector<512xf32>
    %22 = vector.shape_cast %21 : vector<512xf32> to vector<1x512xf32>
    %cst_17 = arith.constant 2.000000e+00 : f32
    %23 = vector.broadcast %cst_17 : f32 to vector<1x512xf32>
    %24 = arith.divf %22, %23 : vector<1x512xf32>
    %25 = arith.mulf %20, %20 : vector<2x512xf32>
    %cst_18 = arith.constant dense<0.000000e+00> : vector<512xf32>
    %26 = vector.multi_reduction <add>, %25, %cst_18 [0] : vector<2x512xf32> to vector<512xf32>
    %27 = vector.shape_cast %26 : vector<512xf32> to vector<1x512xf32>
    %cst_19 = arith.constant 2.000000e+00 : f32
    %28 = vector.broadcast %cst_19 : f32 to vector<1x512xf32>
    %29 = arith.divf %27, %28 : vector<1x512xf32>
    %30 = arith.mulf %24, %24 : vector<1x512xf32>
    %31 = arith.subf %29, %30 : vector<1x512xf32>
    %c0_20 = arith.constant 0 : index
    %c0_21 = arith.constant 0 : index
    %32 = vector.load %arg6[%c0_20, %c0_21] : memref<2x512xf32, #tpu.memory_space<vmem>>, vector<2x512xf32>
    %33 = vector.broadcast %24 : vector<1x512xf32> to vector<2x512xf32>
    %34 = arith.subf %20, %33 : vector<2x512xf32>
    %cst_22 = arith.constant 9.99999974E-6 : f32
    %35 = vector.broadcast %cst_22 : f32 to vector<1x512xf32>
    %36 = arith.addf %31, %35 : vector<1x512xf32>
    %37 = math.rsqrt %36 : vector<1x512xf32>
    %38 = vector.broadcast %37 : vector<1x512xf32> to vector<2x512xf32>
    %39 = arith.mulf %34, %38 : vector<2x512xf32>
    %40 = vector.extract_strided_slice %32 {offsets = [0, 0], sizes = [1, 512], strides = [1, 1]} : vector<2x512xf32> to vector<1x512xf32>
    %41 = vector.broadcast %40 : vector<1x512xf32> to vector<2x512xf32>
    %42 = arith.mulf %39, %41 : vector<2x512xf32>
    %43 = vector.extract_strided_slice %32 {offsets = [1, 0], sizes = [1, 512], strides = [1, 1]} : vector<2x512xf32> to vector<1x512xf32>
    %44 = vector.broadcast %43 : vector<1x512xf32> to vector<2x512xf32>
    %45 = arith.addf %42, %44 : vector<2x512xf32>
    %cst_23 = arith.constant 0.000000e+00 : f32
    %46 = vector.broadcast %cst_23 : f32 to vector<2x512xf32>
    %47 = arith.maximumf %45, %46 : vector<2x512xf32>
    %48 = vector.extract_strided_slice %47 {offsets = [0, 0], sizes = [2, 128], strides = [1, 1]} : vector<2x512xf32> to vector<2x128xf32>
    %49 = vector.extract_strided_slice %47 {offsets = [0, 128], sizes = [2, 128], strides = [1, 1]} : vector<2x512xf32> to vector<2x128xf32>
    %50 = vector.extract_strided_slice %47 {offsets = [0, 256], sizes = [2, 128], strides = [1, 1]} : vector<2x512xf32> to vector<2x128xf32>
    %51 = vector.extract_strided_slice %47 {offsets = [0, 384], sizes = [2, 128], strides = [1, 1]} : vector<2x512xf32> to vector<2x128xf32>
    %52 = tpu.concatenate %48, %49, %50, %51 in 0 : vector<2x128xf32>, vector<2x128xf32>, vector<2x128xf32>, vector<2x128xf32> -> vector<8x128xf32>
    %53 = arith.truncf %52 : vector<8x128xf32> to vector<8x128xbf16>
    %c0_24 = arith.constant 0 : index
    %c0_25 = arith.constant 0 : index
    %c0_26 = arith.constant 0 : index
    %54 = vector.load %arg7[%c0_24, %c0_25, %c0_26] : memref<3x16x8xbf16, #tpu.memory_space<vmem>>, vector<1x16x8xbf16>
    %55 = vector.shape_cast %54 : vector<1x16x8xbf16> to vector<16x8xbf16>
    %cst_27 = arith.constant dense<0.000000e+00> : vector<16x128xf32>
    %56 = tpu.matmul %55, %53, %cst_27 {dimension_numbers = #tpu.dot_dimension_numbers<[1], [0], [0], [1], [0, 0, 1, 1], [], []>} : vector<16x8xbf16>, vector<8x128xbf16>, vector<16x128xf32> -> vector<16x128xf32>
    %57 = arith.truncf %56 : vector<16x128xf32> to vector<16x128xbf16>
    %c0_28 = arith.constant 0 : index
    %c0_29 = arith.constant 0 : index
    %c0_30 = arith.constant 0 : index
    %58 = vector.load %arg11[%c0_28, %c0_29, %c0_30] : memref<12x128x128xbf16, #tpu.memory_space<vmem>>, vector<1x128x128xbf16>
    %59 = vector.shape_cast %58 : vector<1x128x128xbf16> to vector<128x128xbf16>
    %cst_31 = arith.constant dense<0.000000e+00> : vector<16x128xf32>
    %60 = tpu.matmul %57, %59, %cst_31 {dimension_numbers = #tpu.dot_dimension_numbers<[1], [0], [0], [1], [0, 0, 1, 1], [], []>} : vector<16x128xbf16>, vector<128x128xbf16>, vector<16x128xf32> -> vector<16x128xf32>
    %c1 = arith.constant 1 : index
    %c0_32 = arith.constant 0 : index
    %c0_33 = arith.constant 0 : index
    %61 = vector.load %arg7[%c1, %c0_32, %c0_33] : memref<3x16x8xbf16, #tpu.memory_space<vmem>>, vector<1x16x8xbf16>
    %62 = vector.shape_cast %61 : vector<1x16x8xbf16> to vector<16x8xbf16>
    %cst_34 = arith.constant dense<0.000000e+00> : vector<16x128xf32>
    %63 = tpu.matmul %62, %53, %cst_34 {dimension_numbers = #tpu.dot_dimension_numbers<[1], [0], [0], [1], [0, 0, 1, 1], [], []>} : vector<16x8xbf16>, vector<8x128xbf16>, vector<16x128xf32> -> vector<16x128xf32>
    %64 = arith.truncf %63 : vector<16x128xf32> to vector<16x128xbf16>
    %c1_35 = arith.constant 1 : index
    %c0_36 = arith.constant 0 : index
    %c0_37 = arith.constant 0 : index
    %65 = vector.load %arg11[%c1_35, %c0_36, %c0_37] : memref<12x128x128xbf16, #tpu.memory_space<vmem>>, vector<1x128x128xbf16>
    %66 = vector.shape_cast %65 : vector<1x128x128xbf16> to vector<128x128xbf16>
    %cst_38 = arith.constant dense<0.000000e+00> : vector<16x128xf32>
    %67 = tpu.matmul %64, %66, %cst_38 {dimension_numbers = #tpu.dot_dimension_numbers<[1], [0], [0], [1], [0, 0, 1, 1], [], []>} : vector<16x128xbf16>, vector<128x128xbf16>, vector<16x128xf32> -> vector<16x128xf32>
    %68 = arith.addf %60, %67 : vector<16x128xf32>
    %c2 = arith.constant 2 : index
    %c0_39 = arith.constant 0 : index
    %c0_40 = arith.constant 0 : index
    %69 = vector.load %arg7[%c2, %c0_39, %c0_40] : memref<3x16x8xbf16, #tpu.memory_space<vmem>>, vector<1x16x8xbf16>
    %70 = vector.shape_cast %69 : vector<1x16x8xbf16> to vector<16x8xbf16>
    %cst_41 = arith.constant dense<0.000000e+00> : vector<16x128xf32>
    %71 = tpu.matmul %70, %53, %cst_41 {dimension_numbers = #tpu.dot_dimension_numbers<[1], [0], [0], [1], [0, 0, 1, 1], [], []>} : vector<16x8xbf16>, vector<8x128xbf16>, vector<16x128xf32> -> vector<16x128xf32>
    %72 = arith.truncf %71 : vector<16x128xf32> to vector<16x128xbf16>
    %c2_42 = arith.constant 2 : index
    %c0_43 = arith.constant 0 : index
    %c0_44 = arith.constant 0 : index
    %73 = vector.load %arg11[%c2_42, %c0_43, %c0_44] : memref<12x128x128xbf16, #tpu.memory_space<vmem>>, vector<1x128x128xbf16>
    %74 = vector.shape_cast %73 : vector<1x128x128xbf16> to vector<128x128xbf16>
    %cst_45 = arith.constant dense<0.000000e+00> : vector<16x128xf32>
    %75 = tpu.matmul %72, %74, %cst_45 {dimension_numbers = #tpu.dot_dimension_numbers<[1], [0], [0], [1], [0, 0, 1, 1], [], []>} : vector<16x128xbf16>, vector<128x128xbf16>, vector<16x128xf32> -> vector<16x128xf32>
    %76 = arith.addf %68, %75 : vector<16x128xf32>
    %cst_46 = arith.constant 1.000000e+00 : f32
    %77 = vector.broadcast %cst_46 : f32 to vector<1x16xf32>
    %cst_47 = arith.constant dense<0.000000e+00> : vector<1x128xf32>
    %78 = tpu.matmul %77, %76, %cst_47 {dimension_numbers = #tpu.dot_dimension_numbers<[1], [0], [0], [1], [0, 0, 1, 1], [], []>} : vector<1x16xf32>, vector<16x128xf32>, vector<1x128xf32> -> vector<1x128xf32>
    %c0_48 = arith.constant 0 : index
    %c0_49 = arith.constant 0 : index
    %c0_50 = arith.constant 0 : index
    %79 = vector.load %arg13[%c0_48, %c0_49, %c0_50] : memref<4x128x16xf32, #tpu.memory_space<vmem>>, vector<1x128x16xf32>
    %80 = vector.shape_cast %79 : vector<1x128x16xf32> to vector<128x16xf32>
    %cst_51 = arith.constant dense<0.000000e+00> : vector<1x16xf32>
    %81 = tpu.matmul %78, %80, %cst_51 {dimension_numbers = #tpu.dot_dimension_numbers<[1], [0], [0], [1], [0, 0, 1, 1], [], []>} : vector<1x128xf32>, vector<128x16xf32>, vector<1x16xf32> -> vector<1x16xf32>
    %82 = arith.mulf %76, %76 : vector<16x128xf32>
    %cst_52 = arith.constant dense<0.000000e+00> : vector<1x128xf32>
    %83 = tpu.matmul %77, %82, %cst_52 {dimension_numbers = #tpu.dot_dimension_numbers<[1], [0], [0], [1], [0, 0, 1, 1], [], []>} : vector<1x16xf32>, vector<16x128xf32>, vector<1x128xf32> -> vector<1x128xf32>
    %c0_53 = arith.constant 0 : index
    %c0_54 = arith.constant 0 : index
    %c0_55 = arith.constant 0 : index
    %84 = vector.load %arg13[%c0_53, %c0_54, %c0_55] : memref<4x128x16xf32, #tpu.memory_space<vmem>>, vector<1x128x16xf32>
    %85 = vector.shape_cast %84 : vector<1x128x16xf32> to vector<128x16xf32>
    %cst_56 = arith.constant dense<0.000000e+00> : vector<1x16xf32>
    %86 = tpu.matmul %83, %85, %cst_56 {dimension_numbers = #tpu.dot_dimension_numbers<[1], [0], [0], [1], [0, 0, 1, 1], [], []>} : vector<1x128xf32>, vector<128x16xf32>, vector<1x16xf32> -> vector<1x16xf32>
    %87 = arith.mulf %81, %81 : vector<1x16xf32>
    %88 = arith.subf %86, %87 : vector<1x16xf32>
    %c0_57 = arith.constant 0 : index
    %c0_58 = arith.constant 0 : index
    %c0_59 = arith.constant 0 : index
    %89 = vector.load %arg12[%c0_57, %c0_58, %c0_59] : memref<4x2x16xf32, #tpu.memory_space<vmem>>, vector<1x2x16xf32>
    %90 = vector.shape_cast %89 : vector<1x2x16xf32> to vector<2x16xf32>
    %91 = vector.extract_strided_slice %90 {offsets = [0, 0], sizes = [1, 16], strides = [1, 1]} : vector<2x16xf32> to vector<1x16xf32>
    %cst_60 = arith.constant 9.99999974E-6 : f32
    %92 = vector.broadcast %cst_60 : f32 to vector<1x16xf32>
    %93 = arith.addf %88, %92 : vector<1x16xf32>
    %94 = math.rsqrt %93 : vector<1x16xf32>
    %95 = arith.mulf %91, %94 : vector<1x16xf32>
    %96 = vector.extract_strided_slice %90 {offsets = [1, 0], sizes = [1, 16], strides = [1, 1]} : vector<2x16xf32> to vector<1x16xf32>
    %97 = arith.mulf %81, %95 : vector<1x16xf32>
    %98 = arith.subf %96, %97 : vector<1x16xf32>
    %99 = tpu.concatenate %95, %98 in 0 : vector<1x16xf32>, vector<1x16xf32> -> vector<2x16xf32>
    %c0_61 = arith.constant 0 : index
    %c0_62 = arith.constant 0 : index
    %c0_63 = arith.constant 0 : index
    %100 = vector.load %arg14[%c0_61, %c0_62, %c0_63] : memref<4x16x128xf32, #tpu.memory_space<vmem>>, vector<1x16x128xf32>
    %101 = vector.shape_cast %100 : vector<1x16x128xf32> to vector<16x128xf32>
    %cst_64 = arith.constant dense<0.000000e+00> : vector<2x128xf32>
    %102 = tpu.matmul %99, %101, %cst_64 {dimension_numbers = #tpu.dot_dimension_numbers<[1], [0], [0], [1], [0, 0, 1, 1], [], []>} : vector<2x16xf32>, vector<16x128xf32>, vector<2x128xf32> -> vector<2x128xf32>
    %103 = vector.extract_strided_slice %102 {offsets = [0, 0], sizes = [1, 128], strides = [1, 1]} : vector<2x128xf32> to vector<1x128xf32>
    %104 = vector.broadcast %103 : vector<1x128xf32> to vector<16x128xf32>
    %105 = arith.mulf %76, %104 : vector<16x128xf32>
    %106 = vector.extract_strided_slice %102 {offsets = [1, 0], sizes = [1, 128], strides = [1, 1]} : vector<2x128xf32> to vector<1x128xf32>
    %107 = vector.broadcast %106 : vector<1x128xf32> to vector<16x128xf32>
    %108 = arith.addf %105, %107 : vector<16x128xf32>
    %cst_65 = arith.constant 0.000000e+00 : f32
    %109 = vector.broadcast %cst_65 : f32 to vector<16x128xf32>
    %110 = arith.maximumf %108, %109 : vector<16x128xf32>
    %111 = arith.truncf %110 : vector<16x128xf32> to vector<16x128xbf16>
    %c0_66 = arith.constant 0 : index
    %c0_67 = arith.constant 0 : index
    %c0_68 = arith.constant 0 : index
    %112 = vector.load %arg8[%c0_66, %c0_67, %c0_68] : memref<3x32x16xbf16, #tpu.memory_space<vmem>>, vector<1x32x16xbf16>
    %113 = vector.shape_cast %112 : vector<1x32x16xbf16> to vector<32x16xbf16>
    %cst_69 = arith.constant dense<0.000000e+00> : vector<32x128xf32>
    %114 = tpu.matmul %113, %111, %cst_69 {dimension_numbers = #tpu.dot_dimension_numbers<[1], [0], [0], [1], [0, 0, 1, 1], [], []>} : vector<32x16xbf16>, vector<16x128xbf16>, vector<32x128xf32> -> vector<32x128xf32>
    %115 = arith.truncf %114 : vector<32x128xf32> to vector<32x128xbf16>
    %c3 = arith.constant 3 : index
    %c0_70 = arith.constant 0 : index
    %c0_71 = arith.constant 0 : index
    %116 = vector.load %arg11[%c3, %c0_70, %c0_71] : memref<12x128x128xbf16, #tpu.memory_space<vmem>>, vector<1x128x128xbf16>
    %117 = vector.shape_cast %116 : vector<1x128x128xbf16> to vector<128x128xbf16>
    %cst_72 = arith.constant dense<0.000000e+00> : vector<32x128xf32>
    %118 = tpu.matmul %115, %117, %cst_72 {dimension_numbers = #tpu.dot_dimension_numbers<[1], [0], [0], [1], [0, 0, 1, 1], [], []>} : vector<32x128xbf16>, vector<128x128xbf16>, vector<32x128xf32> -> vector<32x128xf32>
    %c1_73 = arith.constant 1 : index
    %c0_74 = arith.constant 0 : index
    %c0_75 = arith.constant 0 : index
    %119 = vector.load %arg8[%c1_73, %c0_74, %c0_75] : memref<3x32x16xbf16, #tpu.memory_space<vmem>>, vector<1x32x16xbf16>
    %120 = vector.shape_cast %119 : vector<1x32x16xbf16> to vector<32x16xbf16>
    %cst_76 = arith.constant dense<0.000000e+00> : vector<32x128xf32>
    %121 = tpu.matmul %120, %111, %cst_76 {dimension_numbers = #tpu.dot_dimension_numbers<[1], [0], [0], [1], [0, 0, 1, 1], [], []>} : vector<32x16xbf16>, vector<16x128xbf16>, vector<32x128xf32> -> vector<32x128xf32>
    %122 = arith.truncf %121 : vector<32x128xf32> to vector<32x128xbf16>
    %c4 = arith.constant 4 : index
    %c0_77 = arith.constant 0 : index
    %c0_78 = arith.constant 0 : index
    %123 = vector.load %arg11[%c4, %c0_77, %c0_78] : memref<12x128x128xbf16, #tpu.memory_space<vmem>>, vector<1x128x128xbf16>
    %124 = vector.shape_cast %123 : vector<1x128x128xbf16> to vector<128x128xbf16>
    %cst_79 = arith.constant dense<0.000000e+00> : vector<32x128xf32>
    %125 = tpu.matmul %122, %124, %cst_79 {dimension_numbers = #tpu.dot_dimension_numbers<[1], [0], [0], [1], [0, 0, 1, 1], [], []>} : vector<32x128xbf16>, vector<128x128xbf16>, vector<32x128xf32> -> vector<32x128xf32>
    %126 = arith.addf %118, %125 : vector<32x128xf32>
    %c2_80 = arith.constant 2 : index
    %c0_81 = arith.constant 0 : index
    %c0_82 = arith.constant 0 : index
    %127 = vector.load %arg8[%c2_80, %c0_81, %c0_82] : memref<3x32x16xbf16, #tpu.memory_space<vmem>>, vector<1x32x16xbf16>
    %128 = vector.shape_cast %127 : vector<1x32x16xbf16> to vector<32x16xbf16>
    %cst_83 = arith.constant dense<0.000000e+00> : vector<32x128xf32>
    %129 = tpu.matmul %128, %111, %cst_83 {dimension_numbers = #tpu.dot_dimension_numbers<[1], [0], [0], [1], [0, 0, 1, 1], [], []>} : vector<32x16xbf16>, vector<16x128xbf16>, vector<32x128xf32> -> vector<32x128xf32>
    %130 = arith.truncf %129 : vector<32x128xf32> to vector<32x128xbf16>
    %c5 = arith.constant 5 : index
    %c0_84 = arith.constant 0 : index
    %c0_85 = arith.constant 0 : index
    %131 = vector.load %arg11[%c5, %c0_84, %c0_85] : memref<12x128x128xbf16, #tpu.memory_space<vmem>>, vector<1x128x128xbf16>
    %132 = vector.shape_cast %131 : vector<1x128x128xbf16> to vector<128x128xbf16>
    %cst_86 = arith.constant dense<0.000000e+00> : vector<32x128xf32>
    %133 = tpu.matmul %130, %132, %cst_86 {dimension_numbers = #tpu.dot_dimension_numbers<[1], [0], [0], [1], [0, 0, 1, 1], [], []>} : vector<32x128xbf16>, vector<128x128xbf16>, vector<32x128xf32> -> vector<32x128xf32>
    %134 = arith.addf %126, %133 : vector<32x128xf32>
    %cst_87 = arith.constant 1.000000e+00 : f32
    %135 = vector.broadcast %cst_87 : f32 to vector<1x32xf32>
    %cst_88 = arith.constant dense<0.000000e+00> : vector<1x128xf32>
    %136 = tpu.matmul %135, %134, %cst_88 {dimension_numbers = #tpu.dot_dimension_numbers<[1], [0], [0], [1], [0, 0, 1, 1], [], []>} : vector<1x32xf32>, vector<32x128xf32>, vector<1x128xf32> -> vector<1x128xf32>
    %c1_89 = arith.constant 1 : index
    %c0_90 = arith.constant 0 : index
    %c0_91 = arith.constant 0 : index
    %137 = vector.load %arg13[%c1_89, %c0_90, %c0_91] : memref<4x128x16xf32, #tpu.memory_space<vmem>>, vector<1x128x16xf32>
    %138 = vector.shape_cast %137 : vector<1x128x16xf32> to vector<128x16xf32>
    %cst_92 = arith.constant dense<0.000000e+00> : vector<1x16xf32>
    %139 = tpu.matmul %136, %138, %cst_92 {dimension_numbers = #tpu.dot_dimension_numbers<[1], [0], [0], [1], [0, 0, 1, 1], [], []>} : vector<1x128xf32>, vector<128x16xf32>, vector<1x16xf32> -> vector<1x16xf32>
    %140 = arith.mulf %134, %134 : vector<32x128xf32>
    %cst_93 = arith.constant dense<0.000000e+00> : vector<1x128xf32>
    %141 = tpu.matmul %135, %140, %cst_93 {dimension_numbers = #tpu.dot_dimension_numbers<[1], [0], [0], [1], [0, 0, 1, 1], [], []>} : vector<1x32xf32>, vector<32x128xf32>, vector<1x128xf32> -> vector<1x128xf32>
    %c1_94 = arith.constant 1 : index
    %c0_95 = arith.constant 0 : index
    %c0_96 = arith.constant 0 : index
    %142 = vector.load %arg13[%c1_94, %c0_95, %c0_96] : memref<4x128x16xf32, #tpu.memory_space<vmem>>, vector<1x128x16xf32>
    %143 = vector.shape_cast %142 : vector<1x128x16xf32> to vector<128x16xf32>
    %cst_97 = arith.constant dense<0.000000e+00> : vector<1x16xf32>
    %144 = tpu.matmul %141, %143, %cst_97 {dimension_numbers = #tpu.dot_dimension_numbers<[1], [0], [0], [1], [0, 0, 1, 1], [], []>} : vector<1x128xf32>, vector<128x16xf32>, vector<1x16xf32> -> vector<1x16xf32>
    %145 = arith.mulf %139, %139 : vector<1x16xf32>
    %146 = arith.subf %144, %145 : vector<1x16xf32>
    %c1_98 = arith.constant 1 : index
    %c0_99 = arith.constant 0 : index
    %c0_100 = arith.constant 0 : index
    %147 = vector.load %arg12[%c1_98, %c0_99, %c0_100] : memref<4x2x16xf32, #tpu.memory_space<vmem>>, vector<1x2x16xf32>
    %148 = vector.shape_cast %147 : vector<1x2x16xf32> to vector<2x16xf32>
    %149 = vector.extract_strided_slice %148 {offsets = [0, 0], sizes = [1, 16], strides = [1, 1]} : vector<2x16xf32> to vector<1x16xf32>
    %cst_101 = arith.constant 9.99999974E-6 : f32
    %150 = vector.broadcast %cst_101 : f32 to vector<1x16xf32>
    %151 = arith.addf %146, %150 : vector<1x16xf32>
    %152 = math.rsqrt %151 : vector<1x16xf32>
    %153 = arith.mulf %149, %152 : vector<1x16xf32>
    %154 = vector.extract_strided_slice %148 {offsets = [1, 0], sizes = [1, 16], strides = [1, 1]} : vector<2x16xf32> to vector<1x16xf32>
    %155 = arith.mulf %139, %153 : vector<1x16xf32>
    %156 = arith.subf %154, %155 : vector<1x16xf32>
    %157 = tpu.concatenate %153, %156 in 0 : vector<1x16xf32>, vector<1x16xf32> -> vector<2x16xf32>
    %c1_102 = arith.constant 1 : index
    %c0_103 = arith.constant 0 : index
    %c0_104 = arith.constant 0 : index
    %158 = vector.load %arg14[%c1_102, %c0_103, %c0_104] : memref<4x16x128xf32, #tpu.memory_space<vmem>>, vector<1x16x128xf32>
    %159 = vector.shape_cast %158 : vector<1x16x128xf32> to vector<16x128xf32>
    %cst_105 = arith.constant dense<0.000000e+00> : vector<2x128xf32>
    %160 = tpu.matmul %157, %159, %cst_105 {dimension_numbers = #tpu.dot_dimension_numbers<[1], [0], [0], [1], [0, 0, 1, 1], [], []>} : vector<2x16xf32>, vector<16x128xf32>, vector<2x128xf32> -> vector<2x128xf32>
    %161 = vector.extract_strided_slice %160 {offsets = [0, 0], sizes = [1, 128], strides = [1, 1]} : vector<2x128xf32> to vector<1x128xf32>
    %162 = vector.broadcast %161 : vector<1x128xf32> to vector<32x128xf32>
    %163 = arith.mulf %134, %162 : vector<32x128xf32>
    %164 = vector.extract_strided_slice %160 {offsets = [1, 0], sizes = [1, 128], strides = [1, 1]} : vector<2x128xf32> to vector<1x128xf32>
    %165 = vector.broadcast %164 : vector<1x128xf32> to vector<32x128xf32>
    %166 = arith.addf %163, %165 : vector<32x128xf32>
    %cst_106 = arith.constant 0.000000e+00 : f32
    %167 = vector.broadcast %cst_106 : f32 to vector<32x128xf32>
    %168 = arith.maximumf %166, %167 : vector<32x128xf32>
    %169 = arith.truncf %168 : vector<32x128xf32> to vector<32x128xbf16>
    %c0_107 = arith.constant 0 : index
    %c0_108 = arith.constant 0 : index
    %c0_109 = arith.constant 0 : index
    %170 = vector.load %arg9[%c0_107, %c0_108, %c0_109] : memref<3x64x32xbf16, #tpu.memory_space<vmem>>, vector<1x64x32xbf16>
    %171 = vector.shape_cast %170 : vector<1x64x32xbf16> to vector<64x32xbf16>
    %cst_110 = arith.constant dense<0.000000e+00> : vector<64x128xf32>
    %172 = tpu.matmul %171, %169, %cst_110 {dimension_numbers = #tpu.dot_dimension_numbers<[1], [0], [0], [1], [0, 0, 1, 1], [], []>} : vector<64x32xbf16>, vector<32x128xbf16>, vector<64x128xf32> -> vector<64x128xf32>
    %173 = arith.truncf %172 : vector<64x128xf32> to vector<64x128xbf16>
    %c6 = arith.constant 6 : index
    %c0_111 = arith.constant 0 : index
    %c0_112 = arith.constant 0 : index
    %174 = vector.load %arg11[%c6, %c0_111, %c0_112] : memref<12x128x128xbf16, #tpu.memory_space<vmem>>, vector<1x128x128xbf16>
    %175 = vector.shape_cast %174 : vector<1x128x128xbf16> to vector<128x128xbf16>
    %cst_113 = arith.constant dense<0.000000e+00> : vector<64x128xf32>
    %176 = tpu.matmul %173, %175, %cst_113 {dimension_numbers = #tpu.dot_dimension_numbers<[1], [0], [0], [1], [0, 0, 1, 1], [], []>} : vector<64x128xbf16>, vector<128x128xbf16>, vector<64x128xf32> -> vector<64x128xf32>
    %c1_114 = arith.constant 1 : index
    %c0_115 = arith.constant 0 : index
    %c0_116 = arith.constant 0 : index
    %177 = vector.load %arg9[%c1_114, %c0_115, %c0_116] : memref<3x64x32xbf16, #tpu.memory_space<vmem>>, vector<1x64x32xbf16>
    %178 = vector.shape_cast %177 : vector<1x64x32xbf16> to vector<64x32xbf16>
    %cst_117 = arith.constant dense<0.000000e+00> : vector<64x128xf32>
    %179 = tpu.matmul %178, %169, %cst_117 {dimension_numbers = #tpu.dot_dimension_numbers<[1], [0], [0], [1], [0, 0, 1, 1], [], []>} : vector<64x32xbf16>, vector<32x128xbf16>, vector<64x128xf32> -> vector<64x128xf32>
    %180 = arith.truncf %179 : vector<64x128xf32> to vector<64x128xbf16>
    %c7 = arith.constant 7 : index
    %c0_118 = arith.constant 0 : index
    %c0_119 = arith.constant 0 : index
    %181 = vector.load %arg11[%c7, %c0_118, %c0_119] : memref<12x128x128xbf16, #tpu.memory_space<vmem>>, vector<1x128x128xbf16>
    %182 = vector.shape_cast %181 : vector<1x128x128xbf16> to vector<128x128xbf16>
    %cst_120 = arith.constant dense<0.000000e+00> : vector<64x128xf32>
    %183 = tpu.matmul %180, %182, %cst_120 {dimension_numbers = #tpu.dot_dimension_numbers<[1], [0], [0], [1], [0, 0, 1, 1], [], []>} : vector<64x128xbf16>, vector<128x128xbf16>, vector<64x128xf32> -> vector<64x128xf32>
    %184 = arith.addf %176, %183 : vector<64x128xf32>
    %c2_121 = arith.constant 2 : index
    %c0_122 = arith.constant 0 : index
    %c0_123 = arith.constant 0 : index
    %185 = vector.load %arg9[%c2_121, %c0_122, %c0_123] : memref<3x64x32xbf16, #tpu.memory_space<vmem>>, vector<1x64x32xbf16>
    %186 = vector.shape_cast %185 : vector<1x64x32xbf16> to vector<64x32xbf16>
    %cst_124 = arith.constant dense<0.000000e+00> : vector<64x128xf32>
    %187 = tpu.matmul %186, %169, %cst_124 {dimension_numbers = #tpu.dot_dimension_numbers<[1], [0], [0], [1], [0, 0, 1, 1], [], []>} : vector<64x32xbf16>, vector<32x128xbf16>, vector<64x128xf32> -> vector<64x128xf32>
    %188 = arith.truncf %187 : vector<64x128xf32> to vector<64x128xbf16>
    %c8 = arith.constant 8 : index
    %c0_125 = arith.constant 0 : index
    %c0_126 = arith.constant 0 : index
    %189 = vector.load %arg11[%c8, %c0_125, %c0_126] : memref<12x128x128xbf16, #tpu.memory_space<vmem>>, vector<1x128x128xbf16>
    %190 = vector.shape_cast %189 : vector<1x128x128xbf16> to vector<128x128xbf16>
    %cst_127 = arith.constant dense<0.000000e+00> : vector<64x128xf32>
    %191 = tpu.matmul %188, %190, %cst_127 {dimension_numbers = #tpu.dot_dimension_numbers<[1], [0], [0], [1], [0, 0, 1, 1], [], []>} : vector<64x128xbf16>, vector<128x128xbf16>, vector<64x128xf32> -> vector<64x128xf32>
    %192 = arith.addf %184, %191 : vector<64x128xf32>
    %cst_128 = arith.constant 1.000000e+00 : f32
    %193 = vector.broadcast %cst_128 : f32 to vector<1x64xf32>
    %cst_129 = arith.constant dense<0.000000e+00> : vector<1x128xf32>
    %194 = tpu.matmul %193, %192, %cst_129 {dimension_numbers = #tpu.dot_dimension_numbers<[1], [0], [0], [1], [0, 0, 1, 1], [], []>} : vector<1x64xf32>, vector<64x128xf32>, vector<1x128xf32> -> vector<1x128xf32>
    %c2_130 = arith.constant 2 : index
    %c0_131 = arith.constant 0 : index
    %c0_132 = arith.constant 0 : index
    %195 = vector.load %arg13[%c2_130, %c0_131, %c0_132] : memref<4x128x16xf32, #tpu.memory_space<vmem>>, vector<1x128x16xf32>
    %196 = vector.shape_cast %195 : vector<1x128x16xf32> to vector<128x16xf32>
    %cst_133 = arith.constant dense<0.000000e+00> : vector<1x16xf32>
    %197 = tpu.matmul %194, %196, %cst_133 {dimension_numbers = #tpu.dot_dimension_numbers<[1], [0], [0], [1], [0, 0, 1, 1], [], []>} : vector<1x128xf32>, vector<128x16xf32>, vector<1x16xf32> -> vector<1x16xf32>
    %198 = arith.mulf %192, %192 : vector<64x128xf32>
    %cst_134 = arith.constant dense<0.000000e+00> : vector<1x128xf32>
    %199 = tpu.matmul %193, %198, %cst_134 {dimension_numbers = #tpu.dot_dimension_numbers<[1], [0], [0], [1], [0, 0, 1, 1], [], []>} : vector<1x64xf32>, vector<64x128xf32>, vector<1x128xf32> -> vector<1x128xf32>
    %c2_135 = arith.constant 2 : index
    %c0_136 = arith.constant 0 : index
    %c0_137 = arith.constant 0 : index
    %200 = vector.load %arg13[%c2_135, %c0_136, %c0_137] : memref<4x128x16xf32, #tpu.memory_space<vmem>>, vector<1x128x16xf32>
    %201 = vector.shape_cast %200 : vector<1x128x16xf32> to vector<128x16xf32>
    %cst_138 = arith.constant dense<0.000000e+00> : vector<1x16xf32>
    %202 = tpu.matmul %199, %201, %cst_138 {dimension_numbers = #tpu.dot_dimension_numbers<[1], [0], [0], [1], [0, 0, 1, 1], [], []>} : vector<1x128xf32>, vector<128x16xf32>, vector<1x16xf32> -> vector<1x16xf32>
    %203 = arith.mulf %197, %197 : vector<1x16xf32>
    %204 = arith.subf %202, %203 : vector<1x16xf32>
    %c2_139 = arith.constant 2 : index
    %c0_140 = arith.constant 0 : index
    %c0_141 = arith.constant 0 : index
    %205 = vector.load %arg12[%c2_139, %c0_140, %c0_141] : memref<4x2x16xf32, #tpu.memory_space<vmem>>, vector<1x2x16xf32>
    %206 = vector.shape_cast %205 : vector<1x2x16xf32> to vector<2x16xf32>
    %207 = vector.extract_strided_slice %206 {offsets = [0, 0], sizes = [1, 16], strides = [1, 1]} : vector<2x16xf32> to vector<1x16xf32>
    %cst_142 = arith.constant 9.99999974E-6 : f32
    %208 = vector.broadcast %cst_142 : f32 to vector<1x16xf32>
    %209 = arith.addf %204, %208 : vector<1x16xf32>
    %210 = math.rsqrt %209 : vector<1x16xf32>
    %211 = arith.mulf %207, %210 : vector<1x16xf32>
    %212 = vector.extract_strided_slice %206 {offsets = [1, 0], sizes = [1, 16], strides = [1, 1]} : vector<2x16xf32> to vector<1x16xf32>
    %213 = arith.mulf %197, %211 : vector<1x16xf32>
    %214 = arith.subf %212, %213 : vector<1x16xf32>
    %215 = tpu.concatenate %211, %214 in 0 : vector<1x16xf32>, vector<1x16xf32> -> vector<2x16xf32>
    %c2_143 = arith.constant 2 : index
    %c0_144 = arith.constant 0 : index
    %c0_145 = arith.constant 0 : index
    %216 = vector.load %arg14[%c2_143, %c0_144, %c0_145] : memref<4x16x128xf32, #tpu.memory_space<vmem>>, vector<1x16x128xf32>
    %217 = vector.shape_cast %216 : vector<1x16x128xf32> to vector<16x128xf32>
    %cst_146 = arith.constant dense<0.000000e+00> : vector<2x128xf32>
    %218 = tpu.matmul %215, %217, %cst_146 {dimension_numbers = #tpu.dot_dimension_numbers<[1], [0], [0], [1], [0, 0, 1, 1], [], []>} : vector<2x16xf32>, vector<16x128xf32>, vector<2x128xf32> -> vector<2x128xf32>
    %219 = vector.extract_strided_slice %218 {offsets = [0, 0], sizes = [1, 128], strides = [1, 1]} : vector<2x128xf32> to vector<1x128xf32>
    %220 = vector.broadcast %219 : vector<1x128xf32> to vector<64x128xf32>
    %221 = arith.mulf %192, %220 : vector<64x128xf32>
    %222 = vector.extract_strided_slice %218 {offsets = [1, 0], sizes = [1, 128], strides = [1, 1]} : vector<2x128xf32> to vector<1x128xf32>
    %223 = vector.broadcast %222 : vector<1x128xf32> to vector<64x128xf32>
    %224 = arith.addf %221, %223 : vector<64x128xf32>
    %cst_147 = arith.constant 0.000000e+00 : f32
    %225 = vector.broadcast %cst_147 : f32 to vector<64x128xf32>
    %226 = arith.maximumf %224, %225 : vector<64x128xf32>
    %227 = arith.truncf %226 : vector<64x128xf32> to vector<64x128xbf16>
    %c0_148 = arith.constant 0 : index
    %c0_149 = arith.constant 0 : index
    %c0_150 = arith.constant 0 : index
    %228 = vector.load %arg10[%c0_148, %c0_149, %c0_150] : memref<3x128x64xbf16, #tpu.memory_space<vmem>>, vector<1x128x64xbf16>
    %229 = vector.shape_cast %228 : vector<1x128x64xbf16> to vector<128x64xbf16>
    %cst_151 = arith.constant dense<0.000000e+00> : vector<128x128xf32>
    %230 = tpu.matmul %229, %227, %cst_151 {dimension_numbers = #tpu.dot_dimension_numbers<[1], [0], [0], [1], [0, 0, 1, 1], [], []>} : vector<128x64xbf16>, vector<64x128xbf16>, vector<128x128xf32> -> vector<128x128xf32>
    %231 = arith.truncf %230 : vector<128x128xf32> to vector<128x128xbf16>
    %c9 = arith.constant 9 : index
    %c0_152 = arith.constant 0 : index
    %c0_153 = arith.constant 0 : index
    %232 = vector.load %arg11[%c9, %c0_152, %c0_153] : memref<12x128x128xbf16, #tpu.memory_space<vmem>>, vector<1x128x128xbf16>
    %233 = vector.shape_cast %232 : vector<1x128x128xbf16> to vector<128x128xbf16>
    %cst_154 = arith.constant dense<0.000000e+00> : vector<128x128xf32>
    %234 = tpu.matmul %231, %233, %cst_154 {dimension_numbers = #tpu.dot_dimension_numbers<[1], [0], [0], [1], [0, 0, 1, 1], [], []>} : vector<128x128xbf16>, vector<128x128xbf16>, vector<128x128xf32> -> vector<128x128xf32>
    %c1_155 = arith.constant 1 : index
    %c0_156 = arith.constant 0 : index
    %c0_157 = arith.constant 0 : index
    %235 = vector.load %arg10[%c1_155, %c0_156, %c0_157] : memref<3x128x64xbf16, #tpu.memory_space<vmem>>, vector<1x128x64xbf16>
    %236 = vector.shape_cast %235 : vector<1x128x64xbf16> to vector<128x64xbf16>
    %cst_158 = arith.constant dense<0.000000e+00> : vector<128x128xf32>
    %237 = tpu.matmul %236, %227, %cst_158 {dimension_numbers = #tpu.dot_dimension_numbers<[1], [0], [0], [1], [0, 0, 1, 1], [], []>} : vector<128x64xbf16>, vector<64x128xbf16>, vector<128x128xf32> -> vector<128x128xf32>
    %238 = arith.truncf %237 : vector<128x128xf32> to vector<128x128xbf16>
    %c10 = arith.constant 10 : index
    %c0_159 = arith.constant 0 : index
    %c0_160 = arith.constant 0 : index
    %239 = vector.load %arg11[%c10, %c0_159, %c0_160] : memref<12x128x128xbf16, #tpu.memory_space<vmem>>, vector<1x128x128xbf16>
    %240 = vector.shape_cast %239 : vector<1x128x128xbf16> to vector<128x128xbf16>
    %cst_161 = arith.constant dense<0.000000e+00> : vector<128x128xf32>
    %241 = tpu.matmul %238, %240, %cst_161 {dimension_numbers = #tpu.dot_dimension_numbers<[1], [0], [0], [1], [0, 0, 1, 1], [], []>} : vector<128x128xbf16>, vector<128x128xbf16>, vector<128x128xf32> -> vector<128x128xf32>
    %242 = arith.addf %234, %241 : vector<128x128xf32>
    %c2_162 = arith.constant 2 : index
    %c0_163 = arith.constant 0 : index
    %c0_164 = arith.constant 0 : index
    %243 = vector.load %arg10[%c2_162, %c0_163, %c0_164] : memref<3x128x64xbf16, #tpu.memory_space<vmem>>, vector<1x128x64xbf16>
    %244 = vector.shape_cast %243 : vector<1x128x64xbf16> to vector<128x64xbf16>
    %cst_165 = arith.constant dense<0.000000e+00> : vector<128x128xf32>
    %245 = tpu.matmul %244, %227, %cst_165 {dimension_numbers = #tpu.dot_dimension_numbers<[1], [0], [0], [1], [0, 0, 1, 1], [], []>} : vector<128x64xbf16>, vector<64x128xbf16>, vector<128x128xf32> -> vector<128x128xf32>
    %246 = arith.truncf %245 : vector<128x128xf32> to vector<128x128xbf16>
    %c11 = arith.constant 11 : index
    %c0_166 = arith.constant 0 : index
    %c0_167 = arith.constant 0 : index
    %247 = vector.load %arg11[%c11, %c0_166, %c0_167] : memref<12x128x128xbf16, #tpu.memory_space<vmem>>, vector<1x128x128xbf16>
    %248 = vector.shape_cast %247 : vector<1x128x128xbf16> to vector<128x128xbf16>
    %cst_168 = arith.constant dense<0.000000e+00> : vector<128x128xf32>
    %249 = tpu.matmul %246, %248, %cst_168 {dimension_numbers = #tpu.dot_dimension_numbers<[1], [0], [0], [1], [0, 0, 1, 1], [], []>} : vector<128x128xbf16>, vector<128x128xbf16>, vector<128x128xf32> -> vector<128x128xf32>
    %250 = arith.addf %242, %249 : vector<128x128xf32>
    %cst_169 = arith.constant 1.000000e+00 : f32
    %251 = vector.broadcast %cst_169 : f32 to vector<1x128xf32>
    %cst_170 = arith.constant dense<0.000000e+00> : vector<1x128xf32>
    %252 = tpu.matmul %251, %250, %cst_170 {dimension_numbers = #tpu.dot_dimension_numbers<[1], [0], [0], [1], [0, 0, 1, 1], [], []>} : vector<1x128xf32>, vector<128x128xf32>, vector<1x128xf32> -> vector<1x128xf32>
    %c3_171 = arith.constant 3 : index
    %c0_172 = arith.constant 0 : index
    %c0_173 = arith.constant 0 : index
    %253 = vector.load %arg13[%c3_171, %c0_172, %c0_173] : memref<4x128x16xf32, #tpu.memory_space<vmem>>, vector<1x128x16xf32>
    %254 = vector.shape_cast %253 : vector<1x128x16xf32> to vector<128x16xf32>
    %cst_174 = arith.constant dense<0.000000e+00> : vector<1x16xf32>
    %255 = tpu.matmul %252, %254, %cst_174 {dimension_numbers = #tpu.dot_dimension_numbers<[1], [0], [0], [1], [0, 0, 1, 1], [], []>} : vector<1x128xf32>, vector<128x16xf32>, vector<1x16xf32> -> vector<1x16xf32>
    %256 = arith.mulf %250, %250 : vector<128x128xf32>
    %cst_175 = arith.constant dense<0.000000e+00> : vector<1x128xf32>
    %257 = tpu.matmul %251, %256, %cst_175 {dimension_numbers = #tpu.dot_dimension_numbers<[1], [0], [0], [1], [0, 0, 1, 1], [], []>} : vector<1x128xf32>, vector<128x128xf32>, vector<1x128xf32> -> vector<1x128xf32>
    %c3_176 = arith.constant 3 : index
    %c0_177 = arith.constant 0 : index
    %c0_178 = arith.constant 0 : index
    %258 = vector.load %arg13[%c3_176, %c0_177, %c0_178] : memref<4x128x16xf32, #tpu.memory_space<vmem>>, vector<1x128x16xf32>
    %259 = vector.shape_cast %258 : vector<1x128x16xf32> to vector<128x16xf32>
    %cst_179 = arith.constant dense<0.000000e+00> : vector<1x16xf32>
    %260 = tpu.matmul %257, %259, %cst_179 {dimension_numbers = #tpu.dot_dimension_numbers<[1], [0], [0], [1], [0, 0, 1, 1], [], []>} : vector<1x128xf32>, vector<128x16xf32>, vector<1x16xf32> -> vector<1x16xf32>
    %261 = arith.mulf %255, %255 : vector<1x16xf32>
    %262 = arith.subf %260, %261 : vector<1x16xf32>
    %c3_180 = arith.constant 3 : index
    %c0_181 = arith.constant 0 : index
    %c0_182 = arith.constant 0 : index
    %263 = vector.load %arg12[%c3_180, %c0_181, %c0_182] : memref<4x2x16xf32, #tpu.memory_space<vmem>>, vector<1x2x16xf32>
    %264 = vector.shape_cast %263 : vector<1x2x16xf32> to vector<2x16xf32>
    %265 = vector.extract_strided_slice %264 {offsets = [0, 0], sizes = [1, 16], strides = [1, 1]} : vector<2x16xf32> to vector<1x16xf32>
    %cst_183 = arith.constant 9.99999974E-6 : f32
    %266 = vector.broadcast %cst_183 : f32 to vector<1x16xf32>
    %267 = arith.addf %262, %266 : vector<1x16xf32>
    %268 = math.rsqrt %267 : vector<1x16xf32>
    %269 = arith.mulf %265, %268 : vector<1x16xf32>
    %270 = vector.extract_strided_slice %264 {offsets = [1, 0], sizes = [1, 16], strides = [1, 1]} : vector<2x16xf32> to vector<1x16xf32>
    %271 = arith.mulf %255, %269 : vector<1x16xf32>
    %272 = arith.subf %270, %271 : vector<1x16xf32>
    %273 = tpu.concatenate %269, %272 in 0 : vector<1x16xf32>, vector<1x16xf32> -> vector<2x16xf32>
    %c3_184 = arith.constant 3 : index
    %c0_185 = arith.constant 0 : index
    %c0_186 = arith.constant 0 : index
    %274 = vector.load %arg14[%c3_184, %c0_185, %c0_186] : memref<4x16x128xf32, #tpu.memory_space<vmem>>, vector<1x16x128xf32>
    %275 = vector.shape_cast %274 : vector<1x16x128xf32> to vector<16x128xf32>
    %cst_187 = arith.constant dense<0.000000e+00> : vector<2x128xf32>
    %276 = tpu.matmul %273, %275, %cst_187 {dimension_numbers = #tpu.dot_dimension_numbers<[1], [0], [0], [1], [0, 0, 1, 1], [], []>} : vector<2x16xf32>, vector<16x128xf32>, vector<2x128xf32> -> vector<2x128xf32>
    %277 = vector.extract_strided_slice %276 {offsets = [0, 0], sizes = [1, 128], strides = [1, 1]} : vector<2x128xf32> to vector<1x128xf32>
    %278 = vector.broadcast %277 : vector<1x128xf32> to vector<128x128xf32>
    %279 = arith.mulf %250, %278 : vector<128x128xf32>
    %280 = vector.extract_strided_slice %276 {offsets = [1, 0], sizes = [1, 128], strides = [1, 1]} : vector<2x128xf32> to vector<1x128xf32>
    %281 = vector.broadcast %280 : vector<1x128xf32> to vector<128x128xf32>
    %282 = arith.addf %279, %281 : vector<128x128xf32>
    %cst_188 = arith.constant 0.000000e+00 : f32
    %283 = vector.broadcast %cst_188 : f32 to vector<128x128xf32>
    %284 = arith.maximumf %282, %283 : vector<128x128xf32>
    %285 = arith.truncf %284 : vector<128x128xf32> to vector<128x128xbf16>
    %c0_189 = arith.constant 0 : index
    %c0_190 = arith.constant 0 : index
    %c0_191 = arith.constant 0 : index
    %286 = vector.load %arg15[%c0_189, %c0_190, %c0_191] : memref<3x128x128xbf16, #tpu.memory_space<vmem>>, vector<1x128x128xbf16>
    %287 = vector.shape_cast %286 : vector<1x128x128xbf16> to vector<128x128xbf16>
    %cst_192 = arith.constant dense<0.000000e+00> : vector<128x128xf32>
    %288 = tpu.matmul %287, %285, %cst_192 {dimension_numbers = #tpu.dot_dimension_numbers<[1], [0], [0], [1], [0, 0, 1, 1], [], []>} : vector<128x128xbf16>, vector<128x128xbf16>, vector<128x128xf32> -> vector<128x128xf32>
    %289 = arith.truncf %288 : vector<128x128xf32> to vector<128x128xbf16>
    %c0_193 = arith.constant 0 : index
    %c0_194 = arith.constant 0 : index
    %c0_195 = arith.constant 0 : index
    %290 = vector.load %arg16[%c0_193, %c0_194, %c0_195] : memref<3x128x192xbf16, #tpu.memory_space<vmem>>, vector<1x128x192xbf16>
    %291 = vector.shape_cast %290 : vector<1x128x192xbf16> to vector<128x192xbf16>
    %cst_196 = arith.constant dense<0.000000e+00> : vector<128x192xf32>
    %292 = tpu.matmul %289, %291, %cst_196 {dimension_numbers = #tpu.dot_dimension_numbers<[1], [0], [0], [1], [0, 0, 1, 1], [], []>} : vector<128x128xbf16>, vector<128x192xbf16>, vector<128x192xf32> -> vector<128x192xf32>
    %c1_197 = arith.constant 1 : index
    %c0_198 = arith.constant 0 : index
    %c0_199 = arith.constant 0 : index
    %293 = vector.load %arg15[%c1_197, %c0_198, %c0_199] : memref<3x128x128xbf16, #tpu.memory_space<vmem>>, vector<1x128x128xbf16>
    %294 = vector.shape_cast %293 : vector<1x128x128xbf16> to vector<128x128xbf16>
    %cst_200 = arith.constant dense<0.000000e+00> : vector<128x128xf32>
    %295 = tpu.matmul %294, %285, %cst_200 {dimension_numbers = #tpu.dot_dimension_numbers<[1], [0], [0], [1], [0, 0, 1, 1], [], []>} : vector<128x128xbf16>, vector<128x128xbf16>, vector<128x128xf32> -> vector<128x128xf32>
    %296 = arith.truncf %295 : vector<128x128xf32> to vector<128x128xbf16>
    %c1_201 = arith.constant 1 : index
    %c0_202 = arith.constant 0 : index
    %c0_203 = arith.constant 0 : index
    %297 = vector.load %arg16[%c1_201, %c0_202, %c0_203] : memref<3x128x192xbf16, #tpu.memory_space<vmem>>, vector<1x128x192xbf16>
    %298 = vector.shape_cast %297 : vector<1x128x192xbf16> to vector<128x192xbf16>
    %cst_204 = arith.constant dense<0.000000e+00> : vector<128x192xf32>
    %299 = tpu.matmul %296, %298, %cst_204 {dimension_numbers = #tpu.dot_dimension_numbers<[1], [0], [0], [1], [0, 0, 1, 1], [], []>} : vector<128x128xbf16>, vector<128x192xbf16>, vector<128x192xf32> -> vector<128x192xf32>
    %300 = arith.addf %292, %299 : vector<128x192xf32>
    %c2_205 = arith.constant 2 : index
    %c0_206 = arith.constant 0 : index
    %c0_207 = arith.constant 0 : index
    %301 = vector.load %arg15[%c2_205, %c0_206, %c0_207] : memref<3x128x128xbf16, #tpu.memory_space<vmem>>, vector<1x128x128xbf16>
    %302 = vector.shape_cast %301 : vector<1x128x128xbf16> to vector<128x128xbf16>
    %cst_208 = arith.constant dense<0.000000e+00> : vector<128x128xf32>
    %303 = tpu.matmul %302, %285, %cst_208 {dimension_numbers = #tpu.dot_dimension_numbers<[1], [0], [0], [1], [0, 0, 1, 1], [], []>} : vector<128x128xbf16>, vector<128x128xbf16>, vector<128x128xf32> -> vector<128x128xf32>
    %304 = arith.truncf %303 : vector<128x128xf32> to vector<128x128xbf16>
    %c2_209 = arith.constant 2 : index
    %c0_210 = arith.constant 0 : index
    %c0_211 = arith.constant 0 : index
    %305 = vector.load %arg16[%c2_209, %c0_210, %c0_211] : memref<3x128x192xbf16, #tpu.memory_space<vmem>>, vector<1x128x192xbf16>
    %306 = vector.shape_cast %305 : vector<1x128x192xbf16> to vector<128x192xbf16>
    %cst_212 = arith.constant dense<0.000000e+00> : vector<128x192xf32>
    %307 = tpu.matmul %304, %306, %cst_212 {dimension_numbers = #tpu.dot_dimension_numbers<[1], [0], [0], [1], [0, 0, 1, 1], [], []>} : vector<128x128xbf16>, vector<128x192xbf16>, vector<128x192xf32> -> vector<128x192xf32>
    %308 = arith.addf %300, %307 : vector<128x192xf32>
    %309 = math.tanh %308 : vector<128x192xf32>
    %c0_213 = arith.constant 0 : index
    %c0_214 = arith.constant 0 : index
    %310 = vector.load %arg17[%c0_213, %c0_214] : memref<128x192xf32, #tpu.memory_space<vmem>>, vector<128x192xf32>
    tpu.vector_store %arg17[%c0_213, %c0_214], %309 {strides = array<i32>} : memref<128x192xf32, #tpu.memory_space<vmem>>, vector<128x192xf32>,
    return
  }
}

</mosaic_0001>

<llo_original>
// kernel: stage1_generator_forward.1
$region0: #{stage1_generator_forward.1}
  #allocation0 [shape = 'u32[]', space=smem, size = 0x4, offset = 0x4, fixed_abs, tag = 'smem constant byte address 0x4 - core index']
  #allocation1 [shape = 'u32[144,128]{1,0:T(1,128)}', space=vmem, size = 0x12000, scoped, tag = 'internal scratch']
  %s0 = inlined_call_operand.vmem [shape: f32[2,16], index: 0, kind: input, shape index: {}]
  %s1 = inlined_call_operand.vmem [shape: f32[2,8], index: 1, kind: input, shape index: {}]
  %s2 = inlined_call_operand.vmem [shape: f32[2,8], index: 2, kind: input, shape index: {}]
  %s3 = inlined_call_operand.vmem [shape: f32[16,16], index: 3, kind: input, shape index: {}]
  %s4 = inlined_call_operand.vmem [shape: f32[1,16], index: 4, kind: input, shape index: {}]
  %s5 = inlined_call_operand.vmem [shape: f32[16,512], index: 5, kind: input, shape index: {}]
  %s6 = inlined_call_operand.vmem [shape: f32[2,512], index: 6, kind: input, shape index: {}]
  %s7 = inlined_call_operand.vmem [shape: bf16[3,16,8], index: 7, kind: input, shape index: {}]
  %s8 = inlined_call_operand.vmem [shape: bf16[3,32,16], index: 8, kind: input, shape index: {}]
  %s9 = inlined_call_operand.vmem [shape: bf16[3,64,32], index: 9, kind: input, shape index: {}]
  %s10 = inlined_call_operand.vmem [shape: bf16[3,128,64], index: 10, kind: input, shape index: {}]
  %s11 = inlined_call_operand.vmem [shape: bf16[12,128,128], index: 11, kind: input, shape index: {}]
  %s12 = inlined_call_operand.vmem [shape: f32[4,2,16], index: 12, kind: input, shape index: {}]
  %s13 = inlined_call_operand.vmem [shape: f32[4,128,16], index: 13, kind: input, shape index: {}]
  %s14 = inlined_call_operand.vmem [shape: f32[4,16,128], index: 14, kind: input, shape index: {}]
  %s15 = inlined_call_operand.vmem [shape: bf16[3,128,128], index: 15, kind: input, shape index: {}]
  %s16 = inlined_call_operand.vmem [shape: bf16[3,128,192], index: 16, kind: input, shape index: {}]
  %s17 = inlined_call_operand.vmem [shape: f32[128,192], index: 17, kind: output, shape index: {0}]
  %s18 = inlined_call_operand.vmem [shape: f32[2,16], index: 18, kind: output, shape index: {1}]
  %19 = xla_tuple %s17, %s18
  %s20 = sld [smem:[#allocation0]]
  $region86: #{stage1_generator_forward.1} parent=0
    _
  %s22 = ssub.s32 1, %s20
  %s23 = scalar_select 0, %s22, %s20
  // Predicated region
  $region2: #{stage1_generator_forward.1} parent=0 // pred_check
    _
  $region3: #{stage1_generator_forward.1} parent=0 // pred_check_branch
    %25 = sbr.rel (0) target = $region5
  $region4: #{stage1_generator_forward.1} parent=0 // pred_region
    _
  $region5: #{stage1_generator_forward.1} parent=0 // pred_fallthru
    _
  // Predicated region
  $region6: #{stage1_generator_forward.1} parent=0 // pred_check
    _
  $region7: #{stage1_generator_forward.1} parent=0 // pred_check_branch
    %27 = sbr.rel (0) target = $region9
  $region8: #{stage1_generator_forward.1} parent=0 // pred_region
    _
  $region9: #{stage1_generator_forward.1} parent=0 // pred_fallthru
    _
  // Predicated region
  $region10: #{stage1_generator_forward.1} parent=0 // pred_check
    _
  $region11: #{stage1_generator_forward.1} parent=0 // pred_check_branch
    %29 = sbr.rel (0) target = $region13
  $region12: #{stage1_generator_forward.1} parent=0 // pred_region
    _
  $region13: #{stage1_generator_forward.1} parent=0 // pred_fallthru
    _
  // Predicated region
  $region14: #{stage1_generator_forward.1} parent=0 // pred_check
    _
  $region15: #{stage1_generator_forward.1} parent=0 // pred_check_branch
    %31 = sbr.rel (0) target = $region17
  $region16: #{stage1_generator_forward.1} parent=0 // pred_region
    _
  $region17: #{stage1_generator_forward.1} parent=0 // pred_fallthru
    _
  // Predicated region
  $region18: #{stage1_generator_forward.1} parent=0 // pred_check
    _
  $region19: #{stage1_generator_forward.1} parent=0 // pred_check_branch
    %33 = sbr.rel (0) target = $region21
  $region20: #{stage1_generator_forward.1} parent=0 // pred_region
    _
  $region21: #{stage1_generator_forward.1} parent=0 // pred_fallthru
    _
  // Predicated region
  $region22: #{stage1_generator_forward.1} parent=0 // pred_check
    _
  $region23: #{stage1_generator_forward.1} parent=0 // pred_check_branch
    %35 = sbr.rel (0) target = $region25
  $region24: #{stage1_generator_forward.1} parent=0 // pred_region
    _
  $region25: #{stage1_generator_forward.1} parent=0 // pred_fallthru
    _
  // Predicated region
  $region26: #{stage1_generator_forward.1} parent=0 // pred_check
    _
  $region27: #{stage1_generator_forward.1} parent=0 // pred_check_branch
    %37 = sbr.rel (0) target = $region29
  $region28: #{stage1_generator_forward.1} parent=0 // pred_region
    _
  $region29: #{stage1_generator_forward.1} parent=0 // pred_fallthru
    _
  // Predicated region
  $region30: #{stage1_generator_forward.1} parent=0 // pred_check
    _
  $region31: #{stage1_generator_forward.1} parent=0 // pred_check_branch
    %39 = sbr.rel (0) target = $region33
  $region32: #{stage1_generator_forward.1} parent=0 // pred_region
    _
  $region33: #{stage1_generator_forward.1} parent=0 // pred_fallthru
    _
  // Predicated region
  $region34: #{stage1_generator_forward.1} parent=0 // pred_check
    _
  $region35: #{stage1_generator_forward.1} parent=0 // pred_check_branch
    %41 = sbr.rel (0) target = $region37
  $region36: #{stage1_generator_forward.1} parent=0 // pred_region
    _
  $region37: #{stage1_generator_forward.1} parent=0 // pred_fallthru
    _
  // Predicated region
  $region38: #{stage1_generator_forward.1} parent=0 // pred_check
    _
  $region39: #{stage1_generator_forward.1} parent=0 // pred_check_branch
    %43 = sbr.rel (0) target = $region41
  $region40: #{stage1_generator_forward.1} parent=0 // pred_region
    _
  $region41: #{stage1_generator_forward.1} parent=0 // pred_fallthru
    _
  // Predicated region
  $region42: #{stage1_generator_forward.1} parent=0 // pred_check
    _
  $region43: #{stage1_generator_forward.1} parent=0 // pred_check_branch
    %45 = sbr.rel (0) target = $region45
  $region44: #{stage1_generator_forward.1} parent=0 // pred_region
    _
  $region45: #{stage1_generator_forward.1} parent=0 // pred_fallthru
    _
  // Predicated region
  $region46: #{stage1_generator_forward.1} parent=0 // pred_check
    _
  $region47: #{stage1_generator_forward.1} parent=0 // pred_check_branch
    %47 = sbr.rel (0) target = $region49
  $region48: #{stage1_generator_forward.1} parent=0 // pred_region
    _
  $region49: #{stage1_generator_forward.1} parent=0 // pred_fallthru
    _
  // Predicated region
  $region50: #{stage1_generator_forward.1} parent=0 // pred_check
    _
  $region51: #{stage1_generator_forward.1} parent=0 // pred_check_branch
    %49 = sbr.rel (0) target = $region53
  $region52: #{stage1_generator_forward.1} parent=0 // pred_region
    _
  $region53: #{stage1_generator_forward.1} parent=0 // pred_fallthru
    _
  // Predicated region
  $region54: #{stage1_generator_forward.1} parent=0 // pred_check
    _
  $region55: #{stage1_generator_forward.1} parent=0 // pred_check_branch
    %51 = sbr.rel (0) target = $region57
  $region56: #{stage1_generator_forward.1} parent=0 // pred_region
    _
  $region57: #{stage1_generator_forward.1} parent=0 // pred_fallthru
    _
  // Predicated region
  $region58: #{stage1_generator_forward.1} parent=0 // pred_check
    _
  $region59: #{stage1_generator_forward.1} parent=0 // pred_check_branch
    %53 = sbr.rel (0) target = $region61
  $region60: #{stage1_generator_forward.1} parent=0 // pred_region
    _
  $region61: #{stage1_generator_forward.1} parent=0 // pred_fallthru
    _
  // Predicated region
  $region62: #{stage1_generator_forward.1} parent=0 // pred_check
    _
  $region63: #{stage1_generator_forward.1} parent=0 // pred_check_branch
    %55 = sbr.rel (0) target = $region65
  $region64: #{stage1_generator_forward.1} parent=0 // pred_region
    _
  $region65: #{stage1_generator_forward.1} parent=0 // pred_fallthru
    _
  // Predicated region
  $region66: #{stage1_generator_forward.1} parent=0 // pred_check
    _
  $region67: #{stage1_generator_forward.1} parent=0 // pred_check_branch
    %57 = sbr.rel (0) target = $region69
  $region68: #{stage1_generator_forward.1} parent=0 // pred_region
    _
  $region69: #{stage1_generator_forward.1} parent=0 // pred_fallthru
    _
  %v59 = vld [vmem:[%s0] sm:$0x3]
  %v60 = vld [vmem:[%s3] sm:$0xff]
  %v61 = vld [vmem:[%s3 + $0x8] sm:$0xff]
  %v62 = vld [vmem:[%s4] sm:$0x1]
  %v64 = vlaneseq
  %v65 = vshrl.u32 %v64, 7
  %v66 = vsub.s32 0, %v65
  %v67 = vrot.slane %v62, %v66
  %vm69 = vcmask 130048
  %v71 = vsel %vm69, %v59, 0
  %73 = vmatprep.subr.mxu0 0.0
  %74 = vmatpush1.msra.mxu0 %v60
  %75 = vmatprep.subr.mxu0 0.0
  %76 = vmatpush1.msra.mxu0 %v61
  %77 = vmatprep.subr.mxu0 0.0
  %78 = vmatpush1.msra.mxu0 0.0
  %79 = vmatprep.subr.mxu0 0.0
  %80 = vmatpush1.msra.mxu0 0.0
  %81 = vmatprep.subr.mxu0 0.0
  %82 = vmatpush1.msra.mxu0 0.0
  %83 = vmatprep.subr.mxu0 0.0
  %84 = vmatpush1.msra.mxu0 0.0
  %85 = vmatprep.subr.mxu0 0.0
  %86 = vmatpush1.msra.mxu0 0.0
  %87 = vmatprep.subr.mxu0 0.0
  %88 = vmatpush1.msra.mxu0 0.0
  %89 = vmatprep.subr.mxu0 0.0
  %90 = vmatpush1.msra.mxu0 0.0
  %91 = vmatprep.subr.mxu0 0.0
  %92 = vmatpush1.msra.mxu0 0.0
  %93 = vmatprep.subr.mxu0 0.0
  %94 = vmatpush1.msra.mxu0 0.0
  %95 = vmatprep.subr.mxu0 0.0
  %96 = vmatpush1.msra.mxu0 0.0
  %97 = vmatprep.subr.mxu0 0.0
  %98 = vmatpush1.msra.mxu0 0.0
  %99 = vmatprep.subr.mxu0 0.0
  %100 = vmatpush1.msra.mxu0 0.0
  %101 = vmatprep.subr.mxu0 0.0
  %102 = vmatpush1.msra.mxu0 0.0
  %103 = vmatprep.subr.mxu0 0.0
  %104 = vmatpush1.msra.mxu0 0.0
  %105 = vmatprep.subr.mxu0 0.0
  %106 = vmatpush1.msra.mxu0 0.0
  %107 = vmatprep.subr.mxu0 0.0
  %108 = vmatpush1.msra.mxu0 0.0
  %109 = vmatprep.subr.mxu0 0.0
  %110 = vmatpush1.msra.mxu0 0.0
  %111 = vmatprep.subr.mxu0 0.0
  %112 = vmatpush1.msra.mxu0 0.0
  %113 = vmatprep.subr.mxu0 0.0
  %114 = vmatpush1.msra.mxu0 0.0
  %115 = vmatprep.subr.mxu0 0.0
  %116 = vmatpush1.msra.mxu0 0.0
  %117 = vmatprep.subr.mxu0 0.0
  %118 = vmatpush1.msra.mxu0 0.0
  %119 = vmatprep.subr.mxu0 0.0
  %120 = vmatpush1.msra.mxu0 0.0
  %121 = vmatprep.subr.mxu0 0.0
  %122 = vmatpush1.msra.mxu0 0.0
  %123 = vmatprep.subr.mxu0 0.0
  %124 = vmatpush1.msra.mxu0 0.0
  %125 = vmatprep.subr.mxu0 0.0
  %126 = vmatpush1.msra.mxu0 0.0
  %127 = vmatprep.subr.mxu0 0.0
  %128 = vmatpush1.msra.mxu0 0.0
  %129 = vmatprep.subr.mxu0 0.0
  %130 = vmatpush1.msra.mxu0 0.0
  %131 = vmatprep.subr.mxu0 0.0
  %132 = vmatpush1.msra.mxu0 0.0
  %133 = vmatprep.subr.mxu0 0.0
  %134 = vmatpush1.msra.mxu0 0.0
  %135 = vmatprep.subr.mxu0 0.0
  %136 = vmatpush1.msra.mxu0 0.0
  %137 = vmatprep.mubr.f32.mxu0 0.0
  %138 = vmatmul.mubr.f32.gmra.mrb[0].mxu0 %v71
  %v139 = vpop.f32.mrb[0].mxu0
  %v140 = vadd.f32 %v67, %v139
  %v141 = vpop.f32.mrb[0].mxu0
  %142 = vdwg.mxu0
  %v143 = vmax.f32 %v140, 0.0
  %vm144 = vcmask 123904
  %145 = vst.msk [vmem:[%s18] sm:$0x3] %vm144, %v143
  %v146 = vld [vmem:[%s2] sm:$0x3]
  %v147 = vmul.f32 %v143, 0.5
  %v148 = vmul.f32 %v147, 1.442695
  %v149 = vpow.pop %v148
  %151 = vrot.lane.b32.xlu0 %v149, 120
  %v152 = vpop.permute.xlu0 %151
  %v154 = vmul.f32 %v146, %v152
  %v155 = vadd.f32 %v143, %v154
  %v156 = vld [vmem:[%s1] sm:$0x3]
  %158 = vrot.lane.b32.xlu0 %v155, 8
  %v159 = vpop.permute.xlu0 %158
  %vm161 = vcmask 64512
  %v162 = vsel %vm161, %v156, %v159
  %v163 = vld [vmem:[%s5] sm:$0xff]
  %v164 = vld [vmem:[%s5 + $0x8] sm:$0xff]
  %v165 = vld [vmem:[%s5 + $0x10] sm:$0xff]
  %v166 = vld [vmem:[%s5 + $0x18] sm:$0xff]
  %v167 = vld [vmem:[%s5 + $0x20] sm:$0xff]
  %v168 = vld [vmem:[%s5 + $0x28] sm:$0xff]
  %v169 = vld [vmem:[%s5 + $0x30] sm:$0xff]
  %v170 = vld [vmem:[%s5 + $0x38] sm:$0xff]
  %v172 = vsel %vm69, %v162, 0
  %174 = vmatprep.subr.mxu0 %v164
  %175 = vmatpush1.msra.mxu0 %v163
  %176 = vmatprep.subr.mxu0 %v168
  %177 = vmatpush1.msra.mxu0 %v167
  %178 = vmatprep.subr.mxu0 0.0
  %179 = vmatpush1.msra.mxu0 0.0
  %180 = vmatprep.subr.mxu0 0.0
  %181 = vmatpush1.msra.mxu0 0.0
  %182 = vmatprep.subr.mxu0 0.0
  %183 = vmatpush1.msra.mxu0 0.0
  %184 = vmatprep.subr.mxu0 0.0
  %185 = vmatpush1.msra.mxu0 0.0
  %186 = vmatprep.subr.mxu0 0.0
  %187 = vmatpush1.msra.mxu0 0.0
  %188 = vmatprep.subr.mxu0 0.0
  %189 = vmatpush1.msra.mxu0 0.0
  %190 = vmatprep.subr.mxu0 0.0
  %191 = vmatpush1.msra.mxu0 0.0
  %192 = vmatprep.subr.mxu0 0.0
  %193 = vmatpush1.msra.mxu0 0.0
  %194 = vmatprep.subr.mxu0 0.0
  %195 = vmatpush1.msra.mxu0 0.0
  %196 = vmatprep.subr.mxu0 0.0
  %197 = vmatpush1.msra.mxu0 0.0
  %198 = vmatprep.subr.mxu0 0.0
  %199 = vmatpush1.msra.mxu0 0.0
  %200 = vmatprep.subr.mxu0 0.0
  %201 = vmatpush1.msra.mxu0 0.0
  %202 = vmatprep.subr.mxu0 0.0
  %203 = vmatpush1.msra.mxu0 0.0
  %204 = vmatprep.subr.mxu0 0.0
  %205 = vmatpush1.msra.mxu0 0.0
  %206 = vmatprep.subr.mxu0 0.0
  %207 = vmatpush1.msra.mxu0 0.0
  %208 = vmatprep.subr.mxu0 0.0
  %209 = vmatpush1.msra.mxu0 0.0
  %210 = vmatprep.subr.mxu0 0.0
  %211 = vmatpush1.msra.mxu0 0.0
  %212 = vmatprep.subr.mxu0 0.0
  %213 = vmatpush1.msra.mxu0 0.0
  %214 = vmatprep.subr.mxu0 0.0
  %215 = vmatpush1.msra.mxu0 0.0
  %216 = vmatprep.subr.mxu0 0.0
  %217 = vmatpush1.msra.mxu0 0.0
  %218 = vmatprep.subr.mxu0 0.0
  %219 = vmatpush1.msra.mxu0 0.0
  %220 = vmatprep.subr.mxu0 0.0
  %221 = vmatpush1.msra.mxu0 0.0
  %222 = vmatprep.subr.mxu0 0.0
  %223 = vmatpush1.msra.mxu0 0.0
  %224 = vmatprep.subr.mxu0 0.0
  %225 = vmatpush1.msra.mxu0 0.0
  %226 = vmatprep.subr.mxu0 0.0
  %227 = vmatpush1.msra.mxu0 0.0
  %228 = vmatprep.subr.mxu0 0.0
  %229 = vmatpush1.msra.mxu0 0.0
  %230 = vmatprep.subr.mxu0 0.0
  %231 = vmatpush1.msra.mxu0 0.0
  %232 = vmatprep.subr.mxu0 0.0
  %233 = vmatpush1.msra.mxu0 0.0
  %234 = vmatprep.subr.mxu0 0.0
  %235 = vmatpush1.msra.mxu0 0.0
  %236 = vmatprep.subr.mxu0 0.0
  %237 = vmatpush1.msra.mxu0 0.0
  %238 = vmatprep.mubr.f32.mxu0 0.0
  %239 = vmatmul.mubr.f32.gmra.mrb[0].mxu0 %v172
  %v240 = vpop.f32.mrb[0].mxu0
  %v241 = vadd.f32 0.0, %v240
  %v242 = vpop.f32.mrb[0].mxu0
  %v243 = vadd.f32 0.0, %v242
  %244 = vdwg.mxu0
  %245 = vmatprep.subr.mxu0 %v166
  %246 = vmatpush1.msra.mxu0 %v165
  %247 = vmatprep.subr.mxu0 %v170
  %248 = vmatpush1.msra.mxu0 %v169
  %249 = vmatprep.subr.mxu0 0.0
  %250 = vmatpush1.msra.mxu0 0.0
  %251 = vmatprep.subr.mxu0 0.0
  %252 = vmatpush1.msra.mxu0 0.0
  %253 = vmatprep.subr.mxu0 0.0
  %254 = vmatpush1.msra.mxu0 0.0
  %255 = vmatprep.subr.mxu0 0.0
  %256 = vmatpush1.msra.mxu0 0.0
  %257 = vmatprep.subr.mxu0 0.0
  %258 = vmatpush1.msra.mxu0 0.0
  %259 = vmatprep.subr.mxu0 0.0
  %260 = vmatpush1.msra.mxu0 0.0
  %261 = vmatprep.subr.mxu0 0.0
  %262 = vmatpush1.msra.mxu0 0.0
  %263 = vmatprep.subr.mxu0 0.0
  %264 = vmatpush1.msra.mxu0 0.0
  %265 = vmatprep.subr.mxu0 0.0
  %266 = vmatpush1.msra.mxu0 0.0
  %267 = vmatprep.subr.mxu0 0.0
  %268 = vmatpush1.msra.mxu0 0.0
  %269 = vmatprep.subr.mxu0 0.0
  %270 = vmatpush1.msra.mxu0 0.0
  %271 = vmatprep.subr.mxu0 0.0
  %272 = vmatpush1.msra.mxu0 0.0
  %273 = vmatprep.subr.mxu0 0.0
  %274 = vmatpush1.msra.mxu0 0.0
  %275 = vmatprep.subr.mxu0 0.0
  %276 = vmatpush1.msra.mxu0 0.0
  %277 = vmatprep.subr.mxu0 0.0
  %278 = vmatpush1.msra.mxu0 0.0
  %279 = vmatprep.subr.mxu0 0.0
  %280 = vmatpush1.msra.mxu0 0.0
  %281 = vmatprep.subr.mxu0 0.0
  %282 = vmatpush1.msra.mxu0 0.0
  %283 = vmatprep.subr.mxu0 0.0
  %284 = vmatpush1.msra.mxu0 0.0
  %285 = vmatprep.subr.mxu0 0.0
  %286 = vmatpush1.msra.mxu0 0.0
  %287 = vmatprep.subr.mxu0 0.0
  %288 = vmatpush1.msra.mxu0 0.0
  %289 = vmatprep.subr.mxu0 0.0
  %290 = vmatpush1.msra.mxu0 0.0
  %291 = vmatprep.subr.mxu0 0.0
  %292 = vmatpush1.msra.mxu0 0.0
  %293 = vmatprep.subr.mxu0 0.0
  %294 = vmatpush1.msra.mxu0 0.0
  %295 = vmatprep.subr.mxu0 0.0
  %296 = vmatpush1.msra.mxu0 0.0
  %297 = vmatprep.subr.mxu0 0.0
  %298 = vmatpush1.msra.mxu0 0.0
  %299 = vmatprep.subr.mxu0 0.0
  %300 = vmatpush1.msra.mxu0 0.0
  %301 = vmatprep.subr.mxu0 0.0
  %302 = vmatpush1.msra.mxu0 0.0
  %303 = vmatprep.subr.mxu0 0.0
  %304 = vmatpush1.msra.mxu0 0.0
  %305 = vmatprep.subr.mxu0 0.0
  %306 = vmatpush1.msra.mxu0 0.0
  %307 = vmatprep.subr.mxu0 0.0
  %308 = vmatpush1.msra.mxu0 0.0
  %309 = vmatprep.mubr.f32.mxu0 0.0
  %310 = vmatmul.mubr.f32.gmra.mrb[0].mxu0 %v172
  %v311 = vpop.f32.mrb[0].mxu0
  %v312 = vadd.f32 0.0, %v311
  %v313 = vpop.f32.mrb[0].mxu0
  %v314 = vadd.f32 0.0, %v313
  %315 = vdwg.mxu0
  %vm316 = vcmask 1041408
  %v317 = vsel %vm316, %v241, 0.0
  %v318 = vrot.slane %v317, 4
  %v319 = vadd.f32 %v317, %v318
  %v320 = vrot.slane %v319, 2
  %v321 = vadd.f32 %v319, %v320
  %v322 = vrot.slane %v321, 1
  %v323 = vadd.f32 %v321, %v322
  %v324 = vsel %vm316, %v243, 0.0
  %v325 = vrot.slane %v324, 4
  %v326 = vadd.f32 %v324, %v325
  %v327 = vrot.slane %v326, 2
  %v328 = vadd.f32 %v326, %v327
  %v329 = vrot.slane %v328, 1
  %v330 = vadd.f32 %v328, %v329
  %v331 = vsel %vm316, %v312, 0.0
  %v332 = vrot.slane %v331, 4
  %v333 = vadd.f32 %v331, %v332
  %v334 = vrot.slane %v333, 2
  %v335 = vadd.f32 %v333, %v334
  %v336 = vrot.slane %v335, 1
  %v337 = vadd.f32 %v335, %v336
  %v338 = vsel %vm316, %v314, 0.0
  %v339 = vrot.slane %v338, 4
  %v340 = vadd.f32 %v338, %v339
  %v341 = vrot.slane %v340, 2
  %v342 = vadd.f32 %v340, %v341
  %v343 = vrot.slane %v342, 1
  %v344 = vadd.f32 %v342, %v343
  %v345 = vrcp.pop 2.0
  %v346 = vmul.f32 %v323, %v345
  %v347 = vmul.f32 %v330, %v345
  %v348 = vmul.f32 %v337, %v345
  %v349 = vmul.f32 %v344, %v345
  %v350 = vmul.f32 %v241, %v241
  %v351 = vmul.f32 %v243, %v243
  %v352 = vmul.f32 %v312, %v312
  %v353 = vmul.f32 %v314, %v314
  %v354 = vsel %vm316, %v350, 0.0
  %v355 = vrot.slane %v354, 4
  %v356 = vadd.f32 %v354, %v355
  %v357 = vrot.slane %v356, 2
  %v358 = vadd.f32 %v356, %v357
  %v359 = vrot.slane %v358, 1
  %v360 = vadd.f32 %v358, %v359
  %v361 = vsel %vm316, %v351, 0.0
  %v362 = vrot.slane %v361, 4
  %v363 = vadd.f32 %v361, %v362
  %v364 = vrot.slane %v363, 2
  %v365 = vadd.f32 %v363, %v364
  %v366 = vrot.slane %v365, 1
  %v367 = vadd.f32 %v365, %v366
  %v368 = vsel %vm316, %v352, 0.0
  %v369 = vrot.slane %v368, 4
  %v370 = vadd.f32 %v368, %v369
  %v371 = vrot.slane %v370, 2
  %v372 = vadd.f32 %v370, %v371
  %v373 = vrot.slane %v372, 1
  %v374 = vadd.f32 %v372, %v373
  %v375 = vsel %vm316, %v353, 0.0
  %v376 = vrot.slane %v375, 4
  %v377 = vadd.f32 %v375, %v376
  %v378 = vrot.slane %v377, 2
  %v379 = vadd.f32 %v377, %v378
  %v380 = vrot.slane %v379, 1
  %v381 = vadd.f32 %v379, %v380
  %v382 = vmul.f32 %v360, %v345
  %v383 = vmul.f32 %v367, %v345
  %v384 = vmul.f32 %v374, %v345
  %v385 = vmul.f32 %v381, %v345
  %v386 = vmul.f32 %v346, %v346
  %v387 = vmul.f32 %v347, %v347
  %v388 = vmul.f32 %v348, %v348
  %v389 = vmul.f32 %v349, %v349
  %v390 = vsub.f32 %v382, %v386
  %v391 = vsub.f32 %v383, %v387
  %v392 = vsub.f32 %v384, %v388
  %v393 = vsub.f32 %v385, %v389
  %v394 = vld [vmem:[%s6] sm:$0xff]
  %v395 = vsub.f32 %v241, %v346
  %v396 = vsub.f32 %v243, %v347
  %v397 = vsub.f32 %v312, %v348
  %v398 = vsub.f32 %v314, %v349
  %v399 = vadd.f32 %v390, 1e-05
  %v400 = vadd.f32 %v391, 1e-05
  %v401 = vadd.f32 %v392, 1e-05
  %v402 = vadd.f32 %v393, 1e-05
  %v403 = vrsqrt.pop %v399
  %v404 = vrsqrt.pop %v400
  %v405 = vrsqrt.pop %v401
  %v406 = vrsqrt.pop %v402
  %v407 = vmul.f32 %v395, %v403
  %v408 = vmul.f32 %v396, %v404
  %v409 = vmul.f32 %v397, %v405
  %v410 = vmul.f32 %v398, %v406
  %v412 = vlaneseq
  %v413 = vshrl.u32 %v412, 7
  %v414 = vsub.s32 0, %v413
  %v415 = vrot.slane %v394, %v414
  %v416 = vlaneseq
  %v417 = vshrl.u32 %v416, 7
  %v418 = vsub.s32 2, %v417
  %v419 = vrot.slane %v394, %v418
  %v420 = vlaneseq
  %v421 = vshrl.u32 %v420, 7
  %v422 = vsub.s32 4, %v421
  %v423 = vrot.slane %v394, %v422
  %v424 = vlaneseq
  %v425 = vshrl.u32 %v424, 7
  %v426 = vsub.s32 6, %v425
  %v427 = vrot.slane %v394, %v426
  %v432 = vlaneseq
  %v433 = vshrl.u32 %v432, 7
  %v434 = vsub.s32 0, %v433
  %v435 = vrot.slane %v415, %v434
  %v436 = vlaneseq
  %v437 = vshrl.u32 %v436, 7
  %v438 = vsub.s32 0, %v437
  %v439 = vrot.slane %v419, %v438
  %v440 = vlaneseq
  %v441 = vshrl.u32 %v440, 7
  %v442 = vsub.s32 0, %v441
  %v443 = vrot.slane %v423, %v442
  %v444 = vlaneseq
  %v445 = vshrl.u32 %v444, 7
  %v446 = vsub.s32 0, %v445
  %v447 = vrot.slane %v427, %v446
  %v448 = vmul.f32 %v407, %v435
  %v449 = vmul.f32 %v408, %v439
  %v450 = vmul.f32 %v409, %v443
  %v451 = vmul.f32 %v410, %v447
  %v452 = vlaneseq
  %v453 = vshrl.u32 %v452, 7
  %v454 = vsub.s32 1, %v453
  %v455 = vrot.slane %v394, %v454
  %v456 = vlaneseq
  %v457 = vshrl.u32 %v456, 7
  %v458 = vsub.s32 3, %v457
  %v459 = vrot.slane %v394, %v458
  %v460 = vlaneseq
  %v461 = vshrl.u32 %v460, 7
  %v462 = vsub.s32 5, %v461
  %v463 = vrot.slane %v394, %v462
  %v464 = vlaneseq
  %v465 = vshrl.u32 %v464, 7
  %v466 = vsub.s32 7, %v465
  %v467 = vrot.slane %v394, %v466
  %v472 = vlaneseq
  %v473 = vshrl.u32 %v472, 7
  %v474 = vsub.s32 1, %v473
  %v475 = vrot.slane %v455, %v474
  %v476 = vlaneseq
  %v477 = vshrl.u32 %v476, 7
  %v478 = vsub.s32 1, %v477
  %v479 = vrot.slane %v459, %v478
  %v480 = vlaneseq
  %v481 = vshrl.u32 %v480, 7
  %v482 = vsub.s32 1, %v481
  %v483 = vrot.slane %v463, %v482
  %v484 = vlaneseq
  %v485 = vshrl.u32 %v484, 7
  %v486 = vsub.s32 1, %v485
  %v487 = vrot.slane %v467, %v486
  %v488 = vadd.f32 %v448, %v475
  %v489 = vadd.f32 %v449, %v479
  %v490 = vadd.f32 %v450, %v483
  %v491 = vadd.f32 %v451, %v487
  %v492 = vmax.f32 %v488, 0.0
  %v493 = vmax.f32 %v489, 0.0
  %v494 = vmax.f32 %v490, 0.0
  %v495 = vmax.f32 %v491, 0.0
  %v497 = vrot.slane %v493, 6
  %v500 = vrot.slane %v494, 4
  %v503 = vrot.slane %v495, 2
  %v505 = vsel %vm316, %v492, %v497
  %vm506 = vcmask 1043456
  %v507 = vsel %vm506, %v505, %v500
  %vm508 = vcmask 1045504
  %v509 = vsel %vm508, %v507, %v503
  %v510 = vpack.c.bf16 %v509, %v509
  %v511 = vld [vmem:[%s7] sm:$0xf]
  %v512 = vld [vmem:[%s7 + $0x4] sm:$0xf]
  %v515 = vunpack.c.l.b16 %v511
  %v516 = vunpack.c.l.b16 %v512
  %v517 = vpack.c.b16 %v516, %v515
  %v519 = vsel %vm161, %v517, 0
  %v522 = vsel %vm506, %v510, 0
  %524 = vmatprep.subr.bf16.mxu0 0
  %525 = vmatpush1.bf16.msra.mxu0 %v522
  %526 = vmatprep.subr.bf16.mxu0 0
  %527 = vmatpush1.bf16.msra.mxu0 0
  %528 = vmatprep.subr.bf16.mxu0 0
  %529 = vmatpush1.bf16.msra.mxu0 0
  %530 = vmatprep.subr.bf16.mxu0 0
  %531 = vmatpush1.bf16.msra.mxu0 0
  %532 = vmatprep.subr.bf16.mxu0 0
  %533 = vmatpush1.bf16.msra.mxu0 0
  %534 = vmatprep.subr.bf16.mxu0 0
  %535 = vmatpush1.bf16.msra.mxu0 0
  %536 = vmatprep.subr.bf16.mxu0 0
  %537 = vmatpush1.bf16.msra.mxu0 0
  %538 = vmatprep.subr.bf16.mxu0 0
  %539 = vmatpush1.bf16.msra.mxu0 0
  %540 = vmatprep.subr.bf16.mxu0 0
  %541 = vmatpush1.bf16.msra.mxu0 0
  %542 = vmatprep.subr.bf16.mxu0 0
  %543 = vmatpush1.bf16.msra.mxu0 0
  %544 = vmatprep.subr.bf16.mxu0 0
  %545 = vmatpush1.bf16.msra.mxu0 0
  %546 = vmatprep.subr.bf16.mxu0 0
  %547 = vmatpush1.bf16.msra.mxu0 0
  %548 = vmatprep.subr.bf16.mxu0 0
  %549 = vmatpush1.bf16.msra.mxu0 0
  %550 = vmatprep.subr.bf16.mxu0 0
  %551 = vmatpush1.bf16.msra.mxu0 0
  %552 = vmatprep.subr.bf16.mxu0 0
  %553 = vmatpush1.bf16.msra.mxu0 0
  %554 = vmatprep.subr.bf16.mxu0 0
  %555 = vmatpush1.bf16.msra.mxu0 0
  %556 = vmatprep.mubr.bf16.mxu0 0
  %557 = vmatmul.mubr.bf16.gmra.mrb[0].mxu0 %v519
  %v558 = vpop.f32.mrb[0].mxu0
  %v559 = vadd.f32 0.0, %v558
  %v560 = vpop.f32.mrb[0].mxu0
  %v561 = vpop.f32.mrb[0].mxu0
  %v562 = vadd.f32 0.0, %v561
  %v563 = vpop.f32.mrb[0].mxu0
  %564 = vdwg.mxu0
  %v565 = vpack.c.bf16 %v562, %v559
  %v566 = vld [vmem:[%s11] sm:$0xf]
  %v567 = vld [vmem:[%s11 + $0x4] sm:$0xf]
  %v568 = vld [vmem:[%s11 + $0x8] sm:$0xf]
  %v569 = vld [vmem:[%s11 + $0xc] sm:$0xf]
  %v570 = vld [vmem:[%s11 + $0x10] sm:$0xf]
  %v571 = vld [vmem:[%s11 + $0x14] sm:$0xf]
  %v572 = vld [vmem:[%s11 + $0x18] sm:$0xf]
  %v573 = vld [vmem:[%s11 + $0x1c] sm:$0xf]
  %v574 = vld [vmem:[%s11 + $0x20] sm:$0xf]
  %v575 = vld [vmem:[%s11 + $0x24] sm:$0xf]
  %v576 = vld [vmem:[%s11 + $0x28] sm:$0xf]
  %v577 = vld [vmem:[%s11 + $0x2c] sm:$0xf]
  %v578 = vld [vmem:[%s11 + $0x30] sm:$0xf]
  %v579 = vld [vmem:[%s11 + $0x34] sm:$0xf]
  %v580 = vld [vmem:[%s11 + $0x38] sm:$0xf]
  %v581 = vld [vmem:[%s11 + $0x3c] sm:$0xf]
  %s582 = scalar_lea.vmem %s7, 8
  %v583 = vld [vmem:[%s582] sm:$0xf]
  %v584 = vld [vmem:[%s582 + $0x4] sm:$0xf]
  %v587 = vunpack.c.l.b16 %v583
  %v588 = vunpack.c.l.b16 %v584
  %v589 = vpack.c.b16 %v588, %v587
  %v591 = vsel %vm161, %v589, 0
  %593 = vmatprep.subr.bf16.mxu0 0
  %594 = vmatpush1.bf16.msra.mxu0 %v522
  %595 = vmatprep.subr.bf16.mxu0 0
  %596 = vmatpush1.bf16.msra.mxu0 0
  %597 = vmatprep.subr.bf16.mxu0 0
  %598 = vmatpush1.bf16.msra.mxu0 0
  %599 = vmatprep.subr.bf16.mxu0 0
  %600 = vmatpush1.bf16.msra.mxu0 0
  %601 = vmatprep.subr.bf16.mxu0 0
  %602 = vmatpush1.bf16.msra.mxu0 0
  %603 = vmatprep.subr.bf16.mxu0 0
  %604 = vmatpush1.bf16.msra.mxu0 0
  %605 = vmatprep.subr.bf16.mxu0 0
  %606 = vmatpush1.bf16.msra.mxu0 0
  %607 = vmatprep.subr.bf16.mxu0 0
  %608 = vmatpush1.bf16.msra.mxu0 0
  %609 = vmatprep.subr.bf16.mxu0 0
  %610 = vmatpush1.bf16.msra.mxu0 0
  %611 = vmatprep.subr.bf16.mxu0 0
  %612 = vmatpush1.bf16.msra.mxu0 0
  %613 = vmatprep.subr.bf16.mxu0 0
  %614 = vmatpush1.bf16.msra.mxu0 0
  %615 = vmatprep.subr.bf16.mxu0 0
  %616 = vmatpush1.bf16.msra.mxu0 0
  %617 = vmatprep.subr.bf16.mxu0 0
  %618 = vmatpush1.bf16.msra.mxu0 0
  %619 = vmatprep.subr.bf16.mxu0 0
  %620 = vmatpush1.bf16.msra.mxu0 0
  %621 = vmatprep.subr.bf16.mxu0 0
  %622 = vmatpush1.bf16.msra.mxu0 0
  %623 = vmatprep.subr.bf16.mxu0 0
  %624 = vmatpush1.bf16.msra.mxu0 0
  %625 = vmatprep.mubr.bf16.mxu0 0
  %626 = vmatmul.mubr.bf16.gmra.mrb[0].mxu0 %v591
  %v627 = vpop.f32.mrb[0].mxu0
  %v628 = vadd.f32 0.0, %v627
  %v629 = vpop.f32.mrb[0].mxu0
  %v630 = vpop.f32.mrb[0].mxu0
  %v631 = vadd.f32 0.0, %v630
  %v632 = vpop.f32.mrb[0].mxu0
  %633 = vdwg.mxu0
  %v634 = vpack.c.bf16 %v631, %v628
  %s635 = scalar_lea.vmem %s11, 64
  %v636 = vld [vmem:[%s635] sm:$0xf]
  %v637 = vld [vmem:[%s635 + $0x4] sm:$0xf]
  %v638 = vld [vmem:[%s635 + $0x8] sm:$0xf]
  %v639 = vld [vmem:[%s635 + $0xc] sm:$0xf]
  %v640 = vld [vmem:[%s635 + $0x10] sm:$0xf]
  %v641 = vld [vmem:[%s635 + $0x14] sm:$0xf]
  %v642 = vld [vmem:[%s635 + $0x18] sm:$0xf]
  %v643 = vld [vmem:[%s635 + $0x1c] sm:$0xf]
  %v644 = vld [vmem:[%s635 + $0x20] sm:$0xf]
  %v645 = vld [vmem:[%s635 + $0x24] sm:$0xf]
  %v646 = vld [vmem:[%s635 + $0x28] sm:$0xf]
  %v647 = vld [vmem:[%s635 + $0x2c] sm:$0xf]
  %v648 = vld [vmem:[%s635 + $0x30] sm:$0xf]
  %v649 = vld [vmem:[%s635 + $0x34] sm:$0xf]
  %v650 = vld [vmem:[%s635 + $0x38] sm:$0xf]
  %v651 = vld [vmem:[%s635 + $0x3c] sm:$0xf]
  %v668 = vunpack.c.l.b16 %v636
  %v669 = vunpack.c.l.b16 %v637
  %v670 = vunpack.c.l.b16 %v638
  %v671 = vunpack.c.l.b16 %v639
  %v672 = vunpack.c.l.b16 %v640
  %v673 = vunpack.c.l.b16 %v641
  %v674 = vunpack.c.l.b16 %v642
  %v675 = vunpack.c.l.b16 %v643
  %v676 = vunpack.c.l.b16 %v644
  %v677 = vunpack.c.l.b16 %v645
  %v678 = vunpack.c.l.b16 %v646
  %v679 = vunpack.c.l.b16 %v647
  %v680 = vunpack.c.l.b16 %v648
  %v681 = vunpack.c.l.b16 %v649
  %v682 = vunpack.c.l.b16 %v650
  %v683 = vunpack.c.l.b16 %v651
  %v684 = vpack.c.b16 %v669, %v668
  %v685 = vpack.c.b16 %v671, %v670
  %v686 = vpack.c.b16 %v673, %v672
  %v687 = vpack.c.b16 %v675, %v674
  %v688 = vpack.c.b16 %v677, %v676
  %v689 = vpack.c.b16 %v679, %v678
  %v690 = vpack.c.b16 %v681, %v680
  %v691 = vpack.c.b16 %v683, %v682
  %700 = vmatprep.subr.bf16.mxu0 0
  %701 = vmatpush1.bf16.msra.mxu0 %v684
  %702 = vmatprep.subr.bf16.mxu0 0
  %703 = vmatpush1.bf16.msra.mxu0 %v685
  %704 = vmatprep.subr.bf16.mxu0 0
  %705 = vmatpush1.bf16.msra.mxu0 %v686
  %706 = vmatprep.subr.bf16.mxu0 0
  %707 = vmatpush1.bf16.msra.mxu0 %v687
  %708 = vmatprep.subr.bf16.mxu0 0
  %709 = vmatpush1.bf16.msra.mxu0 %v688
  %710 = vmatprep.subr.bf16.mxu0 0
  %711 = vmatpush1.bf16.msra.mxu0 %v689
  %712 = vmatprep.subr.bf16.mxu0 0
  %713 = vmatpush1.bf16.msra.mxu0 %v690
  %714 = vmatprep.subr.bf16.mxu0 0
  %715 = vmatpush1.bf16.msra.mxu0 %v691
  %716 = vmatprep.subr.bf16.mxu0 0
  %717 = vmatpush1.bf16.msra.mxu0 0
  %718 = vmatprep.subr.bf16.mxu0 0
  %719 = vmatpush1.bf16.msra.mxu0 0
  %720 = vmatprep.subr.bf16.mxu0 0
  %721 = vmatpush1.bf16.msra.mxu0 0
  %722 = vmatprep.subr.bf16.mxu0 0
  %723 = vmatpush1.bf16.msra.mxu0 0
  %724 = vmatprep.subr.bf16.mxu0 0
  %725 = vmatpush1.bf16.msra.mxu0 0
  %726 = vmatprep.subr.bf16.mxu0 0
  %727 = vmatpush1.bf16.msra.mxu0 0
  %728 = vmatprep.subr.bf16.mxu0 0
  %729 = vmatpush1.bf16.msra.mxu0 0
  %730 = vmatprep.subr.bf16.mxu0 0
  %731 = vmatpush1.bf16.msra.mxu0 0
  %732 = vmatprep.mubr.bf16.mxu0 0
  %733 = vmatmul.mubr.bf16.gmra.mrb[0].mxu0 %v634
  %v734 = vpop.f32.mrb[0].mxu0
  %v735 = vadd.f32 0.0, %v734
  %v736 = vpop.f32.mrb[0].mxu0
  %v737 = vpop.f32.mrb[0].mxu0
  %v738 = vadd.f32 0.0, %v737
  %v739 = vpop.f32.mrb[0].mxu0
  %740 = vdwg.mxu0
  %v757 = vunpack.c.l.b16 %v566
  %v758 = vunpack.c.l.b16 %v567
  %v759 = vunpack.c.l.b16 %v568
  %v760 = vunpack.c.l.b16 %v569
  %v761 = vunpack.c.l.b16 %v570
  %v762 = vunpack.c.l.b16 %v571
  %v763 = vunpack.c.l.b16 %v572
  %v764 = vunpack.c.l.b16 %v573
  %v765 = vunpack.c.l.b16 %v574
  %v766 = vunpack.c.l.b16 %v575
  %v767 = vunpack.c.l.b16 %v576
  %v768 = vunpack.c.l.b16 %v577
  %v769 = vunpack.c.l.b16 %v578
  %v770 = vunpack.c.l.b16 %v579
  %v771 = vunpack.c.l.b16 %v580
  %v772 = vunpack.c.l.b16 %v581
  %v773 = vpack.c.b16 %v758, %v757
  %v774 = vpack.c.b16 %v760, %v759
  %v775 = vpack.c.b16 %v762, %v761
  %v776 = vpack.c.b16 %v764, %v763
  %v777 = vpack.c.b16 %v766, %v765
  %v778 = vpack.c.b16 %v768, %v767
  %v779 = vpack.c.b16 %v770, %v769
  %v780 = vpack.c.b16 %v772, %v771
  %789 = vmatprep.subr.bf16.mxu0 0
  %790 = vmatpush1.bf16.msra.mxu0 %v773
  %791 = vmatprep.subr.bf16.mxu0 0
  %792 = vmatpush1.bf16.msra.mxu0 %v774
  %793 = vmatprep.subr.bf16.mxu0 0
  %794 = vmatpush1.bf16.msra.mxu0 %v775
  %795 = vmatprep.subr.bf16.mxu0 0
  %796 = vmatpush1.bf16.msra.mxu0 %v776
  %797 = vmatprep.subr.bf16.mxu0 0
  %798 = vmatpush1.bf16.msra.mxu0 %v777
  %799 = vmatprep.subr.bf16.mxu0 0
  %800 = vmatpush1.bf16.msra.mxu0 %v778
  %801 = vmatprep.subr.bf16.mxu0 0
  %802 = vmatpush1.bf16.msra.mxu0 %v779
  %803 = vmatprep.subr.bf16.mxu0 0
  %804 = vmatpush1.bf16.msra.mxu0 %v780
  %805 = vmatprep.subr.bf16.mxu0 0
  %806 = vmatpush1.bf16.msra.mxu0 0
  %807 = vmatprep.subr.bf16.mxu0 0
  %808 = vmatpush1.bf16.msra.mxu0 0
  %809 = vmatprep.subr.bf16.mxu0 0
  %810 = vmatpush1.bf16.msra.mxu0 0
  %811 = vmatprep.subr.bf16.mxu0 0
  %812 = vmatpush1.bf16.msra.mxu0 0
  %813 = vmatprep.subr.bf16.mxu0 0
  %814 = vmatpush1.bf16.msra.mxu0 0
  %815 = vmatprep.subr.bf16.mxu0 0
  %816 = vmatpush1.bf16.msra.mxu0 0
  %817 = vmatprep.subr.bf16.mxu0 0
  %818 = vmatpush1.bf16.msra.mxu0 0
  %819 = vmatprep.subr.bf16.mxu0 0
  %820 = vmatpush1.bf16.msra.mxu0 0
  %821 = vmatprep.mubr.bf16.mxu0 0
  %822 = vmatmul.mubr.bf16.gmra.mrb[0].mxu0 %v565
  %v823 = vpop.f32.mrb[0].mxu0
  %v824 = vadd.f32 %v735, %v823
  %v825 = vpop.f32.mrb[0].mxu0
  %v826 = vpop.f32.mrb[0].mxu0
  %v827 = vadd.f32 %v738, %v826
  %v828 = vpop.f32.mrb[0].mxu0
  %829 = vdwg.mxu0
  %s830 = scalar_lea.vmem %s7, 16
  %v831 = vld [vmem:[%s830] sm:$0xf]
  %v832 = vld [vmem:[%s830 + $0x4] sm:$0xf]
  %v835 = vunpack.c.l.b16 %v831
  %v836 = vunpack.c.l.b16 %v832
  %v837 = vpack.c.b16 %v836, %v835
  %v839 = vsel %vm161, %v837, 0
  %841 = vmatprep.subr.bf16.mxu0 0
  %842 = vmatpush1.bf16.msra.mxu0 %v522
  %843 = vmatprep.subr.bf16.mxu0 0
  %844 = vmatpush1.bf16.msra.mxu0 0
  %845 = vmatprep.subr.bf16.mxu0 0
  %846 = vmatpush1.bf16.msra.mxu0 0
  %847 = vmatprep.subr.bf16.mxu0 0
  %848 = vmatpush1.bf16.msra.mxu0 0
  %849 = vmatprep.subr.bf16.mxu0 0
  %850 = vmatpush1.bf16.msra.mxu0 0
  %851 = vmatprep.subr.bf16.mxu0 0
  %852 = vmatpush1.bf16.msra.mxu0 0
  %853 = vmatprep.subr.bf16.mxu0 0
  %854 = vmatpush1.bf16.msra.mxu0 0
  %855 = vmatprep.subr.bf16.mxu0 0
  %856 = vmatpush1.bf16.msra.mxu0 0
  %857 = vmatprep.subr.bf16.mxu0 0
  %858 = vmatpush1.bf16.msra.mxu0 0
  %859 = vmatprep.subr.bf16.mxu0 0
  %860 = vmatpush1.bf16.msra.mxu0 0
  %861 = vmatprep.subr.bf16.mxu0 0
  %862 = vmatpush1.bf16.msra.mxu0 0
  %863 = vmatprep.subr.bf16.mxu0 0
  %864 = vmatpush1.bf16.msra.mxu0 0
  %865 = vmatprep.subr.bf16.mxu0 0
  %866 = vmatpush1.bf16.msra.mxu0 0
  %867 = vmatprep.subr.bf16.mxu0 0
  %868 = vmatpush1.bf16.msra.mxu0 0
  %869 = vmatprep.subr.bf16.mxu0 0
  %870 = vmatpush1.bf16.msra.mxu0 0
  %871 = vmatprep.subr.bf16.mxu0 0
  %872 = vmatpush1.bf16.msra.mxu0 0
  %873 = vmatprep.mubr.bf16.mxu0 0
  %874 = vmatmul.mubr.bf16.gmra.mrb[0].mxu0 %v839
  %v875 = vpop.f32.mrb[0].mxu0
  %v876 = vadd.f32 0.0, %v875
  %v877 = vpop.f32.mrb[0].mxu0
  %v878 = vpop.f32.mrb[0].mxu0
  %v879 = vadd.f32 0.0, %v878
  %v880 = vpop.f32.mrb[0].mxu0
  %881 = vdwg.mxu0
  %v882 = vpack.c.bf16 %v879, %v876
  %s883 = scalar_lea.vmem %s11, 128
  %v884 = vld [vmem:[%s883] sm:$0xf]
  %v885 = vld [vmem:[%s883 + $0x4] sm:$0xf]
  %v886 = vld [vmem:[%s883 + $0x8] sm:$0xf]
  %v887 = vld [vmem:[%s883 + $0xc] sm:$0xf]
  %v888 = vld [vmem:[%s883 + $0x10] sm:$0xf]
  %v889 = vld [vmem:[%s883 + $0x14] sm:$0xf]
  %v890 = vld [vmem:[%s883 + $0x18] sm:$0xf]
  %v891 = vld [vmem:[%s883 + $0x1c] sm:$0xf]
  %v892 = vld [vmem:[%s883 + $0x20] sm:$0xf]
  %v893 = vld [vmem:[%s883 + $0x24] sm:$0xf]
  %v894 = vld [vmem:[%s883 + $0x28] sm:$0xf]
  %v895 = vld [vmem:[%s883 + $0x2c] sm:$0xf]
  %v896 = vld [vmem:[%s883 + $0x30] sm:$0xf]
  %v897 = vld [vmem:[%s883 + $0x34] sm:$0xf]
  %v898 = vld [vmem:[%s883 + $0x38] sm:$0xf]
  %v899 = vld [vmem:[%s883 + $0x3c] sm:$0xf]
  %v916 = vunpack.c.l.b16 %v884
  %v917 = vunpack.c.l.b16 %v885
  %v918 = vunpack.c.l.b16 %v886
  %v919 = vunpack.c.l.b16 %v887
  %v920 = vunpack.c.l.b16 %v888
  %v921 = vunpack.c.l.b16 %v889
  %v922 = vunpack.c.l.b16 %v890
  %v923 = vunpack.c.l.b16 %v891
  %v924 = vunpack.c.l.b16 %v892
  %v925 = vunpack.c.l.b16 %v893
  %v926 = vunpack.c.l.b16 %v894
  %v927 = vunpack.c.l.b16 %v895
  %v928 = vunpack.c.l.b16 %v896
  %v929 = vunpack.c.l.b16 %v897
  %v930 = vunpack.c.l.b16 %v898
  %v931 = vunpack.c.l.b16 %v899
  %v932 = vpack.c.b16 %v917, %v916
  %v933 = vpack.c.b16 %v919, %v918
  %v934 = vpack.c.b16 %v921, %v920
  %v935 = vpack.c.b16 %v923, %v922
  %v936 = vpack.c.b16 %v925, %v924
  %v937 = vpack.c.b16 %v927, %v926
  %v938 = vpack.c.b16 %v929, %v928
  %v939 = vpack.c.b16 %v931, %v930
  %948 = vmatprep.subr.bf16.mxu0 0
  %949 = vmatpush1.bf16.msra.mxu0 %v932
  %950 = vmatprep.subr.bf16.mxu0 0
  %951 = vmatpush1.bf16.msra.mxu0 %v933
  %952 = vmatprep.subr.bf16.mxu0 0
  %953 = vmatpush1.bf16.msra.mxu0 %v934
  %954 = vmatprep.subr.bf16.mxu0 0
  %955 = vmatpush1.bf16.msra.mxu0 %v935
  %956 = vmatprep.subr.bf16.mxu0 0
  %957 = vmatpush1.bf16.msra.mxu0 %v936
  %958 = vmatprep.subr.bf16.mxu0 0
  %959 = vmatpush1.bf16.msra.mxu0 %v937
  %960 = vmatprep.subr.bf16.mxu0 0
  %961 = vmatpush1.bf16.msra.mxu0 %v938
  %962 = vmatprep.subr.bf16.mxu0 0
  %963 = vmatpush1.bf16.msra.mxu0 %v939
  %964 = vmatprep.subr.bf16.mxu0 0
  %965 = vmatpush1.bf16.msra.mxu0 0
  %966 = vmatprep.subr.bf16.mxu0 0
  %967 = vmatpush1.bf16.msra.mxu0 0
  %968 = vmatprep.subr.bf16.mxu0 0
  %969 = vmatpush1.bf16.msra.mxu0 0
  %970 = vmatprep.subr.bf16.mxu0 0
  %971 = vmatpush1.bf16.msra.mxu0 0
  %972 = vmatprep.subr.bf16.mxu0 0
  %973 = vmatpush1.bf16.msra.mxu0 0
  %974 = vmatprep.subr.bf16.mxu0 0
  %975 = vmatpush1.bf16.msra.mxu0 0
  %976 = vmatprep.subr.bf16.mxu0 0
  %977 = vmatpush1.bf16.msra.mxu0 0
  %978 = vmatprep.subr.bf16.mxu0 0
  %979 = vmatpush1.bf16.msra.mxu0 0
  %980 = vmatprep.mubr.bf16.mxu0 0
  %981 = vmatmul.mubr.bf16.gmra.mrb[0].mxu0 %v882
  %v982 = vpop.f32.mrb[0].mxu0
  %v983 = vadd.f32 0.0, %v982
  %v984 = vpop.f32.mrb[0].mxu0
  %v985 = vpop.f32.mrb[0].mxu0
  %v986 = vadd.f32 0.0, %v985
  %v987 = vpop.f32.mrb[0].mxu0
  %988 = vdwg.mxu0
  %v989 = vadd.f32 %v824, %v983
  %v990 = vadd.f32 %v827, %v986
  %v992 = vsel %vm69, 1.0, 0
  %994 = vmatprep.subr.mxu0 0.0
  %995 = vmatpush1.msra.mxu0 %v989
  %996 = vmatprep.subr.mxu0 0.0
  %997 = vmatpush1.msra.mxu0 %v990
  %998 = vmatprep.subr.mxu0 0.0
  %999 = vmatpush1.msra.mxu0 0.0
  %1000 = vmatprep.subr.mxu0 0.0
  %1001 = vmatpush1.msra.mxu0 0.0
  %1002 = vmatprep.subr.mxu0 0.0
  %1003 = vmatpush1.msra.mxu0 0.0
  %1004 = vmatprep.subr.mxu0 0.0
  %1005 = vmatpush1.msra.mxu0 0.0
  %1006 = vmatprep.subr.mxu0 0.0
  %1007 = vmatpush1.msra.mxu0 0.0
  %1008 = vmatprep.subr.mxu0 0.0
  %1009 = vmatpush1.msra.mxu0 0.0
  %1010 = vmatprep.subr.mxu0 0.0
  %1011 = vmatpush1.msra.mxu0 0.0
  %1012 = vmatprep.subr.mxu0 0.0
  %1013 = vmatpush1.msra.mxu0 0.0
  %1014 = vmatprep.subr.mxu0 0.0
  %1015 = vmatpush1.msra.mxu0 0.0
  %1016 = vmatprep.subr.mxu0 0.0
  %1017 = vmatpush1.msra.mxu0 0.0
  %1018 = vmatprep.subr.mxu0 0.0
  %1019 = vmatpush1.msra.mxu0 0.0
  %1020 = vmatprep.subr.mxu0 0.0
  %1021 = vmatpush1.msra.mxu0 0.0
  %1022 = vmatprep.subr.mxu0 0.0
  %1023 = vmatpush1.msra.mxu0 0.0
  %1024 = vmatprep.subr.mxu0 0.0
  %1025 = vmatpush1.msra.mxu0 0.0
  %1026 = vmatprep.subr.mxu0 0.0
  %1027 = vmatpush1.msra.mxu0 0.0
  %1028 = vmatprep.subr.mxu0 0.0
  %1029 = vmatpush1.msra.mxu0 0.0
  %1030 = vmatprep.subr.mxu0 0.0
  %1031 = vmatpush1.msra.mxu0 0.0
  %1032 = vmatprep.subr.mxu0 0.0
  %1033 = vmatpush1.msra.mxu0 0.0
  %1034 = vmatprep.subr.mxu0 0.0
  %1035 = vmatpush1.msra.mxu0 0.0
  %1036 = vmatprep.subr.mxu0 0.0
  %1037 = vmatpush1.msra.mxu0 0.0
  %1038 = vmatprep.subr.mxu0 0.0
  %1039 = vmatpush1.msra.mxu0 0.0
  %1040 = vmatprep.subr.mxu0 0.0
  %1041 = vmatpush1.msra.mxu0 0.0
  %1042 = vmatprep.subr.mxu0 0.0
  %1043 = vmatpush1.msra.mxu0 0.0
  %1044 = vmatprep.subr.mxu0 0.0
  %1045 = vmatpush1.msra.mxu0 0.0
  %1046 = vmatprep.subr.mxu0 0.0
  %1047 = vmatpush1.msra.mxu0 0.0
  %1048 = vmatprep.subr.mxu0 0.0
  %1049 = vmatpush1.msra.mxu0 0.0
  %1050 = vmatprep.subr.mxu0 0.0
  %1051 = vmatpush1.msra.mxu0 0.0
  %1052 = vmatprep.subr.mxu0 0.0
  %1053 = vmatpush1.msra.mxu0 0.0
  %1054 = vmatprep.subr.mxu0 0.0
  %1055 = vmatpush1.msra.mxu0 0.0
  %1056 = vmatprep.subr.mxu0 0.0
  %1057 = vmatpush1.msra.mxu0 0.0
  %1058 = vmatprep.mubr.f32.mxu0 0.0
  %1059 = vmatmul.mubr.f32.gmra.mrb[0].mxu0 %v992
  %v1060 = vpop.f32.mrb[0].mxu0
  %v1061 = vadd.f32 0.0, %v1060
  %v1062 = vpop.f32.mrb[0].mxu0
  %1063 = vdwg.mxu0
  %v1064 = vld [vmem:[%s13] sm:$0xff]
  %v1065 = vld [vmem:[%s13 + $0x8] sm:$0xff]
  %v1066 = vld [vmem:[%s13 + $0x10] sm:$0xff]
  %v1067 = vld [vmem:[%s13 + $0x18] sm:$0xff]
  %v1068 = vld [vmem:[%s13 + $0x20] sm:$0xff]
  %v1069 = vld [vmem:[%s13 + $0x28] sm:$0xff]
  %v1070 = vld [vmem:[%s13 + $0x30] sm:$0xff]
  %v1071 = vld [vmem:[%s13 + $0x38] sm:$0xff]
  %v1072 = vld [vmem:[%s13 + $0x40] sm:$0xff]
  %v1073 = vld [vmem:[%s13 + $0x48] sm:$0xff]
  %v1074 = vld [vmem:[%s13 + $0x50] sm:$0xff]
  %v1075 = vld [vmem:[%s13 + $0x58] sm:$0xff]
  %v1076 = vld [vmem:[%s13 + $0x60] sm:$0xff]
  %v1077 = vld [vmem:[%s13 + $0x68] sm:$0xff]
  %v1078 = vld [vmem:[%s13 + $0x70] sm:$0xff]
  %v1079 = vld [vmem:[%s13 + $0x78] sm:$0xff]
  %1080 = vmatprep.subr.mxu0 0.0
  %1081 = vmatpush1.msra.mxu0 %v1064
  %1082 = vmatprep.subr.mxu0 0.0
  %1083 = vmatpush1.msra.mxu0 %v1065
  %1084 = vmatprep.subr.mxu0 0.0
  %1085 = vmatpush1.msra.mxu0 %v1066
  %1086 = vmatprep.subr.mxu0 0.0
  %1087 = vmatpush1.msra.mxu0 %v1067
  %1088 = vmatprep.subr.mxu0 0.0
  %1089 = vmatpush1.msra.mxu0 %v1068
  %1090 = vmatprep.subr.mxu0 0.0
  %1091 = vmatpush1.msra.mxu0 %v1069
  %1092 = vmatprep.subr.mxu0 0.0
  %1093 = vmatpush1.msra.mxu0 %v1070
  %1094 = vmatprep.subr.mxu0 0.0
  %1095 = vmatpush1.msra.mxu0 %v1071
  %1096 = vmatprep.subr.mxu0 0.0
  %1097 = vmatpush1.msra.mxu0 %v1072
  %1098 = vmatprep.subr.mxu0 0.0
  %1099 = vmatpush1.msra.mxu0 %v1073
  %1100 = vmatprep.subr.mxu0 0.0
  %1101 = vmatpush1.msra.mxu0 %v1074
  %1102 = vmatprep.subr.mxu0 0.0
  %1103 = vmatpush1.msra.mxu0 %v1075
  %1104 = vmatprep.subr.mxu0 0.0
  %1105 = vmatpush1.msra.mxu0 %v1076
  %1106 = vmatprep.subr.mxu0 0.0
  %1107 = vmatpush1.msra.mxu0 %v1077
  %1108 = vmatprep.subr.mxu0 0.0
  %1109 = vmatpush1.msra.mxu0 %v1078
  %1110 = vmatprep.subr.mxu0 0.0
  %1111 = vmatpush1.msra.mxu0 %v1079
  %1112 = vmatprep.subr.mxu0 0.0
  %1113 = vmatpush1.msra.mxu0 0.0
  %1114 = vmatprep.subr.mxu0 0.0
  %1115 = vmatpush1.msra.mxu0 0.0
  %1116 = vmatprep.subr.mxu0 0.0
  %1117 = vmatpush1.msra.mxu0 0.0
  %1118 = vmatprep.subr.mxu0 0.0
  %1119 = vmatpush1.msra.mxu0 0.0
  %1120 = vmatprep.subr.mxu0 0.0
  %1121 = vmatpush1.msra.mxu0 0.0
  %1122 = vmatprep.subr.mxu0 0.0
  %1123 = vmatpush1.msra.mxu0 0.0
  %1124 = vmatprep.subr.mxu0 0.0
  %1125 = vmatpush1.msra.mxu0 0.0
  %1126 = vmatprep.subr.mxu0 0.0
  %1127 = vmatpush1.msra.mxu0 0.0
  %1128 = vmatprep.subr.mxu0 0.0
  %1129 = vmatpush1.msra.mxu0 0.0
  %1130 = vmatprep.subr.mxu0 0.0
  %1131 = vmatpush1.msra.mxu0 0.0
  %1132 = vmatprep.subr.mxu0 0.0
  %1133 = vmatpush1.msra.mxu0 0.0
  %1134 = vmatprep.subr.mxu0 0.0
  %1135 = vmatpush1.msra.mxu0 0.0
  %1136 = vmatprep.subr.mxu0 0.0
  %1137 = vmatpush1.msra.mxu0 0.0
  %1138 = vmatprep.subr.mxu0 0.0
  %1139 = vmatpush1.msra.mxu0 0.0
  %1140 = vmatprep.subr.mxu0 0.0
  %1141 = vmatpush1.msra.mxu0 0.0
  %1142 = vmatprep.subr.mxu0 0.0
  %1143 = vmatpush1.msra.mxu0 0.0
  %1144 = vmatprep.mubr.f32.mxu0 0.0
  %1145 = vmatmul.mubr.f32.gmra.mrb[0].mxu0 %v1061
  %v1146 = vpop.f32.mrb[0].mxu0
  %v1147 = vadd.f32 0.0, %v1146
  %v1148 = vpop.f32.mrb[0].mxu0
  %1149 = vdwg.mxu0
  %v1150 = vmul.f32 %v989, %v989
  %v1151 = vmul.f32 %v990, %v990
  %1152 = vmatprep.subr.mxu0 0.0
  %1153 = vmatpush1.msra.mxu0 %v1150
  %1154 = vmatprep.subr.mxu0 0.0
  %1155 = vmatpush1.msra.mxu0 %v1151
  %1156 = vmatprep.subr.mxu0 0.0
  %1157 = vmatpush1.msra.mxu0 0.0
  %1158 = vmatprep.subr.mxu0 0.0
  %1159 = vmatpush1.msra.mxu0 0.0
  %1160 = vmatprep.subr.mxu0 0.0
  %1161 = vmatpush1.msra.mxu0 0.0
  %1162 = vmatprep.subr.mxu0 0.0
  %1163 = vmatpush1.msra.mxu0 0.0
  %1164 = vmatprep.subr.mxu0 0.0
  %1165 = vmatpush1.msra.mxu0 0.0
  %1166 = vmatprep.subr.mxu0 0.0
  %1167 = vmatpush1.msra.mxu0 0.0
  %1168 = vmatprep.subr.mxu0 0.0
  %1169 = vmatpush1.msra.mxu0 0.0
  %1170 = vmatprep.subr.mxu0 0.0
  %1171 = vmatpush1.msra.mxu0 0.0
  %1172 = vmatprep.subr.mxu0 0.0
  %1173 = vmatpush1.msra.mxu0 0.0
  %1174 = vmatprep.subr.mxu0 0.0
  %1175 = vmatpush1.msra.mxu0 0.0
  %1176 = vmatprep.subr.mxu0 0.0
  %1177 = vmatpush1.msra.mxu0 0.0
  %1178 = vmatprep.subr.mxu0 0.0
  %1179 = vmatpush1.msra.mxu0 0.0
  %1180 = vmatprep.subr.mxu0 0.0
  %1181 = vmatpush1.msra.mxu0 0.0
  %1182 = vmatprep.subr.mxu0 0.0
  %1183 = vmatpush1.msra.mxu0 0.0
  %1184 = vmatprep.subr.mxu0 0.0
  %1185 = vmatpush1.msra.mxu0 0.0
  %1186 = vmatprep.subr.mxu0 0.0
  %1187 = vmatpush1.msra.mxu0 0.0
  %1188 = vmatprep.subr.mxu0 0.0
  %1189 = vmatpush1.msra.mxu0 0.0
  %1190 = vmatprep.subr.mxu0 0.0
  %1191 = vmatpush1.msra.mxu0 0.0
  %1192 = vmatprep.subr.mxu0 0.0
  %1193 = vmatpush1.msra.mxu0 0.0
  %1194 = vmatprep.subr.mxu0 0.0
  %1195 = vmatpush1.msra.mxu0 0.0
  %1196 = vmatprep.subr.mxu0 0.0
  %1197 = vmatpush1.msra.mxu0 0.0
  %1198 = vmatprep.subr.mxu0 0.0
  %1199 = vmatpush1.msra.mxu0 0.0
  %1200 = vmatprep.subr.mxu0 0.0
  %1201 = vmatpush1.msra.mxu0 0.0
  %1202 = vmatprep.subr.mxu0 0.0
  %1203 = vmatpush1.msra.mxu0 0.0
  %1204 = vmatprep.subr.mxu0 0.0
  %1205 = vmatpush1.msra.mxu0 0.0
  %1206 = vmatprep.subr.mxu0 0.0
  %1207 = vmatpush1.msra.mxu0 0.0
  %1208 = vmatprep.subr.mxu0 0.0
  %1209 = vmatpush1.msra.mxu0 0.0
  %1210 = vmatprep.subr.mxu0 0.0
  %1211 = vmatpush1.msra.mxu0 0.0
  %1212 = vmatprep.subr.mxu0 0.0
  %1213 = vmatpush1.msra.mxu0 0.0
  %1214 = vmatprep.subr.mxu0 0.0
  %1215 = vmatpush1.msra.mxu0 0.0
  %1216 = vmatprep.mubr.f32.mxu0 0.0
  %1217 = vmatmul.mubr.f32.gmra.mrb[0].mxu0 %v992
  %v1218 = vpop.f32.mrb[0].mxu0
  %v1219 = vadd.f32 0.0, %v1218
  %v1220 = vpop.f32.mrb[0].mxu0
  %1221 = vdwg.mxu0
  %1222 = vmatprep.subr.mxu0 0.0
  %1223 = vmatpush1.msra.mxu0 %v1064
  %1224 = vmatprep.subr.mxu0 0.0
  %1225 = vmatpush1.msra.mxu0 %v1065
  %1226 = vmatprep.subr.mxu0 0.0
  %1227 = vmatpush1.msra.mxu0 %v1066
  %1228 = vmatprep.subr.mxu0 0.0
  %1229 = vmatpush1.msra.mxu0 %v1067
  %1230 = vmatprep.subr.mxu0 0.0
  %1231 = vmatpush1.msra.mxu0 %v1068
  %1232 = vmatprep.subr.mxu0 0.0
  %1233 = vmatpush1.msra.mxu0 %v1069
  %1234 = vmatprep.subr.mxu0 0.0
  %1235 = vmatpush1.msra.mxu0 %v1070
  %1236 = vmatprep.subr.mxu0 0.0
  %1237 = vmatpush1.msra.mxu0 %v1071
  %1238 = vmatprep.subr.mxu0 0.0
  %1239 = vmatpush1.msra.mxu0 %v1072
  %1240 = vmatprep.subr.mxu0 0.0
  %1241 = vmatpush1.msra.mxu0 %v1073
  %1242 = vmatprep.subr.mxu0 0.0
  %1243 = vmatpush1.msra.mxu0 %v1074
  %1244 = vmatprep.subr.mxu0 0.0
  %1245 = vmatpush1.msra.mxu0 %v1075
  %1246 = vmatprep.subr.mxu0 0.0
  %1247 = vmatpush1.msra.mxu0 %v1076
  %1248 = vmatprep.subr.mxu0 0.0
  %1249 = vmatpush1.msra.mxu0 %v1077
  %1250 = vmatprep.subr.mxu0 0.0
  %1251 = vmatpush1.msra.mxu0 %v1078
  %1252 = vmatprep.subr.mxu0 0.0
  %1253 = vmatpush1.msra.mxu0 %v1079
  %1254 = vmatprep.subr.mxu0 0.0
  %1255 = vmatpush1.msra.mxu0 0.0
  %1256 = vmatprep.subr.mxu0 0.0
  %1257 = vmatpush1.msra.mxu0 0.0
  %1258 = vmatprep.subr.mxu0 0.0
  %1259 = vmatpush1.msra.mxu0 0.0
  %1260 = vmatprep.subr.mxu0 0.0
  %1261 = vmatpush1.msra.mxu0 0.0
  %1262 = vmatprep.subr.mxu0 0.0
  %1263 = vmatpush1.msra.mxu0 0.0
  %1264 = vmatprep.subr.mxu0 0.0
  %1265 = vmatpush1.msra.mxu0 0.0
  %1266 = vmatprep.subr.mxu0 0.0
  %1267 = vmatpush1.msra.mxu0 0.0
  %1268 = vmatprep.subr.mxu0 0.0
  %1269 = vmatpush1.msra.mxu0 0.0
  %1270 = vmatprep.subr.mxu0 0.0
  %1271 = vmatpush1.msra.mxu0 0.0
  %1272 = vmatprep.subr.mxu0 0.0
  %1273 = vmatpush1.msra.mxu0 0.0
  %1274 = vmatprep.subr.mxu0 0.0
  %1275 = vmatpush1.msra.mxu0 0.0
  %1276 = vmatprep.subr.mxu0 0.0
  %1277 = vmatpush1.msra.mxu0 0.0
  %1278 = vmatprep.subr.mxu0 0.0
  %1279 = vmatpush1.msra.mxu0 0.0
  %1280 = vmatprep.subr.mxu0 0.0
  %1281 = vmatpush1.msra.mxu0 0.0
  %1282 = vmatprep.subr.mxu0 0.0
  %1283 = vmatpush1.msra.mxu0 0.0
  %1284 = vmatprep.subr.mxu0 0.0
  %1285 = vmatpush1.msra.mxu0 0.0
  %1286 = vmatprep.mubr.f32.mxu0 0.0
  %1287 = vmatmul.mubr.f32.gmra.mrb[0].mxu0 %v1219
  %v1288 = vpop.f32.mrb[0].mxu0
  %v1289 = vadd.f32 0.0, %v1288
  %v1290 = vpop.f32.mrb[0].mxu0
  %1291 = vdwg.mxu0
  %v1292 = vmul.f32 %v1147, %v1147
  %v1293 = vsub.f32 %v1289, %v1292
  %v1294 = vld [vmem:[%s12] sm:$0x3]
  %v1295 = vadd.f32 %v1293, 1e-05
  %v1296 = vrsqrt.pop %v1295
  %v1297 = vmul.f32 %v1294, %v1296
  %v1298 = vmul.f32 %v1147, %v1297
  %v1300 = vrot.slane %v1298, 7
  %v1302 = vsub.f32 %v1294, %v1300
  %vm1303 = vcmask 1040384
  %v1304 = vsel %vm1303, %v1297, %v1302
  %v1305 = vld [vmem:[%s14] sm:$0xff]
  %v1306 = vld [vmem:[%s14 + $0x8] sm:$0xff]
  %v1308 = vsel %vm69, %v1304, 0
  %1310 = vmatprep.subr.mxu0 0.0
  %1311 = vmatpush1.msra.mxu0 %v1305
  %1312 = vmatprep.subr.mxu0 0.0
  %1313 = vmatpush1.msra.mxu0 %v1306
  %1314 = vmatprep.subr.mxu0 0.0
  %1315 = vmatpush1.msra.mxu0 0.0
  %1316 = vmatprep.subr.mxu0 0.0
  %1317 = vmatpush1.msra.mxu0 0.0
  %1318 = vmatprep.subr.mxu0 0.0
  %1319 = vmatpush1.msra.mxu0 0.0
  %1320 = vmatprep.subr.mxu0 0.0
  %1321 = vmatpush1.msra.mxu0 0.0
  %1322 = vmatprep.subr.mxu0 0.0
  %1323 = vmatpush1.msra.mxu0 0.0
  %1324 = vmatprep.subr.mxu0 0.0
  %1325 = vmatpush1.msra.mxu0 0.0
  %1326 = vmatprep.subr.mxu0 0.0
  %1327 = vmatpush1.msra.mxu0 0.0
  %1328 = vmatprep.subr.mxu0 0.0
  %1329 = vmatpush1.msra.mxu0 0.0
  %1330 = vmatprep.subr.mxu0 0.0
  %1331 = vmatpush1.msra.mxu0 0.0
  %1332 = vmatprep.subr.mxu0 0.0
  %1333 = vmatpush1.msra.mxu0 0.0
  %1334 = vmatprep.subr.mxu0 0.0
  %1335 = vmatpush1.msra.mxu0 0.0
  %1336 = vmatprep.subr.mxu0 0.0
  %1337 = vmatpush1.msra.mxu0 0.0
  %1338 = vmatprep.subr.mxu0 0.0
  %1339 = vmatpush1.msra.mxu0 0.0
  %1340 = vmatprep.subr.mxu0 0.0
  %1341 = vmatpush1.msra.mxu0 0.0
  %1342 = vmatprep.subr.mxu0 0.0
  %1343 = vmatpush1.msra.mxu0 0.0
  %1344 = vmatprep.subr.mxu0 0.0
  %1345 = vmatpush1.msra.mxu0 0.0
  %1346 = vmatprep.subr.mxu0 0.0
  %1347 = vmatpush1.msra.mxu0 0.0
  %1348 = vmatprep.subr.mxu0 0.0
  %1349 = vmatpush1.msra.mxu0 0.0
  %1350 = vmatprep.subr.mxu0 0.0
  %1351 = vmatpush1.msra.mxu0 0.0
  %1352 = vmatprep.subr.mxu0 0.0
  %1353 = vmatpush1.msra.mxu0 0.0
  %1354 = vmatprep.subr.mxu0 0.0
  %1355 = vmatpush1.msra.mxu0 0.0
  %1356 = vmatprep.subr.mxu0 0.0
  %1357 = vmatpush1.msra.mxu0 0.0
  %1358 = vmatprep.subr.mxu0 0.0
  %1359 = vmatpush1.msra.mxu0 0.0
  %1360 = vmatprep.subr.mxu0 0.0
  %1361 = vmatpush1.msra.mxu0 0.0
  %1362 = vmatprep.subr.mxu0 0.0
  %1363 = vmatpush1.msra.mxu0 0.0
  %1364 = vmatprep.subr.mxu0 0.0
  %1365 = vmatpush1.msra.mxu0 0.0
  %1366 = vmatprep.subr.mxu0 0.0
  %1367 = vmatpush1.msra.mxu0 0.0
  %1368 = vmatprep.subr.mxu0 0.0
  %1369 = vmatpush1.msra.mxu0 0.0
  %1370 = vmatprep.subr.mxu0 0.0
  %1371 = vmatpush1.msra.mxu0 0.0
  %1372 = vmatprep.subr.mxu0 0.0
  %1373 = vmatpush1.msra.mxu0 0.0
  %1374 = vmatprep.mubr.f32.mxu0 0.0
  %1375 = vmatmul.mubr.f32.gmra.mrb[0].mxu0 %v1308
  %v1376 = vpop.f32.mrb[0].mxu0
  %v1377 = vadd.f32 0.0, %v1376
  %v1378 = vpop.f32.mrb[0].mxu0
  %1379 = vdwg.mxu0
  %v1380 = vlaneseq
  %v1381 = vshrl.u32 %v1380, 7
  %v1382 = vsub.s32 0, %v1381
  %v1383 = vrot.slane %v1377, %v1382
  %v1384 = vmul.f32 %v989, %v1383
  %v1385 = vmul.f32 %v990, %v1383
  %v1386 = vlaneseq
  %v1387 = vshrl.u32 %v1386, 7
  %v1388 = vsub.s32 1, %v1387
  %v1389 = vrot.slane %v1377, %v1388
  %v1390 = vadd.f32 %v1384, %v1389
  %v1391 = vadd.f32 %v1385, %v1389
  %v1392 = vmax.f32 %v1390, 0.0
  %v1393 = vmax.f32 %v1391, 0.0
  %v1394 = vpack.c.bf16 %v1393, %v1392
  %v1395 = vld [vmem:[%s8] sm:$0xf]
  %v1396 = vld [vmem:[%s8 + $0x4] sm:$0xf]
  %v1397 = vld [vmem:[%s8 + $0x8] sm:$0xf]
  %v1398 = vld [vmem:[%s8 + $0xc] sm:$0xf]
  %v1403 = vunpack.c.l.b16 %v1395
  %v1404 = vunpack.c.l.b16 %v1396
  %v1405 = vunpack.c.l.b16 %v1397
  %v1406 = vunpack.c.l.b16 %v1398
  %v1407 = vpack.c.b16 %v1404, %v1403
  %v1408 = vpack.c.b16 %v1406, %v1405
  %v1410 = vsel %vm69, %v1407, 0
  %v1413 = vsel %vm69, %v1408, 0
  %1415 = vmatprep.subr.bf16.mxu0 0
  %1416 = vmatpush1.bf16.msra.mxu0 %v1394
  %1417 = vmatprep.subr.bf16.mxu0 0
  %1418 = vmatpush1.bf16.msra.mxu0 0
  %1419 = vmatprep.subr.bf16.mxu0 0
  %1420 = vmatpush1.bf16.msra.mxu0 0
  %1421 = vmatprep.subr.bf16.mxu0 0
  %1422 = vmatpush1.bf16.msra.mxu0 0
  %1423 = vmatprep.subr.bf16.mxu0 0
  %1424 = vmatpush1.bf16.msra.mxu0 0
  %1425 = vmatprep.subr.bf16.mxu0 0
  %1426 = vmatpush1.bf16.msra.mxu0 0
  %1427 = vmatprep.subr.bf16.mxu0 0
  %1428 = vmatpush1.bf16.msra.mxu0 0
  %1429 = vmatprep.subr.bf16.mxu0 0
  %1430 = vmatpush1.bf16.msra.mxu0 0
  %1431 = vmatprep.subr.bf16.mxu0 0
  %1432 = vmatpush1.bf16.msra.mxu0 0
  %1433 = vmatprep.subr.bf16.mxu0 0
  %1434 = vmatpush1.bf16.msra.mxu0 0
  %1435 = vmatprep.subr.bf16.mxu0 0
  %1436 = vmatpush1.bf16.msra.mxu0 0
  %1437 = vmatprep.subr.bf16.mxu0 0
  %1438 = vmatpush1.bf16.msra.mxu0 0
  %1439 = vmatprep.subr.bf16.mxu0 0
  %1440 = vmatpush1.bf16.msra.mxu0 0
  %1441 = vmatprep.subr.bf16.mxu0 0
  %1442 = vmatpush1.bf16.msra.mxu0 0
  %1443 = vmatprep.subr.bf16.mxu0 0
  %1444 = vmatpush1.bf16.msra.mxu0 0
  %1445 = vmatprep.subr.bf16.mxu0 0
  %1446 = vmatpush1.bf16.msra.mxu0 0
  %1447 = vmatprep.mubr.bf16.mxu0 0
  %1448 = vmatmul.mubr.bf16.gmra.mrb[0].mxu0 %v1410
  %v1449 = vpop.f32.mrb[0].mxu0
  %v1450 = vadd.f32 0.0, %v1449
  %v1451 = vpop.f32.mrb[0].mxu0
  %v1452 = vpop.f32.mrb[0].mxu0
  %v1453 = vadd.f32 0.0, %v1452
  %v1454 = vpop.f32.mrb[0].mxu0
  %1455 = vmatprep.mubr.bf16.mxu0 0
  %1456 = vmatmul.mubr.bf16.gmra.mrb[0].mxu0 %v1413
  %v1457 = vpop.f32.mrb[0].mxu0
  %v1458 = vadd.f32 0.0, %v1457
  %v1459 = vpop.f32.mrb[0].mxu0
  %v1460 = vpop.f32.mrb[0].mxu0
  %v1461 = vadd.f32 0.0, %v1460
  %v1462 = vpop.f32.mrb[0].mxu0
  %1463 = vdwg.mxu0
  %v1464 = vpack.c.bf16 %v1453, %v1450
  %v1465 = vpack.c.bf16 %v1461, %v1458
  %s1466 = scalar_lea.vmem %s11, 192
  %v1467 = vld [vmem:[%s1466] sm:$0xf]
  %v1468 = vld [vmem:[%s1466 + $0x4] sm:$0xf]
  %v1469 = vld [vmem:[%s1466 + $0x8] sm:$0xf]
  %v1470 = vld [vmem:[%s1466 + $0xc] sm:$0xf]
  %v1471 = vld [vmem:[%s1466 + $0x10] sm:$0xf]
  %v1472 = vld [vmem:[%s1466 + $0x14] sm:$0xf]
  %v1473 = vld [vmem:[%s1466 + $0x18] sm:$0xf]
  %v1474 = vld [vmem:[%s1466 + $0x1c] sm:$0xf]
  %v1475 = vld [vmem:[%s1466 + $0x20] sm:$0xf]
  %v1476 = vld [vmem:[%s1466 + $0x24] sm:$0xf]
  %v1477 = vld [vmem:[%s1466 + $0x28] sm:$0xf]
  %v1478 = vld [vmem:[%s1466 + $0x2c] sm:$0xf]
  %v1479 = vld [vmem:[%s1466 + $0x30] sm:$0xf]
  %v1480 = vld [vmem:[%s1466 + $0x34] sm:$0xf]
  %v1481 = vld [vmem:[%s1466 + $0x38] sm:$0xf]
  %v1482 = vld [vmem:[%s1466 + $0x3c] sm:$0xf]
  %s1483 = scalar_lea.vmem %s8, 16
  %v1484 = vld [vmem:[%s1483] sm:$0xf]
  %v1485 = vld [vmem:[%s1483 + $0x4] sm:$0xf]
  %v1486 = vld [vmem:[%s1483 + $0x8] sm:$0xf]
  %v1487 = vld [vmem:[%s1483 + $0xc] sm:$0xf]
  %v1492 = vunpack.c.l.b16 %v1484
  %v1493 = vunpack.c.l.b16 %v1485
  %v1494 = vunpack.c.l.b16 %v1486
  %v1495 = vunpack.c.l.b16 %v1487
  %v1496 = vpack.c.b16 %v1493, %v1492
  %v1497 = vpack.c.b16 %v1495, %v1494
  %v1499 = vsel %vm69, %v1496, 0
  %v1502 = vsel %vm69, %v1497, 0
  %1504 = vmatprep.subr.bf16.mxu0 0
  %1505 = vmatpush1.bf16.msra.mxu0 %v1394
  %1506 = vmatprep.subr.bf16.mxu0 0
  %1507 = vmatpush1.bf16.msra.mxu0 0
  %1508 = vmatprep.subr.bf16.mxu0 0
  %1509 = vmatpush1.bf16.msra.mxu0 0
  %1510 = vmatprep.subr.bf16.mxu0 0
  %1511 = vmatpush1.bf16.msra.mxu0 0
  %1512 = vmatprep.subr.bf16.mxu0 0
  %1513 = vmatpush1.bf16.msra.mxu0 0
  %1514 = vmatprep.subr.bf16.mxu0 0
  %1515 = vmatpush1.bf16.msra.mxu0 0
  %1516 = vmatprep.subr.bf16.mxu0 0
  %1517 = vmatpush1.bf16.msra.mxu0 0
  %1518 = vmatprep.subr.bf16.mxu0 0
  %1519 = vmatpush1.bf16.msra.mxu0 0
  %1520 = vmatprep.subr.bf16.mxu0 0
  %1521 = vmatpush1.bf16.msra.mxu0 0
  %1522 = vmatprep.subr.bf16.mxu0 0
  %1523 = vmatpush1.bf16.msra.mxu0 0
  %1524 = vmatprep.subr.bf16.mxu0 0
  %1525 = vmatpush1.bf16.msra.mxu0 0
  %1526 = vmatprep.subr.bf16.mxu0 0
  %1527 = vmatpush1.bf16.msra.mxu0 0
  %1528 = vmatprep.subr.bf16.mxu0 0
  %1529 = vmatpush1.bf16.msra.mxu0 0
  %1530 = vmatprep.subr.bf16.mxu0 0
  %1531 = vmatpush1.bf16.msra.mxu0 0
  %1532 = vmatprep.subr.bf16.mxu0 0
  %1533 = vmatpush1.bf16.msra.mxu0 0
  %1534 = vmatprep.subr.bf16.mxu0 0
  %1535 = vmatpush1.bf16.msra.mxu0 0
  %1536 = vmatprep.mubr.bf16.mxu0 0
  %1537 = vmatmul.mubr.bf16.gmra.mrb[0].mxu0 %v1499
  %v1538 = vpop.f32.mrb[0].mxu0
  %v1539 = vadd.f32 0.0, %v1538
  %v1540 = vpop.f32.mrb[0].mxu0
  %v1541 = vpop.f32.mrb[0].mxu0
  %v1542 = vadd.f32 0.0, %v1541
  %v1543 = vpop.f32.mrb[0].mxu0
  %1544 = vmatprep.mubr.bf16.mxu0 0
  %1545 = vmatmul.mubr.bf16.gmra.mrb[0].mxu0 %v1502
  %v1546 = vpop.f32.mrb[0].mxu0
  %v1547 = vadd.f32 0.0, %v1546
  %v1548 = vpop.f32.mrb[0].mxu0
  %v1549 = vpop.f32.mrb[0].mxu0
  %v1550 = vadd.f32 0.0, %v1549
  %v1551 = vpop.f32.mrb[0].mxu0
  %1552 = vdwg.mxu0
  %v1553 = vpack.c.bf16 %v1542, %v1539
  %v1554 = vpack.c.bf16 %v1550, %v1547
  %s1555 = scalar_lea.vmem %s11, 256
  %v1556 = vld [vmem:[%s1555] sm:$0xf]
  %v1557 = vld [vmem:[%s1555 + $0x4] sm:$0xf]
  %v1558 = vld [vmem:[%s1555 + $0x8] sm:$0xf]
  %v1559 = vld [vmem:[%s1555 + $0xc] sm:$0xf]
  %v1560 = vld [vmem:[%s1555 + $0x10] sm:$0xf]
  %v1561 = vld [vmem:[%s1555 + $0x14] sm:$0xf]
  %v1562 = vld [vmem:[%s1555 + $0x18] sm:$0xf]
  %v1563 = vld [vmem:[%s1555 + $0x1c] sm:$0xf]
  %v1564 = vld [vmem:[%s1555 + $0x20] sm:$0xf]
  %v1565 = vld [vmem:[%s1555 + $0x24] sm:$0xf]
  %v1566 = vld [vmem:[%s1555 + $0x28] sm:$0xf]
  %v1567 = vld [vmem:[%s1555 + $0x2c] sm:$0xf]
  %v1568 = vld [vmem:[%s1555 + $0x30] sm:$0xf]
  %v1569 = vld [vmem:[%s1555 + $0x34] sm:$0xf]
  %v1570 = vld [vmem:[%s1555 + $0x38] sm:$0xf]
  %v1571 = vld [vmem:[%s1555 + $0x3c] sm:$0xf]
  %v1588 = vunpack.c.l.b16 %v1556
  %v1589 = vunpack.c.l.b16 %v1557
  %v1590 = vunpack.c.l.b16 %v1558
  %v1591 = vunpack.c.l.b16 %v1559
  %v1592 = vunpack.c.l.b16 %v1560
  %v1593 = vunpack.c.l.b16 %v1561
  %v1594 = vunpack.c.l.b16 %v1562
  %v1595 = vunpack.c.l.b16 %v1563
  %v1596 = vunpack.c.l.b16 %v1564
  %v1597 = vunpack.c.l.b16 %v1565
  %v1598 = vunpack.c.l.b16 %v1566
  %v1599 = vunpack.c.l.b16 %v1567
  %v1600 = vunpack.c.l.b16 %v1568
  %v1601 = vunpack.c.l.b16 %v1569
  %v1602 = vunpack.c.l.b16 %v1570
  %v1603 = vunpack.c.l.b16 %v1571
  %v1604 = vpack.c.b16 %v1589, %v1588
  %v1605 = vpack.c.b16 %v1591, %v1590
  %v1606 = vpack.c.b16 %v1593, %v1592
  %v1607 = vpack.c.b16 %v1595, %v1594
  %v1608 = vpack.c.b16 %v1597, %v1596
  %v1609 = vpack.c.b16 %v1599, %v1598
  %v1610 = vpack.c.b16 %v1601, %v1600
  %v1611 = vpack.c.b16 %v1603, %v1602
  %1620 = vmatprep.subr.bf16.mxu0 0
  %1621 = vmatpush1.bf16.msra.mxu0 %v1604
  %1622 = vmatprep.subr.bf16.mxu0 0
  %1623 = vmatpush1.bf16.msra.mxu0 %v1605
  %1624 = vmatprep.subr.bf16.mxu0 0
  %1625 = vmatpush1.bf16.msra.mxu0 %v1606
  %1626 = vmatprep.subr.bf16.mxu0 0
  %1627 = vmatpush1.bf16.msra.mxu0 %v1607
  %1628 = vmatprep.subr.bf16.mxu0 0
  %1629 = vmatpush1.bf16.msra.mxu0 %v1608
  %1630 = vmatprep.subr.bf16.mxu0 0
  %1631 = vmatpush1.bf16.msra.mxu0 %v1609
  %1632 = vmatprep.subr.bf16.mxu0 0
  %1633 = vmatpush1.bf16.msra.mxu0 %v1610
  %1634 = vmatprep.subr.bf16.mxu0 0
  %1635 = vmatpush1.bf16.msra.mxu0 %v1611
  %1636 = vmatprep.subr.bf16.mxu0 0
  %1637 = vmatpush1.bf16.msra.mxu0 0
  %1638 = vmatprep.subr.bf16.mxu0 0
  %1639 = vmatpush1.bf16.msra.mxu0 0
  %1640 = vmatprep.subr.bf16.mxu0 0
  %1641 = vmatpush1.bf16.msra.mxu0 0
  %1642 = vmatprep.subr.bf16.mxu0 0
  %1643 = vmatpush1.bf16.msra.mxu0 0
  %1644 = vmatprep.subr.bf16.mxu0 0
  %1645 = vmatpush1.bf16.msra.mxu0 0
  %1646 = vmatprep.subr.bf16.mxu0 0
  %1647 = vmatpush1.bf16.msra.mxu0 0
  %1648 = vmatprep.subr.bf16.mxu0 0
  %1649 = vmatpush1.bf16.msra.mxu0 0
  %1650 = vmatprep.subr.bf16.mxu0 0
  %1651 = vmatpush1.bf16.msra.mxu0 0
  %1652 = vmatprep.mubr.bf16.mxu0 0
  %1653 = vmatmul.mubr.bf16.gmra.mrb[0].mxu0 %v1553
  %v1654 = vpop.f32.mrb[0].mxu0
  %v1655 = vadd.f32 0.0, %v1654
  %v1656 = vpop.f32.mrb[0].mxu0
  %v1657 = vpop.f32.mrb[0].mxu0
  %v1658 = vadd.f32 0.0, %v1657
  %v1659 = vpop.f32.mrb[0].mxu0
  %1660 = vmatprep.mubr.bf16.mxu0 0
  %1661 = vmatmul.mubr.bf16.gmra.mrb[0].mxu0 %v1554
  %v1662 = vpop.f32.mrb[0].mxu0
  %v1663 = vadd.f32 0.0, %v1662
  %v1664 = vpop.f32.mrb[0].mxu0
  %v1665 = vpop.f32.mrb[0].mxu0
  %v1666 = vadd.f32 0.0, %v1665
  %v1667 = vpop.f32.mrb[0].mxu0
  %1668 = vdwg.mxu0
  %v1685 = vunpack.c.l.b16 %v1467
  %v1686 = vunpack.c.l.b16 %v1468
  %v1687 = vunpack.c.l.b16 %v1469
  %v1688 = vunpack.c.l.b16 %v1470
  %v1689 = vunpack.c.l.b16 %v1471
  %v1690 = vunpack.c.l.b16 %v1472
  %v1691 = vunpack.c.l.b16 %v1473
  %v1692 = vunpack.c.l.b16 %v1474
  %v1693 = vunpack.c.l.b16 %v1475
  %v1694 = vunpack.c.l.b16 %v1476
  %v1695 = vunpack.c.l.b16 %v1477
  %v1696 = vunpack.c.l.b16 %v1478
  %v1697 = vunpack.c.l.b16 %v1479
  %v1698 = vunpack.c.l.b16 %v1480
  %v1699 = vunpack.c.l.b16 %v1481
  %v1700 = vunpack.c.l.b16 %v1482
  %v1701 = vpack.c.b16 %v1686, %v1685
  %v1702 = vpack.c.b16 %v1688, %v1687
  %v1703 = vpack.c.b16 %v1690, %v1689
  %v1704 = vpack.c.b16 %v1692, %v1691
  %v1705 = vpack.c.b16 %v1694, %v1693
  %v1706 = vpack.c.b16 %v1696, %v1695
  %v1707 = vpack.c.b16 %v1698, %v1697
  %v1708 = vpack.c.b16 %v1700, %v1699
  %1717 = vmatprep.subr.bf16.mxu0 0
  %1718 = vmatpush1.bf16.msra.mxu0 %v1701
  %1719 = vmatprep.subr.bf16.mxu0 0
  %1720 = vmatpush1.bf16.msra.mxu0 %v1702
  %1721 = vmatprep.subr.bf16.mxu0 0
  %1722 = vmatpush1.bf16.msra.mxu0 %v1703
  %1723 = vmatprep.subr.bf16.mxu0 0
  %1724 = vmatpush1.bf16.msra.mxu0 %v1704
  %1725 = vmatprep.subr.bf16.mxu0 0
  %1726 = vmatpush1.bf16.msra.mxu0 %v1705
  %1727 = vmatprep.subr.bf16.mxu0 0
  %1728 = vmatpush1.bf16.msra.mxu0 %v1706
  %1729 = vmatprep.subr.bf16.mxu0 0
  %1730 = vmatpush1.bf16.msra.mxu0 %v1707
  %1731 = vmatprep.subr.bf16.mxu0 0
  %1732 = vmatpush1.bf16.msra.mxu0 %v1708
  %1733 = vmatprep.subr.bf16.mxu0 0
  %1734 = vmatpush1.bf16.msra.mxu0 0
  %1735 = vmatprep.subr.bf16.mxu0 0
  %1736 = vmatpush1.bf16.msra.mxu0 0
  %1737 = vmatprep.subr.bf16.mxu0 0
  %1738 = vmatpush1.bf16.msra.mxu0 0
  %1739 = vmatprep.subr.bf16.mxu0 0
  %1740 = vmatpush1.bf16.msra.mxu0 0
  %1741 = vmatprep.subr.bf16.mxu0 0
  %1742 = vmatpush1.bf16.msra.mxu0 0
  %1743 = vmatprep.subr.bf16.mxu0 0
  %1744 = vmatpush1.bf16.msra.mxu0 0
  %1745 = vmatprep.subr.bf16.mxu0 0
  %1746 = vmatpush1.bf16.msra.mxu0 0
  %1747 = vmatprep.subr.bf16.mxu0 0
  %1748 = vmatpush1.bf16.msra.mxu0 0
  %1749 = vmatprep.mubr.bf16.mxu0 0
  %1750 = vmatmul.mubr.bf16.gmra.mrb[0].mxu0 %v1464
  %v1751 = vpop.f32.mrb[0].mxu0
  %v1752 = vadd.f32 %v1655, %v1751
  %v1753 = vpop.f32.mrb[0].mxu0
  %v1754 = vpop.f32.mrb[0].mxu0
  %v1755 = vadd.f32 %v1658, %v1754
  %v1756 = vpop.f32.mrb[0].mxu0
  %1757 = vmatprep.mubr.bf16.mxu0 0
  %1758 = vmatmul.mubr.bf16.gmra.mrb[0].mxu0 %v1465
  %v1759 = vpop.f32.mrb[0].mxu0
  %v1760 = vadd.f32 %v1663, %v1759
  %v1761 = vpop.f32.mrb[0].mxu0
  %v1762 = vpop.f32.mrb[0].mxu0
  %v1763 = vadd.f32 %v1666, %v1762
  %v1764 = vpop.f32.mrb[0].mxu0
  %1765 = vdwg.mxu0
  %s1766 = scalar_lea.vmem %s8, 32
  %v1767 = vld [vmem:[%s1766] sm:$0xf]
  %v1768 = vld [vmem:[%s1766 + $0x4] sm:$0xf]
  %v1769 = vld [vmem:[%s1766 + $0x8] sm:$0xf]
  %v1770 = vld [vmem:[%s1766 + $0xc] sm:$0xf]
  %v1775 = vunpack.c.l.b16 %v1767
  %v1776 = vunpack.c.l.b16 %v1768
  %v1777 = vunpack.c.l.b16 %v1769
  %v1778 = vunpack.c.l.b16 %v1770
  %v1779 = vpack.c.b16 %v1776, %v1775
  %v1780 = vpack.c.b16 %v1778, %v1777
  %v1782 = vsel %vm69, %v1779, 0
  %v1785 = vsel %vm69, %v1780, 0
  %1787 = vmatprep.subr.bf16.mxu0 0
  %1788 = vmatpush1.bf16.msra.mxu0 %v1394
  %1789 = vmatprep.subr.bf16.mxu0 0
  %1790 = vmatpush1.bf16.msra.mxu0 0
  %1791 = vmatprep.subr.bf16.mxu0 0
  %1792 = vmatpush1.bf16.msra.mxu0 0
  %1793 = vmatprep.subr.bf16.mxu0 0
  %1794 = vmatpush1.bf16.msra.mxu0 0
  %1795 = vmatprep.subr.bf16.mxu0 0
  %1796 = vmatpush1.bf16.msra.mxu0 0
  %1797 = vmatprep.subr.bf16.mxu0 0
  %1798 = vmatpush1.bf16.msra.mxu0 0
  %1799 = vmatprep.subr.bf16.mxu0 0
  %1800 = vmatpush1.bf16.msra.mxu0 0
  %1801 = vmatprep.subr.bf16.mxu0 0
  %1802 = vmatpush1.bf16.msra.mxu0 0
  %1803 = vmatprep.subr.bf16.mxu0 0
  %1804 = vmatpush1.bf16.msra.mxu0 0
  %1805 = vmatprep.subr.bf16.mxu0 0
  %1806 = vmatpush1.bf16.msra.mxu0 0
  %1807 = vmatprep.subr.bf16.mxu0 0
  %1808 = vmatpush1.bf16.msra.mxu0 0
  %1809 = vmatprep.subr.bf16.mxu0 0
  %1810 = vmatpush1.bf16.msra.mxu0 0
  %1811 = vmatprep.subr.bf16.mxu0 0
  %1812 = vmatpush1.bf16.msra.mxu0 0
  %1813 = vmatprep.subr.bf16.mxu0 0
  %1814 = vmatpush1.bf16.msra.mxu0 0
  %1815 = vmatprep.subr.bf16.mxu0 0
  %1816 = vmatpush1.bf16.msra.mxu0 0
  %1817 = vmatprep.subr.bf16.mxu0 0
  %1818 = vmatpush1.bf16.msra.mxu0 0
  %1819 = vmatprep.mubr.bf16.mxu0 0
  %1820 = vmatmul.mubr.bf16.gmra.mrb[0].mxu0 %v1782
  %v1821 = vpop.f32.mrb[0].mxu0
  %v1822 = vadd.f32 0.0, %v1821
  %v1823 = vpop.f32.mrb[0].mxu0
  %v1824 = vpop.f32.mrb[0].mxu0
  %v1825 = vadd.f32 0.0, %v1824
  %v1826 = vpop.f32.mrb[0].mxu0
  %1827 = vmatprep.mubr.bf16.mxu0 0
  %1828 = vmatmul.mubr.bf16.gmra.mrb[0].mxu0 %v1785
  %v1829 = vpop.f32.mrb[0].mxu0
  %v1830 = vadd.f32 0.0, %v1829
  %v1831 = vpop.f32.mrb[0].mxu0
  %v1832 = vpop.f32.mrb[0].mxu0
  %v1833 = vadd.f32 0.0, %v1832
  %v1834 = vpop.f32.mrb[0].mxu0
  %1835 = vdwg.mxu0
  %v1836 = vpack.c.bf16 %v1825, %v1822
  %v1837 = vpack.c.bf16 %v1833, %v1830
  %s1838 = scalar_lea.vmem %s11, 320
  %v1839 = vld [vmem:[%s1838] sm:$0xf]
  %v1840 = vld [vmem:[%s1838 + $0x4] sm:$0xf]
  %v1841 = vld [vmem:[%s1838 + $0x8] sm:$0xf]
  %v1842 = vld [vmem:[%s1838 + $0xc] sm:$0xf]
  %v1843 = vld [vmem:[%s1838 + $0x10] sm:$0xf]
  %v1844 = vld [vmem:[%s1838 + $0x14] sm:$0xf]
  %v1845 = vld [vmem:[%s1838 + $0x18] sm:$0xf]
  %v1846 = vld [vmem:[%s1838 + $0x1c] sm:$0xf]
  %v1847 = vld [vmem:[%s1838 + $0x20] sm:$0xf]
  %v1848 = vld [vmem:[%s1838 + $0x24] sm:$0xf]
  %v1849 = vld [vmem:[%s1838 + $0x28] sm:$0xf]
  %v1850 = vld [vmem:[%s1838 + $0x2c] sm:$0xf]
  %v1851 = vld [vmem:[%s1838 + $0x30] sm:$0xf]
  %v1852 = vld [vmem:[%s1838 + $0x34] sm:$0xf]
  %v1853 = vld [vmem:[%s1838 + $0x38] sm:$0xf]
  %v1854 = vld [vmem:[%s1838 + $0x3c] sm:$0xf]
  %v1871 = vunpack.c.l.b16 %v1839
  %v1872 = vunpack.c.l.b16 %v1840
  %v1873 = vunpack.c.l.b16 %v1841
  %v1874 = vunpack.c.l.b16 %v1842
  %v1875 = vunpack.c.l.b16 %v1843
  %v1876 = vunpack.c.l.b16 %v1844
  %v1877 = vunpack.c.l.b16 %v1845
  %v1878 = vunpack.c.l.b16 %v1846
  %v1879 = vunpack.c.l.b16 %v1847
  %v1880 = vunpack.c.l.b16 %v1848
  %v1881 = vunpack.c.l.b16 %v1849
  %v1882 = vunpack.c.l.b16 %v1850
  %v1883 = vunpack.c.l.b16 %v1851
  %v1884 = vunpack.c.l.b16 %v1852
  %v1885 = vunpack.c.l.b16 %v1853
  %v1886 = vunpack.c.l.b16 %v1854
  %v1887 = vpack.c.b16 %v1872, %v1871
  %v1888 = vpack.c.b16 %v1874, %v1873
  %v1889 = vpack.c.b16 %v1876, %v1875
  %v1890 = vpack.c.b16 %v1878, %v1877
  %v1891 = vpack.c.b16 %v1880, %v1879
  %v1892 = vpack.c.b16 %v1882, %v1881
  %v1893 = vpack.c.b16 %v1884, %v1883
  %v1894 = vpack.c.b16 %v1886, %v1885
  %1903 = vmatprep.subr.bf16.mxu0 0
  %1904 = vmatpush1.bf16.msra.mxu0 %v1887
  %1905 = vmatprep.subr.bf16.mxu0 0
  %1906 = vmatpush1.bf16.msra.mxu0 %v1888
  %1907 = vmatprep.subr.bf16.mxu0 0
  %1908 = vmatpush1.bf16.msra.mxu0 %v1889
  %1909 = vmatprep.subr.bf16.mxu0 0
  %1910 = vmatpush1.bf16.msra.mxu0 %v1890
  %1911 = vmatprep.subr.bf16.mxu0 0
  %1912 = vmatpush1.bf16.msra.mxu0 %v1891
  %1913 = vmatprep.subr.bf16.mxu0 0
  %1914 = vmatpush1.bf16.msra.mxu0 %v1892
  %1915 = vmatprep.subr.bf16.mxu0 0
  %1916 = vmatpush1.bf16.msra.mxu0 %v1893
  %1917 = vmatprep.subr.bf16.mxu0 0
  %1918 = vmatpush1.bf16.msra.mxu0 %v1894
  %1919 = vmatprep.subr.bf16.mxu0 0
  %1920 = vmatpush1.bf16.msra.mxu0 0
  %1921 = vmatprep.subr.bf16.mxu0 0
  %1922 = vmatpush1.bf16.msra.mxu0 0
  %1923 = vmatprep.subr.bf16.mxu0 0
  %1924 = vmatpush1.bf16.msra.mxu0 0
  %1925 = vmatprep.subr.bf16.mxu0 0
  %1926 = vmatpush1.bf16.msra.mxu0 0
  %1927 = vmatprep.subr.bf16.mxu0 0
  %1928 = vmatpush1.bf16.msra.mxu0 0
  %1929 = vmatprep.subr.bf16.mxu0 0
  %1930 = vmatpush1.bf16.msra.mxu0 0
  %1931 = vmatprep.subr.bf16.mxu0 0
  %1932 = vmatpush1.bf16.msra.mxu0 0
  %1933 = vmatprep.subr.bf16.mxu0 0
  %1934 = vmatpush1.bf16.msra.mxu0 0
  %1935 = vmatprep.mubr.bf16.mxu0 0
  %1936 = vmatmul.mubr.bf16.gmra.mrb[0].mxu0 %v1836
  %v1937 = vpop.f32.mrb[0].mxu0
  %v1938 = vadd.f32 0.0, %v1937
  %v1939 = vpop.f32.mrb[0].mxu0
  %v1940 = vpop.f32.mrb[0].mxu0
  %v1941 = vadd.f32 0.0, %v1940
  %v1942 = vpop.f32.mrb[0].mxu0
  %1943 = vmatprep.mubr.bf16.mxu0 0
  %1944 = vmatmul.mubr.bf16.gmra.mrb[0].mxu0 %v1837
  %v1945 = vpop.f32.mrb[0].mxu0
  %v1946 = vadd.f32 0.0, %v1945
  %v1947 = vpop.f32.mrb[0].mxu0
  %v1948 = vpop.f32.mrb[0].mxu0
  %v1949 = vadd.f32 0.0, %v1948
  %v1950 = vpop.f32.mrb[0].mxu0
  %1951 = vdwg.mxu0
  %v1952 = vadd.f32 %v1752, %v1938
  %v1953 = vadd.f32 %v1755, %v1941
  %v1954 = vadd.f32 %v1760, %v1946
  %v1955 = vadd.f32 %v1763, %v1949
  %vm1956 = vcmask 261120
  %v1957 = vsel %vm1956, 1.0, 0
  %1959 = vmatprep.subr.mxu0 0.0
  %1960 = vmatpush1.msra.mxu0 %v1952
  %1961 = vmatprep.subr.mxu0 0.0
  %1962 = vmatpush1.msra.mxu0 %v1953
  %1963 = vmatprep.subr.mxu0 0.0
  %1964 = vmatpush1.msra.mxu0 %v1954
  %1965 = vmatprep.subr.mxu0 0.0
  %1966 = vmatpush1.msra.mxu0 %v1955
  %1967 = vmatprep.subr.mxu0 0.0
  %1968 = vmatpush1.msra.mxu0 0.0
  %1969 = vmatprep.subr.mxu0 0.0
  %1970 = vmatpush1.msra.mxu0 0.0
  %1971 = vmatprep.subr.mxu0 0.0
  %1972 = vmatpush1.msra.mxu0 0.0
  %1973 = vmatprep.subr.mxu0 0.0
  %1974 = vmatpush1.msra.mxu0 0.0
  %1975 = vmatprep.subr.mxu0 0.0
  %1976 = vmatpush1.msra.mxu0 0.0
  %1977 = vmatprep.subr.mxu0 0.0
  %1978 = vmatpush1.msra.mxu0 0.0
  %1979 = vmatprep.subr.mxu0 0.0
  %1980 = vmatpush1.msra.mxu0 0.0
  %1981 = vmatprep.subr.mxu0 0.0
  %1982 = vmatpush1.msra.mxu0 0.0
  %1983 = vmatprep.subr.mxu0 0.0
  %1984 = vmatpush1.msra.mxu0 0.0
  %1985 = vmatprep.subr.mxu0 0.0
  %1986 = vmatpush1.msra.mxu0 0.0
  %1987 = vmatprep.subr.mxu0 0.0
  %1988 = vmatpush1.msra.mxu0 0.0
  %1989 = vmatprep.subr.mxu0 0.0
  %1990 = vmatpush1.msra.mxu0 0.0
  %1991 = vmatprep.subr.mxu0 0.0
  %1992 = vmatpush1.msra.mxu0 0.0
  %1993 = vmatprep.subr.mxu0 0.0
  %1994 = vmatpush1.msra.mxu0 0.0
  %1995 = vmatprep.subr.mxu0 0.0
  %1996 = vmatpush1.msra.mxu0 0.0
  %1997 = vmatprep.subr.mxu0 0.0
  %1998 = vmatpush1.msra.mxu0 0.0
  %1999 = vmatprep.subr.mxu0 0.0
  %2000 = vmatpush1.msra.mxu0 0.0
  %2001 = vmatprep.subr.mxu0 0.0
  %2002 = vmatpush1.msra.mxu0 0.0
  %2003 = vmatprep.subr.mxu0 0.0
  %2004 = vmatpush1.msra.mxu0 0.0
  %2005 = vmatprep.subr.mxu0 0.0
  %2006 = vmatpush1.msra.mxu0 0.0
  %2007 = vmatprep.subr.mxu0 0.0
  %2008 = vmatpush1.msra.mxu0 0.0
  %2009 = vmatprep.subr.mxu0 0.0
  %2010 = vmatpush1.msra.mxu0 0.0
  %2011 = vmatprep.subr.mxu0 0.0
  %2012 = vmatpush1.msra.mxu0 0.0
  %2013 = vmatprep.subr.mxu0 0.0
  %2014 = vmatpush1.msra.mxu0 0.0
  %2015 = vmatprep.subr.mxu0 0.0
  %2016 = vmatpush1.msra.mxu0 0.0
  %2017 = vmatprep.subr.mxu0 0.0
  %2018 = vmatpush1.msra.mxu0 0.0
  %2019 = vmatprep.subr.mxu0 0.0
  %2020 = vmatpush1.msra.mxu0 0.0
  %2021 = vmatprep.subr.mxu0 0.0
  %2022 = vmatpush1.msra.mxu0 0.0
  %2023 = vmatprep.mubr.f32.mxu0 0.0
  %2024 = vmatmul.mubr.f32.gmra.mrb[0].mxu0 %v1957
  %v2025 = vpop.f32.mrb[0].mxu0
  %v2026 = vadd.f32 0.0, %v2025
  %v2027 = vpop.f32.mrb[0].mxu0
  %2028 = vdwg.mxu0
  %s2029 = scalar_lea.vmem %s13, 128
  %v2030 = vld [vmem:[%s2029] sm:$0xff]
  %v2031 = vld [vmem:[%s2029 + $0x8] sm:$0xff]
  %v2032 = vld [vmem:[%s2029 + $0x10] sm:$0xff]
  %v2033 = vld [vmem:[%s2029 + $0x18] sm:$0xff]
  %v2034 = vld [vmem:[%s2029 + $0x20] sm:$0xff]
  %v2035 = vld [vmem:[%s2029 + $0x28] sm:$0xff]
  %v2036 = vld [vmem:[%s2029 + $0x30] sm:$0xff]
  %v2037 = vld [vmem:[%s2029 + $0x38] sm:$0xff]
  %v2038 = vld [vmem:[%s2029 + $0x40] sm:$0xff]
  %v2039 = vld [vmem:[%s2029 + $0x48] sm:$0xff]
  %v2040 = vld [vmem:[%s2029 + $0x50] sm:$0xff]
  %v2041 = vld [vmem:[%s2029 + $0x58] sm:$0xff]
  %v2042 = vld [vmem:[%s2029 + $0x60] sm:$0xff]
  %v2043 = vld [vmem:[%s2029 + $0x68] sm:$0xff]
  %v2044 = vld [vmem:[%s2029 + $0x70] sm:$0xff]
  %v2045 = vld [vmem:[%s2029 + $0x78] sm:$0xff]
  %2046 = vmatprep.subr.mxu0 0.0
  %2047 = vmatpush1.msra.mxu0 %v2030
  %2048 = vmatprep.subr.mxu0 0.0
  %2049 = vmatpush1.msra.mxu0 %v2031
  %2050 = vmatprep.subr.mxu0 0.0
  %2051 = vmatpush1.msra.mxu0 %v2032
  %2052 = vmatprep.subr.mxu0 0.0
  %2053 = vmatpush1.msra.mxu0 %v2033
  %2054 = vmatprep.subr.mxu0 0.0
  %2055 = vmatpush1.msra.mxu0 %v2034
  %2056 = vmatprep.subr.mxu0 0.0
  %2057 = vmatpush1.msra.mxu0 %v2035
  %2058 = vmatprep.subr.mxu0 0.0
  %2059 = vmatpush1.msra.mxu0 %v2036
  %2060 = vmatprep.subr.mxu0 0.0
  %2061 = vmatpush1.msra.mxu0 %v2037
  %2062 = vmatprep.subr.mxu0 0.0
  %2063 = vmatpush1.msra.mxu0 %v2038
  %2064 = vmatprep.subr.mxu0 0.0
  %2065 = vmatpush1.msra.mxu0 %v2039
  %2066 = vmatprep.subr.mxu0 0.0
  %2067 = vmatpush1.msra.mxu0 %v2040
  %2068 = vmatprep.subr.mxu0 0.0
  %2069 = vmatpush1.msra.mxu0 %v2041
  %2070 = vmatprep.subr.mxu0 0.0
  %2071 = vmatpush1.msra.mxu0 %v2042
  %2072 = vmatprep.subr.mxu0 0.0
  %2073 = vmatpush1.msra.mxu0 %v2043
  %2074 = vmatprep.subr.mxu0 0.0
  %2075 = vmatpush1.msra.mxu0 %v2044
  %2076 = vmatprep.subr.mxu0 0.0
  %2077 = vmatpush1.msra.mxu0 %v2045
  %2078 = vmatprep.subr.mxu0 0.0
  %2079 = vmatpush1.msra.mxu0 0.0
  %2080 = vmatprep.subr.mxu0 0.0
  %2081 = vmatpush1.msra.mxu0 0.0
  %2082 = vmatprep.subr.mxu0 0.0
  %2083 = vmatpush1.msra.mxu0 0.0
  %2084 = vmatprep.subr.mxu0 0.0
  %2085 = vmatpush1.msra.mxu0 0.0
  %2086 = vmatprep.subr.mxu0 0.0
  %2087 = vmatpush1.msra.mxu0 0.0
  %2088 = vmatprep.subr.mxu0 0.0
  %2089 = vmatpush1.msra.mxu0 0.0
  %2090 = vmatprep.subr.mxu0 0.0
  %2091 = vmatpush1.msra.mxu0 0.0
  %2092 = vmatprep.subr.mxu0 0.0
  %2093 = vmatpush1.msra.mxu0 0.0
  %2094 = vmatprep.subr.mxu0 0.0
  %2095 = vmatpush1.msra.mxu0 0.0
  %2096 = vmatprep.subr.mxu0 0.0
  %2097 = vmatpush1.msra.mxu0 0.0
  %2098 = vmatprep.subr.mxu0 0.0
  %2099 = vmatpush1.msra.mxu0 0.0
  %2100 = vmatprep.subr.mxu0 0.0
  %2101 = vmatpush1.msra.mxu0 0.0
  %2102 = vmatprep.subr.mxu0 0.0
  %2103 = vmatpush1.msra.mxu0 0.0
  %2104 = vmatprep.subr.mxu0 0.0
  %2105 = vmatpush1.msra.mxu0 0.0
  %2106 = vmatprep.subr.mxu0 0.0
  %2107 = vmatpush1.msra.mxu0 0.0
  %2108 = vmatprep.subr.mxu0 0.0
  %2109 = vmatpush1.msra.mxu0 0.0
  %2110 = vmatprep.mubr.f32.mxu0 0.0
  %2111 = vmatmul.mubr.f32.gmra.mrb[0].mxu0 %v2026
  %v2112 = vpop.f32.mrb[0].mxu0
  %v2113 = vadd.f32 0.0, %v2112
  %v2114 = vpop.f32.mrb[0].mxu0
  %2115 = vdwg.mxu0
  %v2116 = vmul.f32 %v1952, %v1952
  %v2117 = vmul.f32 %v1953, %v1953
  %v2118 = vmul.f32 %v1954, %v1954
  %v2119 = vmul.f32 %v1955, %v1955
  %2120 = vmatprep.subr.mxu0 0.0
  %2121 = vmatpush1.msra.mxu0 %v2116
  %2122 = vmatprep.subr.mxu0 0.0
  %2123 = vmatpush1.msra.mxu0 %v2117
  %2124 = vmatprep.subr.mxu0 0.0
  %2125 = vmatpush1.msra.mxu0 %v2118
  %2126 = vmatprep.subr.mxu0 0.0
  %2127 = vmatpush1.msra.mxu0 %v2119
  %2128 = vmatprep.subr.mxu0 0.0
  %2129 = vmatpush1.msra.mxu0 0.0
  %2130 = vmatprep.subr.mxu0 0.0
  %2131 = vmatpush1.msra.mxu0 0.0
  %2132 = vmatprep.subr.mxu0 0.0
  %2133 = vmatpush1.msra.mxu0 0.0
  %2134 = vmatprep.subr.mxu0 0.0
  %2135 = vmatpush1.msra.mxu0 0.0
  %2136 = vmatprep.subr.mxu0 0.0
  %2137 = vmatpush1.msra.mxu0 0.0
  %2138 = vmatprep.subr.mxu0 0.0
  %2139 = vmatpush1.msra.mxu0 0.0
  %2140 = vmatprep.subr.mxu0 0.0
  %2141 = vmatpush1.msra.mxu0 0.0
  %2142 = vmatprep.subr.mxu0 0.0
  %2143 = vmatpush1.msra.mxu0 0.0
  %2144 = vmatprep.subr.mxu0 0.0
  %2145 = vmatpush1.msra.mxu0 0.0
  %2146 = vmatprep.subr.mxu0 0.0
  %2147 = vmatpush1.msra.mxu0 0.0
  %2148 = vmatprep.subr.mxu0 0.0
  %2149 = vmatpush1.msra.mxu0 0.0
  %2150 = vmatprep.subr.mxu0 0.0
  %2151 = vmatpush1.msra.mxu0 0.0
  %2152 = vmatprep.subr.mxu0 0.0
  %2153 = vmatpush1.msra.mxu0 0.0
  %2154 = vmatprep.subr.mxu0 0.0
  %2155 = vmatpush1.msra.mxu0 0.0
  %2156 = vmatprep.subr.mxu0 0.0
  %2157 = vmatpush1.msra.mxu0 0.0
  %2158 = vmatprep.subr.mxu0 0.0
  %2159 = vmatpush1.msra.mxu0 0.0
  %2160 = vmatprep.subr.mxu0 0.0
  %2161 = vmatpush1.msra.mxu0 0.0
  %2162 = vmatprep.subr.mxu0 0.0
  %2163 = vmatpush1.msra.mxu0 0.0
  %2164 = vmatprep.subr.mxu0 0.0
  %2165 = vmatpush1.msra.mxu0 0.0
  %2166 = vmatprep.subr.mxu0 0.0
  %2167 = vmatpush1.msra.mxu0 0.0
  %2168 = vmatprep.subr.mxu0 0.0
  %2169 = vmatpush1.msra.mxu0 0.0
  %2170 = vmatprep.subr.mxu0 0.0
  %2171 = vmatpush1.msra.mxu0 0.0
  %2172 = vmatprep.subr.mxu0 0.0
  %2173 = vmatpush1.msra.mxu0 0.0
  %2174 = vmatprep.subr.mxu0 0.0
  %2175 = vmatpush1.msra.mxu0 0.0
  %2176 = vmatprep.subr.mxu0 0.0
  %2177 = vmatpush1.msra.mxu0 0.0
  %2178 = vmatprep.subr.mxu0 0.0
  %2179 = vmatpush1.msra.mxu0 0.0
  %2180 = vmatprep.subr.mxu0 0.0
  %2181 = vmatpush1.msra.mxu0 0.0
  %2182 = vmatprep.subr.mxu0 0.0
  %2183 = vmatpush1.msra.mxu0 0.0
  %2184 = vmatprep.mubr.f32.mxu0 0.0
  %2185 = vmatmul.mubr.f32.gmra.mrb[0].mxu0 %v1957
  %v2186 = vpop.f32.mrb[0].mxu0
  %v2187 = vadd.f32 0.0, %v2186
  %v2188 = vpop.f32.mrb[0].mxu0
  %2189 = vdwg.mxu0
  %2190 = vmatprep.subr.mxu0 0.0
  %2191 = vmatpush1.msra.mxu0 %v2030
  %2192 = vmatprep.subr.mxu0 0.0
  %2193 = vmatpush1.msra.mxu0 %v2031
  %2194 = vmatprep.subr.mxu0 0.0
  %2195 = vmatpush1.msra.mxu0 %v2032
  %2196 = vmatprep.subr.mxu0 0.0
  %2197 = vmatpush1.msra.mxu0 %v2033
  %2198 = vmatprep.subr.mxu0 0.0
  %2199 = vmatpush1.msra.mxu0 %v2034
  %2200 = vmatprep.subr.mxu0 0.0
  %2201 = vmatpush1.msra.mxu0 %v2035
  %2202 = vmatprep.subr.mxu0 0.0
  %2203 = vmatpush1.msra.mxu0 %v2036
  %2204 = vmatprep.subr.mxu0 0.0
  %2205 = vmatpush1.msra.mxu0 %v2037
  %2206 = vmatprep.subr.mxu0 0.0
  %2207 = vmatpush1.msra.mxu0 %v2038
  %2208 = vmatprep.subr.mxu0 0.0
  %2209 = vmatpush1.msra.mxu0 %v2039
  %2210 = vmatprep.subr.mxu0 0.0
  %2211 = vmatpush1.msra.mxu0 %v2040
  %2212 = vmatprep.subr.mxu0 0.0
  %2213 = vmatpush1.msra.mxu0 %v2041
  %2214 = vmatprep.subr.mxu0 0.0
  %2215 = vmatpush1.msra.mxu0 %v2042
  %2216 = vmatprep.subr.mxu0 0.0
  %2217 = vmatpush1.msra.mxu0 %v2043
  %2218 = vmatprep.subr.mxu0 0.0
  %2219 = vmatpush1.msra.mxu0 %v2044
  %2220 = vmatprep.subr.mxu0 0.0
  %2221 = vmatpush1.msra.mxu0 %v2045
  %2222 = vmatprep.subr.mxu0 0.0
  %2223 = vmatpush1.msra.mxu0 0.0
  %2224 = vmatprep.subr.mxu0 0.0
  %2225 = vmatpush1.msra.mxu0 0.0
  %2226 = vmatprep.subr.mxu0 0.0
  %2227 = vmatpush1.msra.mxu0 0.0
  %2228 = vmatprep.subr.mxu0 0.0
  %2229 = vmatpush1.msra.mxu0 0.0
  %2230 = vmatprep.subr.mxu0 0.0
  %2231 = vmatpush1.msra.mxu0 0.0
  %2232 = vmatprep.subr.mxu0 0.0
  %2233 = vmatpush1.msra.mxu0 0.0
  %2234 = vmatprep.subr.mxu0 0.0
  %2235 = vmatpush1.msra.mxu0 0.0
  %2236 = vmatprep.subr.mxu0 0.0
  %2237 = vmatpush1.msra.mxu0 0.0
  %2238 = vmatprep.subr.mxu0 0.0
  %2239 = vmatpush1.msra.mxu0 0.0
  %2240 = vmatprep.subr.mxu0 0.0
  %2241 = vmatpush1.msra.mxu0 0.0
  %2242 = vmatprep.subr.mxu0 0.0
  %2243 = vmatpush1.msra.mxu0 0.0
  %2244 = vmatprep.subr.mxu0 0.0
  %2245 = vmatpush1.msra.mxu0 0.0
  %2246 = vmatprep.subr.mxu0 0.0
  %2247 = vmatpush1.msra.mxu0 0.0
  %2248 = vmatprep.subr.mxu0 0.0
  %2249 = vmatpush1.msra.mxu0 0.0
  %2250 = vmatprep.subr.mxu0 0.0
  %2251 = vmatpush1.msra.mxu0 0.0
  %2252 = vmatprep.subr.mxu0 0.0
  %2253 = vmatpush1.msra.mxu0 0.0
  %2254 = vmatprep.mubr.f32.mxu0 0.0
  %2255 = vmatmul.mubr.f32.gmra.mrb[0].mxu0 %v2187
  %v2256 = vpop.f32.mrb[0].mxu0
  %v2257 = vadd.f32 0.0, %v2256
  %v2258 = vpop.f32.mrb[0].mxu0
  %2259 = vdwg.mxu0
  %v2260 = vmul.f32 %v2113, %v2113
  %v2261 = vsub.f32 %v2257, %v2260
  %s2262 = scalar_lea.vmem %s12, 2
  %v2263 = vld [vmem:[%s2262] sm:$0x3]
  %v2264 = vadd.f32 %v2261, 1e-05
  %v2265 = vrsqrt.pop %v2264
  %v2266 = vmul.f32 %v2263, %v2265
  %v2267 = vmul.f32 %v2113, %v2266
  %v2269 = vrot.slane %v2267, 7
  %v2271 = vsub.f32 %v2263, %v2269
  %v2272 = vsel %vm1303, %v2266, %v2271
  %s2273 = scalar_lea.vmem %s14, 16
  %v2274 = vld [vmem:[%s2273] sm:$0xff]
  %v2275 = vld [vmem:[%s2273 + $0x8] sm:$0xff]
  %v2277 = vsel %vm69, %v2272, 0
  %2279 = vmatprep.subr.mxu0 0.0
  %2280 = vmatpush1.msra.mxu0 %v2274
  %2281 = vmatprep.subr.mxu0 0.0
  %2282 = vmatpush1.msra.mxu0 %v2275
  %2283 = vmatprep.subr.mxu0 0.0
  %2284 = vmatpush1.msra.mxu0 0.0
  %2285 = vmatprep.subr.mxu0 0.0
  %2286 = vmatpush1.msra.mxu0 0.0
  %2287 = vmatprep.subr.mxu0 0.0
  %2288 = vmatpush1.msra.mxu0 0.0
  %2289 = vmatprep.subr.mxu0 0.0
  %2290 = vmatpush1.msra.mxu0 0.0
  %2291 = vmatprep.subr.mxu0 0.0
  %2292 = vmatpush1.msra.mxu0 0.0
  %2293 = vmatprep.subr.mxu0 0.0
  %2294 = vmatpush1.msra.mxu0 0.0
  %2295 = vmatprep.subr.mxu0 0.0
  %2296 = vmatpush1.msra.mxu0 0.0
  %2297 = vmatprep.subr.mxu0 0.0
  %2298 = vmatpush1.msra.mxu0 0.0
  %2299 = vmatprep.subr.mxu0 0.0
  %2300 = vmatpush1.msra.mxu0 0.0
  %2301 = vmatprep.subr.mxu0 0.0
  %2302 = vmatpush1.msra.mxu0 0.0
  %2303 = vmatprep.subr.mxu0 0.0
  %2304 = vmatpush1.msra.mxu0 0.0
  %2305 = vmatprep.subr.mxu0 0.0
  %2306 = vmatpush1.msra.mxu0 0.0
  %2307 = vmatprep.subr.mxu0 0.0
  %2308 = vmatpush1.msra.mxu0 0.0
  %2309 = vmatprep.subr.mxu0 0.0
  %2310 = vmatpush1.msra.mxu0 0.0
  %2311 = vmatprep.subr.mxu0 0.0
  %2312 = vmatpush1.msra.mxu0 0.0
  %2313 = vmatprep.subr.mxu0 0.0
  %2314 = vmatpush1.msra.mxu0 0.0
  %2315 = vmatprep.subr.mxu0 0.0
  %2316 = vmatpush1.msra.mxu0 0.0
  %2317 = vmatprep.subr.mxu0 0.0
  %2318 = vmatpush1.msra.mxu0 0.0
  %2319 = vmatprep.subr.mxu0 0.0
  %2320 = vmatpush1.msra.mxu0 0.0
  %2321 = vmatprep.subr.mxu0 0.0
  %2322 = vmatpush1.msra.mxu0 0.0
  %2323 = vmatprep.subr.mxu0 0.0
  %2324 = vmatpush1.msra.mxu0 0.0
  %2325 = vmatprep.subr.mxu0 0.0
  %2326 = vmatpush1.msra.mxu0 0.0
  %2327 = vmatprep.subr.mxu0 0.0
  %2328 = vmatpush1.msra.mxu0 0.0
  %2329 = vmatprep.subr.mxu0 0.0
  %2330 = vmatpush1.msra.mxu0 0.0
  %2331 = vmatprep.subr.mxu0 0.0
  %2332 = vmatpush1.msra.mxu0 0.0
  %2333 = vmatprep.subr.mxu0 0.0
  %2334 = vmatpush1.msra.mxu0 0.0
  %2335 = vmatprep.subr.mxu0 0.0
  %2336 = vmatpush1.msra.mxu0 0.0
  %2337 = vmatprep.subr.mxu0 0.0
  %2338 = vmatpush1.msra.mxu0 0.0
  %2339 = vmatprep.subr.mxu0 0.0
  %2340 = vmatpush1.msra.mxu0 0.0
  %2341 = vmatprep.subr.mxu0 0.0
  %2342 = vmatpush1.msra.mxu0 0.0
  %2343 = vmatprep.mubr.f32.mxu0 0.0
  %2344 = vmatmul.mubr.f32.gmra.mrb[0].mxu0 %v2277
  %v2345 = vpop.f32.mrb[0].mxu0
  %v2346 = vadd.f32 0.0, %v2345
  %v2347 = vpop.f32.mrb[0].mxu0
  %2348 = vdwg.mxu0
  %v2349 = vlaneseq
  %v2350 = vshrl.u32 %v2349, 7
  %v2351 = vsub.s32 0, %v2350
  %v2352 = vrot.slane %v2346, %v2351
  %v2353 = vmul.f32 %v1952, %v2352
  %v2354 = vmul.f32 %v1953, %v2352
  %v2355 = vmul.f32 %v1954, %v2352
  %v2356 = vmul.f32 %v1955, %v2352
  %v2357 = vlaneseq
  %v2358 = vshrl.u32 %v2357, 7
  %v2359 = vsub.s32 1, %v2358
  %v2360 = vrot.slane %v2346, %v2359
  %v2361 = vadd.f32 %v2353, %v2360
  %v2362 = vadd.f32 %v2354, %v2360
  %v2363 = vadd.f32 %v2355, %v2360
  %v2364 = vadd.f32 %v2356, %v2360
  %v2365 = vmax.f32 %v2361, 0.0
  %v2366 = vmax.f32 %v2362, 0.0
  %v2367 = vmax.f32 %v2363, 0.0
  %v2368 = vmax.f32 %v2364, 0.0
  %v2369 = vpack.c.bf16 %v2366, %v2365
  %v2370 = vpack.c.bf16 %v2368, %v2367
  %v2371 = vld [vmem:[%s9] sm:$0xf]
  %v2372 = vld [vmem:[%s9 + $0x4] sm:$0xf]
  %v2373 = vld [vmem:[%s9 + $0x8] sm:$0xf]
  %v2374 = vld [vmem:[%s9 + $0xc] sm:$0xf]
  %v2375 = vld [vmem:[%s9 + $0x10] sm:$0xf]
  %v2376 = vld [vmem:[%s9 + $0x14] sm:$0xf]
  %v2377 = vld [vmem:[%s9 + $0x18] sm:$0xf]
  %v2378 = vld [vmem:[%s9 + $0x1c] sm:$0xf]
  %v2387 = vunpack.c.l.b16 %v2371
  %v2388 = vunpack.c.l.b16 %v2372
  %v2389 = vunpack.c.l.b16 %v2373
  %v2390 = vunpack.c.l.b16 %v2374
  %v2391 = vunpack.c.l.b16 %v2375
  %v2392 = vunpack.c.l.b16 %v2376
  %v2393 = vunpack.c.l.b16 %v2377
  %v2394 = vunpack.c.l.b16 %v2378
  %v2395 = vpack.c.b16 %v2388, %v2387
  %v2396 = vpack.c.b16 %v2390, %v2389
  %v2397 = vpack.c.b16 %v2392, %v2391
  %v2398 = vpack.c.b16 %v2394, %v2393
  %v2400 = vsel %vm1956, %v2395, 0
  %v2403 = vsel %vm1956, %v2396, 0
  %v2406 = vsel %vm1956, %v2397, 0
  %v2409 = vsel %vm1956, %v2398, 0
  %2411 = vmatprep.subr.bf16.mxu0 0
  %2412 = vmatpush1.bf16.msra.mxu0 %v2369
  %2413 = vmatprep.subr.bf16.mxu0 0
  %2414 = vmatpush1.bf16.msra.mxu0 %v2370
  %2415 = vmatprep.subr.bf16.mxu0 0
  %2416 = vmatpush1.bf16.msra.mxu0 0
  %2417 = vmatprep.subr.bf16.mxu0 0
  %2418 = vmatpush1.bf16.msra.mxu0 0
  %2419 = vmatprep.subr.bf16.mxu0 0
  %2420 = vmatpush1.bf16.msra.mxu0 0
  %2421 = vmatprep.subr.bf16.mxu0 0
  %2422 = vmatpush1.bf16.msra.mxu0 0
  %2423 = vmatprep.subr.bf16.mxu0 0
  %2424 = vmatpush1.bf16.msra.mxu0 0
  %2425 = vmatprep.subr.bf16.mxu0 0
  %2426 = vmatpush1.bf16.msra.mxu0 0
  %2427 = vmatprep.subr.bf16.mxu0 0
  %2428 = vmatpush1.bf16.msra.mxu0 0
  %2429 = vmatprep.subr.bf16.mxu0 0
  %2430 = vmatpush1.bf16.msra.mxu0 0
  %2431 = vmatprep.subr.bf16.mxu0 0
  %2432 = vmatpush1.bf16.msra.mxu0 0
  %2433 = vmatprep.subr.bf16.mxu0 0
  %2434 = vmatpush1.bf16.msra.mxu0 0
  %2435 = vmatprep.subr.bf16.mxu0 0
  %2436 = vmatpush1.bf16.msra.mxu0 0
  %2437 = vmatprep.subr.bf16.mxu0 0
  %2438 = vmatpush1.bf16.msra.mxu0 0
  %2439 = vmatprep.subr.bf16.mxu0 0
  %2440 = vmatpush1.bf16.msra.mxu0 0
  %2441 = vmatprep.subr.bf16.mxu0 0
  %2442 = vmatpush1.bf16.msra.mxu0 0
  %2443 = vmatprep.mubr.bf16.mxu0 0
  %2444 = vmatmul.mubr.bf16.gmra.mrb[0].mxu0 %v2400
  %v2445 = vpop.f32.mrb[0].mxu0
  %v2446 = vadd.f32 0.0, %v2445
  %v2447 = vpop.f32.mrb[0].mxu0
  %v2448 = vpop.f32.mrb[0].mxu0
  %v2449 = vadd.f32 0.0, %v2448
  %v2450 = vpop.f32.mrb[0].mxu0
  %2451 = vmatprep.mubr.bf16.mxu0 0
  %2452 = vmatmul.mubr.bf16.gmra.mrb[0].mxu0 %v2403
  %v2453 = vpop.f32.mrb[0].mxu0
  %v2454 = vadd.f32 0.0, %v2453
  %v2455 = vpop.f32.mrb[0].mxu0
  %v2456 = vpop.f32.mrb[0].mxu0
  %v2457 = vadd.f32 0.0, %v2456
  %v2458 = vpop.f32.mrb[0].mxu0
  %2459 = vmatprep.mubr.bf16.mxu0 0
  %2460 = vmatmul.mubr.bf16.gmra.mrb[0].mxu0 %v2406
  %v2461 = vpop.f32.mrb[0].mxu0
  %v2462 = vadd.f32 0.0, %v2461
  %v2463 = vpop.f32.mrb[0].mxu0
  %v2464 = vpop.f32.mrb[0].mxu0
  %v2465 = vadd.f32 0.0, %v2464
  %v2466 = vpop.f32.mrb[0].mxu0
  %2467 = vmatprep.mubr.bf16.mxu0 0
  %2468 = vmatmul.mubr.bf16.gmra.mrb[0].mxu0 %v2409
  %v2469 = vpop.f32.mrb[0].mxu0
  %v2470 = vadd.f32 0.0, %v2469
  %v2471 = vpop.f32.mrb[0].mxu0
  %v2472 = vpop.f32.mrb[0].mxu0
  %v2473 = vadd.f32 0.0, %v2472
  %v2474 = vpop.f32.mrb[0].mxu0
  %2475 = vdwg.mxu0
  %v2476 = vpack.c.bf16 %v2449, %v2446
  %v2477 = vpack.c.bf16 %v2457, %v2454
  %v2478 = vpack.c.bf16 %v2465, %v2462
  %v2479 = vpack.c.bf16 %v2473, %v2470
  %s2480 = scalar_lea.vmem %s11, 384
  %v2481 = vld [vmem:[%s2480] sm:$0xf]
  %v2482 = vld [vmem:[%s2480 + $0x4] sm:$0xf]
  %v2483 = vld [vmem:[%s2480 + $0x8] sm:$0xf]
  %v2484 = vld [vmem:[%s2480 + $0xc] sm:$0xf]
  %v2485 = vld [vmem:[%s2480 + $0x10] sm:$0xf]
  %v2486 = vld [vmem:[%s2480 + $0x14] sm:$0xf]
  %v2487 = vld [vmem:[%s2480 + $0x18] sm:$0xf]
  %v2488 = vld [vmem:[%s2480 + $0x1c] sm:$0xf]
  %v2489 = vld [vmem:[%s2480 + $0x20] sm:$0xf]
  %v2490 = vld [vmem:[%s2480 + $0x24] sm:$0xf]
  %v2491 = vld [vmem:[%s2480 + $0x28] sm:$0xf]
  %v2492 = vld [vmem:[%s2480 + $0x2c] sm:$0xf]
  %v2493 = vld [vmem:[%s2480 + $0x30] sm:$0xf]
  %v2494 = vld [vmem:[%s2480 + $0x34] sm:$0xf]
  %v2495 = vld [vmem:[%s2480 + $0x38] sm:$0xf]
  %v2496 = vld [vmem:[%s2480 + $0x3c] sm:$0xf]
  %s2497 = scalar_lea.vmem %s9, 32
  %v2498 = vld [vmem:[%s2497] sm:$0xf]
  %v2499 = vld [vmem:[%s2497 + $0x4] sm:$0xf]
  %v2500 = vld [vmem:[%s2497 + $0x8] sm:$0xf]
  %v2501 = vld [vmem:[%s2497 + $0xc] sm:$0xf]
  %v2502 = vld [vmem:[%s2497 + $0x10] sm:$0xf]
  %v2503 = vld [vmem:[%s2497 + $0x14] sm:$0xf]
  %v2504 = vld [vmem:[%s2497 + $0x18] sm:$0xf]
  %v2505 = vld [vmem:[%s2497 + $0x1c] sm:$0xf]
  %v2514 = vunpack.c.l.b16 %v2498
  %v2515 = vunpack.c.l.b16 %v2499
  %v2516 = vunpack.c.l.b16 %v2500
  %v2517 = vunpack.c.l.b16 %v2501
  %v2518 = vunpack.c.l.b16 %v2502
  %v2519 = vunpack.c.l.b16 %v2503
  %v2520 = vunpack.c.l.b16 %v2504
  %v2521 = vunpack.c.l.b16 %v2505
  %v2522 = vpack.c.b16 %v2515, %v2514
  %v2523 = vpack.c.b16 %v2517, %v2516
  %v2524 = vpack.c.b16 %v2519, %v2518
  %v2525 = vpack.c.b16 %v2521, %v2520
  %v2527 = vsel %vm1956, %v2522, 0
  %v2530 = vsel %vm1956, %v2523, 0
  %v2533 = vsel %vm1956, %v2524, 0
  %v2536 = vsel %vm1956, %v2525, 0
  %2538 = vmatprep.subr.bf16.mxu0 0
  %2539 = vmatpush1.bf16.msra.mxu0 %v2369
  %2540 = vmatprep.subr.bf16.mxu0 0
  %2541 = vmatpush1.bf16.msra.mxu0 %v2370
  %2542 = vmatprep.subr.bf16.mxu0 0
  %2543 = vmatpush1.bf16.msra.mxu0 0
  %2544 = vmatprep.subr.bf16.mxu0 0
  %2545 = vmatpush1.bf16.msra.mxu0 0
  %2546 = vmatprep.subr.bf16.mxu0 0
  %2547 = vmatpush1.bf16.msra.mxu0 0
  %2548 = vmatprep.subr.bf16.mxu0 0
  %2549 = vmatpush1.bf16.msra.mxu0 0
  %2550 = vmatprep.subr.bf16.mxu0 0
  %2551 = vmatpush1.bf16.msra.mxu0 0
  %2552 = vmatprep.subr.bf16.mxu0 0
  %2553 = vmatpush1.bf16.msra.mxu0 0
  %2554 = vmatprep.subr.bf16.mxu0 0
  %2555 = vmatpush1.bf16.msra.mxu0 0
  %2556 = vmatprep.subr.bf16.mxu0 0
  %2557 = vmatpush1.bf16.msra.mxu0 0
  %2558 = vmatprep.subr.bf16.mxu0 0
  %2559 = vmatpush1.bf16.msra.mxu0 0
  %2560 = vmatprep.subr.bf16.mxu0 0
  %2561 = vmatpush1.bf16.msra.mxu0 0
  %2562 = vmatprep.subr.bf16.mxu0 0
  %2563 = vmatpush1.bf16.msra.mxu0 0
  %2564 = vmatprep.subr.bf16.mxu0 0
  %2565 = vmatpush1.bf16.msra.mxu0 0
  %2566 = vmatprep.subr.bf16.mxu0 0
  %2567 = vmatpush1.bf16.msra.mxu0 0
  %2568 = vmatprep.subr.bf16.mxu0 0
  %2569 = vmatpush1.bf16.msra.mxu0 0
  %2570 = vmatprep.mubr.bf16.mxu0 0
  %2571 = vmatmul.mubr.bf16.gmra.mrb[0].mxu0 %v2527
  %v2572 = vpop.f32.mrb[0].mxu0
  %v2573 = vadd.f32 0.0, %v2572
  %v2574 = vpop.f32.mrb[0].mxu0
  %v2575 = vpop.f32.mrb[0].mxu0
  %v2576 = vadd.f32 0.0, %v2575
  %v2577 = vpop.f32.mrb[0].mxu0
  %2578 = vmatprep.mubr.bf16.mxu0 0
  %2579 = vmatmul.mubr.bf16.gmra.mrb[0].mxu0 %v2530
  %v2580 = vpop.f32.mrb[0].mxu0
  %v2581 = vadd.f32 0.0, %v2580
  %v2582 = vpop.f32.mrb[0].mxu0
  %v2583 = vpop.f32.mrb[0].mxu0
  %v2584 = vadd.f32 0.0, %v2583
  %v2585 = vpop.f32.mrb[0].mxu0
  %2586 = vmatprep.mubr.bf16.mxu0 0
  %2587 = vmatmul.mubr.bf16.gmra.mrb[0].mxu0 %v2533
  %v2588 = vpop.f32.mrb[0].mxu0
  %v2589 = vadd.f32 0.0, %v2588
  %v2590 = vpop.f32.mrb[0].mxu0
  %v2591 = vpop.f32.mrb[0].mxu0
  %v2592 = vadd.f32 0.0, %v2591
  %v2593 = vpop.f32.mrb[0].mxu0
  %2594 = vmatprep.mubr.bf16.mxu0 0
  %2595 = vmatmul.mubr.bf16.gmra.mrb[0].mxu0 %v2536
  %v2596 = vpop.f32.mrb[0].mxu0
  %v2597 = vadd.f32 0.0, %v2596
  %v2598 = vpop.f32.mrb[0].mxu0
  %v2599 = vpop.f32.mrb[0].mxu0
  %v2600 = vadd.f32 0.0, %v2599
  %v2601 = vpop.f32.mrb[0].mxu0
  %2602 = vdwg.mxu0
  %v2603 = vpack.c.bf16 %v2576, %v2573
  %v2604 = vpack.c.bf16 %v2584, %v2581
  %v2605 = vpack.c.bf16 %v2592, %v2589
  %v2606 = vpack.c.bf16 %v2600, %v2597
  %s2607 = scalar_lea.vmem %s11, 448
  %v2608 = vld [vmem:[%s2607] sm:$0xf]
  %v2609 = vld [vmem:[%s2607 + $0x4] sm:$0xf]
  %v2610 = vld [vmem:[%s2607 + $0x8] sm:$0xf]
  %v2611 = vld [vmem:[%s2607 + $0xc] sm:$0xf]
  %v2612 = vld [vmem:[%s2607 + $0x10] sm:$0xf]
  %v2613 = vld [vmem:[%s2607 + $0x14] sm:$0xf]
  %v2614 = vld [vmem:[%s2607 + $0x18] sm:$0xf]
  %v2615 = vld [vmem:[%s2607 + $0x1c] sm:$0xf]
  %v2616 = vld [vmem:[%s2607 + $0x20] sm:$0xf]
  %v2617 = vld [vmem:[%s2607 + $0x24] sm:$0xf]
  %v2618 = vld [vmem:[%s2607 + $0x28] sm:$0xf]
  %v2619 = vld [vmem:[%s2607 + $0x2c] sm:$0xf]
  %v2620 = vld [vmem:[%s2607 + $0x30] sm:$0xf]
  %v2621 = vld [vmem:[%s2607 + $0x34] sm:$0xf]
  %v2622 = vld [vmem:[%s2607 + $0x38] sm:$0xf]
  %v2623 = vld [vmem:[%s2607 + $0x3c] sm:$0xf]
  %v2640 = vunpack.c.l.b16 %v2608
  %v2641 = vunpack.c.l.b16 %v2609
  %v2642 = vunpack.c.l.b16 %v2610
  %v2643 = vunpack.c.l.b16 %v2611
  %v2644 = vunpack.c.l.b16 %v2612
  %v2645 = vunpack.c.l.b16 %v2613
  %v2646 = vunpack.c.l.b16 %v2614
  %v2647 = vunpack.c.l.b16 %v2615
  %v2648 = vunpack.c.l.b16 %v2616
  %v2649 = vunpack.c.l.b16 %v2617
  %v2650 = vunpack.c.l.b16 %v2618
  %v2651 = vunpack.c.l.b16 %v2619
  %v2652 = vunpack.c.l.b16 %v2620
  %v2653 = vunpack.c.l.b16 %v2621
  %v2654 = vunpack.c.l.b16 %v2622
  %v2655 = vunpack.c.l.b16 %v2623
  %v2656 = vpack.c.b16 %v2641, %v2640
  %v2657 = vpack.c.b16 %v2643, %v2642
  %v2658 = vpack.c.b16 %v2645, %v2644
  %v2659 = vpack.c.b16 %v2647, %v2646
  %v2660 = vpack.c.b16 %v2649, %v2648
  %v2661 = vpack.c.b16 %v2651, %v2650
  %v2662 = vpack.c.b16 %v2653, %v2652
  %v2663 = vpack.c.b16 %v2655, %v2654
  %2672 = vmatprep.subr.bf16.mxu0 0
  %2673 = vmatpush1.bf16.msra.mxu0 %v2656
  %2674 = vmatprep.subr.bf16.mxu0 0
  %2675 = vmatpush1.bf16.msra.mxu0 %v2657
  %2676 = vmatprep.subr.bf16.mxu0 0
  %2677 = vmatpush1.bf16.msra.mxu0 %v2658
  %2678 = vmatprep.subr.bf16.mxu0 0
  %2679 = vmatpush1.bf16.msra.mxu0 %v2659
  %2680 = vmatprep.subr.bf16.mxu0 0
  %2681 = vmatpush1.bf16.msra.mxu0 %v2660
  %2682 = vmatprep.subr.bf16.mxu0 0
  %2683 = vmatpush1.bf16.msra.mxu0 %v2661
  %2684 = vmatprep.subr.bf16.mxu0 0
  %2685 = vmatpush1.bf16.msra.mxu0 %v2662
  %2686 = vmatprep.subr.bf16.mxu0 0
  %2687 = vmatpush1.bf16.msra.mxu0 %v2663
  %2688 = vmatprep.subr.bf16.mxu0 0
  %2689 = vmatpush1.bf16.msra.mxu0 0
  %2690 = vmatprep.subr.bf16.mxu0 0
  %2691 = vmatpush1.bf16.msra.mxu0 0
  %2692 = vmatprep.subr.bf16.mxu0 0
  %2693 = vmatpush1.bf16.msra.mxu0 0
  %2694 = vmatprep.subr.bf16.mxu0 0
  %2695 = vmatpush1.bf16.msra.mxu0 0
  %2696 = vmatprep.subr.bf16.mxu0 0
  %2697 = vmatpush1.bf16.msra.mxu0 0
  %2698 = vmatprep.subr.bf16.mxu0 0
  %2699 = vmatpush1.bf16.msra.mxu0 0
  %2700 = vmatprep.subr.bf16.mxu0 0
  %2701 = vmatpush1.bf16.msra.mxu0 0
  %2702 = vmatprep.subr.bf16.mxu0 0
  %2703 = vmatpush1.bf16.msra.mxu0 0
  %2704 = vmatprep.mubr.bf16.mxu0 0
  %2705 = vmatmul.mubr.bf16.gmra.mrb[0].mxu0 %v2603
  %v2706 = vpop.f32.mrb[0].mxu0
  %v2707 = vadd.f32 0.0, %v2706
  %v2708 = vpop.f32.mrb[0].mxu0
  %v2709 = vpop.f32.mrb[0].mxu0
  %v2710 = vadd.f32 0.0, %v2709
  %v2711 = vpop.f32.mrb[0].mxu0
  %2712 = vmatprep.mubr.bf16.mxu0 0
  %2713 = vmatmul.mubr.bf16.gmra.mrb[0].mxu0 %v2604
  %v2714 = vpop.f32.mrb[0].mxu0
  %v2715 = vadd.f32 0.0, %v2714
  %v2716 = vpop.f32.mrb[0].mxu0
  %v2717 = vpop.f32.mrb[0].mxu0
  %v2718 = vadd.f32 0.0, %v2717
  %v2719 = vpop.f32.mrb[0].mxu0
  %2720 = vmatprep.mubr.bf16.mxu0 0
  %2721 = vmatmul.mubr.bf16.gmra.mrb[0].mxu0 %v2605
  %v2722 = vpop.f32.mrb[0].mxu0
  %v2723 = vadd.f32 0.0, %v2722
  %v2724 = vpop.f32.mrb[0].mxu0
  %v2725 = vpop.f32.mrb[0].mxu0
  %v2726 = vadd.f32 0.0, %v2725
  %v2727 = vpop.f32.mrb[0].mxu0
  %2728 = vmatprep.mubr.bf16.mxu0 0
  %2729 = vmatmul.mubr.bf16.gmra.mrb[0].mxu0 %v2606
  %v2730 = vpop.f32.mrb[0].mxu0
  %v2731 = vadd.f32 0.0, %v2730
  %v2732 = vpop.f32.mrb[0].mxu0
  %v2733 = vpop.f32.mrb[0].mxu0
  %v2734 = vadd.f32 0.0, %v2733
  %v2735 = vpop.f32.mrb[0].mxu0
  %2736 = vdwg.mxu0
  %v2753 = vunpack.c.l.b16 %v2481
  %v2754 = vunpack.c.l.b16 %v2482
  %v2755 = vunpack.c.l.b16 %v2483
  %v2756 = vunpack.c.l.b16 %v2484
  %v2757 = vunpack.c.l.b16 %v2485
  %v2758 = vunpack.c.l.b16 %v2486
  %v2759 = vunpack.c.l.b16 %v2487
  %v2760 = vunpack.c.l.b16 %v2488
  %v2761 = vunpack.c.l.b16 %v2489
  %v2762 = vunpack.c.l.b16 %v2490
  %v2763 = vunpack.c.l.b16 %v2491
  %v2764 = vunpack.c.l.b16 %v2492
  %v2765 = vunpack.c.l.b16 %v2493
  %v2766 = vunpack.c.l.b16 %v2494
  %v2767 = vunpack.c.l.b16 %v2495
  %v2768 = vunpack.c.l.b16 %v2496
  %v2769 = vpack.c.b16 %v2754, %v2753
  %v2770 = vpack.c.b16 %v2756, %v2755
  %v2771 = vpack.c.b16 %v2758, %v2757
  %v2772 = vpack.c.b16 %v2760, %v2759
  %v2773 = vpack.c.b16 %v2762, %v2761
  %v2774 = vpack.c.b16 %v2764, %v2763
  %v2775 = vpack.c.b16 %v2766, %v2765
  %v2776 = vpack.c.b16 %v2768, %v2767
  %2785 = vmatprep.subr.bf16.mxu0 0
  %2786 = vmatpush1.bf16.msra.mxu0 %v2769
  %2787 = vmatprep.subr.bf16.mxu0 0
  %2788 = vmatpush1.bf16.msra.mxu0 %v2770
  %2789 = vmatprep.subr.bf16.mxu0 0
  %2790 = vmatpush1.bf16.msra.mxu0 %v2771
  %2791 = vmatprep.subr.bf16.mxu0 0
  %2792 = vmatpush1.bf16.msra.mxu0 %v2772
  %2793 = vmatprep.subr.bf16.mxu0 0
  %2794 = vmatpush1.bf16.msra.mxu0 %v2773
  %2795 = vmatprep.subr.bf16.mxu0 0
  %2796 = vmatpush1.bf16.msra.mxu0 %v2774
  %2797 = vmatprep.subr.bf16.mxu0 0
  %2798 = vmatpush1.bf16.msra.mxu0 %v2775
  %2799 = vmatprep.subr.bf16.mxu0 0
  %2800 = vmatpush1.bf16.msra.mxu0 %v2776
  %2801 = vmatprep.subr.bf16.mxu0 0
  %2802 = vmatpush1.bf16.msra.mxu0 0
  %2803 = vmatprep.subr.bf16.mxu0 0
  %2804 = vmatpush1.bf16.msra.mxu0 0
  %2805 = vmatprep.subr.bf16.mxu0 0
  %2806 = vmatpush1.bf16.msra.mxu0 0
  %2807 = vmatprep.subr.bf16.mxu0 0
  %2808 = vmatpush1.bf16.msra.mxu0 0
  %2809 = vmatprep.subr.bf16.mxu0 0
  %2810 = vmatpush1.bf16.msra.mxu0 0
  %2811 = vmatprep.subr.bf16.mxu0 0
  %2812 = vmatpush1.bf16.msra.mxu0 0
  %2813 = vmatprep.subr.bf16.mxu0 0
  %2814 = vmatpush1.bf16.msra.mxu0 0
  %2815 = vmatprep.subr.bf16.mxu0 0
  %2816 = vmatpush1.bf16.msra.mxu0 0
  %2817 = vmatprep.mubr.bf16.mxu0 0
  %2818 = vmatmul.mubr.bf16.gmra.mrb[0].mxu0 %v2476
  %v2819 = vpop.f32.mrb[0].mxu0
  %v2820 = vadd.f32 %v2707, %v2819
  %v2821 = vpop.f32.mrb[0].mxu0
  %v2822 = vpop.f32.mrb[0].mxu0
  %v2823 = vadd.f32 %v2710, %v2822
  %v2824 = vpop.f32.mrb[0].mxu0
  %2825 = vmatprep.mubr.bf16.mxu0 0
  %2826 = vmatmul.mubr.bf16.gmra.mrb[0].mxu0 %v2477
  %v2827 = vpop.f32.mrb[0].mxu0
  %v2828 = vadd.f32 %v2715, %v2827
  %v2829 = vpop.f32.mrb[0].mxu0
  %v2830 = vpop.f32.mrb[0].mxu0
  %v2831 = vadd.f32 %v2718, %v2830
  %v2832 = vpop.f32.mrb[0].mxu0
  %2833 = vmatprep.mubr.bf16.mxu0 0
  %2834 = vmatmul.mubr.bf16.gmra.mrb[0].mxu0 %v2478
  %v2835 = vpop.f32.mrb[0].mxu0
  %v2836 = vadd.f32 %v2723, %v2835
  %v2837 = vpop.f32.mrb[0].mxu0
  %v2838 = vpop.f32.mrb[0].mxu0
  %v2839 = vadd.f32 %v2726, %v2838
  %v2840 = vpop.f32.mrb[0].mxu0
  %2841 = vmatprep.mubr.bf16.mxu0 0
  %2842 = vmatmul.mubr.bf16.gmra.mrb[0].mxu0 %v2479
  %v2843 = vpop.f32.mrb[0].mxu0
  %v2844 = vadd.f32 %v2731, %v2843
  %v2845 = vpop.f32.mrb[0].mxu0
  %v2846 = vpop.f32.mrb[0].mxu0
  %v2847 = vadd.f32 %v2734, %v2846
  %v2848 = vpop.f32.mrb[0].mxu0
  %2849 = vdwg.mxu0
  %s2850 = scalar_lea.vmem %s9, 64
  %v2851 = vld [vmem:[%s2850] sm:$0xf]
  %v2852 = vld [vmem:[%s2850 + $0x4] sm:$0xf]
  %v2853 = vld [vmem:[%s2850 + $0x8] sm:$0xf]
  %v2854 = vld [vmem:[%s2850 + $0xc] sm:$0xf]
  %v2855 = vld [vmem:[%s2850 + $0x10] sm:$0xf]
  %v2856 = vld [vmem:[%s2850 + $0x14] sm:$0xf]
  %v2857 = vld [vmem:[%s2850 + $0x18] sm:$0xf]
  %v2858 = vld [vmem:[%s2850 + $0x1c] sm:$0xf]
  %v2867 = vunpack.c.l.b16 %v2851
  %v2868 = vunpack.c.l.b16 %v2852
  %v2869 = vunpack.c.l.b16 %v2853
  %v2870 = vunpack.c.l.b16 %v2854
  %v2871 = vunpack.c.l.b16 %v2855
  %v2872 = vunpack.c.l.b16 %v2856
  %v2873 = vunpack.c.l.b16 %v2857
  %v2874 = vunpack.c.l.b16 %v2858
  %v2875 = vpack.c.b16 %v2868, %v2867
  %v2876 = vpack.c.b16 %v2870, %v2869
  %v2877 = vpack.c.b16 %v2872, %v2871
  %v2878 = vpack.c.b16 %v2874, %v2873
  %v2880 = vsel %vm1956, %v2875, 0
  %v2883 = vsel %vm1956, %v2876, 0
  %v2886 = vsel %vm1956, %v2877, 0
  %v2889 = vsel %vm1956, %v2878, 0
  %2891 = vmatprep.subr.bf16.mxu0 0
  %2892 = vmatpush1.bf16.msra.mxu0 %v2369
  %2893 = vmatprep.subr.bf16.mxu0 0
  %2894 = vmatpush1.bf16.msra.mxu0 %v2370
  %2895 = vmatprep.subr.bf16.mxu0 0
  %2896 = vmatpush1.bf16.msra.mxu0 0
  %2897 = vmatprep.subr.bf16.mxu0 0
  %2898 = vmatpush1.bf16.msra.mxu0 0
  %2899 = vmatprep.subr.bf16.mxu0 0
  %2900 = vmatpush1.bf16.msra.mxu0 0
  %2901 = vmatprep.subr.bf16.mxu0 0
  %2902 = vmatpush1.bf16.msra.mxu0 0
  %2903 = vmatprep.subr.bf16.mxu0 0
  %2904 = vmatpush1.bf16.msra.mxu0 0
  %2905 = vmatprep.subr.bf16.mxu0 0
  %2906 = vmatpush1.bf16.msra.mxu0 0
  %2907 = vmatprep.subr.bf16.mxu0 0
  %2908 = vmatpush1.bf16.msra.mxu0 0
  %2909 = vmatprep.subr.bf16.mxu0 0
  %2910 = vmatpush1.bf16.msra.mxu0 0
  %2911 = vmatprep.subr.bf16.mxu0 0
  %2912 = vmatpush1.bf16.msra.mxu0 0
  %2913 = vmatprep.subr.bf16.mxu0 0
  %2914 = vmatpush1.bf16.msra.mxu0 0
  %2915 = vmatprep.subr.bf16.mxu0 0
  %2916 = vmatpush1.bf16.msra.mxu0 0
  %2917 = vmatprep.subr.bf16.mxu0 0
  %2918 = vmatpush1.bf16.msra.mxu0 0
  %2919 = vmatprep.subr.bf16.mxu0 0
  %2920 = vmatpush1.bf16.msra.mxu0 0
  %2921 = vmatprep.subr.bf16.mxu0 0
  %2922 = vmatpush1.bf16.msra.mxu0 0
  %2923 = vmatprep.mubr.bf16.mxu0 0
  %2924 = vmatmul.mubr.bf16.gmra.mrb[0].mxu0 %v2880
  %v2925 = vpop.f32.mrb[0].mxu0
  %v2926 = vadd.f32 0.0, %v2925
  %v2927 = vpop.f32.mrb[0].mxu0
  %v2928 = vpop.f32.mrb[0].mxu0
  %v2929 = vadd.f32 0.0, %v2928
  %v2930 = vpop.f32.mrb[0].mxu0
  %2931 = vmatprep.mubr.bf16.mxu0 0
  %2932 = vmatmul.mubr.bf16.gmra.mrb[0].mxu0 %v2883
  %v2933 = vpop.f32.mrb[0].mxu0
  %v2934 = vadd.f32 0.0, %v2933
  %v2935 = vpop.f32.mrb[0].mxu0
  %v2936 = vpop.f32.mrb[0].mxu0
  %v2937 = vadd.f32 0.0, %v2936
  %v2938 = vpop.f32.mrb[0].mxu0
  %2939 = vmatprep.mubr.bf16.mxu0 0
  %2940 = vmatmul.mubr.bf16.gmra.mrb[0].mxu0 %v2886
  %v2941 = vpop.f32.mrb[0].mxu0
  %v2942 = vadd.f32 0.0, %v2941
  %v2943 = vpop.f32.mrb[0].mxu0
  %v2944 = vpop.f32.mrb[0].mxu0
  %v2945 = vadd.f32 0.0, %v2944
  %v2946 = vpop.f32.mrb[0].mxu0
  %2947 = vmatprep.mubr.bf16.mxu0 0
  %2948 = vmatmul.mubr.bf16.gmra.mrb[0].mxu0 %v2889
  %v2949 = vpop.f32.mrb[0].mxu0
  %v2950 = vadd.f32 0.0, %v2949
  %v2951 = vpop.f32.mrb[0].mxu0
  %v2952 = vpop.f32.mrb[0].mxu0
  %v2953 = vadd.f32 0.0, %v2952
  %v2954 = vpop.f32.mrb[0].mxu0
  %2955 = vdwg.mxu0
  %v2956 = vpack.c.bf16 %v2929, %v2926
  %v2957 = vpack.c.bf16 %v2937, %v2934
  %v2958 = vpack.c.bf16 %v2945, %v2942
  %v2959 = vpack.c.bf16 %v2953, %v2950
  %s2960 = scalar_lea.vmem %s11, 512
  %v2961 = vld [vmem:[%s2960] sm:$0xf]
  %v2962 = vld [vmem:[%s2960 + $0x4] sm:$0xf]
  %v2963 = vld [vmem:[%s2960 + $0x8] sm:$0xf]
  %v2964 = vld [vmem:[%s2960 + $0xc] sm:$0xf]
  %v2965 = vld [vmem:[%s2960 + $0x10] sm:$0xf]
  %v2966 = vld [vmem:[%s2960 + $0x14] sm:$0xf]
  %v2967 = vld [vmem:[%s2960 + $0x18] sm:$0xf]
  %v2968 = vld [vmem:[%s2960 + $0x1c] sm:$0xf]
  %v2969 = vld [vmem:[%s2960 + $0x20] sm:$0xf]
  %v2970 = vld [vmem:[%s2960 + $0x24] sm:$0xf]
  %v2971 = vld [vmem:[%s2960 + $0x28] sm:$0xf]
  %v2972 = vld [vmem:[%s2960 + $0x2c] sm:$0xf]
  %v2973 = vld [vmem:[%s2960 + $0x30] sm:$0xf]
  %v2974 = vld [vmem:[%s2960 + $0x34] sm:$0xf]
  %v2975 = vld [vmem:[%s2960 + $0x38] sm:$0xf]
  %v2976 = vld [vmem:[%s2960 + $0x3c] sm:$0xf]
  %v2993 = vunpack.c.l.b16 %v2961
  %v2994 = vunpack.c.l.b16 %v2962
  %v2995 = vunpack.c.l.b16 %v2963
  %v2996 = vunpack.c.l.b16 %v2964
  %v2997 = vunpack.c.l.b16 %v2965
  %v2998 = vunpack.c.l.b16 %v2966
  %v2999 = vunpack.c.l.b16 %v2967
  %v3000 = vunpack.c.l.b16 %v2968
  %v3001 = vunpack.c.l.b16 %v2969
  %v3002 = vunpack.c.l.b16 %v2970
  %v3003 = vunpack.c.l.b16 %v2971
  %v3004 = vunpack.c.l.b16 %v2972
  %v3005 = vunpack.c.l.b16 %v2973
  %v3006 = vunpack.c.l.b16 %v2974
  %v3007 = vunpack.c.l.b16 %v2975
  %v3008 = vunpack.c.l.b16 %v2976
  %v3009 = vpack.c.b16 %v2994, %v2993
  %v3010 = vpack.c.b16 %v2996, %v2995
  %v3011 = vpack.c.b16 %v2998, %v2997
  %v3012 = vpack.c.b16 %v3000, %v2999
  %v3013 = vpack.c.b16 %v3002, %v3001
  %v3014 = vpack.c.b16 %v3004, %v3003
  %v3015 = vpack.c.b16 %v3006, %v3005
  %v3016 = vpack.c.b16 %v3008, %v3007
  %3025 = vmatprep.subr.bf16.mxu0 0
  %3026 = vmatpush1.bf16.msra.mxu0 %v3009
  %3027 = vmatprep.subr.bf16.mxu0 0
  %3028 = vmatpush1.bf16.msra.mxu0 %v3010
  %3029 = vmatprep.subr.bf16.mxu0 0
  %3030 = vmatpush1.bf16.msra.mxu0 %v3011
  %3031 = vmatprep.subr.bf16.mxu0 0
  %3032 = vmatpush1.bf16.msra.mxu0 %v3012
  %3033 = vmatprep.subr.bf16.mxu0 0
  %3034 = vmatpush1.bf16.msra.mxu0 %v3013
  %3035 = vmatprep.subr.bf16.mxu0 0
  %3036 = vmatpush1.bf16.msra.mxu0 %v3014
  %3037 = vmatprep.subr.bf16.mxu0 0
  %3038 = vmatpush1.bf16.msra.mxu0 %v3015
  %3039 = vmatprep.subr.bf16.mxu0 0
  %3040 = vmatpush1.bf16.msra.mxu0 %v3016
  %3041 = vmatprep.subr.bf16.mxu0 0
  %3042 = vmatpush1.bf16.msra.mxu0 0
  %3043 = vmatprep.subr.bf16.mxu0 0
  %3044 = vmatpush1.bf16.msra.mxu0 0
  %3045 = vmatprep.subr.bf16.mxu0 0
  %3046 = vmatpush1.bf16.msra.mxu0 0
  %3047 = vmatprep.subr.bf16.mxu0 0
  %3048 = vmatpush1.bf16.msra.mxu0 0
  %3049 = vmatprep.subr.bf16.mxu0 0
  %3050 = vmatpush1.bf16.msra.mxu0 0
  %3051 = vmatprep.subr.bf16.mxu0 0
  %3052 = vmatpush1.bf16.msra.mxu0 0
  %3053 = vmatprep.subr.bf16.mxu0 0
  %3054 = vmatpush1.bf16.msra.mxu0 0
  %3055 = vmatprep.subr.bf16.mxu0 0
  %3056 = vmatpush1.bf16.msra.mxu0 0
  %3057 = vmatprep.mubr.bf16.mxu0 0
  %3058 = vmatmul.mubr.bf16.gmra.mrb[0].mxu0 %v2956
  %v3059 = vpop.f32.mrb[0].mxu0
  %v3060 = vadd.f32 0.0, %v3059
  %v3061 = vpop.f32.mrb[0].mxu0
  %v3062 = vpop.f32.mrb[0].mxu0
  %v3063 = vadd.f32 0.0, %v3062
  %v3064 = vpop.f32.mrb[0].mxu0
  %3065 = vmatprep.mubr.bf16.mxu0 0
  %3066 = vmatmul.mubr.bf16.gmra.mrb[0].mxu0 %v2957
  %v3067 = vpop.f32.mrb[0].mxu0
  %v3068 = vadd.f32 0.0, %v3067
  %v3069 = vpop.f32.mrb[0].mxu0
  %v3070 = vpop.f32.mrb[0].mxu0
  %v3071 = vadd.f32 0.0, %v3070
  %v3072 = vpop.f32.mrb[0].mxu0
  %3073 = vmatprep.mubr.bf16.mxu0 0
  %3074 = vmatmul.mubr.bf16.gmra.mrb[0].mxu0 %v2958
  %v3075 = vpop.f32.mrb[0].mxu0
  %v3076 = vadd.f32 0.0, %v3075
  %v3077 = vpop.f32.mrb[0].mxu0
  %v3078 = vpop.f32.mrb[0].mxu0
  %v3079 = vadd.f32 0.0, %v3078
  %v3080 = vpop.f32.mrb[0].mxu0
  %3081 = vmatprep.mubr.bf16.mxu0 0
  %3082 = vmatmul.mubr.bf16.gmra.mrb[0].mxu0 %v2959
  %v3083 = vpop.f32.mrb[0].mxu0
  %v3084 = vadd.f32 0.0, %v3083
  %v3085 = vpop.f32.mrb[0].mxu0
  %v3086 = vpop.f32.mrb[0].mxu0
  %v3087 = vadd.f32 0.0, %v3086
  %v3088 = vpop.f32.mrb[0].mxu0
  %3089 = vdwg.mxu0
  %v3090 = vadd.f32 %v2820, %v3060
  %v3091 = vadd.f32 %v2823, %v3063
  %v3092 = vadd.f32 %v2828, %v3068
  %v3093 = vadd.f32 %v2831, %v3071
  %v3094 = vadd.f32 %v2836, %v3076
  %v3095 = vadd.f32 %v2839, %v3079
  %v3096 = vadd.f32 %v2844, %v3084
  %v3097 = vadd.f32 %v2847, %v3087
  %vm3098 = vcmask 523264
  %v3099 = vsel %vm3098, 1.0, 0
  %3101 = vmatprep.subr.mxu0 0.0
  %3102 = vmatpush1.msra.mxu0 %v3090
  %3103 = vmatprep.subr.mxu0 0.0
  %3104 = vmatpush1.msra.mxu0 %v3091
  %3105 = vmatprep.subr.mxu0 0.0
  %3106 = vmatpush1.msra.mxu0 %v3092
  %3107 = vmatprep.subr.mxu0 0.0
  %3108 = vmatpush1.msra.mxu0 %v3093
  %3109 = vmatprep.subr.mxu0 0.0
  %3110 = vmatpush1.msra.mxu0 %v3094
  %3111 = vmatprep.subr.mxu0 0.0
  %3112 = vmatpush1.msra.mxu0 %v3095
  %3113 = vmatprep.subr.mxu0 0.0
  %3114 = vmatpush1.msra.mxu0 %v3096
  %3115 = vmatprep.subr.mxu0 0.0
  %3116 = vmatpush1.msra.mxu0 %v3097
  %3117 = vmatprep.subr.mxu0 0.0
  %3118 = vmatpush1.msra.mxu0 0.0
  %3119 = vmatprep.subr.mxu0 0.0
  %3120 = vmatpush1.msra.mxu0 0.0
  %3121 = vmatprep.subr.mxu0 0.0
  %3122 = vmatpush1.msra.mxu0 0.0
  %3123 = vmatprep.subr.mxu0 0.0
  %3124 = vmatpush1.msra.mxu0 0.0
  %3125 = vmatprep.subr.mxu0 0.0
  %3126 = vmatpush1.msra.mxu0 0.0
  %3127 = vmatprep.subr.mxu0 0.0
  %3128 = vmatpush1.msra.mxu0 0.0
  %3129 = vmatprep.subr.mxu0 0.0
  %3130 = vmatpush1.msra.mxu0 0.0
  %3131 = vmatprep.subr.mxu0 0.0
  %3132 = vmatpush1.msra.mxu0 0.0
  %3133 = vmatprep.subr.mxu0 0.0
  %3134 = vmatpush1.msra.mxu0 0.0
  %3135 = vmatprep.subr.mxu0 0.0
  %3136 = vmatpush1.msra.mxu0 0.0
  %3137 = vmatprep.subr.mxu0 0.0
  %3138 = vmatpush1.msra.mxu0 0.0
  %3139 = vmatprep.subr.mxu0 0.0
  %3140 = vmatpush1.msra.mxu0 0.0
  %3141 = vmatprep.subr.mxu0 0.0
  %3142 = vmatpush1.msra.mxu0 0.0
  %3143 = vmatprep.subr.mxu0 0.0
  %3144 = vmatpush1.msra.mxu0 0.0
  %3145 = vmatprep.subr.mxu0 0.0
  %3146 = vmatpush1.msra.mxu0 0.0
  %3147 = vmatprep.subr.mxu0 0.0
  %3148 = vmatpush1.msra.mxu0 0.0
  %3149 = vmatprep.subr.mxu0 0.0
  %3150 = vmatpush1.msra.mxu0 0.0
  %3151 = vmatprep.subr.mxu0 0.0
  %3152 = vmatpush1.msra.mxu0 0.0
  %3153 = vmatprep.subr.mxu0 0.0
  %3154 = vmatpush1.msra.mxu0 0.0
  %3155 = vmatprep.subr.mxu0 0.0
  %3156 = vmatpush1.msra.mxu0 0.0
  %3157 = vmatprep.subr.mxu0 0.0
  %3158 = vmatpush1.msra.mxu0 0.0
  %3159 = vmatprep.subr.mxu0 0.0
  %3160 = vmatpush1.msra.mxu0 0.0
  %3161 = vmatprep.subr.mxu0 0.0
  %3162 = vmatpush1.msra.mxu0 0.0
  %3163 = vmatprep.subr.mxu0 0.0
  %3164 = vmatpush1.msra.mxu0 0.0
  %3165 = vmatprep.mubr.f32.mxu0 0.0
  %3166 = vmatmul.mubr.f32.gmra.mrb[0].mxu0 %v3099
  %v3167 = vpop.f32.mrb[0].mxu0
  %v3168 = vadd.f32 0.0, %v3167
  %v3169 = vpop.f32.mrb[0].mxu0
  %3170 = vdwg.mxu0
  %s3171 = scalar_lea.vmem %s13, 256
  %v3172 = vld [vmem:[%s3171] sm:$0xff]
  %v3173 = vld [vmem:[%s3171 + $0x8] sm:$0xff]
  %v3174 = vld [vmem:[%s3171 + $0x10] sm:$0xff]
  %v3175 = vld [vmem:[%s3171 + $0x18] sm:$0xff]
  %v3176 = vld [vmem:[%s3171 + $0x20] sm:$0xff]
  %v3177 = vld [vmem:[%s3171 + $0x28] sm:$0xff]
  %v3178 = vld [vmem:[%s3171 + $0x30] sm:$0xff]
  %v3179 = vld [vmem:[%s3171 + $0x38] sm:$0xff]
  %v3180 = vld [vmem:[%s3171 + $0x40] sm:$0xff]
  %v3181 = vld [vmem:[%s3171 + $0x48] sm:$0xff]
  %v3182 = vld [vmem:[%s3171 + $0x50] sm:$0xff]
  %v3183 = vld [vmem:[%s3171 + $0x58] sm:$0xff]
  %v3184 = vld [vmem:[%s3171 + $0x60] sm:$0xff]
  %v3185 = vld [vmem:[%s3171 + $0x68] sm:$0xff]
  %v3186 = vld [vmem:[%s3171 + $0x70] sm:$0xff]
  %v3187 = vld [vmem:[%s3171 + $0x78] sm:$0xff]
  %3188 = vmatprep.subr.mxu0 0.0
  %3189 = vmatpush1.msra.mxu0 %v3172
  %3190 = vmatprep.subr.mxu0 0.0
  %3191 = vmatpush1.msra.mxu0 %v3173
  %3192 = vmatprep.subr.mxu0 0.0
  %3193 = vmatpush1.msra.mxu0 %v3174
  %3194 = vmatprep.subr.mxu0 0.0
  %3195 = vmatpush1.msra.mxu0 %v3175
  %3196 = vmatprep.subr.mxu0 0.0
  %3197 = vmatpush1.msra.mxu0 %v3176
  %3198 = vmatprep.subr.mxu0 0.0
  %3199 = vmatpush1.msra.mxu0 %v3177
  %3200 = vmatprep.subr.mxu0 0.0
  %3201 = vmatpush1.msra.mxu0 %v3178
  %3202 = vmatprep.subr.mxu0 0.0
  %3203 = vmatpush1.msra.mxu0 %v3179
  %3204 = vmatprep.subr.mxu0 0.0
  %3205 = vmatpush1.msra.mxu0 %v3180
  %3206 = vmatprep.subr.mxu0 0.0
  %3207 = vmatpush1.msra.mxu0 %v3181
  %3208 = vmatprep.subr.mxu0 0.0
  %3209 = vmatpush1.msra.mxu0 %v3182
  %3210 = vmatprep.subr.mxu0 0.0
  %3211 = vmatpush1.msra.mxu0 %v3183
  %3212 = vmatprep.subr.mxu0 0.0
  %3213 = vmatpush1.msra.mxu0 %v3184
  %3214 = vmatprep.subr.mxu0 0.0
  %3215 = vmatpush1.msra.mxu0 %v3185
  %3216 = vmatprep.subr.mxu0 0.0
  %3217 = vmatpush1.msra.mxu0 %v3186
  %3218 = vmatprep.subr.mxu0 0.0
  %3219 = vmatpush1.msra.mxu0 %v3187
  %3220 = vmatprep.subr.mxu0 0.0
  %3221 = vmatpush1.msra.mxu0 0.0
  %3222 = vmatprep.subr.mxu0 0.0
  %3223 = vmatpush1.msra.mxu0 0.0
  %3224 = vmatprep.subr.mxu0 0.0
  %3225 = vmatpush1.msra.mxu0 0.0
  %3226 = vmatprep.subr.mxu0 0.0
  %3227 = vmatpush1.msra.mxu0 0.0
  %3228 = vmatprep.subr.mxu0 0.0
  %3229 = vmatpush1.msra.mxu0 0.0
  %3230 = vmatprep.subr.mxu0 0.0
  %3231 = vmatpush1.msra.mxu0 0.0
  %3232 = vmatprep.subr.mxu0 0.0
  %3233 = vmatpush1.msra.mxu0 0.0
  %3234 = vmatprep.subr.mxu0 0.0
  %3235 = vmatpush1.msra.mxu0 0.0
  %3236 = vmatprep.subr.mxu0 0.0
  %3237 = vmatpush1.msra.mxu0 0.0
  %3238 = vmatprep.subr.mxu0 0.0
  %3239 = vmatpush1.msra.mxu0 0.0
  %3240 = vmatprep.subr.mxu0 0.0
  %3241 = vmatpush1.msra.mxu0 0.0
  %3242 = vmatprep.subr.mxu0 0.0
  %3243 = vmatpush1.msra.mxu0 0.0
  %3244 = vmatprep.subr.mxu0 0.0
  %3245 = vmatpush1.msra.mxu0 0.0
  %3246 = vmatprep.subr.mxu0 0.0
  %3247 = vmatpush1.msra.mxu0 0.0
  %3248 = vmatprep.subr.mxu0 0.0
  %3249 = vmatpush1.msra.mxu0 0.0
  %3250 = vmatprep.subr.mxu0 0.0
  %3251 = vmatpush1.msra.mxu0 0.0
  %3252 = vmatprep.mubr.f32.mxu0 0.0
  %3253 = vmatmul.mubr.f32.gmra.mrb[0].mxu0 %v3168
  %v3254 = vpop.f32.mrb[0].mxu0
  %v3255 = vadd.f32 0.0, %v3254
  %v3256 = vpop.f32.mrb[0].mxu0
  %3257 = vdwg.mxu0
  %v3258 = vmul.f32 %v3090, %v3090
  %v3259 = vmul.f32 %v3091, %v3091
  %v3260 = vmul.f32 %v3092, %v3092
  %v3261 = vmul.f32 %v3093, %v3093
  %v3262 = vmul.f32 %v3094, %v3094
  %v3263 = vmul.f32 %v3095, %v3095
  %v3264 = vmul.f32 %v3096, %v3096
  %v3265 = vmul.f32 %v3097, %v3097
  %3266 = vmatprep.subr.mxu0 0.0
  %3267 = vmatpush1.msra.mxu0 %v3258
  %3268 = vmatprep.subr.mxu0 0.0
  %3269 = vmatpush1.msra.mxu0 %v3259
  %3270 = vmatprep.subr.mxu0 0.0
  %3271 = vmatpush1.msra.mxu0 %v3260
  %3272 = vmatprep.subr.mxu0 0.0
  %3273 = vmatpush1.msra.mxu0 %v3261
  %3274 = vmatprep.subr.mxu0 0.0
  %3275 = vmatpush1.msra.mxu0 %v3262
  %3276 = vmatprep.subr.mxu0 0.0
  %3277 = vmatpush1.msra.mxu0 %v3263
  %3278 = vmatprep.subr.mxu0 0.0
  %3279 = vmatpush1.msra.mxu0 %v3264
  %3280 = vmatprep.subr.mxu0 0.0
  %3281 = vmatpush1.msra.mxu0 %v3265
  %3282 = vmatprep.subr.mxu0 0.0
  %3283 = vmatpush1.msra.mxu0 0.0
  %3284 = vmatprep.subr.mxu0 0.0
  %3285 = vmatpush1.msra.mxu0 0.0
  %3286 = vmatprep.subr.mxu0 0.0
  %3287 = vmatpush1.msra.mxu0 0.0
  %3288 = vmatprep.subr.mxu0 0.0
  %3289 = vmatpush1.msra.mxu0 0.0
  %3290 = vmatprep.subr.mxu0 0.0
  %3291 = vmatpush1.msra.mxu0 0.0
  %3292 = vmatprep.subr.mxu0 0.0
  %3293 = vmatpush1.msra.mxu0 0.0
  %3294 = vmatprep.subr.mxu0 0.0
  %3295 = vmatpush1.msra.mxu0 0.0
  %3296 = vmatprep.subr.mxu0 0.0
  %3297 = vmatpush1.msra.mxu0 0.0
  %3298 = vmatprep.subr.mxu0 0.0
  %3299 = vmatpush1.msra.mxu0 0.0
  %3300 = vmatprep.subr.mxu0 0.0
  %3301 = vmatpush1.msra.mxu0 0.0
  %3302 = vmatprep.subr.mxu0 0.0
  %3303 = vmatpush1.msra.mxu0 0.0
  %3304 = vmatprep.subr.mxu0 0.0
  %3305 = vmatpush1.msra.mxu0 0.0
  %3306 = vmatprep.subr.mxu0 0.0
  %3307 = vmatpush1.msra.mxu0 0.0
  %3308 = vmatprep.subr.mxu0 0.0
  %3309 = vmatpush1.msra.mxu0 0.0
  %3310 = vmatprep.subr.mxu0 0.0
  %3311 = vmatpush1.msra.mxu0 0.0
  %3312 = vmatprep.subr.mxu0 0.0
  %3313 = vmatpush1.msra.mxu0 0.0
  %3314 = vmatprep.subr.mxu0 0.0
  %3315 = vmatpush1.msra.mxu0 0.0
  %3316 = vmatprep.subr.mxu0 0.0
  %3317 = vmatpush1.msra.mxu0 0.0
  %3318 = vmatprep.subr.mxu0 0.0
  %3319 = vmatpush1.msra.mxu0 0.0
  %3320 = vmatprep.subr.mxu0 0.0
  %3321 = vmatpush1.msra.mxu0 0.0
  %3322 = vmatprep.subr.mxu0 0.0
  %3323 = vmatpush1.msra.mxu0 0.0
  %3324 = vmatprep.subr.mxu0 0.0
  %3325 = vmatpush1.msra.mxu0 0.0
  %3326 = vmatprep.subr.mxu0 0.0
  %3327 = vmatpush1.msra.mxu0 0.0
  %3328 = vmatprep.subr.mxu0 0.0
  %3329 = vmatpush1.msra.mxu0 0.0
  %3330 = vmatprep.mubr.f32.mxu0 0.0
  %3331 = vmatmul.mubr.f32.gmra.mrb[0].mxu0 %v3099
  %v3332 = vpop.f32.mrb[0].mxu0
  %v3333 = vadd.f32 0.0, %v3332
  %v3334 = vpop.f32.mrb[0].mxu0
  %3335 = vdwg.mxu0
  %3336 = vmatprep.subr.mxu0 0.0
  %3337 = vmatpush1.msra.mxu0 %v3172
  %3338 = vmatprep.subr.mxu0 0.0
  %3339 = vmatpush1.msra.mxu0 %v3173
  %3340 = vmatprep.subr.mxu0 0.0
  %3341 = vmatpush1.msra.mxu0 %v3174
  %3342 = vmatprep.subr.mxu0 0.0
  %3343 = vmatpush1.msra.mxu0 %v3175
  %3344 = vmatprep.subr.mxu0 0.0
  %3345 = vmatpush1.msra.mxu0 %v3176
  %3346 = vmatprep.subr.mxu0 0.0
  %3347 = vmatpush1.msra.mxu0 %v3177
  %3348 = vmatprep.subr.mxu0 0.0
  %3349 = vmatpush1.msra.mxu0 %v3178
  %3350 = vmatprep.subr.mxu0 0.0
  %3351 = vmatpush1.msra.mxu0 %v3179
  %3352 = vmatprep.subr.mxu0 0.0
  %3353 = vmatpush1.msra.mxu0 %v3180
  %3354 = vmatprep.subr.mxu0 0.0
  %3355 = vmatpush1.msra.mxu0 %v3181
  %3356 = vmatprep.subr.mxu0 0.0
  %3357 = vmatpush1.msra.mxu0 %v3182
  %3358 = vmatprep.subr.mxu0 0.0
  %3359 = vmatpush1.msra.mxu0 %v3183
  %3360 = vmatprep.subr.mxu0 0.0
  %3361 = vmatpush1.msra.mxu0 %v3184
  %3362 = vmatprep.subr.mxu0 0.0
  %3363 = vmatpush1.msra.mxu0 %v3185
  %3364 = vmatprep.subr.mxu0 0.0
  %3365 = vmatpush1.msra.mxu0 %v3186
  %3366 = vmatprep.subr.mxu0 0.0
  %3367 = vmatpush1.msra.mxu0 %v3187
  %3368 = vmatprep.subr.mxu0 0.0
  %3369 = vmatpush1.msra.mxu0 0.0
  %3370 = vmatprep.subr.mxu0 0.0
  %3371 = vmatpush1.msra.mxu0 0.0
  %3372 = vmatprep.subr.mxu0 0.0
  %3373 = vmatpush1.msra.mxu0 0.0
  %3374 = vmatprep.subr.mxu0 0.0
  %3375 = vmatpush1.msra.mxu0 0.0
  %3376 = vmatprep.subr.mxu0 0.0
  %3377 = vmatpush1.msra.mxu0 0.0
  %3378 = vmatprep.subr.mxu0 0.0
  %3379 = vmatpush1.msra.mxu0 0.0
  %3380 = vmatprep.subr.mxu0 0.0
  %3381 = vmatpush1.msra.mxu0 0.0
  %3382 = vmatprep.subr.mxu0 0.0
  %3383 = vmatpush1.msra.mxu0 0.0
  %3384 = vmatprep.subr.mxu0 0.0
  %3385 = vmatpush1.msra.mxu0 0.0
  %3386 = vmatprep.subr.mxu0 0.0
  %3387 = vmatpush1.msra.mxu0 0.0
  %3388 = vmatprep.subr.mxu0 0.0
  %3389 = vmatpush1.msra.mxu0 0.0
  %3390 = vmatprep.subr.mxu0 0.0
  %3391 = vmatpush1.msra.mxu0 0.0
  %3392 = vmatprep.subr.mxu0 0.0
  %3393 = vmatpush1.msra.mxu0 0.0
  %3394 = vmatprep.subr.mxu0 0.0
  %3395 = vmatpush1.msra.mxu0 0.0
  %3396 = vmatprep.subr.mxu0 0.0
  %3397 = vmatpush1.msra.mxu0 0.0
  %3398 = vmatprep.subr.mxu0 0.0
  %3399 = vmatpush1.msra.mxu0 0.0
  %3400 = vmatprep.mubr.f32.mxu0 0.0
  %3401 = vmatmul.mubr.f32.gmra.mrb[0].mxu0 %v3333
  %v3402 = vpop.f32.mrb[0].mxu0
  %v3403 = vadd.f32 0.0, %v3402
  %v3404 = vpop.f32.mrb[0].mxu0
  %3405 = vdwg.mxu0
  %v3406 = vmul.f32 %v3255, %v3255
  %v3407 = vsub.f32 %v3403, %v3406
  %s3408 = scalar_lea.vmem %s12, 4
  %v3409 = vld [vmem:[%s3408] sm:$0x3]
  %v3410 = vadd.f32 %v3407, 1e-05
  %v3411 = vrsqrt.pop %v3410
  %v3412 = vmul.f32 %v3409, %v3411
  %v3413 = vmul.f32 %v3255, %v3412
  %v3415 = vrot.slane %v3413, 7
  %v3417 = vsub.f32 %v3409, %v3415
  %v3418 = vsel %vm1303, %v3412, %v3417
  %s3419 = scalar_lea.vmem %s14, 32
  %v3420 = vld [vmem:[%s3419] sm:$0xff]
  %v3421 = vld [vmem:[%s3419 + $0x8] sm:$0xff]
  %v3423 = vsel %vm69, %v3418, 0
  %3425 = vmatprep.subr.mxu0 0.0
  %3426 = vmatpush1.msra.mxu0 %v3420
  %3427 = vmatprep.subr.mxu0 0.0
  %3428 = vmatpush1.msra.mxu0 %v3421
  %3429 = vmatprep.subr.mxu0 0.0
  %3430 = vmatpush1.msra.mxu0 0.0
  %3431 = vmatprep.subr.mxu0 0.0
  %3432 = vmatpush1.msra.mxu0 0.0
  %3433 = vmatprep.subr.mxu0 0.0
  %3434 = vmatpush1.msra.mxu0 0.0
  %3435 = vmatprep.subr.mxu0 0.0
  %3436 = vmatpush1.msra.mxu0 0.0
  %3437 = vmatprep.subr.mxu0 0.0
  %3438 = vmatpush1.msra.mxu0 0.0
  %3439 = vmatprep.subr.mxu0 0.0
  %3440 = vmatpush1.msra.mxu0 0.0
  %3441 = vmatprep.subr.mxu0 0.0
  %3442 = vmatpush1.msra.mxu0 0.0
  %3443 = vmatprep.subr.mxu0 0.0
  %3444 = vmatpush1.msra.mxu0 0.0
  %3445 = vmatprep.subr.mxu0 0.0
  %3446 = vmatpush1.msra.mxu0 0.0
  %3447 = vmatprep.subr.mxu0 0.0
  %3448 = vmatpush1.msra.mxu0 0.0
  %3449 = vmatprep.subr.mxu0 0.0
  %3450 = vmatpush1.msra.mxu0 0.0
  %3451 = vmatprep.subr.mxu0 0.0
  %3452 = vmatpush1.msra.mxu0 0.0
  %3453 = vmatprep.subr.mxu0 0.0
  %3454 = vmatpush1.msra.mxu0 0.0
  %3455 = vmatprep.subr.mxu0 0.0
  %3456 = vmatpush1.msra.mxu0 0.0
  %3457 = vmatprep.subr.mxu0 0.0
  %3458 = vmatpush1.msra.mxu0 0.0
  %3459 = vmatprep.subr.mxu0 0.0
  %3460 = vmatpush1.msra.mxu0 0.0
  %3461 = vmatprep.subr.mxu0 0.0
  %3462 = vmatpush1.msra.mxu0 0.0
  %3463 = vmatprep.subr.mxu0 0.0
  %3464 = vmatpush1.msra.mxu0 0.0
  %3465 = vmatprep.subr.mxu0 0.0
  %3466 = vmatpush1.msra.mxu0 0.0
  %3467 = vmatprep.subr.mxu0 0.0
  %3468 = vmatpush1.msra.mxu0 0.0
  %3469 = vmatprep.subr.mxu0 0.0
  %3470 = vmatpush1.msra.mxu0 0.0
  %3471 = vmatprep.subr.mxu0 0.0
  %3472 = vmatpush1.msra.mxu0 0.0
  %3473 = vmatprep.subr.mxu0 0.0
  %3474 = vmatpush1.msra.mxu0 0.0
  %3475 = vmatprep.subr.mxu0 0.0
  %3476 = vmatpush1.msra.mxu0 0.0
  %3477 = vmatprep.subr.mxu0 0.0
  %3478 = vmatpush1.msra.mxu0 0.0
  %3479 = vmatprep.subr.mxu0 0.0
  %3480 = vmatpush1.msra.mxu0 0.0
  %3481 = vmatprep.subr.mxu0 0.0
  %3482 = vmatpush1.msra.mxu0 0.0
  %3483 = vmatprep.subr.mxu0 0.0
  %3484 = vmatpush1.msra.mxu0 0.0
  %3485 = vmatprep.subr.mxu0 0.0
  %3486 = vmatpush1.msra.mxu0 0.0
  %3487 = vmatprep.subr.mxu0 0.0
  %3488 = vmatpush1.msra.mxu0 0.0
  %3489 = vmatprep.mubr.f32.mxu0 0.0
  %3490 = vmatmul.mubr.f32.gmra.mrb[0].mxu0 %v3423
  %v3491 = vpop.f32.mrb[0].mxu0
  %v3492 = vadd.f32 0.0, %v3491
  %v3493 = vpop.f32.mrb[0].mxu0
  %3494 = vdwg.mxu0
  %v3495 = vlaneseq
  %v3496 = vshrl.u32 %v3495, 7
  %v3497 = vsub.s32 0, %v3496
  %v3498 = vrot.slane %v3492, %v3497
  %v3499 = vmul.f32 %v3090, %v3498
  %v3500 = vmul.f32 %v3091, %v3498
  %v3501 = vmul.f32 %v3092, %v3498
  %v3502 = vmul.f32 %v3093, %v3498
  %v3503 = vmul.f32 %v3094, %v3498
  %v3504 = vmul.f32 %v3095, %v3498
  %v3505 = vmul.f32 %v3096, %v3498
  %v3506 = vmul.f32 %v3097, %v3498
  %v3507 = vlaneseq
  %v3508 = vshrl.u32 %v3507, 7
  %v3509 = vsub.s32 1, %v3508
  %v3510 = vrot.slane %v3492, %v3509
  %v3511 = vadd.f32 %v3499, %v3510
  %v3512 = vadd.f32 %v3500, %v3510
  %v3513 = vadd.f32 %v3501, %v3510
  %v3514 = vadd.f32 %v3502, %v3510
  %v3515 = vadd.f32 %v3503, %v3510
  %v3516 = vadd.f32 %v3504, %v3510
  %v3517 = vadd.f32 %v3505, %v3510
  %v3518 = vadd.f32 %v3506, %v3510
  %v3519 = vmax.f32 %v3511, 0.0
  %v3520 = vmax.f32 %v3512, 0.0
  %v3521 = vmax.f32 %v3513, 0.0
  %v3522 = vmax.f32 %v3514, 0.0
  %v3523 = vmax.f32 %v3515, 0.0
  %v3524 = vmax.f32 %v3516, 0.0
  %v3525 = vmax.f32 %v3517, 0.0
  %v3526 = vmax.f32 %v3518, 0.0
  %v3527 = vpack.c.bf16 %v3520, %v3519
  %v3528 = vpack.c.bf16 %v3522, %v3521
  %v3529 = vpack.c.bf16 %v3524, %v3523
  %v3530 = vpack.c.bf16 %v3526, %v3525
  %v3531 = vld [vmem:[%s10] sm:$0xf]
  %v3532 = vld [vmem:[%s10 + $0x4] sm:$0xf]
  %v3533 = vld [vmem:[%s10 + $0x8] sm:$0xf]
  %v3534 = vld [vmem:[%s10 + $0xc] sm:$0xf]
  %v3535 = vld [vmem:[%s10 + $0x10] sm:$0xf]
  %v3536 = vld [vmem:[%s10 + $0x14] sm:$0xf]
  %v3537 = vld [vmem:[%s10 + $0x18] sm:$0xf]
  %v3538 = vld [vmem:[%s10 + $0x1c] sm:$0xf]
  %v3539 = vld [vmem:[%s10 + $0x20] sm:$0xf]
  %v3540 = vld [vmem:[%s10 + $0x24] sm:$0xf]
  %v3541 = vld [vmem:[%s10 + $0x28] sm:$0xf]
  %v3542 = vld [vmem:[%s10 + $0x2c] sm:$0xf]
  %v3543 = vld [vmem:[%s10 + $0x30] sm:$0xf]
  %v3544 = vld [vmem:[%s10 + $0x34] sm:$0xf]
  %v3545 = vld [vmem:[%s10 + $0x38] sm:$0xf]
  %v3546 = vld [vmem:[%s10 + $0x3c] sm:$0xf]
  %v3563 = vunpack.c.l.b16 %v3531
  %v3564 = vunpack.c.l.b16 %v3532
  %v3565 = vunpack.c.l.b16 %v3533
  %v3566 = vunpack.c.l.b16 %v3534
  %v3567 = vunpack.c.l.b16 %v3535
  %v3568 = vunpack.c.l.b16 %v3536
  %v3569 = vunpack.c.l.b16 %v3537
  %v3570 = vunpack.c.l.b16 %v3538
  %v3571 = vunpack.c.l.b16 %v3539
  %v3572 = vunpack.c.l.b16 %v3540
  %v3573 = vunpack.c.l.b16 %v3541
  %v3574 = vunpack.c.l.b16 %v3542
  %v3575 = vunpack.c.l.b16 %v3543
  %v3576 = vunpack.c.l.b16 %v3544
  %v3577 = vunpack.c.l.b16 %v3545
  %v3578 = vunpack.c.l.b16 %v3546
  %v3579 = vpack.c.b16 %v3564, %v3563
  %v3580 = vpack.c.b16 %v3566, %v3565
  %v3581 = vpack.c.b16 %v3568, %v3567
  %v3582 = vpack.c.b16 %v3570, %v3569
  %v3583 = vpack.c.b16 %v3572, %v3571
  %v3584 = vpack.c.b16 %v3574, %v3573
  %v3585 = vpack.c.b16 %v3576, %v3575
  %v3586 = vpack.c.b16 %v3578, %v3577
  %v3588 = vsel %vm3098, %v3579, 0
  %v3591 = vsel %vm3098, %v3580, 0
  %v3594 = vsel %vm3098, %v3581, 0
  %v3597 = vsel %vm3098, %v3582, 0
  %v3600 = vsel %vm3098, %v3583, 0
  %v3603 = vsel %vm3098, %v3584, 0
  %v3606 = vsel %vm3098, %v3585, 0
  %v3609 = vsel %vm3098, %v3586, 0
  %3611 = vmatprep.subr.bf16.mxu0 0
  %3612 = vmatpush1.bf16.msra.mxu0 %v3527
  %3613 = vmatprep.subr.bf16.mxu0 0
  %3614 = vmatpush1.bf16.msra.mxu0 %v3528
  %3615 = vmatprep.subr.bf16.mxu0 0
  %3616 = vmatpush1.bf16.msra.mxu0 %v3529
  %3617 = vmatprep.subr.bf16.mxu0 0
  %3618 = vmatpush1.bf16.msra.mxu0 %v3530
  %3619 = vmatprep.subr.bf16.mxu0 0
  %3620 = vmatpush1.bf16.msra.mxu0 0
  %3621 = vmatprep.subr.bf16.mxu0 0
  %3622 = vmatpush1.bf16.msra.mxu0 0
  %3623 = vmatprep.subr.bf16.mxu0 0
  %3624 = vmatpush1.bf16.msra.mxu0 0
  %3625 = vmatprep.subr.bf16.mxu0 0
  %3626 = vmatpush1.bf16.msra.mxu0 0
  %3627 = vmatprep.subr.bf16.mxu0 0
  %3628 = vmatpush1.bf16.msra.mxu0 0
  %3629 = vmatprep.subr.bf16.mxu0 0
  %3630 = vmatpush1.bf16.msra.mxu0 0
  %3631 = vmatprep.subr.bf16.mxu0 0
  %3632 = vmatpush1.bf16.msra.mxu0 0
  %3633 = vmatprep.subr.bf16.mxu0 0
  %3634 = vmatpush1.bf16.msra.mxu0 0
  %3635 = vmatprep.subr.bf16.mxu0 0
  %3636 = vmatpush1.bf16.msra.mxu0 0
  %3637 = vmatprep.subr.bf16.mxu0 0
  %3638 = vmatpush1.bf16.msra.mxu0 0
  %3639 = vmatprep.subr.bf16.mxu0 0
  %3640 = vmatpush1.bf16.msra.mxu0 0
  %3641 = vmatprep.subr.bf16.mxu0 0
  %3642 = vmatpush1.bf16.msra.mxu0 0
  %3643 = vmatprep.mubr.bf16.mxu0 0
  %3644 = vmatmul.mubr.bf16.gmra.mrb[0].mxu0 %v3588
  %v3645 = vpop.f32.mrb[0].mxu0
  %v3646 = vadd.f32 0.0, %v3645
  %v3647 = vpop.f32.mrb[0].mxu0
  %v3648 = vpop.f32.mrb[0].mxu0
  %v3649 = vadd.f32 0.0, %v3648
  %v3650 = vpop.f32.mrb[0].mxu0
  %3651 = vmatprep.mubr.bf16.mxu0 0
  %3652 = vmatmul.mubr.bf16.gmra.mrb[0].mxu0 %v3591
  %v3653 = vpop.f32.mrb[0].mxu0
  %v3654 = vadd.f32 0.0, %v3653
  %v3655 = vpop.f32.mrb[0].mxu0
  %v3656 = vpop.f32.mrb[0].mxu0
  %v3657 = vadd.f32 0.0, %v3656
  %v3658 = vpop.f32.mrb[0].mxu0
  %3659 = vmatprep.mubr.bf16.mxu0 0
  %3660 = vmatmul.mubr.bf16.gmra.mrb[0].mxu0 %v3594
  %v3661 = vpop.f32.mrb[0].mxu0
  %v3662 = vadd.f32 0.0, %v3661
  %v3663 = vpop.f32.mrb[0].mxu0
  %v3664 = vpop.f32.mrb[0].mxu0
  %v3665 = vadd.f32 0.0, %v3664
  %v3666 = vpop.f32.mrb[0].mxu0
  %3667 = vmatprep.mubr.bf16.mxu0 0
  %3668 = vmatmul.mubr.bf16.gmra.mrb[0].mxu0 %v3597
  %v3669 = vpop.f32.mrb[0].mxu0
  %v3670 = vadd.f32 0.0, %v3669
  %v3671 = vpop.f32.mrb[0].mxu0
  %v3672 = vpop.f32.mrb[0].mxu0
  %v3673 = vadd.f32 0.0, %v3672
  %v3674 = vpop.f32.mrb[0].mxu0
  %3675 = vmatprep.mubr.bf16.mxu0 0
  %3676 = vmatmul.mubr.bf16.gmra.mrb[0].mxu0 %v3600
  %v3677 = vpop.f32.mrb[0].mxu0
  %v3678 = vadd.f32 0.0, %v3677
  %v3679 = vpop.f32.mrb[0].mxu0
  %v3680 = vpop.f32.mrb[0].mxu0
  %v3681 = vadd.f32 0.0, %v3680
  %v3682 = vpop.f32.mrb[0].mxu0
  %3683 = vmatprep.mubr.bf16.mxu0 0
  %3684 = vmatmul.mubr.bf16.gmra.mrb[0].mxu0 %v3603
  %v3685 = vpop.f32.mrb[0].mxu0
  %v3686 = vadd.f32 0.0, %v3685
  %v3687 = vpop.f32.mrb[0].mxu0
  %v3688 = vpop.f32.mrb[0].mxu0
  %v3689 = vadd.f32 0.0, %v3688
  %v3690 = vpop.f32.mrb[0].mxu0
  %3691 = vmatprep.mubr.bf16.mxu0 0
  %3692 = vmatmul.mubr.bf16.gmra.mrb[0].mxu0 %v3606
  %v3693 = vpop.f32.mrb[0].mxu0
  %v3694 = vadd.f32 0.0, %v3693
  %v3695 = vpop.f32.mrb[0].mxu0
  %v3696 = vpop.f32.mrb[0].mxu0
  %v3697 = vadd.f32 0.0, %v3696
  %v3698 = vpop.f32.mrb[0].mxu0
  %3699 = vmatprep.mubr.bf16.mxu0 0
  %3700 = vmatmul.mubr.bf16.gmra.mrb[0].mxu0 %v3609
  %v3701 = vpop.f32.mrb[0].mxu0
  %v3702 = vadd.f32 0.0, %v3701
  %v3703 = vpop.f32.mrb[0].mxu0
  %v3704 = vpop.f32.mrb[0].mxu0
  %v3705 = vadd.f32 0.0, %v3704
  %v3706 = vpop.f32.mrb[0].mxu0
  %3707 = vdwg.mxu0
  %v3708 = vpack.c.bf16 %v3649, %v3646
  %v3709 = vpack.c.bf16 %v3657, %v3654
  %v3710 = vpack.c.bf16 %v3665, %v3662
  %v3711 = vpack.c.bf16 %v3673, %v3670
  %v3712 = vpack.c.bf16 %v3681, %v3678
  %v3713 = vpack.c.bf16 %v3689, %v3686
  %v3714 = vpack.c.bf16 %v3697, %v3694
  %v3715 = vpack.c.bf16 %v3705, %v3702
  %s3716 = scalar_lea.vmem %s11, 576
  %v3717 = vld [vmem:[%s3716] sm:$0xf]
  %v3718 = vld [vmem:[%s3716 + $0x4] sm:$0xf]
  %v3719 = vld [vmem:[%s3716 + $0x8] sm:$0xf]
  %v3720 = vld [vmem:[%s3716 + $0xc] sm:$0xf]
  %v3721 = vld [vmem:[%s3716 + $0x10] sm:$0xf]
  %v3722 = vld [vmem:[%s3716 + $0x14] sm:$0xf]
  %v3723 = vld [vmem:[%s3716 + $0x18] sm:$0xf]
  %v3724 = vld [vmem:[%s3716 + $0x1c] sm:$0xf]
  %v3725 = vld [vmem:[%s3716 + $0x20] sm:$0xf]
  %v3726 = vld [vmem:[%s3716 + $0x24] sm:$0xf]
  %v3727 = vld [vmem:[%s3716 + $0x28] sm:$0xf]
  %v3728 = vld [vmem:[%s3716 + $0x2c] sm:$0xf]
  %v3729 = vld [vmem:[%s3716 + $0x30] sm:$0xf]
  %v3730 = vld [vmem:[%s3716 + $0x34] sm:$0xf]
  %v3731 = vld [vmem:[%s3716 + $0x38] sm:$0xf]
  %v3732 = vld [vmem:[%s3716 + $0x3c] sm:$0xf]
  %s3733 = scalar_lea.vmem %s10, 64
  %v3734 = vld [vmem:[%s3733] sm:$0xf]
  %v3735 = vld [vmem:[%s3733 + $0x4] sm:$0xf]
  %v3736 = vld [vmem:[%s3733 + $0x8] sm:$0xf]
  %v3737 = vld [vmem:[%s3733 + $0xc] sm:$0xf]
  %v3738 = vld [vmem:[%s3733 + $0x10] sm:$0xf]
  %v3739 = vld [vmem:[%s3733 + $0x14] sm:$0xf]
  %v3740 = vld [vmem:[%s3733 + $0x18] sm:$0xf]
  %v3741 = vld [vmem:[%s3733 + $0x1c] sm:$0xf]
  %v3742 = vld [vmem:[%s3733 + $0x20] sm:$0xf]
  %v3743 = vld [vmem:[%s3733 + $0x24] sm:$0xf]
  %v3744 = vld [vmem:[%s3733 + $0x28] sm:$0xf]
  %v3745 = vld [vmem:[%s3733 + $0x2c] sm:$0xf]
  %v3746 = vld [vmem:[%s3733 + $0x30] sm:$0xf]
  %v3747 = vld [vmem:[%s3733 + $0x34] sm:$0xf]
  %v3748 = vld [vmem:[%s3733 + $0x38] sm:$0xf]
  %v3749 = vld [vmem:[%s3733 + $0x3c] sm:$0xf]
  %v3766 = vunpack.c.l.b16 %v3734
  %v3767 = vunpack.c.l.b16 %v3735
  %v3768 = vunpack.c.l.b16 %v3736
  %v3769 = vunpack.c.l.b16 %v3737
  %v3770 = vunpack.c.l.b16 %v3738
  %v3771 = vunpack.c.l.b16 %v3739
  %v3772 = vunpack.c.l.b16 %v3740
  %v3773 = vunpack.c.l.b16 %v3741
  %v3774 = vunpack.c.l.b16 %v3742
  %v3775 = vunpack.c.l.b16 %v3743
  %v3776 = vunpack.c.l.b16 %v3744
  %v3777 = vunpack.c.l.b16 %v3745
  %v3778 = vunpack.c.l.b16 %v3746
  %v3779 = vunpack.c.l.b16 %v3747
  %v3780 = vunpack.c.l.b16 %v3748
  %v3781 = vunpack.c.l.b16 %v3749
  %v3782 = vpack.c.b16 %v3767, %v3766
  %v3783 = vpack.c.b16 %v3769, %v3768
  %v3784 = vpack.c.b16 %v3771, %v3770
  %v3785 = vpack.c.b16 %v3773, %v3772
  %v3786 = vpack.c.b16 %v3775, %v3774
  %v3787 = vpack.c.b16 %v3777, %v3776
  %v3788 = vpack.c.b16 %v3779, %v3778
  %v3789 = vpack.c.b16 %v3781, %v3780
  %v3791 = vsel %vm3098, %v3782, 0
  %v3794 = vsel %vm3098, %v3783, 0
  %v3797 = vsel %vm3098, %v3784, 0
  %v3800 = vsel %vm3098, %v3785, 0
  %v3803 = vsel %vm3098, %v3786, 0
  %v3806 = vsel %vm3098, %v3787, 0
  %v3809 = vsel %vm3098, %v3788, 0
  %v3812 = vsel %vm3098, %v3789, 0
  %3814 = vmatprep.subr.bf16.mxu0 0
  %3815 = vmatpush1.bf16.msra.mxu0 %v3527
  %3816 = vmatprep.subr.bf16.mxu0 0
  %3817 = vmatpush1.bf16.msra.mxu0 %v3528
  %3818 = vmatprep.subr.bf16.mxu0 0
  %3819 = vmatpush1.bf16.msra.mxu0 %v3529
  %3820 = vmatprep.subr.bf16.mxu0 0
  %3821 = vmatpush1.bf16.msra.mxu0 %v3530
  %3822 = vmatprep.subr.bf16.mxu0 0
  %3823 = vmatpush1.bf16.msra.mxu0 0
  %3824 = vmatprep.subr.bf16.mxu0 0
  %3825 = vmatpush1.bf16.msra.mxu0 0
  %3826 = vmatprep.subr.bf16.mxu0 0
  %3827 = vmatpush1.bf16.msra.mxu0 0
  %3828 = vmatprep.subr.bf16.mxu0 0
  %3829 = vmatpush1.bf16.msra.mxu0 0
  %3830 = vmatprep.subr.bf16.mxu0 0
  %3831 = vmatpush1.bf16.msra.mxu0 0
  %3832 = vmatprep.subr.bf16.mxu0 0
  %3833 = vmatpush1.bf16.msra.mxu0 0
  %3834 = vmatprep.subr.bf16.mxu0 0
  %3835 = vmatpush1.bf16.msra.mxu0 0
  %3836 = vmatprep.subr.bf16.mxu0 0
  %3837 = vmatpush1.bf16.msra.mxu0 0
  %3838 = vmatprep.subr.bf16.mxu0 0
  %3839 = vmatpush1.bf16.msra.mxu0 0
  %3840 = vmatprep.subr.bf16.mxu0 0
  %3841 = vmatpush1.bf16.msra.mxu0 0
  %3842 = vmatprep.subr.bf16.mxu0 0
  %3843 = vmatpush1.bf16.msra.mxu0 0
  %3844 = vmatprep.subr.bf16.mxu0 0
  %3845 = vmatpush1.bf16.msra.mxu0 0
  %3846 = vmatprep.mubr.bf16.mxu0 0
  %3847 = vmatmul.mubr.bf16.gmra.mrb[0].mxu0 %v3791
  %v3848 = vpop.f32.mrb[0].mxu0
  %v3849 = vadd.f32 0.0, %v3848
  %v3850 = vpop.f32.mrb[0].mxu0
  %v3851 = vpop.f32.mrb[0].mxu0
  %v3852 = vadd.f32 0.0, %v3851
  %v3853 = vpop.f32.mrb[0].mxu0
  %3854 = vmatprep.mubr.bf16.mxu0 0
  %3855 = vmatmul.mubr.bf16.gmra.mrb[0].mxu0 %v3794
  %v3856 = vpop.f32.mrb[0].mxu0
  %v3857 = vadd.f32 0.0, %v3856
  %v3858 = vpop.f32.mrb[0].mxu0
  %v3859 = vpop.f32.mrb[0].mxu0
  %v3860 = vadd.f32 0.0, %v3859
  %v3861 = vpop.f32.mrb[0].mxu0
  %3862 = vmatprep.mubr.bf16.mxu0 0
  %3863 = vmatmul.mubr.bf16.gmra.mrb[0].mxu0 %v3797
  %v3864 = vpop.f32.mrb[0].mxu0
  %v3865 = vadd.f32 0.0, %v3864
  %v3866 = vpop.f32.mrb[0].mxu0
  %v3867 = vpop.f32.mrb[0].mxu0
  %v3868 = vadd.f32 0.0, %v3867
  %v3869 = vpop.f32.mrb[0].mxu0
  %3870 = vmatprep.mubr.bf16.mxu0 0
  %3871 = vmatmul.mubr.bf16.gmra.mrb[0].mxu0 %v3800
  %v3872 = vpop.f32.mrb[0].mxu0
  %v3873 = vadd.f32 0.0, %v3872
  %v3874 = vpop.f32.mrb[0].mxu0
  %v3875 = vpop.f32.mrb[0].mxu0
  %v3876 = vadd.f32 0.0, %v3875
  %v3877 = vpop.f32.mrb[0].mxu0
  %3878 = vmatprep.mubr.bf16.mxu0 0
  %3879 = vmatmul.mubr.bf16.gmra.mrb[0].mxu0 %v3803
  %v3880 = vpop.f32.mrb[0].mxu0
  %v3881 = vadd.f32 0.0, %v3880
  %v3882 = vpop.f32.mrb[0].mxu0
  %v3883 = vpop.f32.mrb[0].mxu0
  %v3884 = vadd.f32 0.0, %v3883
  %v3885 = vpop.f32.mrb[0].mxu0
  %3886 = vmatprep.mubr.bf16.mxu0 0
  %3887 = vmatmul.mubr.bf16.gmra.mrb[0].mxu0 %v3806
  %v3888 = vpop.f32.mrb[0].mxu0
  %v3889 = vadd.f32 0.0, %v3888
  %v3890 = vpop.f32.mrb[0].mxu0
  %v3891 = vpop.f32.mrb[0].mxu0
  %v3892 = vadd.f32 0.0, %v3891
  %v3893 = vpop.f32.mrb[0].mxu0
  %3894 = vmatprep.mubr.bf16.mxu0 0
  %3895 = vmatmul.mubr.bf16.gmra.mrb[0].mxu0 %v3809
  %v3896 = vpop.f32.mrb[0].mxu0
  %v3897 = vadd.f32 0.0, %v3896
  %v3898 = vpop.f32.mrb[0].mxu0
  %v3899 = vpop.f32.mrb[0].mxu0
  %v3900 = vadd.f32 0.0, %v3899
  %v3901 = vpop.f32.mrb[0].mxu0
  %3902 = vmatprep.mubr.bf16.mxu0 0
  %3903 = vmatmul.mubr.bf16.gmra.mrb[0].mxu0 %v3812
  %v3904 = vpop.f32.mrb[0].mxu0
  %v3905 = vadd.f32 0.0, %v3904
  %v3906 = vpop.f32.mrb[0].mxu0
  %v3907 = vpop.f32.mrb[0].mxu0
  %v3908 = vadd.f32 0.0, %v3907
  %v3909 = vpop.f32.mrb[0].mxu0
  %3910 = vdwg.mxu0
  %v3911 = vpack.c.bf16 %v3852, %v3849
  %v3912 = vpack.c.bf16 %v3860, %v3857
  %v3913 = vpack.c.bf16 %v3868, %v3865
  %v3914 = vpack.c.bf16 %v3876, %v3873
  %v3915 = vpack.c.bf16 %v3884, %v3881
  %v3916 = vpack.c.bf16 %v3892, %v3889
  %v3917 = vpack.c.bf16 %v3900, %v3897
  %v3918 = vpack.c.bf16 %v3908, %v3905
  %s3919 = scalar_lea.vmem %s11, 640
  %v3920 = vld [vmem:[%s3919] sm:$0xf]
  %v3921 = vld [vmem:[%s3919 + $0x4] sm:$0xf]
  %v3922 = vld [vmem:[%s3919 + $0x8] sm:$0xf]
  %v3923 = vld [vmem:[%s3919 + $0xc] sm:$0xf]
  %v3924 = vld [vmem:[%s3919 + $0x10] sm:$0xf]
  %v3925 = vld [vmem:[%s3919 + $0x14] sm:$0xf]
  %v3926 = vld [vmem:[%s3919 + $0x18] sm:$0xf]
  %v3927 = vld [vmem:[%s3919 + $0x1c] sm:$0xf]
  %v3928 = vld [vmem:[%s3919 + $0x20] sm:$0xf]
  %v3929 = vld [vmem:[%s3919 + $0x24] sm:$0xf]
  %v3930 = vld [vmem:[%s3919 + $0x28] sm:$0xf]
  %v3931 = vld [vmem:[%s3919 + $0x2c] sm:$0xf]
  %v3932 = vld [vmem:[%s3919 + $0x30] sm:$0xf]
  %v3933 = vld [vmem:[%s3919 + $0x34] sm:$0xf]
  %v3934 = vld [vmem:[%s3919 + $0x38] sm:$0xf]
  %v3935 = vld [vmem:[%s3919 + $0x3c] sm:$0xf]
  %v3952 = vunpack.c.l.b16 %v3920
  %v3953 = vunpack.c.l.b16 %v3921
  %v3954 = vunpack.c.l.b16 %v3922
  %v3955 = vunpack.c.l.b16 %v3923
  %v3956 = vunpack.c.l.b16 %v3924
  %v3957 = vunpack.c.l.b16 %v3925
  %v3958 = vunpack.c.l.b16 %v3926
  %v3959 = vunpack.c.l.b16 %v3927
  %v3960 = vunpack.c.l.b16 %v3928
  %v3961 = vunpack.c.l.b16 %v3929
  %v3962 = vunpack.c.l.b16 %v3930
  %v3963 = vunpack.c.l.b16 %v3931
  %v3964 = vunpack.c.l.b16 %v3932
  %v3965 = vunpack.c.l.b16 %v3933
  %v3966 = vunpack.c.l.b16 %v3934
  %v3967 = vunpack.c.l.b16 %v3935
  %v3968 = vpack.c.b16 %v3953, %v3952
  %v3969 = vpack.c.b16 %v3955, %v3954
  %v3970 = vpack.c.b16 %v3957, %v3956
  %v3971 = vpack.c.b16 %v3959, %v3958
  %v3972 = vpack.c.b16 %v3961, %v3960
  %v3973 = vpack.c.b16 %v3963, %v3962
  %v3974 = vpack.c.b16 %v3965, %v3964
  %v3975 = vpack.c.b16 %v3967, %v3966
  %3984 = vmatprep.subr.bf16.mxu0 0
  %3985 = vmatpush1.bf16.msra.mxu0 %v3968
  %3986 = vmatprep.subr.bf16.mxu0 0
  %3987 = vmatpush1.bf16.msra.mxu0 %v3969
  %3988 = vmatprep.subr.bf16.mxu0 0
  %3989 = vmatpush1.bf16.msra.mxu0 %v3970
  %3990 = vmatprep.subr.bf16.mxu0 0
  %3991 = vmatpush1.bf16.msra.mxu0 %v3971
  %3992 = vmatprep.subr.bf16.mxu0 0
  %3993 = vmatpush1.bf16.msra.mxu0 %v3972
  %3994 = vmatprep.subr.bf16.mxu0 0
  %3995 = vmatpush1.bf16.msra.mxu0 %v3973
  %3996 = vmatprep.subr.bf16.mxu0 0
  %3997 = vmatpush1.bf16.msra.mxu0 %v3974
  %3998 = vmatprep.subr.bf16.mxu0 0
  %3999 = vmatpush1.bf16.msra.mxu0 %v3975
  %4000 = vmatprep.subr.bf16.mxu0 0
  %4001 = vmatpush1.bf16.msra.mxu0 0
  %4002 = vmatprep.subr.bf16.mxu0 0
  %4003 = vmatpush1.bf16.msra.mxu0 0
  %4004 = vmatprep.subr.bf16.mxu0 0
  %4005 = vmatpush1.bf16.msra.mxu0 0
  %4006 = vmatprep.subr.bf16.mxu0 0
  %4007 = vmatpush1.bf16.msra.mxu0 0
  %4008 = vmatprep.subr.bf16.mxu0 0
  %4009 = vmatpush1.bf16.msra.mxu0 0
  %4010 = vmatprep.subr.bf16.mxu0 0
  %4011 = vmatpush1.bf16.msra.mxu0 0
  %4012 = vmatprep.subr.bf16.mxu0 0
  %4013 = vmatpush1.bf16.msra.mxu0 0
  %4014 = vmatprep.subr.bf16.mxu0 0
  %4015 = vmatpush1.bf16.msra.mxu0 0
  %4016 = vmatprep.mubr.bf16.mxu0 0
  %4017 = vmatmul.mubr.bf16.gmra.mrb[0].mxu0 %v3911
  %v4018 = vpop.f32.mrb[0].mxu0
  %v4019 = vadd.f32 0.0, %v4018
  %v4020 = vpop.f32.mrb[0].mxu0
  %v4021 = vpop.f32.mrb[0].mxu0
  %v4022 = vadd.f32 0.0, %v4021
  %v4023 = vpop.f32.mrb[0].mxu0
  %4024 = vmatprep.mubr.bf16.mxu0 0
  %4025 = vmatmul.mubr.bf16.gmra.mrb[0].mxu0 %v3912
  %v4026 = vpop.f32.mrb[0].mxu0
  %v4027 = vadd.f32 0.0, %v4026
  %v4028 = vpop.f32.mrb[0].mxu0
  %v4029 = vpop.f32.mrb[0].mxu0
  %v4030 = vadd.f32 0.0, %v4029
  %v4031 = vpop.f32.mrb[0].mxu0
  %4032 = vmatprep.mubr.bf16.mxu0 0
  %4033 = vmatmul.mubr.bf16.gmra.mrb[0].mxu0 %v3913
  %v4034 = vpop.f32.mrb[0].mxu0
  %v4035 = vadd.f32 0.0, %v4034
  %v4036 = vpop.f32.mrb[0].mxu0
  %v4037 = vpop.f32.mrb[0].mxu0
  %v4038 = vadd.f32 0.0, %v4037
  %v4039 = vpop.f32.mrb[0].mxu0
  %4040 = vmatprep.mubr.bf16.mxu0 0
  %4041 = vmatmul.mubr.bf16.gmra.mrb[0].mxu0 %v3914
  %v4042 = vpop.f32.mrb[0].mxu0
  %v4043 = vadd.f32 0.0, %v4042
  %v4044 = vpop.f32.mrb[0].mxu0
  %v4045 = vpop.f32.mrb[0].mxu0
  %v4046 = vadd.f32 0.0, %v4045
  %v4047 = vpop.f32.mrb[0].mxu0
  %4048 = vmatprep.mubr.bf16.mxu0 0
  %4049 = vmatmul.mubr.bf16.gmra.mrb[0].mxu0 %v3915
  %v4050 = vpop.f32.mrb[0].mxu0
  %v4051 = vadd.f32 0.0, %v4050
  %v4052 = vpop.f32.mrb[0].mxu0
  %v4053 = vpop.f32.mrb[0].mxu0
  %v4054 = vadd.f32 0.0, %v4053
  %v4055 = vpop.f32.mrb[0].mxu0
  %4056 = vmatprep.mubr.bf16.mxu0 0
  %4057 = vmatmul.mubr.bf16.gmra.mrb[0].mxu0 %v3916
  %v4058 = vpop.f32.mrb[0].mxu0
  %v4059 = vadd.f32 0.0, %v4058
  %v4060 = vpop.f32.mrb[0].mxu0
  %v4061 = vpop.f32.mrb[0].mxu0
  %v4062 = vadd.f32 0.0, %v4061
  %v4063 = vpop.f32.mrb[0].mxu0
  %4064 = vmatprep.mubr.bf16.mxu0 0
  %4065 = vmatmul.mubr.bf16.gmra.mrb[0].mxu0 %v3917
  %v4066 = vpop.f32.mrb[0].mxu0
  %v4067 = vadd.f32 0.0, %v4066
  %v4068 = vpop.f32.mrb[0].mxu0
  %v4069 = vpop.f32.mrb[0].mxu0
  %v4070 = vadd.f32 0.0, %v4069
  %v4071 = vpop.f32.mrb[0].mxu0
  %4072 = vmatprep.mubr.bf16.mxu0 0
  %4073 = vmatmul.mubr.bf16.gmra.mrb[0].mxu0 %v3918
  %v4074 = vpop.f32.mrb[0].mxu0
  %v4075 = vadd.f32 0.0, %v4074
  %v4076 = vpop.f32.mrb[0].mxu0
  %v4077 = vpop.f32.mrb[0].mxu0
  %v4078 = vadd.f32 0.0, %v4077
  %v4079 = vpop.f32.mrb[0].mxu0
  %4080 = vdwg.mxu0
  %v4097 = vunpack.c.l.b16 %v3717
  %v4098 = vunpack.c.l.b16 %v3718
  %v4099 = vunpack.c.l.b16 %v3719
  %v4100 = vunpack.c.l.b16 %v3720
  %v4101 = vunpack.c.l.b16 %v3721
  %v4102 = vunpack.c.l.b16 %v3722
  %v4103 = vunpack.c.l.b16 %v3723
  %v4104 = vunpack.c.l.b16 %v3724
  %v4105 = vunpack.c.l.b16 %v3725
  %v4106 = vunpack.c.l.b16 %v3726
  %v4107 = vunpack.c.l.b16 %v3727
  %v4108 = vunpack.c.l.b16 %v3728
  %v4109 = vunpack.c.l.b16 %v3729
  %v4110 = vunpack.c.l.b16 %v3730
  %v4111 = vunpack.c.l.b16 %v3731
  %v4112 = vunpack.c.l.b16 %v3732
  %v4113 = vpack.c.b16 %v4098, %v4097
  %v4114 = vpack.c.b16 %v4100, %v4099
  %v4115 = vpack.c.b16 %v4102, %v4101
  %v4116 = vpack.c.b16 %v4104, %v4103
  %v4117 = vpack.c.b16 %v4106, %v4105
  %v4118 = vpack.c.b16 %v4108, %v4107
  %v4119 = vpack.c.b16 %v4110, %v4109
  %v4120 = vpack.c.b16 %v4112, %v4111
  %4129 = vmatprep.subr.bf16.mxu0 0
  %4130 = vmatpush1.bf16.msra.mxu0 %v4113
  %4131 = vmatprep.subr.bf16.mxu0 0
  %4132 = vmatpush1.bf16.msra.mxu0 %v4114
  %4133 = vmatprep.subr.bf16.mxu0 0
  %4134 = vmatpush1.bf16.msra.mxu0 %v4115
  %4135 = vmatprep.subr.bf16.mxu0 0
  %4136 = vmatpush1.bf16.msra.mxu0 %v4116
  %4137 = vmatprep.subr.bf16.mxu0 0
  %4138 = vmatpush1.bf16.msra.mxu0 %v4117
  %4139 = vmatprep.subr.bf16.mxu0 0
  %4140 = vmatpush1.bf16.msra.mxu0 %v4118
  %4141 = vmatprep.subr.bf16.mxu0 0
  %4142 = vmatpush1.bf16.msra.mxu0 %v4119
  %4143 = vmatprep.subr.bf16.mxu0 0
  %4144 = vmatpush1.bf16.msra.mxu0 %v4120
  %4145 = vmatprep.subr.bf16.mxu0 0
  %4146 = vmatpush1.bf16.msra.mxu0 0
  %4147 = vmatprep.subr.bf16.mxu0 0
  %4148 = vmatpush1.bf16.msra.mxu0 0
  %4149 = vmatprep.subr.bf16.mxu0 0
  %4150 = vmatpush1.bf16.msra.mxu0 0
  %4151 = vmatprep.subr.bf16.mxu0 0
  %4152 = vmatpush1.bf16.msra.mxu0 0
  %4153 = vmatprep.subr.bf16.mxu0 0
  %4154 = vmatpush1.bf16.msra.mxu0 0
  %4155 = vmatprep.subr.bf16.mxu0 0
  %4156 = vmatpush1.bf16.msra.mxu0 0
  %4157 = vmatprep.subr.bf16.mxu0 0
  %4158 = vmatpush1.bf16.msra.mxu0 0
  %4159 = vmatprep.subr.bf16.mxu0 0
  %4160 = vmatpush1.bf16.msra.mxu0 0
  %4161 = vmatprep.mubr.bf16.mxu0 0
  %4162 = vmatmul.mubr.bf16.gmra.mrb[0].mxu0 %v3708
  %v4163 = vpop.f32.mrb[0].mxu0
  %v4164 = vadd.f32 %v4019, %v4163
  %v4165 = vpop.f32.mrb[0].mxu0
  %v4166 = vpop.f32.mrb[0].mxu0
  %v4167 = vadd.f32 %v4022, %v4166
  %v4168 = vpop.f32.mrb[0].mxu0
  %4169 = vmatprep.mubr.bf16.mxu0 0
  %4170 = vmatmul.mubr.bf16.gmra.mrb[0].mxu0 %v3709
  %v4171 = vpop.f32.mrb[0].mxu0
  %v4172 = vadd.f32 %v4027, %v4171
  %v4173 = vpop.f32.mrb[0].mxu0
  %v4174 = vpop.f32.mrb[0].mxu0
  %v4175 = vadd.f32 %v4030, %v4174
  %v4176 = vpop.f32.mrb[0].mxu0
  %4177 = vmatprep.mubr.bf16.mxu0 0
  %4178 = vmatmul.mubr.bf16.gmra.mrb[0].mxu0 %v3710
  %v4179 = vpop.f32.mrb[0].mxu0
  %v4180 = vadd.f32 %v4035, %v4179
  %v4181 = vpop.f32.mrb[0].mxu0
  %v4182 = vpop.f32.mrb[0].mxu0
  %v4183 = vadd.f32 %v4038, %v4182
  %v4184 = vpop.f32.mrb[0].mxu0
  %4185 = vmatprep.mubr.bf16.mxu0 0
  %4186 = vmatmul.mubr.bf16.gmra.mrb[0].mxu0 %v3711
  %v4187 = vpop.f32.mrb[0].mxu0
  %v4188 = vadd.f32 %v4043, %v4187
  %v4189 = vpop.f32.mrb[0].mxu0
  %v4190 = vpop.f32.mrb[0].mxu0
  %v4191 = vadd.f32 %v4046, %v4190
  %v4192 = vpop.f32.mrb[0].mxu0
  %4193 = vmatprep.mubr.bf16.mxu0 0
  %4194 = vmatmul.mubr.bf16.gmra.mrb[0].mxu0 %v3712
  %v4195 = vpop.f32.mrb[0].mxu0
  %v4196 = vadd.f32 %v4051, %v4195
  %v4197 = vpop.f32.mrb[0].mxu0
  %v4198 = vpop.f32.mrb[0].mxu0
  %v4199 = vadd.f32 %v4054, %v4198
  %v4200 = vpop.f32.mrb[0].mxu0
  %4201 = vmatprep.mubr.bf16.mxu0 0
  %4202 = vmatmul.mubr.bf16.gmra.mrb[0].mxu0 %v3713
  %v4203 = vpop.f32.mrb[0].mxu0
  %v4204 = vadd.f32 %v4059, %v4203
  %v4205 = vpop.f32.mrb[0].mxu0
  %v4206 = vpop.f32.mrb[0].mxu0
  %v4207 = vadd.f32 %v4062, %v4206
  %v4208 = vpop.f32.mrb[0].mxu0
  %4209 = vmatprep.mubr.bf16.mxu0 0
  %4210 = vmatmul.mubr.bf16.gmra.mrb[0].mxu0 %v3714
  %v4211 = vpop.f32.mrb[0].mxu0
  %v4212 = vadd.f32 %v4067, %v4211
  %v4213 = vpop.f32.mrb[0].mxu0
  %v4214 = vpop.f32.mrb[0].mxu0
  %v4215 = vadd.f32 %v4070, %v4214
  %v4216 = vpop.f32.mrb[0].mxu0
  %4217 = vmatprep.mubr.bf16.mxu0 0
  %4218 = vmatmul.mubr.bf16.gmra.mrb[0].mxu0 %v3715
  %v4219 = vpop.f32.mrb[0].mxu0
  %v4220 = vadd.f32 %v4075, %v4219
  %v4221 = vpop.f32.mrb[0].mxu0
  %v4222 = vpop.f32.mrb[0].mxu0
  %v4223 = vadd.f32 %v4078, %v4222
  %v4224 = vpop.f32.mrb[0].mxu0
  %4225 = vdwg.mxu0
  %s4226 = scalar_lea.vmem %s10, 128
  %v4227 = vld [vmem:[%s4226] sm:$0xf]
  %v4228 = vld [vmem:[%s4226 + $0x4] sm:$0xf]
  %v4229 = vld [vmem:[%s4226 + $0x8] sm:$0xf]
  %v4230 = vld [vmem:[%s4226 + $0xc] sm:$0xf]
  %v4231 = vld [vmem:[%s4226 + $0x10] sm:$0xf]
  %v4232 = vld [vmem:[%s4226 + $0x14] sm:$0xf]
  %v4233 = vld [vmem:[%s4226 + $0x18] sm:$0xf]
  %v4234 = vld [vmem:[%s4226 + $0x1c] sm:$0xf]
  %v4235 = vld [vmem:[%s4226 + $0x20] sm:$0xf]
  %v4236 = vld [vmem:[%s4226 + $0x24] sm:$0xf]
  %v4237 = vld [vmem:[%s4226 + $0x28] sm:$0xf]
  %v4238 = vld [vmem:[%s4226 + $0x2c] sm:$0xf]
  %v4239 = vld [vmem:[%s4226 + $0x30] sm:$0xf]
  %v4240 = vld [vmem:[%s4226 + $0x34] sm:$0xf]
  %v4241 = vld [vmem:[%s4226 + $0x38] sm:$0xf]
  %v4242 = vld [vmem:[%s4226 + $0x3c] sm:$0xf]
  %v4259 = vunpack.c.l.b16 %v4227
  %v4260 = vunpack.c.l.b16 %v4228
  %v4261 = vunpack.c.l.b16 %v4229
  %v4262 = vunpack.c.l.b16 %v4230
  %v4263 = vunpack.c.l.b16 %v4231
  %v4264 = vunpack.c.l.b16 %v4232
  %v4265 = vunpack.c.l.b16 %v4233
  %v4266 = vunpack.c.l.b16 %v4234
  %v4267 = vunpack.c.l.b16 %v4235
  %v4268 = vunpack.c.l.b16 %v4236
  %v4269 = vunpack.c.l.b16 %v4237
  %v4270 = vunpack.c.l.b16 %v4238
  %v4271 = vunpack.c.l.b16 %v4239
  %v4272 = vunpack.c.l.b16 %v4240
  %v4273 = vunpack.c.l.b16 %v4241
  %v4274 = vunpack.c.l.b16 %v4242
  %v4275 = vpack.c.b16 %v4260, %v4259
  %v4276 = vpack.c.b16 %v4262, %v4261
  %v4277 = vpack.c.b16 %v4264, %v4263
  %v4278 = vpack.c.b16 %v4266, %v4265
  %v4279 = vpack.c.b16 %v4268, %v4267
  %v4280 = vpack.c.b16 %v4270, %v4269
  %v4281 = vpack.c.b16 %v4272, %v4271
  %v4282 = vpack.c.b16 %v4274, %v4273
  %v4284 = vsel %vm3098, %v4275, 0
  %v4287 = vsel %vm3098, %v4276, 0
  %v4290 = vsel %vm3098, %v4277, 0
  %v4293 = vsel %vm3098, %v4278, 0
  %v4296 = vsel %vm3098, %v4279, 0
  %v4299 = vsel %vm3098, %v4280, 0
  %v4302 = vsel %vm3098, %v4281, 0
  %v4305 = vsel %vm3098, %v4282, 0
  %4307 = vmatprep.subr.bf16.mxu0 0
  %4308 = vmatpush1.bf16.msra.mxu0 %v3527
  %4309 = vmatprep.subr.bf16.mxu0 0
  %4310 = vmatpush1.bf16.msra.mxu0 %v3528
  %4311 = vmatprep.subr.bf16.mxu0 0
  %4312 = vmatpush1.bf16.msra.mxu0 %v3529
  %4313 = vmatprep.subr.bf16.mxu0 0
  %4314 = vmatpush1.bf16.msra.mxu0 %v3530
  %4315 = vmatprep.subr.bf16.mxu0 0
  %4316 = vmatpush1.bf16.msra.mxu0 0
  %4317 = vmatprep.subr.bf16.mxu0 0
  %4318 = vmatpush1.bf16.msra.mxu0 0
  %4319 = vmatprep.subr.bf16.mxu0 0
  %4320 = vmatpush1.bf16.msra.mxu0 0
  %4321 = vmatprep.subr.bf16.mxu0 0
  %4322 = vmatpush1.bf16.msra.mxu0 0
  %4323 = vmatprep.subr.bf16.mxu0 0
  %4324 = vmatpush1.bf16.msra.mxu0 0
  %4325 = vmatprep.subr.bf16.mxu0 0
  %4326 = vmatpush1.bf16.msra.mxu0 0
  %4327 = vmatprep.subr.bf16.mxu0 0
  %4328 = vmatpush1.bf16.msra.mxu0 0
  %4329 = vmatprep.subr.bf16.mxu0 0
  %4330 = vmatpush1.bf16.msra.mxu0 0
  %4331 = vmatprep.subr.bf16.mxu0 0
  %4332 = vmatpush1.bf16.msra.mxu0 0
  %4333 = vmatprep.subr.bf16.mxu0 0
  %4334 = vmatpush1.bf16.msra.mxu0 0
  %4335 = vmatprep.subr.bf16.mxu0 0
  %4336 = vmatpush1.bf16.msra.mxu0 0
  %4337 = vmatprep.subr.bf16.mxu0 0
  %4338 = vmatpush1.bf16.msra.mxu0 0
  %4339 = vmatprep.mubr.bf16.mxu0 0
  %4340 = vmatmul.mubr.bf16.gmra.mrb[0].mxu0 %v4284
  %v4341 = vpop.f32.mrb[0].mxu0
  %v4342 = vadd.f32 0.0, %v4341
  %v4343 = vpop.f32.mrb[0].mxu0
  %v4344 = vpop.f32.mrb[0].mxu0
  %v4345 = vadd.f32 0.0, %v4344
  %v4346 = vpop.f32.mrb[0].mxu0
  %4347 = vmatprep.mubr.bf16.mxu0 0
  %4348 = vmatmul.mubr.bf16.gmra.mrb[0].mxu0 %v4287
  %v4349 = vpop.f32.mrb[0].mxu0
  %v4350 = vadd.f32 0.0, %v4349
  %v4351 = vpop.f32.mrb[0].mxu0
  %v4352 = vpop.f32.mrb[0].mxu0
  %v4353 = vadd.f32 0.0, %v4352
  %v4354 = vpop.f32.mrb[0].mxu0
  %4355 = vmatprep.mubr.bf16.mxu0 0
  %4356 = vmatmul.mubr.bf16.gmra.mrb[0].mxu0 %v4290
  %v4357 = vpop.f32.mrb[0].mxu0
  %v4358 = vadd.f32 0.0, %v4357
  %v4359 = vpop.f32.mrb[0].mxu0
  %v4360 = vpop.f32.mrb[0].mxu0
  %v4361 = vadd.f32 0.0, %v4360
  %v4362 = vpop.f32.mrb[0].mxu0
  %4363 = vmatprep.mubr.bf16.mxu0 0
  %4364 = vmatmul.mubr.bf16.gmra.mrb[0].mxu0 %v4293
  %v4365 = vpop.f32.mrb[0].mxu0
  %v4366 = vadd.f32 0.0, %v4365
  %v4367 = vpop.f32.mrb[0].mxu0
  %v4368 = vpop.f32.mrb[0].mxu0
  %v4369 = vadd.f32 0.0, %v4368
  %v4370 = vpop.f32.mrb[0].mxu0
  %4371 = vmatprep.mubr.bf16.mxu0 0
  %4372 = vmatmul.mubr.bf16.gmra.mrb[0].mxu0 %v4296
  %v4373 = vpop.f32.mrb[0].mxu0
  %v4374 = vadd.f32 0.0, %v4373
  %v4375 = vpop.f32.mrb[0].mxu0
  %v4376 = vpop.f32.mrb[0].mxu0
  %v4377 = vadd.f32 0.0, %v4376
  %v4378 = vpop.f32.mrb[0].mxu0
  %4379 = vmatprep.mubr.bf16.mxu0 0
  %4380 = vmatmul.mubr.bf16.gmra.mrb[0].mxu0 %v4299
  %v4381 = vpop.f32.mrb[0].mxu0
  %v4382 = vadd.f32 0.0, %v4381
  %v4383 = vpop.f32.mrb[0].mxu0
  %v4384 = vpop.f32.mrb[0].mxu0
  %v4385 = vadd.f32 0.0, %v4384
  %v4386 = vpop.f32.mrb[0].mxu0
  %4387 = vmatprep.mubr.bf16.mxu0 0
  %4388 = vmatmul.mubr.bf16.gmra.mrb[0].mxu0 %v4302
  %v4389 = vpop.f32.mrb[0].mxu0
  %v4390 = vadd.f32 0.0, %v4389
  %v4391 = vpop.f32.mrb[0].mxu0
  %v4392 = vpop.f32.mrb[0].mxu0
  %v4393 = vadd.f32 0.0, %v4392
  %v4394 = vpop.f32.mrb[0].mxu0
  %4395 = vmatprep.mubr.bf16.mxu0 0
  %4396 = vmatmul.mubr.bf16.gmra.mrb[0].mxu0 %v4305
  %v4397 = vpop.f32.mrb[0].mxu0
  %v4398 = vadd.f32 0.0, %v4397
  %v4399 = vpop.f32.mrb[0].mxu0
  %v4400 = vpop.f32.mrb[0].mxu0
  %v4401 = vadd.f32 0.0, %v4400
  %v4402 = vpop.f32.mrb[0].mxu0
  %4403 = vdwg.mxu0
  %v4404 = vpack.c.bf16 %v4345, %v4342
  %v4405 = vpack.c.bf16 %v4353, %v4350
  %v4406 = vpack.c.bf16 %v4361, %v4358
  %v4407 = vpack.c.bf16 %v4369, %v4366
  %v4408 = vpack.c.bf16 %v4377, %v4374
  %v4409 = vpack.c.bf16 %v4385, %v4382
  %v4410 = vpack.c.bf16 %v4393, %v4390
  %v4411 = vpack.c.bf16 %v4401, %v4398
  %s4412 = scalar_lea.vmem %s11, 704
  %v4413 = vld [vmem:[%s4412] sm:$0xf]
  %v4414 = vld [vmem:[%s4412 + $0x4] sm:$0xf]
  %v4415 = vld [vmem:[%s4412 + $0x8] sm:$0xf]
  %v4416 = vld [vmem:[%s4412 + $0xc] sm:$0xf]
  %v4417 = vld [vmem:[%s4412 + $0x10] sm:$0xf]
  %v4418 = vld [vmem:[%s4412 + $0x14] sm:$0xf]
  %v4419 = vld [vmem:[%s4412 + $0x18] sm:$0xf]
  %v4420 = vld [vmem:[%s4412 + $0x1c] sm:$0xf]
  %v4421 = vld [vmem:[%s4412 + $0x20] sm:$0xf]
  %v4422 = vld [vmem:[%s4412 + $0x24] sm:$0xf]
  %v4423 = vld [vmem:[%s4412 + $0x28] sm:$0xf]
  %v4424 = vld [vmem:[%s4412 + $0x2c] sm:$0xf]
  %v4425 = vld [vmem:[%s4412 + $0x30] sm:$0xf]
  %v4426 = vld [vmem:[%s4412 + $0x34] sm:$0xf]
  %v4427 = vld [vmem:[%s4412 + $0x38] sm:$0xf]
  %v4428 = vld [vmem:[%s4412 + $0x3c] sm:$0xf]
  %v4445 = vunpack.c.l.b16 %v4413
  %v4446 = vunpack.c.l.b16 %v4414
  %v4447 = vunpack.c.l.b16 %v4415
  %v4448 = vunpack.c.l.b16 %v4416
  %v4449 = vunpack.c.l.b16 %v4417
  %v4450 = vunpack.c.l.b16 %v4418
  %v4451 = vunpack.c.l.b16 %v4419
  %v4452 = vunpack.c.l.b16 %v4420
  %v4453 = vunpack.c.l.b16 %v4421
  %v4454 = vunpack.c.l.b16 %v4422
  %v4455 = vunpack.c.l.b16 %v4423
  %v4456 = vunpack.c.l.b16 %v4424
  %v4457 = vunpack.c.l.b16 %v4425
  %v4458 = vunpack.c.l.b16 %v4426
  %v4459 = vunpack.c.l.b16 %v4427
  %v4460 = vunpack.c.l.b16 %v4428
  %v4461 = vpack.c.b16 %v4446, %v4445
  %v4462 = vpack.c.b16 %v4448, %v4447
  %v4463 = vpack.c.b16 %v4450, %v4449
  %v4464 = vpack.c.b16 %v4452, %v4451
  %v4465 = vpack.c.b16 %v4454, %v4453
  %v4466 = vpack.c.b16 %v4456, %v4455
  %v4467 = vpack.c.b16 %v4458, %v4457
  %v4468 = vpack.c.b16 %v4460, %v4459
  %4477 = vmatprep.subr.bf16.mxu0 0
  %4478 = vmatpush1.bf16.msra.mxu0 %v4461
  %4479 = vmatprep.subr.bf16.mxu0 0
  %4480 = vmatpush1.bf16.msra.mxu0 %v4462
  %4481 = vmatprep.subr.bf16.mxu0 0
  %4482 = vmatpush1.bf16.msra.mxu0 %v4463
  %4483 = vmatprep.subr.bf16.mxu0 0
  %4484 = vmatpush1.bf16.msra.mxu0 %v4464
  %4485 = vmatprep.subr.bf16.mxu0 0
  %4486 = vmatpush1.bf16.msra.mxu0 %v4465
  %4487 = vmatprep.subr.bf16.mxu0 0
  %4488 = vmatpush1.bf16.msra.mxu0 %v4466
  %4489 = vmatprep.subr.bf16.mxu0 0
  %4490 = vmatpush1.bf16.msra.mxu0 %v4467
  %4491 = vmatprep.subr.bf16.mxu0 0
  %4492 = vmatpush1.bf16.msra.mxu0 %v4468
  %4493 = vmatprep.subr.bf16.mxu0 0
  %4494 = vmatpush1.bf16.msra.mxu0 0
  %4495 = vmatprep.subr.bf16.mxu0 0
  %4496 = vmatpush1.bf16.msra.mxu0 0
  %4497 = vmatprep.subr.bf16.mxu0 0
  %4498 = vmatpush1.bf16.msra.mxu0 0
  %4499 = vmatprep.subr.bf16.mxu0 0
  %4500 = vmatpush1.bf16.msra.mxu0 0
  %4501 = vmatprep.subr.bf16.mxu0 0
  %4502 = vmatpush1.bf16.msra.mxu0 0
  %4503 = vmatprep.subr.bf16.mxu0 0
  %4504 = vmatpush1.bf16.msra.mxu0 0
  %4505 = vmatprep.subr.bf16.mxu0 0
  %4506 = vmatpush1.bf16.msra.mxu0 0
  %4507 = vmatprep.subr.bf16.mxu0 0
  %4508 = vmatpush1.bf16.msra.mxu0 0
  %4509 = vmatprep.mubr.bf16.mxu0 0
  %4510 = vmatmul.mubr.bf16.gmra.mrb[0].mxu0 %v4404
  %v4511 = vpop.f32.mrb[0].mxu0
  %v4512 = vadd.f32 0.0, %v4511
  %v4513 = vpop.f32.mrb[0].mxu0
  %v4514 = vpop.f32.mrb[0].mxu0
  %v4515 = vadd.f32 0.0, %v4514
  %v4516 = vpop.f32.mrb[0].mxu0
  %4517 = vmatprep.mubr.bf16.mxu0 0
  %4518 = vmatmul.mubr.bf16.gmra.mrb[0].mxu0 %v4405
  %v4519 = vpop.f32.mrb[0].mxu0
  %v4520 = vadd.f32 0.0, %v4519
  %v4521 = vpop.f32.mrb[0].mxu0
  %v4522 = vpop.f32.mrb[0].mxu0
  %v4523 = vadd.f32 0.0, %v4522
  %v4524 = vpop.f32.mrb[0].mxu0
  %4525 = vmatprep.mubr.bf16.mxu0 0
  %4526 = vmatmul.mubr.bf16.gmra.mrb[0].mxu0 %v4406
  %v4527 = vpop.f32.mrb[0].mxu0
  %v4528 = vadd.f32 0.0, %v4527
  %v4529 = vpop.f32.mrb[0].mxu0
  %v4530 = vpop.f32.mrb[0].mxu0
  %v4531 = vadd.f32 0.0, %v4530
  %v4532 = vpop.f32.mrb[0].mxu0
  %4533 = vmatprep.mubr.bf16.mxu0 0
  %4534 = vmatmul.mubr.bf16.gmra.mrb[0].mxu0 %v4407
  %v4535 = vpop.f32.mrb[0].mxu0
  %v4536 = vadd.f32 0.0, %v4535
  %v4537 = vpop.f32.mrb[0].mxu0
  %v4538 = vpop.f32.mrb[0].mxu0
  %v4539 = vadd.f32 0.0, %v4538
  %v4540 = vpop.f32.mrb[0].mxu0
  %4541 = vmatprep.mubr.bf16.mxu0 0
  %4542 = vmatmul.mubr.bf16.gmra.mrb[0].mxu0 %v4408
  %v4543 = vpop.f32.mrb[0].mxu0
  %v4544 = vadd.f32 0.0, %v4543
  %v4545 = vpop.f32.mrb[0].mxu0
  %v4546 = vpop.f32.mrb[0].mxu0
  %v4547 = vadd.f32 0.0, %v4546
  %v4548 = vpop.f32.mrb[0].mxu0
  %4549 = vmatprep.mubr.bf16.mxu0 0
  %4550 = vmatmul.mubr.bf16.gmra.mrb[0].mxu0 %v4409
  %v4551 = vpop.f32.mrb[0].mxu0
  %v4552 = vadd.f32 0.0, %v4551
  %v4553 = vpop.f32.mrb[0].mxu0
  %v4554 = vpop.f32.mrb[0].mxu0
  %v4555 = vadd.f32 0.0, %v4554
  %v4556 = vpop.f32.mrb[0].mxu0
  %4557 = vmatprep.mubr.bf16.mxu0 0
  %4558 = vmatmul.mubr.bf16.gmra.mrb[0].mxu0 %v4410
  %v4559 = vpop.f32.mrb[0].mxu0
  %v4560 = vadd.f32 0.0, %v4559
  %v4561 = vpop.f32.mrb[0].mxu0
  %v4562 = vpop.f32.mrb[0].mxu0
  %v4563 = vadd.f32 0.0, %v4562
  %v4564 = vpop.f32.mrb[0].mxu0
  %4565 = vmatprep.mubr.bf16.mxu0 0
  %4566 = vmatmul.mubr.bf16.gmra.mrb[0].mxu0 %v4411
  %v4567 = vpop.f32.mrb[0].mxu0
  %v4568 = vadd.f32 0.0, %v4567
  %v4569 = vpop.f32.mrb[0].mxu0
  %v4570 = vpop.f32.mrb[0].mxu0
  %v4571 = vadd.f32 0.0, %v4570
  %v4572 = vpop.f32.mrb[0].mxu0
  %4573 = vdwg.mxu0
  %v4574 = vadd.f32 %v4164, %v4512
  %v4575 = vadd.f32 %v4167, %v4515
  %v4576 = vadd.f32 %v4172, %v4520
  %v4577 = vadd.f32 %v4175, %v4523
  %v4578 = vadd.f32 %v4180, %v4528
  %v4579 = vadd.f32 %v4183, %v4531
  %v4580 = vadd.f32 %v4188, %v4536
  %v4581 = vadd.f32 %v4191, %v4539
  %v4582 = vadd.f32 %v4196, %v4544
  %v4583 = vadd.f32 %v4199, %v4547
  %v4584 = vadd.f32 %v4204, %v4552
  %v4585 = vadd.f32 %v4207, %v4555
  %v4586 = vadd.f32 %v4212, %v4560
  %v4587 = vadd.f32 %v4215, %v4563
  %v4588 = vadd.f32 %v4220, %v4568
  %v4589 = vadd.f32 %v4223, %v4571
  %4590 = vmatprep.subr.mxu0 0.0
  %4591 = vmatpush1.msra.mxu0 %v4574
  %4592 = vmatprep.subr.mxu0 0.0
  %4593 = vmatpush1.msra.mxu0 %v4575
  %4594 = vmatprep.subr.mxu0 0.0
  %4595 = vmatpush1.msra.mxu0 %v4576
  %4596 = vmatprep.subr.mxu0 0.0
  %4597 = vmatpush1.msra.mxu0 %v4577
  %4598 = vmatprep.subr.mxu0 0.0
  %4599 = vmatpush1.msra.mxu0 %v4578
  %4600 = vmatprep.subr.mxu0 0.0
  %4601 = vmatpush1.msra.mxu0 %v4579
  %4602 = vmatprep.subr.mxu0 0.0
  %4603 = vmatpush1.msra.mxu0 %v4580
  %4604 = vmatprep.subr.mxu0 0.0
  %4605 = vmatpush1.msra.mxu0 %v4581
  %4606 = vmatprep.subr.mxu0 0.0
  %4607 = vmatpush1.msra.mxu0 %v4582
  %4608 = vmatprep.subr.mxu0 0.0
  %4609 = vmatpush1.msra.mxu0 %v4583
  %4610 = vmatprep.subr.mxu0 0.0
  %4611 = vmatpush1.msra.mxu0 %v4584
  %4612 = vmatprep.subr.mxu0 0.0
  %4613 = vmatpush1.msra.mxu0 %v4585
  %4614 = vmatprep.subr.mxu0 0.0
  %4615 = vmatpush1.msra.mxu0 %v4586
  %4616 = vmatprep.subr.mxu0 0.0
  %4617 = vmatpush1.msra.mxu0 %v4587
  %4618 = vmatprep.subr.mxu0 0.0
  %4619 = vmatpush1.msra.mxu0 %v4588
  %4620 = vmatprep.subr.mxu0 0.0
  %4621 = vmatpush1.msra.mxu0 %v4589
  %4622 = vmatprep.subr.mxu0 0.0
  %4623 = vmatpush1.msra.mxu0 0.0
  %4624 = vmatprep.subr.mxu0 0.0
  %4625 = vmatpush1.msra.mxu0 0.0
  %4626 = vmatprep.subr.mxu0 0.0
  %4627 = vmatpush1.msra.mxu0 0.0
  %4628 = vmatprep.subr.mxu0 0.0
  %4629 = vmatpush1.msra.mxu0 0.0
  %4630 = vmatprep.subr.mxu0 0.0
  %4631 = vmatpush1.msra.mxu0 0.0
  %4632 = vmatprep.subr.mxu0 0.0
  %4633 = vmatpush1.msra.mxu0 0.0
  %4634 = vmatprep.subr.mxu0 0.0
  %4635 = vmatpush1.msra.mxu0 0.0
  %4636 = vmatprep.subr.mxu0 0.0
  %4637 = vmatpush1.msra.mxu0 0.0
  %4638 = vmatprep.subr.mxu0 0.0
  %4639 = vmatpush1.msra.mxu0 0.0
  %4640 = vmatprep.subr.mxu0 0.0
  %4641 = vmatpush1.msra.mxu0 0.0
  %4642 = vmatprep.subr.mxu0 0.0
  %4643 = vmatpush1.msra.mxu0 0.0
  %4644 = vmatprep.subr.mxu0 0.0
  %4645 = vmatpush1.msra.mxu0 0.0
  %4646 = vmatprep.subr.mxu0 0.0
  %4647 = vmatpush1.msra.mxu0 0.0
  %4648 = vmatprep.subr.mxu0 0.0
  %4649 = vmatpush1.msra.mxu0 0.0
  %4650 = vmatprep.subr.mxu0 0.0
  %4651 = vmatpush1.msra.mxu0 0.0
  %4652 = vmatprep.subr.mxu0 0.0
  %4653 = vmatpush1.msra.mxu0 0.0
  %4654 = vmatprep.mubr.f32.mxu0 0.0
  %4655 = vmatmul.mubr.f32.gmra.mrb[0].mxu0 1.0
  %v4656 = vpop.f32.mrb[0].mxu0
  %v4657 = vadd.f32 0.0, %v4656
  %v4658 = vpop.f32.mrb[0].mxu0
  %4659 = vdwg.mxu0
  %s4660 = scalar_lea.vmem %s13, 384
  %v4661 = vld [vmem:[%s4660] sm:$0xff]
  %v4662 = vld [vmem:[%s4660 + $0x8] sm:$0xff]
  %v4663 = vld [vmem:[%s4660 + $0x10] sm:$0xff]
  %v4664 = vld [vmem:[%s4660 + $0x18] sm:$0xff]
  %v4665 = vld [vmem:[%s4660 + $0x20] sm:$0xff]
  %v4666 = vld [vmem:[%s4660 + $0x28] sm:$0xff]
  %v4667 = vld [vmem:[%s4660 + $0x30] sm:$0xff]
  %v4668 = vld [vmem:[%s4660 + $0x38] sm:$0xff]
  %v4669 = vld [vmem:[%s4660 + $0x40] sm:$0xff]
  %v4670 = vld [vmem:[%s4660 + $0x48] sm:$0xff]
  %v4671 = vld [vmem:[%s4660 + $0x50] sm:$0xff]
  %v4672 = vld [vmem:[%s4660 + $0x58] sm:$0xff]
  %v4673 = vld [vmem:[%s4660 + $0x60] sm:$0xff]
  %v4674 = vld [vmem:[%s4660 + $0x68] sm:$0xff]
  %v4675 = vld [vmem:[%s4660 + $0x70] sm:$0xff]
  %v4676 = vld [vmem:[%s4660 + $0x78] sm:$0xff]
  %4677 = vmatprep.subr.mxu0 0.0
  %4678 = vmatpush1.msra.mxu0 %v4661
  %4679 = vmatprep.subr.mxu0 0.0
  %4680 = vmatpush1.msra.mxu0 %v4662
  %4681 = vmatprep.subr.mxu0 0.0
  %4682 = vmatpush1.msra.mxu0 %v4663
  %4683 = vmatprep.subr.mxu0 0.0
  %4684 = vmatpush1.msra.mxu0 %v4664
  %4685 = vmatprep.subr.mxu0 0.0
  %4686 = vmatpush1.msra.mxu0 %v4665
  %4687 = vmatprep.subr.mxu0 0.0
  %4688 = vmatpush1.msra.mxu0 %v4666
  %4689 = vmatprep.subr.mxu0 0.0
  %4690 = vmatpush1.msra.mxu0 %v4667
  %4691 = vmatprep.subr.mxu0 0.0
  %4692 = vmatpush1.msra.mxu0 %v4668
  %4693 = vmatprep.subr.mxu0 0.0
  %4694 = vmatpush1.msra.mxu0 %v4669
  %4695 = vmatprep.subr.mxu0 0.0
  %4696 = vmatpush1.msra.mxu0 %v4670
  %4697 = vmatprep.subr.mxu0 0.0
  %4698 = vmatpush1.msra.mxu0 %v4671
  %4699 = vmatprep.subr.mxu0 0.0
  %4700 = vmatpush1.msra.mxu0 %v4672
  %4701 = vmatprep.subr.mxu0 0.0
  %4702 = vmatpush1.msra.mxu0 %v4673
  %4703 = vmatprep.subr.mxu0 0.0
  %4704 = vmatpush1.msra.mxu0 %v4674
  %4705 = vmatprep.subr.mxu0 0.0
  %4706 = vmatpush1.msra.mxu0 %v4675
  %4707 = vmatprep.subr.mxu0 0.0
  %4708 = vmatpush1.msra.mxu0 %v4676
  %4709 = vmatprep.subr.mxu0 0.0
  %4710 = vmatpush1.msra.mxu0 0.0
  %4711 = vmatprep.subr.mxu0 0.0
  %4712 = vmatpush1.msra.mxu0 0.0
  %4713 = vmatprep.subr.mxu0 0.0
  %4714 = vmatpush1.msra.mxu0 0.0
  %4715 = vmatprep.subr.mxu0 0.0
  %4716 = vmatpush1.msra.mxu0 0.0
  %4717 = vmatprep.subr.mxu0 0.0
  %4718 = vmatpush1.msra.mxu0 0.0
  %4719 = vmatprep.subr.mxu0 0.0
  %4720 = vmatpush1.msra.mxu0 0.0
  %4721 = vmatprep.subr.mxu0 0.0
  %4722 = vmatpush1.msra.mxu0 0.0
  %4723 = vmatprep.subr.mxu0 0.0
  %4724 = vmatpush1.msra.mxu0 0.0
  %4725 = vmatprep.subr.mxu0 0.0
  %4726 = vmatpush1.msra.mxu0 0.0
  %4727 = vmatprep.subr.mxu0 0.0
  %4728 = vmatpush1.msra.mxu0 0.0
  %4729 = vmatprep.subr.mxu0 0.0
  %4730 = vmatpush1.msra.mxu0 0.0
  %4731 = vmatprep.subr.mxu0 0.0
  %4732 = vmatpush1.msra.mxu0 0.0
  %4733 = vmatprep.subr.mxu0 0.0
  %4734 = vmatpush1.msra.mxu0 0.0
  %4735 = vmatprep.subr.mxu0 0.0
  %4736 = vmatpush1.msra.mxu0 0.0
  %4737 = vmatprep.subr.mxu0 0.0
  %4738 = vmatpush1.msra.mxu0 0.0
  %4739 = vmatprep.subr.mxu0 0.0
  %4740 = vmatpush1.msra.mxu0 0.0
  %4741 = vmatprep.mubr.f32.mxu0 0.0
  %4742 = vmatmul.mubr.f32.gmra.mrb[0].mxu0 %v4657
  %v4743 = vpop.f32.mrb[0].mxu0
  %v4744 = vadd.f32 0.0, %v4743
  %v4745 = vpop.f32.mrb[0].mxu0
  %4746 = vdwg.mxu0
  %v4747 = vmul.f32 %v4574, %v4574
  %v4748 = vmul.f32 %v4575, %v4575
  %v4749 = vmul.f32 %v4576, %v4576
  %v4750 = vmul.f32 %v4577, %v4577
  %v4751 = vmul.f32 %v4578, %v4578
  %v4752 = vmul.f32 %v4579, %v4579
  %v4753 = vmul.f32 %v4580, %v4580
  %v4754 = vmul.f32 %v4581, %v4581
  %v4755 = vmul.f32 %v4582, %v4582
  %v4756 = vmul.f32 %v4583, %v4583
  %v4757 = vmul.f32 %v4584, %v4584
  %v4758 = vmul.f32 %v4585, %v4585
  %v4759 = vmul.f32 %v4586, %v4586
  %v4760 = vmul.f32 %v4587, %v4587
  %v4761 = vmul.f32 %v4588, %v4588
  %v4762 = vmul.f32 %v4589, %v4589
  %4763 = vmatprep.subr.mxu0 0.0
  %4764 = vmatpush1.msra.mxu0 %v4747
  %4765 = vmatprep.subr.mxu0 0.0
  %4766 = vmatpush1.msra.mxu0 %v4748
  %4767 = vmatprep.subr.mxu0 0.0
  %4768 = vmatpush1.msra.mxu0 %v4749
  %4769 = vmatprep.subr.mxu0 0.0
  %4770 = vmatpush1.msra.mxu0 %v4750
  %4771 = vmatprep.subr.mxu0 0.0
  %4772 = vmatpush1.msra.mxu0 %v4751
  %4773 = vmatprep.subr.mxu0 0.0
  %4774 = vmatpush1.msra.mxu0 %v4752
  %4775 = vmatprep.subr.mxu0 0.0
  %4776 = vmatpush1.msra.mxu0 %v4753
  %4777 = vmatprep.subr.mxu0 0.0
  %4778 = vmatpush1.msra.mxu0 %v4754
  %4779 = vmatprep.subr.mxu0 0.0
  %4780 = vmatpush1.msra.mxu0 %v4755
  %4781 = vmatprep.subr.mxu0 0.0
  %4782 = vmatpush1.msra.mxu0 %v4756
  %4783 = vmatprep.subr.mxu0 0.0
  %4784 = vmatpush1.msra.mxu0 %v4757
  %4785 = vmatprep.subr.mxu0 0.0
  %4786 = vmatpush1.msra.mxu0 %v4758
  %4787 = vmatprep.subr.mxu0 0.0
  %4788 = vmatpush1.msra.mxu0 %v4759
  %4789 = vmatprep.subr.mxu0 0.0
  %4790 = vmatpush1.msra.mxu0 %v4760
  %4791 = vmatprep.subr.mxu0 0.0
  %4792 = vmatpush1.msra.mxu0 %v4761
  %4793 = vmatprep.subr.mxu0 0.0
  %4794 = vmatpush1.msra.mxu0 %v4762
  %4795 = vmatprep.subr.mxu0 0.0
  %4796 = vmatpush1.msra.mxu0 0.0
  %4797 = vmatprep.subr.mxu0 0.0
  %4798 = vmatpush1.msra.mxu0 0.0
  %4799 = vmatprep.subr.mxu0 0.0
  %4800 = vmatpush1.msra.mxu0 0.0
  %4801 = vmatprep.subr.mxu0 0.0
  %4802 = vmatpush1.msra.mxu0 0.0
  %4803 = vmatprep.subr.mxu0 0.0
  %4804 = vmatpush1.msra.mxu0 0.0
  %4805 = vmatprep.subr.mxu0 0.0
  %4806 = vmatpush1.msra.mxu0 0.0
  %4807 = vmatprep.subr.mxu0 0.0
  %4808 = vmatpush1.msra.mxu0 0.0
  %4809 = vmatprep.subr.mxu0 0.0
  %4810 = vmatpush1.msra.mxu0 0.0
  %4811 = vmatprep.subr.mxu0 0.0
  %4812 = vmatpush1.msra.mxu0 0.0
  %4813 = vmatprep.subr.mxu0 0.0
  %4814 = vmatpush1.msra.mxu0 0.0
  %4815 = vmatprep.subr.mxu0 0.0
  %4816 = vmatpush1.msra.mxu0 0.0
  %4817 = vmatprep.subr.mxu0 0.0
  %4818 = vmatpush1.msra.mxu0 0.0
  %4819 = vmatprep.subr.mxu0 0.0
  %4820 = vmatpush1.msra.mxu0 0.0
  %4821 = vmatprep.subr.mxu0 0.0
  %4822 = vmatpush1.msra.mxu0 0.0
  %4823 = vmatprep.subr.mxu0 0.0
  %4824 = vmatpush1.msra.mxu0 0.0
  %4825 = vmatprep.subr.mxu0 0.0
  %4826 = vmatpush1.msra.mxu0 0.0
  %4827 = vmatprep.mubr.f32.mxu0 0.0
  %4828 = vmatmul.mubr.f32.gmra.mrb[0].mxu0 1.0
  %v4829 = vpop.f32.mrb[0].mxu0
  %v4830 = vadd.f32 0.0, %v4829
  %v4831 = vpop.f32.mrb[0].mxu0
  %4832 = vdwg.mxu0
  %4833 = vmatprep.subr.mxu0 0.0
  %4834 = vmatpush1.msra.mxu0 %v4661
  %4835 = vmatprep.subr.mxu0 0.0
  %4836 = vmatpush1.msra.mxu0 %v4662
  %4837 = vmatprep.subr.mxu0 0.0
  %4838 = vmatpush1.msra.mxu0 %v4663
  %4839 = vmatprep.subr.mxu0 0.0
  %4840 = vmatpush1.msra.mxu0 %v4664
  %4841 = vmatprep.subr.mxu0 0.0
  %4842 = vmatpush1.msra.mxu0 %v4665
  %4843 = vmatprep.subr.mxu0 0.0
  %4844 = vmatpush1.msra.mxu0 %v4666
  %4845 = vmatprep.subr.mxu0 0.0
  %4846 = vmatpush1.msra.mxu0 %v4667
  %4847 = vmatprep.subr.mxu0 0.0
  %4848 = vmatpush1.msra.mxu0 %v4668
  %4849 = vmatprep.subr.mxu0 0.0
  %4850 = vmatpush1.msra.mxu0 %v4669
  %4851 = vmatprep.subr.mxu0 0.0
  %4852 = vmatpush1.msra.mxu0 %v4670
  %4853 = vmatprep.subr.mxu0 0.0
  %4854 = vmatpush1.msra.mxu0 %v4671
  %4855 = vmatprep.subr.mxu0 0.0
  %4856 = vmatpush1.msra.mxu0 %v4672
  %4857 = vmatprep.subr.mxu0 0.0
  %4858 = vmatpush1.msra.mxu0 %v4673
  %4859 = vmatprep.subr.mxu0 0.0
  %4860 = vmatpush1.msra.mxu0 %v4674
  %4861 = vmatprep.subr.mxu0 0.0
  %4862 = vmatpush1.msra.mxu0 %v4675
  %4863 = vmatprep.subr.mxu0 0.0
  %4864 = vmatpush1.msra.mxu0 %v4676
  %4865 = vmatprep.subr.mxu0 0.0
  %4866 = vmatpush1.msra.mxu0 0.0
  %4867 = vmatprep.subr.mxu0 0.0
  %4868 = vmatpush1.msra.mxu0 0.0
  %4869 = vmatprep.subr.mxu0 0.0
  %4870 = vmatpush1.msra.mxu0 0.0
  %4871 = vmatprep.subr.mxu0 0.0
  %4872 = vmatpush1.msra.mxu0 0.0
  %4873 = vmatprep.subr.mxu0 0.0
  %4874 = vmatpush1.msra.mxu0 0.0
  %4875 = vmatprep.subr.mxu0 0.0
  %4876 = vmatpush1.msra.mxu0 0.0
  %4877 = vmatprep.subr.mxu0 0.0
  %4878 = vmatpush1.msra.mxu0 0.0
  %4879 = vmatprep.subr.mxu0 0.0
  %4880 = vmatpush1.msra.mxu0 0.0
  %4881 = vmatprep.subr.mxu0 0.0
  %4882 = vmatpush1.msra.mxu0 0.0
  %4883 = vmatprep.subr.mxu0 0.0
  %4884 = vmatpush1.msra.mxu0 0.0
  %4885 = vmatprep.subr.mxu0 0.0
  %4886 = vmatpush1.msra.mxu0 0.0
  %4887 = vmatprep.subr.mxu0 0.0
  %4888 = vmatpush1.msra.mxu0 0.0
  %4889 = vmatprep.subr.mxu0 0.0
  %4890 = vmatpush1.msra.mxu0 0.0
  %4891 = vmatprep.subr.mxu0 0.0
  %4892 = vmatpush1.msra.mxu0 0.0
  %4893 = vmatprep.subr.mxu0 0.0
  %4894 = vmatpush1.msra.mxu0 0.0
  %4895 = vmatprep.subr.mxu0 0.0
  %4896 = vmatpush1.msra.mxu0 0.0
  %4897 = vmatprep.mubr.f32.mxu0 0.0
  %4898 = vmatmul.mubr.f32.gmra.mrb[0].mxu0 %v4830
  %v4899 = vpop.f32.mrb[0].mxu0
  %v4900 = vadd.f32 0.0, %v4899
  %v4901 = vpop.f32.mrb[0].mxu0
  %4902 = vdwg.mxu0
  %v4903 = vmul.f32 %v4744, %v4744
  %v4904 = vsub.f32 %v4900, %v4903
  %s4905 = scalar_lea.vmem %s12, 6
  %v4906 = vld [vmem:[%s4905] sm:$0x3]
  %v4907 = vadd.f32 %v4904, 1e-05
  %v4908 = vrsqrt.pop %v4907
  %v4909 = vmul.f32 %v4906, %v4908
  %v4910 = vmul.f32 %v4744, %v4909
  %v4912 = vrot.slane %v4910, 7
  %v4914 = vsub.f32 %v4906, %v4912
  %v4915 = vsel %vm1303, %v4909, %v4914
  %s4916 = scalar_lea.vmem %s14, 48
  %v4917 = vld [vmem:[%s4916] sm:$0xff]
  %v4918 = vld [vmem:[%s4916 + $0x8] sm:$0xff]
  %v4920 = vsel %vm69, %v4915, 0
  %4922 = vmatprep.subr.mxu0 0.0
  %4923 = vmatpush1.msra.mxu0 %v4917
  %4924 = vmatprep.subr.mxu0 0.0
  %4925 = vmatpush1.msra.mxu0 %v4918
  %4926 = vmatprep.subr.mxu0 0.0
  %4927 = vmatpush1.msra.mxu0 0.0
  %4928 = vmatprep.subr.mxu0 0.0
  %4929 = vmatpush1.msra.mxu0 0.0
  %4930 = vmatprep.subr.mxu0 0.0
  %4931 = vmatpush1.msra.mxu0 0.0
  %4932 = vmatprep.subr.mxu0 0.0
  %4933 = vmatpush1.msra.mxu0 0.0
  %4934 = vmatprep.subr.mxu0 0.0
  %4935 = vmatpush1.msra.mxu0 0.0
  %4936 = vmatprep.subr.mxu0 0.0
  %4937 = vmatpush1.msra.mxu0 0.0
  %4938 = vmatprep.subr.mxu0 0.0
  %4939 = vmatpush1.msra.mxu0 0.0
  %4940 = vmatprep.subr.mxu0 0.0
  %4941 = vmatpush1.msra.mxu0 0.0
  %4942 = vmatprep.subr.mxu0 0.0
  %4943 = vmatpush1.msra.mxu0 0.0
  %4944 = vmatprep.subr.mxu0 0.0
  %4945 = vmatpush1.msra.mxu0 0.0
  %4946 = vmatprep.subr.mxu0 0.0
  %4947 = vmatpush1.msra.mxu0 0.0
  %4948 = vmatprep.subr.mxu0 0.0
  %4949 = vmatpush1.msra.mxu0 0.0
  %4950 = vmatprep.subr.mxu0 0.0
  %4951 = vmatpush1.msra.mxu0 0.0
  %4952 = vmatprep.subr.mxu0 0.0
  %4953 = vmatpush1.msra.mxu0 0.0
  %4954 = vmatprep.subr.mxu0 0.0
  %4955 = vmatpush1.msra.mxu0 0.0
  %4956 = vmatprep.subr.mxu0 0.0
  %4957 = vmatpush1.msra.mxu0 0.0
  %4958 = vmatprep.subr.mxu0 0.0
  %4959 = vmatpush1.msra.mxu0 0.0
  %4960 = vmatprep.subr.mxu0 0.0
  %4961 = vmatpush1.msra.mxu0 0.0
  %4962 = vmatprep.subr.mxu0 0.0
  %4963 = vmatpush1.msra.mxu0 0.0
  %4964 = vmatprep.subr.mxu0 0.0
  %4965 = vmatpush1.msra.mxu0 0.0
  %4966 = vmatprep.subr.mxu0 0.0
  %4967 = vmatpush1.msra.mxu0 0.0
  %4968 = vmatprep.subr.mxu0 0.0
  %4969 = vmatpush1.msra.mxu0 0.0
  %4970 = vmatprep.subr.mxu0 0.0
  %4971 = vmatpush1.msra.mxu0 0.0
  %4972 = vmatprep.subr.mxu0 0.0
  %4973 = vmatpush1.msra.mxu0 0.0
  %4974 = vmatprep.subr.mxu0 0.0
  %4975 = vmatpush1.msra.mxu0 0.0
  %4976 = vmatprep.subr.mxu0 0.0
  %4977 = vmatpush1.msra.mxu0 0.0
  %4978 = vmatprep.subr.mxu0 0.0
  %4979 = vmatpush1.msra.mxu0 0.0
  %4980 = vmatprep.subr.mxu0 0.0
  %4981 = vmatpush1.msra.mxu0 0.0
  %4982 = vmatprep.subr.mxu0 0.0
  %4983 = vmatpush1.msra.mxu0 0.0
  %4984 = vmatprep.subr.mxu0 0.0
  %4985 = vmatpush1.msra.mxu0 0.0
  %4986 = vmatprep.mubr.f32.mxu0 0.0
  %4987 = vmatmul.mubr.f32.gmra.mrb[0].mxu0 %v4920
  %v4988 = vpop.f32.mrb[0].mxu0
  %v4989 = vadd.f32 0.0, %v4988
  %v4990 = vpop.f32.mrb[0].mxu0
  %4991 = vdwg.mxu0
  %v4992 = vlaneseq
  %v4993 = vshrl.u32 %v4992, 7
  %v4994 = vsub.s32 0, %v4993
  %v4995 = vrot.slane %v4989, %v4994
  %v4996 = vmul.f32 %v4574, %v4995
  %v4997 = vmul.f32 %v4575, %v4995
  %v4998 = vmul.f32 %v4576, %v4995
  %v4999 = vmul.f32 %v4577, %v4995
  %v5000 = vmul.f32 %v4578, %v4995
  %v5001 = vmul.f32 %v4579, %v4995
  %v5002 = vmul.f32 %v4580, %v4995
  %v5003 = vmul.f32 %v4581, %v4995
  %v5004 = vmul.f32 %v4582, %v4995
  %v5005 = vmul.f32 %v4583, %v4995
  %v5006 = vmul.f32 %v4584, %v4995
  %v5007 = vmul.f32 %v4585, %v4995
  %v5008 = vmul.f32 %v4586, %v4995
  %v5009 = vmul.f32 %v4587, %v4995
  %v5010 = vmul.f32 %v4588, %v4995
  %v5011 = vmul.f32 %v4589, %v4995
  %v5012 = vlaneseq
  %v5013 = vshrl.u32 %v5012, 7
  %v5014 = vsub.s32 1, %v5013
  %v5015 = vrot.slane %v4989, %v5014
  %v5016 = vadd.f32 %v4996, %v5015
  %v5017 = vadd.f32 %v4997, %v5015
  %v5018 = vadd.f32 %v4998, %v5015
  %v5019 = vadd.f32 %v4999, %v5015
  %v5020 = vadd.f32 %v5000, %v5015
  %v5021 = vadd.f32 %v5001, %v5015
  %v5022 = vadd.f32 %v5002, %v5015
  %v5023 = vadd.f32 %v5003, %v5015
  %v5024 = vadd.f32 %v5004, %v5015
  %v5025 = vadd.f32 %v5005, %v5015
  %v5026 = vadd.f32 %v5006, %v5015
  %v5027 = vadd.f32 %v5007, %v5015
  %v5028 = vadd.f32 %v5008, %v5015
  %v5029 = vadd.f32 %v5009, %v5015
  %v5030 = vadd.f32 %v5010, %v5015
  %v5031 = vadd.f32 %v5011, %v5015
  %v5032 = vmax.f32 %v5016, 0.0
  %v5033 = vmax.f32 %v5017, 0.0
  %v5034 = vmax.f32 %v5018, 0.0
  %v5035 = vmax.f32 %v5019, 0.0
  %v5036 = vmax.f32 %v5020, 0.0
  %v5037 = vmax.f32 %v5021, 0.0
  %v5038 = vmax.f32 %v5022, 0.0
  %v5039 = vmax.f32 %v5023, 0.0
  %v5040 = vmax.f32 %v5024, 0.0
  %v5041 = vmax.f32 %v5025, 0.0
  %v5042 = vmax.f32 %v5026, 0.0
  %v5043 = vmax.f32 %v5027, 0.0
  %v5044 = vmax.f32 %v5028, 0.0
  %v5045 = vmax.f32 %v5029, 0.0
  %v5046 = vmax.f32 %v5030, 0.0
  %v5047 = vmax.f32 %v5031, 0.0
  %v5048 = vpack.c.bf16 %v5033, %v5032
  %v5049 = vpack.c.bf16 %v5035, %v5034
  %v5050 = vpack.c.bf16 %v5037, %v5036
  %v5051 = vpack.c.bf16 %v5039, %v5038
  %v5052 = vpack.c.bf16 %v5041, %v5040
  %v5053 = vpack.c.bf16 %v5043, %v5042
  %v5054 = vpack.c.bf16 %v5045, %v5044
  %v5055 = vpack.c.bf16 %v5047, %v5046
  %v5056 = vld [vmem:[%s15] sm:$0xf]
  %v5057 = vld [vmem:[%s15 + $0x4] sm:$0xf]
  %v5058 = vld [vmem:[%s15 + $0x8] sm:$0xf]
  %v5059 = vld [vmem:[%s15 + $0xc] sm:$0xf]
  %v5060 = vld [vmem:[%s15 + $0x10] sm:$0xf]
  %v5061 = vld [vmem:[%s15 + $0x14] sm:$0xf]
  %v5062 = vld [vmem:[%s15 + $0x18] sm:$0xf]
  %v5063 = vld [vmem:[%s15 + $0x1c] sm:$0xf]
  %v5064 = vld [vmem:[%s15 + $0x20] sm:$0xf]
  %v5065 = vld [vmem:[%s15 + $0x24] sm:$0xf]
  %v5066 = vld [vmem:[%s15 + $0x28] sm:$0xf]
  %v5067 = vld [vmem:[%s15 + $0x2c] sm:$0xf]
  %v5068 = vld [vmem:[%s15 + $0x30] sm:$0xf]
  %v5069 = vld [vmem:[%s15 + $0x34] sm:$0xf]
  %v5070 = vld [vmem:[%s15 + $0x38] sm:$0xf]
  %v5071 = vld [vmem:[%s15 + $0x3c] sm:$0xf]
  %v5088 = vunpack.c.l.b16 %v5056
  %v5089 = vunpack.c.l.b16 %v5057
  %v5090 = vunpack.c.l.b16 %v5058
  %v5091 = vunpack.c.l.b16 %v5059
  %v5092 = vunpack.c.l.b16 %v5060
  %v5093 = vunpack.c.l.b16 %v5061
  %v5094 = vunpack.c.l.b16 %v5062
  %v5095 = vunpack.c.l.b16 %v5063
  %v5096 = vunpack.c.l.b16 %v5064
  %v5097 = vunpack.c.l.b16 %v5065
  %v5098 = vunpack.c.l.b16 %v5066
  %v5099 = vunpack.c.l.b16 %v5067
  %v5100 = vunpack.c.l.b16 %v5068
  %v5101 = vunpack.c.l.b16 %v5069
  %v5102 = vunpack.c.l.b16 %v5070
  %v5103 = vunpack.c.l.b16 %v5071
  %v5104 = vpack.c.b16 %v5089, %v5088
  %v5105 = vpack.c.b16 %v5091, %v5090
  %v5106 = vpack.c.b16 %v5093, %v5092
  %v5107 = vpack.c.b16 %v5095, %v5094
  %v5108 = vpack.c.b16 %v5097, %v5096
  %v5109 = vpack.c.b16 %v5099, %v5098
  %v5110 = vpack.c.b16 %v5101, %v5100
  %v5111 = vpack.c.b16 %v5103, %v5102
  %5120 = vmatprep.subr.bf16.mxu0 0
  %5121 = vmatpush1.bf16.msra.mxu0 %v5048
  %5122 = vmatprep.subr.bf16.mxu0 0
  %5123 = vmatpush1.bf16.msra.mxu0 %v5049
  %5124 = vmatprep.subr.bf16.mxu0 0
  %5125 = vmatpush1.bf16.msra.mxu0 %v5050
  %5126 = vmatprep.subr.bf16.mxu0 0
  %5127 = vmatpush1.bf16.msra.mxu0 %v5051
  %5128 = vmatprep.subr.bf16.mxu0 0
  %5129 = vmatpush1.bf16.msra.mxu0 %v5052
  %5130 = vmatprep.subr.bf16.mxu0 0
  %5131 = vmatpush1.bf16.msra.mxu0 %v5053
  %5132 = vmatprep.subr.bf16.mxu0 0
  %5133 = vmatpush1.bf16.msra.mxu0 %v5054
  %5134 = vmatprep.subr.bf16.mxu0 0
  %5135 = vmatpush1.bf16.msra.mxu0 %v5055
  %5136 = vmatprep.subr.bf16.mxu0 0
  %5137 = vmatpush1.bf16.msra.mxu0 0
  %5138 = vmatprep.subr.bf16.mxu0 0
  %5139 = vmatpush1.bf16.msra.mxu0 0
  %5140 = vmatprep.subr.bf16.mxu0 0
  %5141 = vmatpush1.bf16.msra.mxu0 0
  %5142 = vmatprep.subr.bf16.mxu0 0
  %5143 = vmatpush1.bf16.msra.mxu0 0
  %5144 = vmatprep.subr.bf16.mxu0 0
  %5145 = vmatpush1.bf16.msra.mxu0 0
  %5146 = vmatprep.subr.bf16.mxu0 0
  %5147 = vmatpush1.bf16.msra.mxu0 0
  %5148 = vmatprep.subr.bf16.mxu0 0
  %5149 = vmatpush1.bf16.msra.mxu0 0
  %5150 = vmatprep.subr.bf16.mxu0 0
  %5151 = vmatpush1.bf16.msra.mxu0 0
  %5152 = vmatprep.mubr.bf16.mxu0 0
  %5153 = vmatmul.mubr.bf16.gmra.mrb[0].mxu0 %v5104
  %v5154 = vpop.f32.mrb[0].mxu0
  %v5155 = vadd.f32 0.0, %v5154
  %v5156 = vpop.f32.mrb[0].mxu0
  %v5157 = vpop.f32.mrb[0].mxu0
  %v5158 = vadd.f32 0.0, %v5157
  %v5159 = vpop.f32.mrb[0].mxu0
  %5160 = vmatprep.mubr.bf16.mxu0 0
  %5161 = vmatmul.mubr.bf16.gmra.mrb[0].mxu0 %v5105
  %v5162 = vpop.f32.mrb[0].mxu0
  %v5163 = vadd.f32 0.0, %v5162
  %v5164 = vpop.f32.mrb[0].mxu0
  %v5165 = vpop.f32.mrb[0].mxu0
  %v5166 = vadd.f32 0.0, %v5165
  %v5167 = vpop.f32.mrb[0].mxu0
  %5168 = vmatprep.mubr.bf16.mxu0 0
  %5169 = vmatmul.mubr.bf16.gmra.mrb[0].mxu0 %v5106
  %v5170 = vpop.f32.mrb[0].mxu0
  %v5171 = vadd.f32 0.0, %v5170
  %v5172 = vpop.f32.mrb[0].mxu0
  %v5173 = vpop.f32.mrb[0].mxu0
  %v5174 = vadd.f32 0.0, %v5173
  %v5175 = vpop.f32.mrb[0].mxu0
  %5176 = vmatprep.mubr.bf16.mxu0 0
  %5177 = vmatmul.mubr.bf16.gmra.mrb[0].mxu0 %v5107
  %v5178 = vpop.f32.mrb[0].mxu0
  %v5179 = vadd.f32 0.0, %v5178
  %v5180 = vpop.f32.mrb[0].mxu0
  %v5181 = vpop.f32.mrb[0].mxu0
  %v5182 = vadd.f32 0.0, %v5181
  %v5183 = vpop.f32.mrb[0].mxu0
  %5184 = vmatprep.mubr.bf16.mxu0 0
  %5185 = vmatmul.mubr.bf16.gmra.mrb[0].mxu0 %v5108
  %v5186 = vpop.f32.mrb[0].mxu0
  %v5187 = vadd.f32 0.0, %v5186
  %v5188 = vpop.f32.mrb[0].mxu0
  %v5189 = vpop.f32.mrb[0].mxu0
  %v5190 = vadd.f32 0.0, %v5189
  %v5191 = vpop.f32.mrb[0].mxu0
  %5192 = vmatprep.mubr.bf16.mxu0 0
  %5193 = vmatmul.mubr.bf16.gmra.mrb[0].mxu0 %v5109
  %v5194 = vpop.f32.mrb[0].mxu0
  %v5195 = vadd.f32 0.0, %v5194
  %v5196 = vpop.f32.mrb[0].mxu0
  %v5197 = vpop.f32.mrb[0].mxu0
  %v5198 = vadd.f32 0.0, %v5197
  %v5199 = vpop.f32.mrb[0].mxu0
  %5200 = vmatprep.mubr.bf16.mxu0 0
  %5201 = vmatmul.mubr.bf16.gmra.mrb[0].mxu0 %v5110
  %v5202 = vpop.f32.mrb[0].mxu0
  %v5203 = vadd.f32 0.0, %v5202
  %v5204 = vpop.f32.mrb[0].mxu0
  %v5205 = vpop.f32.mrb[0].mxu0
  %v5206 = vadd.f32 0.0, %v5205
  %v5207 = vpop.f32.mrb[0].mxu0
  %5208 = vmatprep.mubr.bf16.mxu0 0
  %5209 = vmatmul.mubr.bf16.gmra.mrb[0].mxu0 %v5111
  %v5210 = vpop.f32.mrb[0].mxu0
  %v5211 = vadd.f32 0.0, %v5210
  %v5212 = vpop.f32.mrb[0].mxu0
  %v5213 = vpop.f32.mrb[0].mxu0
  %v5214 = vadd.f32 0.0, %v5213
  %v5215 = vpop.f32.mrb[0].mxu0
  %5216 = vdwg.mxu0
  %v5217 = vpack.c.bf16 %v5158, %v5155
  %v5218 = vpack.c.bf16 %v5166, %v5163
  %v5219 = vpack.c.bf16 %v5174, %v5171
  %v5220 = vpack.c.bf16 %v5182, %v5179
  %v5221 = vpack.c.bf16 %v5190, %v5187
  %v5222 = vpack.c.bf16 %v5198, %v5195
  %v5223 = vpack.c.bf16 %v5206, %v5203
  %v5224 = vpack.c.bf16 %v5214, %v5211
  %v5225 = vld [vmem:[%s16] sm:$0xff]
  %v5226 = vld [vmem:[%s16 + $0x8] sm:$0xff]
  %v5227 = vld [vmem:[%s16 + $0x10] sm:$0xff]
  %v5228 = vld [vmem:[%s16 + $0x18] sm:$0xff]
  %v5229 = vld [vmem:[%s16 + $0x20] sm:$0xff]
  %v5230 = vld [vmem:[%s16 + $0x28] sm:$0xff]
  %v5231 = vld [vmem:[%s16 + $0x30] sm:$0xff]
  %v5232 = vld [vmem:[%s16 + $0x38] sm:$0xff]
  %v5233 = vld [vmem:[%s16 + $0x40] sm:$0xff]
  %v5234 = vld [vmem:[%s16 + $0x48] sm:$0xff]
  %v5235 = vld [vmem:[%s16 + $0x50] sm:$0xff]
  %v5236 = vld [vmem:[%s16 + $0x58] sm:$0xff]
  %v5237 = vld [vmem:[%s16 + $0x60] sm:$0xff]
  %v5238 = vld [vmem:[%s16 + $0x68] sm:$0xff]
  %v5239 = vld [vmem:[%s16 + $0x70] sm:$0xff]
  %v5240 = vld [vmem:[%s16 + $0x78] sm:$0xff]
  %s5241 = scalar_lea.vmem %s15, 64
  %v5242 = vld [vmem:[%s5241] sm:$0xf]
  %v5243 = vld [vmem:[%s5241 + $0x4] sm:$0xf]
  %v5244 = vld [vmem:[%s5241 + $0x8] sm:$0xf]
  %v5245 = vld [vmem:[%s5241 + $0xc] sm:$0xf]
  %v5246 = vld [vmem:[%s5241 + $0x10] sm:$0xf]
  %v5247 = vld [vmem:[%s5241 + $0x14] sm:$0xf]
  %v5248 = vld [vmem:[%s5241 + $0x18] sm:$0xf]
  %v5249 = vld [vmem:[%s5241 + $0x1c] sm:$0xf]
  %v5250 = vld [vmem:[%s5241 + $0x20] sm:$0xf]
  %v5251 = vld [vmem:[%s5241 + $0x24] sm:$0xf]
  %v5252 = vld [vmem:[%s5241 + $0x28] sm:$0xf]
  %v5253 = vld [vmem:[%s5241 + $0x2c] sm:$0xf]
  %v5254 = vld [vmem:[%s5241 + $0x30] sm:$0xf]
  %v5255 = vld [vmem:[%s5241 + $0x34] sm:$0xf]
  %v5256 = vld [vmem:[%s5241 + $0x38] sm:$0xf]
  %v5257 = vld [vmem:[%s5241 + $0x3c] sm:$0xf]
  %v5274 = vunpack.c.l.b16 %v5242
  %v5275 = vunpack.c.l.b16 %v5243
  %v5276 = vunpack.c.l.b16 %v5244
  %v5277 = vunpack.c.l.b16 %v5245
  %v5278 = vunpack.c.l.b16 %v5246
  %v5279 = vunpack.c.l.b16 %v5247
  %v5280 = vunpack.c.l.b16 %v5248
  %v5281 = vunpack.c.l.b16 %v5249
  %v5282 = vunpack.c.l.b16 %v5250
  %v5283 = vunpack.c.l.b16 %v5251
  %v5284 = vunpack.c.l.b16 %v5252
  %v5285 = vunpack.c.l.b16 %v5253
  %v5286 = vunpack.c.l.b16 %v5254
  %v5287 = vunpack.c.l.b16 %v5255
  %v5288 = vunpack.c.l.b16 %v5256
  %v5289 = vunpack.c.l.b16 %v5257
  %v5290 = vpack.c.b16 %v5275, %v5274
  %v5291 = vpack.c.b16 %v5277, %v5276
  %v5292 = vpack.c.b16 %v5279, %v5278
  %v5293 = vpack.c.b16 %v5281, %v5280
  %v5294 = vpack.c.b16 %v5283, %v5282
  %v5295 = vpack.c.b16 %v5285, %v5284
  %v5296 = vpack.c.b16 %v5287, %v5286
  %v5297 = vpack.c.b16 %v5289, %v5288
  %5306 = vmatprep.subr.bf16.mxu0 0
  %5307 = vmatpush1.bf16.msra.mxu0 %v5048
  %5308 = vmatprep.subr.bf16.mxu0 0
  %5309 = vmatpush1.bf16.msra.mxu0 %v5049
  %5310 = vmatprep.subr.bf16.mxu0 0
  %5311 = vmatpush1.bf16.msra.mxu0 %v5050
  %5312 = vmatprep.subr.bf16.mxu0 0
  %5313 = vmatpush1.bf16.msra.mxu0 %v5051
  %5314 = vmatprep.subr.bf16.mxu0 0
  %5315 = vmatpush1.bf16.msra.mxu0 %v5052
  %5316 = vmatprep.subr.bf16.mxu0 0
  %5317 = vmatpush1.bf16.msra.mxu0 %v5053
  %5318 = vmatprep.subr.bf16.mxu0 0
  %5319 = vmatpush1.bf16.msra.mxu0 %v5054
  %5320 = vmatprep.subr.bf16.mxu0 0
  %5321 = vmatpush1.bf16.msra.mxu0 %v5055
  %5322 = vmatprep.subr.bf16.mxu0 0
  %5323 = vmatpush1.bf16.msra.mxu0 0
  %5324 = vmatprep.subr.bf16.mxu0 0
  %5325 = vmatpush1.bf16.msra.mxu0 0
  %5326 = vmatprep.subr.bf16.mxu0 0
  %5327 = vmatpush1.bf16.msra.mxu0 0
  %5328 = vmatprep.subr.bf16.mxu0 0
  %5329 = vmatpush1.bf16.msra.mxu0 0
  %5330 = vmatprep.subr.bf16.mxu0 0
  %5331 = vmatpush1.bf16.msra.mxu0 0
  %5332 = vmatprep.subr.bf16.mxu0 0
  %5333 = vmatpush1.bf16.msra.mxu0 0
  %5334 = vmatprep.subr.bf16.mxu0 0
  %5335 = vmatpush1.bf16.msra.mxu0 0
  %5336 = vmatprep.subr.bf16.mxu0 0
  %5337 = vmatpush1.bf16.msra.mxu0 0
  %5338 = vmatprep.mubr.bf16.mxu0 0
  %5339 = vmatmul.mubr.bf16.gmra.mrb[0].mxu0 %v5290
  %v5340 = vpop.f32.mrb[0].mxu0
  %v5341 = vadd.f32 0.0, %v5340
  %v5342 = vpop.f32.mrb[0].mxu0
  %v5343 = vpop.f32.mrb[0].mxu0
  %v5344 = vadd.f32 0.0, %v5343
  %v5345 = vpop.f32.mrb[0].mxu0
  %5346 = vmatprep.mubr.bf16.mxu0 0
  %5347 = vmatmul.mubr.bf16.gmra.mrb[0].mxu0 %v5291
  %v5348 = vpop.f32.mrb[0].mxu0
  %v5349 = vadd.f32 0.0, %v5348
  %v5350 = vpop.f32.mrb[0].mxu0
  %v5351 = vpop.f32.mrb[0].mxu0
  %v5352 = vadd.f32 0.0, %v5351
  %v5353 = vpop.f32.mrb[0].mxu0
  %5354 = vmatprep.mubr.bf16.mxu0 0
  %5355 = vmatmul.mubr.bf16.gmra.mrb[0].mxu0 %v5292
  %v5356 = vpop.f32.mrb[0].mxu0
  %v5357 = vadd.f32 0.0, %v5356
  %v5358 = vpop.f32.mrb[0].mxu0
  %v5359 = vpop.f32.mrb[0].mxu0
  %v5360 = vadd.f32 0.0, %v5359
  %v5361 = vpop.f32.mrb[0].mxu0
  %5362 = vmatprep.mubr.bf16.mxu0 0
  %5363 = vmatmul.mubr.bf16.gmra.mrb[0].mxu0 %v5293
  %v5364 = vpop.f32.mrb[0].mxu0
  %v5365 = vadd.f32 0.0, %v5364
  %v5366 = vpop.f32.mrb[0].mxu0
  %v5367 = vpop.f32.mrb[0].mxu0
  %v5368 = vadd.f32 0.0, %v5367
  %v5369 = vpop.f32.mrb[0].mxu0
  %5370 = vmatprep.mubr.bf16.mxu0 0
  %5371 = vmatmul.mubr.bf16.gmra.mrb[0].mxu0 %v5294
  %v5372 = vpop.f32.mrb[0].mxu0
  %v5373 = vadd.f32 0.0, %v5372
  %v5374 = vpop.f32.mrb[0].mxu0
  %v5375 = vpop.f32.mrb[0].mxu0
  %v5376 = vadd.f32 0.0, %v5375
  %v5377 = vpop.f32.mrb[0].mxu0
  %5378 = vmatprep.mubr.bf16.mxu0 0
  %5379 = vmatmul.mubr.bf16.gmra.mrb[0].mxu0 %v5295
  %v5380 = vpop.f32.mrb[0].mxu0
  %v5381 = vadd.f32 0.0, %v5380
  %v5382 = vpop.f32.mrb[0].mxu0
  %v5383 = vpop.f32.mrb[0].mxu0
  %v5384 = vadd.f32 0.0, %v5383
  %v5385 = vpop.f32.mrb[0].mxu0
  %5386 = vmatprep.mubr.bf16.mxu0 0
  %5387 = vmatmul.mubr.bf16.gmra.mrb[0].mxu0 %v5296
  %v5388 = vpop.f32.mrb[0].mxu0
  %v5389 = vadd.f32 0.0, %v5388
  %v5390 = vpop.f32.mrb[0].mxu0
  %v5391 = vpop.f32.mrb[0].mxu0
  %v5392 = vadd.f32 0.0, %v5391
  %v5393 = vpop.f32.mrb[0].mxu0
  %5394 = vmatprep.mubr.bf16.mxu0 0
  %5395 = vmatmul.mubr.bf16.gmra.mrb[0].mxu0 %v5297
  %v5396 = vpop.f32.mrb[0].mxu0
  %v5397 = vadd.f32 0.0, %v5396
  %v5398 = vpop.f32.mrb[0].mxu0
  %v5399 = vpop.f32.mrb[0].mxu0
  %v5400 = vadd.f32 0.0, %v5399
  %v5401 = vpop.f32.mrb[0].mxu0
  %5402 = vdwg.mxu0
  %v5403 = vpack.c.bf16 %v5344, %v5341
  %v5404 = vpack.c.bf16 %v5352, %v5349
  %v5405 = vpack.c.bf16 %v5360, %v5357
  %v5406 = vpack.c.bf16 %v5368, %v5365
  %v5407 = vpack.c.bf16 %v5376, %v5373
  %v5408 = vpack.c.bf16 %v5384, %v5381
  %v5409 = vpack.c.bf16 %v5392, %v5389
  %v5410 = vpack.c.bf16 %v5400, %v5397
  %s5411 = scalar_lea.vmem %s16, 128
  %v5412 = vld [vmem:[%s5411] sm:$0xff]
  %v5413 = vld [vmem:[%s5411 + $0x8] sm:$0xff]
  %v5414 = vld [vmem:[%s5411 + $0x10] sm:$0xff]
  %v5415 = vld [vmem:[%s5411 + $0x18] sm:$0xff]
  %v5416 = vld [vmem:[%s5411 + $0x20] sm:$0xff]
  %v5417 = vld [vmem:[%s5411 + $0x28] sm:$0xff]
  %v5418 = vld [vmem:[%s5411 + $0x30] sm:$0xff]
  %v5419 = vld [vmem:[%s5411 + $0x38] sm:$0xff]
  %v5420 = vld [vmem:[%s5411 + $0x40] sm:$0xff]
  %v5421 = vld [vmem:[%s5411 + $0x48] sm:$0xff]
  %v5422 = vld [vmem:[%s5411 + $0x50] sm:$0xff]
  %v5423 = vld [vmem:[%s5411 + $0x58] sm:$0xff]
  %v5424 = vld [vmem:[%s5411 + $0x60] sm:$0xff]
  %v5425 = vld [vmem:[%s5411 + $0x68] sm:$0xff]
  %v5426 = vld [vmem:[%s5411 + $0x70] sm:$0xff]
  %v5427 = vld [vmem:[%s5411 + $0x78] sm:$0xff]
  %v5444 = vunpack.c.l.b16 %v5412
  %v5445 = vunpack.c.h.b16 %v5412
  %v5446 = vunpack.c.l.b16 %v5413
  %v5447 = vunpack.c.h.b16 %v5413
  %v5448 = vunpack.c.l.b16 %v5414
  %v5449 = vunpack.c.h.b16 %v5414
  %v5450 = vunpack.c.l.b16 %v5415
  %v5451 = vunpack.c.h.b16 %v5415
  %v5452 = vunpack.c.l.b16 %v5416
  %v5453 = vunpack.c.h.b16 %v5416
  %v5454 = vunpack.c.l.b16 %v5417
  %v5455 = vunpack.c.h.b16 %v5417
  %v5456 = vunpack.c.l.b16 %v5418
  %v5457 = vunpack.c.h.b16 %v5418
  %v5458 = vunpack.c.l.b16 %v5419
  %v5459 = vunpack.c.h.b16 %v5419
  %v5460 = vunpack.c.l.b16 %v5420
  %v5461 = vunpack.c.h.b16 %v5420
  %v5462 = vunpack.c.l.b16 %v5421
  %v5463 = vunpack.c.h.b16 %v5421
  %v5464 = vunpack.c.l.b16 %v5422
  %v5465 = vunpack.c.h.b16 %v5422
  %v5466 = vunpack.c.l.b16 %v5423
  %v5467 = vunpack.c.h.b16 %v5423
  %v5468 = vunpack.c.l.b16 %v5424
  %v5469 = vunpack.c.h.b16 %v5424
  %v5470 = vunpack.c.l.b16 %v5425
  %v5471 = vunpack.c.h.b16 %v5425
  %v5472 = vunpack.c.l.b16 %v5426
  %v5473 = vunpack.c.h.b16 %v5426
  %v5474 = vunpack.c.l.b16 %v5427
  %v5475 = vunpack.c.h.b16 %v5427
  %v5476 = vpack.c.b16 %v5446, %v5444
  %v5477 = vpack.c.b16 %v5447, %v5445
  %v5478 = vpack.c.b16 %v5450, %v5448
  %v5479 = vpack.c.b16 %v5451, %v5449
  %v5480 = vpack.c.b16 %v5454, %v5452
  %v5481 = vpack.c.b16 %v5455, %v5453
  %v5482 = vpack.c.b16 %v5458, %v5456
  %v5483 = vpack.c.b16 %v5459, %v5457
  %v5484 = vpack.c.b16 %v5462, %v5460
  %v5485 = vpack.c.b16 %v5463, %v5461
  %v5486 = vpack.c.b16 %v5466, %v5464
  %v5487 = vpack.c.b16 %v5467, %v5465
  %v5488 = vpack.c.b16 %v5470, %v5468
  %v5489 = vpack.c.b16 %v5471, %v5469
  %v5490 = vpack.c.b16 %v5474, %v5472
  %v5491 = vpack.c.b16 %v5475, %v5473
  %5508 = vmatprep.subr.bf16.mxu0 %v5477
  %5509 = vmatpush1.bf16.msra.mxu0 %v5476
  %5510 = vmatprep.subr.bf16.mxu0 %v5479
  %5511 = vmatpush1.bf16.msra.mxu0 %v5478
  %5512 = vmatprep.subr.bf16.mxu0 %v5481
  %5513 = vmatpush1.bf16.msra.mxu0 %v5480
  %5514 = vmatprep.subr.bf16.mxu0 %v5483
  %5515 = vmatpush1.bf16.msra.mxu0 %v5482
  %5516 = vmatprep.subr.bf16.mxu0 %v5485
  %5517 = vmatpush1.bf16.msra.mxu0 %v5484
  %5518 = vmatprep.subr.bf16.mxu0 %v5487
  %5519 = vmatpush1.bf16.msra.mxu0 %v5486
  %5520 = vmatprep.subr.bf16.mxu0 %v5489
  %5521 = vmatpush1.bf16.msra.mxu0 %v5488
  %5522 = vmatprep.subr.bf16.mxu0 %v5491
  %5523 = vmatpush1.bf16.msra.mxu0 %v5490
  %5524 = vmatprep.subr.bf16.mxu0 0
  %5525 = vmatpush1.bf16.msra.mxu0 0
  %5526 = vmatprep.subr.bf16.mxu0 0
  %5527 = vmatpush1.bf16.msra.mxu0 0
  %5528 = vmatprep.subr.bf16.mxu0 0
  %5529 = vmatpush1.bf16.msra.mxu0 0
  %5530 = vmatprep.subr.bf16.mxu0 0
  %5531 = vmatpush1.bf16.msra.mxu0 0
  %5532 = vmatprep.subr.bf16.mxu0 0
  %5533 = vmatpush1.bf16.msra.mxu0 0
  %5534 = vmatprep.subr.bf16.mxu0 0
  %5535 = vmatpush1.bf16.msra.mxu0 0
  %5536 = vmatprep.subr.bf16.mxu0 0
  %5537 = vmatpush1.bf16.msra.mxu0 0
  %5538 = vmatprep.subr.bf16.mxu0 0
  %5539 = vmatpush1.bf16.msra.mxu0 0
  %5540 = vmatprep.mubr.bf16.mxu0 0
  %5541 = vmatmul.mubr.bf16.gmra.mrb[0].mxu0 %v5403
  %v5542 = vpop.f32.mrb[0].mxu0
  %v5543 = vadd.f32 0.0, %v5542
  %v5544 = vpop.f32.mrb[0].mxu0
  %v5545 = vadd.f32 0.0, %v5544
  %v5546 = vpop.f32.mrb[0].mxu0
  %v5547 = vadd.f32 0.0, %v5546
  %v5548 = vpop.f32.mrb[0].mxu0
  %v5549 = vadd.f32 0.0, %v5548
  %5550 = vmatprep.mubr.bf16.mxu0 0
  %5551 = vmatmul.mubr.bf16.gmra.mrb[0].mxu0 %v5404
  %v5552 = vpop.f32.mrb[0].mxu0
  %v5553 = vadd.f32 0.0, %v5552
  %v5554 = vpop.f32.mrb[0].mxu0
  %v5555 = vadd.f32 0.0, %v5554
  %v5556 = vpop.f32.mrb[0].mxu0
  %v5557 = vadd.f32 0.0, %v5556
  %v5558 = vpop.f32.mrb[0].mxu0
  %v5559 = vadd.f32 0.0, %v5558
  %5560 = vmatprep.mubr.bf16.mxu0 0
  %5561 = vmatmul.mubr.bf16.gmra.mrb[0].mxu0 %v5405
  %v5562 = vpop.f32.mrb[0].mxu0
  %v5563 = vadd.f32 0.0, %v5562
  %v5564 = vpop.f32.mrb[0].mxu0
  %v5565 = vadd.f32 0.0, %v5564
  %v5566 = vpop.f32.mrb[0].mxu0
  %v5567 = vadd.f32 0.0, %v5566
  %v5568 = vpop.f32.mrb[0].mxu0
  %v5569 = vadd.f32 0.0, %v5568
  %5570 = vmatprep.mubr.bf16.mxu0 0
  %5571 = vmatmul.mubr.bf16.gmra.mrb[0].mxu0 %v5406
  %v5572 = vpop.f32.mrb[0].mxu0
  %v5573 = vadd.f32 0.0, %v5572
  %v5574 = vpop.f32.mrb[0].mxu0
  %v5575 = vadd.f32 0.0, %v5574
  %v5576 = vpop.f32.mrb[0].mxu0
  %v5577 = vadd.f32 0.0, %v5576
  %v5578 = vpop.f32.mrb[0].mxu0
  %v5579 = vadd.f32 0.0, %v5578
  %5580 = vmatprep.mubr.bf16.mxu0 0
  %5581 = vmatmul.mubr.bf16.gmra.mrb[0].mxu0 %v5407
  %v5582 = vpop.f32.mrb[0].mxu0
  %v5583 = vadd.f32 0.0, %v5582
  %v5584 = vpop.f32.mrb[0].mxu0
  %v5585 = vadd.f32 0.0, %v5584
  %v5586 = vpop.f32.mrb[0].mxu0
  %v5587 = vadd.f32 0.0, %v5586
  %v5588 = vpop.f32.mrb[0].mxu0
  %v5589 = vadd.f32 0.0, %v5588
  %5590 = vmatprep.mubr.bf16.mxu0 0
  %5591 = vmatmul.mubr.bf16.gmra.mrb[0].mxu0 %v5408
  %v5592 = vpop.f32.mrb[0].mxu0
  %v5593 = vadd.f32 0.0, %v5592
  %v5594 = vpop.f32.mrb[0].mxu0
  %v5595 = vadd.f32 0.0, %v5594
  %v5596 = vpop.f32.mrb[0].mxu0
  %v5597 = vadd.f32 0.0, %v5596
  %v5598 = vpop.f32.mrb[0].mxu0
  %v5599 = vadd.f32 0.0, %v5598
  %5600 = vmatprep.mubr.bf16.mxu0 0
  %5601 = vmatmul.mubr.bf16.gmra.mrb[0].mxu0 %v5409
  %v5602 = vpop.f32.mrb[0].mxu0
  %v5603 = vadd.f32 0.0, %v5602
  %v5604 = vpop.f32.mrb[0].mxu0
  %v5605 = vadd.f32 0.0, %v5604
  %v5606 = vpop.f32.mrb[0].mxu0
  %v5607 = vadd.f32 0.0, %v5606
  %v5608 = vpop.f32.mrb[0].mxu0
  %v5609 = vadd.f32 0.0, %v5608
  %5610 = vmatprep.mubr.bf16.mxu0 0
  %5611 = vmatmul.mubr.bf16.gmra.mrb[0].mxu0 %v5410
  %v5612 = vpop.f32.mrb[0].mxu0
  %v5613 = vadd.f32 0.0, %v5612
  %v5614 = vpop.f32.mrb[0].mxu0
  %v5615 = vadd.f32 0.0, %v5614
  %v5616 = vpop.f32.mrb[0].mxu0
  %v5617 = vadd.f32 0.0, %v5616
  %v5618 = vpop.f32.mrb[0].mxu0
  %v5619 = vadd.f32 0.0, %v5618
  %5620 = vdwg.mxu0
  %v5637 = vunpack.c.l.b16 %v5225
  %v5638 = vunpack.c.h.b16 %v5225
  %v5639 = vunpack.c.l.b16 %v5226
  %v5640 = vunpack.c.h.b16 %v5226
  %v5641 = vunpack.c.l.b16 %v5227
  %v5642 = vunpack.c.h.b16 %v5227
  %v5643 = vunpack.c.l.b16 %v5228
  %v5644 = vunpack.c.h.b16 %v5228
  %v5645 = vunpack.c.l.b16 %v5229
  %v5646 = vunpack.c.h.b16 %v5229
  %v5647 = vunpack.c.l.b16 %v5230
  %v5648 = vunpack.c.h.b16 %v5230
  %v5649 = vunpack.c.l.b16 %v5231
  %v5650 = vunpack.c.h.b16 %v5231
  %v5651 = vunpack.c.l.b16 %v5232
  %v5652 = vunpack.c.h.b16 %v5232
  %v5653 = vunpack.c.l.b16 %v5233
  %v5654 = vunpack.c.h.b16 %v5233
  %v5655 = vunpack.c.l.b16 %v5234
  %v5656 = vunpack.c.h.b16 %v5234
  %v5657 = vunpack.c.l.b16 %v5235
  %v5658 = vunpack.c.h.b16 %v5235
  %v5659 = vunpack.c.l.b16 %v5236
  %v5660 = vunpack.c.h.b16 %v5236
  %v5661 = vunpack.c.l.b16 %v5237
  %v5662 = vunpack.c.h.b16 %v5237
  %v5663 = vunpack.c.l.b16 %v5238
  %v5664 = vunpack.c.h.b16 %v5238
  %v5665 = vunpack.c.l.b16 %v5239
  %v5666 = vunpack.c.h.b16 %v5239
  %v5667 = vunpack.c.l.b16 %v5240
  %v5668 = vunpack.c.h.b16 %v5240
  %v5669 = vpack.c.b16 %v5639, %v5637
  %v5670 = vpack.c.b16 %v5640, %v5638
  %v5671 = vpack.c.b16 %v5643, %v5641
  %v5672 = vpack.c.b16 %v5644, %v5642
  %v5673 = vpack.c.b16 %v5647, %v5645
  %v5674 = vpack.c.b16 %v5648, %v5646
  %v5675 = vpack.c.b16 %v5651, %v5649
  %v5676 = vpack.c.b16 %v5652, %v5650
  %v5677 = vpack.c.b16 %v5655, %v5653
  %v5678 = vpack.c.b16 %v5656, %v5654
  %v5679 = vpack.c.b16 %v5659, %v5657
  %v5680 = vpack.c.b16 %v5660, %v5658
  %v5681 = vpack.c.b16 %v5663, %v5661
  %v5682 = vpack.c.b16 %v5664, %v5662
  %v5683 = vpack.c.b16 %v5667, %v5665
  %v5684 = vpack.c.b16 %v5668, %v5666
  %5701 = vmatprep.subr.bf16.mxu0 %v5670
  %5702 = vmatpush1.bf16.msra.mxu0 %v5669
  %5703 = vmatprep.subr.bf16.mxu0 %v5672
  %5704 = vmatpush1.bf16.msra.mxu0 %v5671
  %5705 = vmatprep.subr.bf16.mxu0 %v5674
  %5706 = vmatpush1.bf16.msra.mxu0 %v5673
  %5707 = vmatprep.subr.bf16.mxu0 %v5676
  %5708 = vmatpush1.bf16.msra.mxu0 %v5675
  %5709 = vmatprep.subr.bf16.mxu0 %v5678
  %5710 = vmatpush1.bf16.msra.mxu0 %v5677
  %5711 = vmatprep.subr.bf16.mxu0 %v5680
  %5712 = vmatpush1.bf16.msra.mxu0 %v5679
  %5713 = vmatprep.subr.bf16.mxu0 %v5682
  %5714 = vmatpush1.bf16.msra.mxu0 %v5681
  %5715 = vmatprep.subr.bf16.mxu0 %v5684
  %5716 = vmatpush1.bf16.msra.mxu0 %v5683
  %5717 = vmatprep.subr.bf16.mxu0 0
  %5718 = vmatpush1.bf16.msra.mxu0 0
  %5719 = vmatprep.subr.bf16.mxu0 0
  %5720 = vmatpush1.bf16.msra.mxu0 0
  %5721 = vmatprep.subr.bf16.mxu0 0
  %5722 = vmatpush1.bf16.msra.mxu0 0
  %5723 = vmatprep.subr.bf16.mxu0 0
  %5724 = vmatpush1.bf16.msra.mxu0 0
  %5725 = vmatprep.subr.bf16.mxu0 0
  %5726 = vmatpush1.bf16.msra.mxu0 0
  %5727 = vmatprep.subr.bf16.mxu0 0
  %5728 = vmatpush1.bf16.msra.mxu0 0
  %5729 = vmatprep.subr.bf16.mxu0 0
  %5730 = vmatpush1.bf16.msra.mxu0 0
  %5731 = vmatprep.subr.bf16.mxu0 0
  %5732 = vmatpush1.bf16.msra.mxu0 0
  %5733 = vmatprep.mubr.bf16.mxu0 0
  %5734 = vmatmul.mubr.bf16.gmra.mrb[0].mxu0 %v5217
  %v5735 = vpop.f32.mrb[0].mxu0
  %v5736 = vadd.f32 %v5543, %v5735
  %v5737 = vpop.f32.mrb[0].mxu0
  %v5738 = vadd.f32 %v5545, %v5737
  %v5739 = vpop.f32.mrb[0].mxu0
  %v5740 = vadd.f32 %v5547, %v5739
  %v5741 = vpop.f32.mrb[0].mxu0
  %v5742 = vadd.f32 %v5549, %v5741
  %5743 = vmatprep.mubr.bf16.mxu0 0
  %5744 = vmatmul.mubr.bf16.gmra.mrb[0].mxu0 %v5218
  %v5745 = vpop.f32.mrb[0].mxu0
  %v5746 = vadd.f32 %v5553, %v5745
  %v5747 = vpop.f32.mrb[0].mxu0
  %v5748 = vadd.f32 %v5555, %v5747
  %v5749 = vpop.f32.mrb[0].mxu0
  %v5750 = vadd.f32 %v5557, %v5749
  %v5751 = vpop.f32.mrb[0].mxu0
  %v5752 = vadd.f32 %v5559, %v5751
  %5753 = vmatprep.mubr.bf16.mxu0 0
  %5754 = vmatmul.mubr.bf16.gmra.mrb[0].mxu0 %v5219
  %v5755 = vpop.f32.mrb[0].mxu0
  %v5756 = vadd.f32 %v5563, %v5755
  %v5757 = vpop.f32.mrb[0].mxu0
  %v5758 = vadd.f32 %v5565, %v5757
  %v5759 = vpop.f32.mrb[0].mxu0
  %v5760 = vadd.f32 %v5567, %v5759
  %v5761 = vpop.f32.mrb[0].mxu0
  %v5762 = vadd.f32 %v5569, %v5761
  %5763 = vmatprep.mubr.bf16.mxu0 0
  %5764 = vmatmul.mubr.bf16.gmra.mrb[0].mxu0 %v5220
  %v5765 = vpop.f32.mrb[0].mxu0
  %v5766 = vadd.f32 %v5573, %v5765
  %v5767 = vpop.f32.mrb[0].mxu0
  %v5768 = vadd.f32 %v5575, %v5767
  %v5769 = vpop.f32.mrb[0].mxu0
  %v5770 = vadd.f32 %v5577, %v5769
  %v5771 = vpop.f32.mrb[0].mxu0
  %v5772 = vadd.f32 %v5579, %v5771
  %5773 = vmatprep.mubr.bf16.mxu0 0
  %5774 = vmatmul.mubr.bf16.gmra.mrb[0].mxu0 %v5221
  %v5775 = vpop.f32.mrb[0].mxu0
  %v5776 = vadd.f32 %v5583, %v5775
  %v5777 = vpop.f32.mrb[0].mxu0
  %v5778 = vadd.f32 %v5585, %v5777
  %v5779 = vpop.f32.mrb[0].mxu0
  %v5780 = vadd.f32 %v5587, %v5779
  %v5781 = vpop.f32.mrb[0].mxu0
  %v5782 = vadd.f32 %v5589, %v5781
  %5783 = vmatprep.mubr.bf16.mxu0 0
  %5784 = vmatmul.mubr.bf16.gmra.mrb[0].mxu0 %v5222
  %v5785 = vpop.f32.mrb[0].mxu0
  %v5786 = vadd.f32 %v5593, %v5785
  %v5787 = vpop.f32.mrb[0].mxu0
  %v5788 = vadd.f32 %v5595, %v5787
  %v5789 = vpop.f32.mrb[0].mxu0
  %v5790 = vadd.f32 %v5597, %v5789
  %v5791 = vpop.f32.mrb[0].mxu0
  %v5792 = vadd.f32 %v5599, %v5791
  %5793 = vmatprep.mubr.bf16.mxu0 0
  %5794 = vmatmul.mubr.bf16.gmra.mrb[0].mxu0 %v5223
  %v5795 = vpop.f32.mrb[0].mxu0
  %v5796 = vadd.f32 %v5603, %v5795
  %v5797 = vpop.f32.mrb[0].mxu0
  %v5798 = vadd.f32 %v5605, %v5797
  %v5799 = vpop.f32.mrb[0].mxu0
  %v5800 = vadd.f32 %v5607, %v5799
  %v5801 = vpop.f32.mrb[0].mxu0
  %v5802 = vadd.f32 %v5609, %v5801
  %5803 = vmatprep.mubr.bf16.mxu0 0
  %5804 = vmatmul.mubr.bf16.gmra.mrb[0].mxu0 %v5224
  %v5805 = vpop.f32.mrb[0].mxu0
  %v5806 = vadd.f32 %v5613, %v5805
  %v5807 = vpop.f32.mrb[0].mxu0
  %v5808 = vadd.f32 %v5615, %v5807
  %v5809 = vpop.f32.mrb[0].mxu0
  %v5810 = vadd.f32 %v5617, %v5809
  %v5811 = vpop.f32.mrb[0].mxu0
  %v5812 = vadd.f32 %v5619, %v5811
  %5813 = vdwg.mxu0
  %s5814 = scalar_lea.vmem %s15, 128
  %v5815 = vld [vmem:[%s5814] sm:$0xf]
  %v5816 = vld [vmem:[%s5814 + $0x4] sm:$0xf]
  %v5817 = vld [vmem:[%s5814 + $0x8] sm:$0xf]
  %v5818 = vld [vmem:[%s5814 + $0xc] sm:$0xf]
  %v5819 = vld [vmem:[%s5814 + $0x10] sm:$0xf]
  %v5820 = vld [vmem:[%s5814 + $0x14] sm:$0xf]
  %v5821 = vld [vmem:[%s5814 + $0x18] sm:$0xf]
  %v5822 = vld [vmem:[%s5814 + $0x1c] sm:$0xf]
  %v5823 = vld [vmem:[%s5814 + $0x20] sm:$0xf]
  %v5824 = vld [vmem:[%s5814 + $0x24] sm:$0xf]
  %v5825 = vld [vmem:[%s5814 + $0x28] sm:$0xf]
  %v5826 = vld [vmem:[%s5814 + $0x2c] sm:$0xf]
  %v5827 = vld [vmem:[%s5814 + $0x30] sm:$0xf]
  %v5828 = vld [vmem:[%s5814 + $0x34] sm:$0xf]
  %v5829 = vld [vmem:[%s5814 + $0x38] sm:$0xf]
  %v5830 = vld [vmem:[%s5814 + $0x3c] sm:$0xf]
  %v5847 = vunpack.c.l.b16 %v5815
  %v5848 = vunpack.c.l.b16 %v5816
  %v5849 = vunpack.c.l.b16 %v5817
  %v5850 = vunpack.c.l.b16 %v5818
  %v5851 = vunpack.c.l.b16 %v5819
  %v5852 = vunpack.c.l.b16 %v5820
  %v5853 = vunpack.c.l.b16 %v5821
  %v5854 = vunpack.c.l.b16 %v5822
  %v5855 = vunpack.c.l.b16 %v5823
  %v5856 = vunpack.c.l.b16 %v5824
  %v5857 = vunpack.c.l.b16 %v5825
  %v5858 = vunpack.c.l.b16 %v5826
  %v5859 = vunpack.c.l.b16 %v5827
  %v5860 = vunpack.c.l.b16 %v5828
  %v5861 = vunpack.c.l.b16 %v5829
  %v5862 = vunpack.c.l.b16 %v5830
  %v5863 = vpack.c.b16 %v5848, %v5847
  %v5864 = vpack.c.b16 %v5850, %v5849
  %v5865 = vpack.c.b16 %v5852, %v5851
  %v5866 = vpack.c.b16 %v5854, %v5853
  %v5867 = vpack.c.b16 %v5856, %v5855
  %v5868 = vpack.c.b16 %v5858, %v5857
  %v5869 = vpack.c.b16 %v5860, %v5859
  %v5870 = vpack.c.b16 %v5862, %v5861
  %5879 = vmatprep.subr.bf16.mxu0 0
  %5880 = vmatpush1.bf16.msra.mxu0 %v5048
  %5881 = vmatprep.subr.bf16.mxu0 0
  %5882 = vmatpush1.bf16.msra.mxu0 %v5049
  %5883 = vmatprep.subr.bf16.mxu0 0
  %5884 = vmatpush1.bf16.msra.mxu0 %v5050
  %5885 = vmatprep.subr.bf16.mxu0 0
  %5886 = vmatpush1.bf16.msra.mxu0 %v5051
  %5887 = vmatprep.subr.bf16.mxu0 0
  %5888 = vmatpush1.bf16.msra.mxu0 %v5052
  %5889 = vmatprep.subr.bf16.mxu0 0
  %5890 = vmatpush1.bf16.msra.mxu0 %v5053
  %5891 = vmatprep.subr.bf16.mxu0 0
  %5892 = vmatpush1.bf16.msra.mxu0 %v5054
  %5893 = vmatprep.subr.bf16.mxu0 0
  %5894 = vmatpush1.bf16.msra.mxu0 %v5055
  %5895 = vmatprep.subr.bf16.mxu0 0
  %5896 = vmatpush1.bf16.msra.mxu0 0
  %5897 = vmatprep.subr.bf16.mxu0 0
  %5898 = vmatpush1.bf16.msra.mxu0 0
  %5899 = vmatprep.subr.bf16.mxu0 0
  %5900 = vmatpush1.bf16.msra.mxu0 0
  %5901 = vmatprep.subr.bf16.mxu0 0
  %5902 = vmatpush1.bf16.msra.mxu0 0
  %5903 = vmatprep.subr.bf16.mxu0 0
  %5904 = vmatpush1.bf16.msra.mxu0 0
  %5905 = vmatprep.subr.bf16.mxu0 0
  %5906 = vmatpush1.bf16.msra.mxu0 0
  %5907 = vmatprep.subr.bf16.mxu0 0
  %5908 = vmatpush1.bf16.msra.mxu0 0
  %5909 = vmatprep.subr.bf16.mxu0 0
  %5910 = vmatpush1.bf16.msra.mxu0 0
  %5911 = vmatprep.mubr.bf16.mxu0 0
  %5912 = vmatmul.mubr.bf16.gmra.mrb[0].mxu0 %v5863
  %v5913 = vpop.f32.mrb[0].mxu0
  %v5914 = vadd.f32 0.0, %v5913
  %v5915 = vpop.f32.mrb[0].mxu0
  %v5916 = vpop.f32.mrb[0].mxu0
  %v5917 = vadd.f32 0.0, %v5916
  %v5918 = vpop.f32.mrb[0].mxu0
  %5919 = vmatprep.mubr.bf16.mxu0 0
  %5920 = vmatmul.mubr.bf16.gmra.mrb[0].mxu0 %v5864
  %v5921 = vpop.f32.mrb[0].mxu0
  %v5922 = vadd.f32 0.0, %v5921
  %v5923 = vpop.f32.mrb[0].mxu0
  %v5924 = vpop.f32.mrb[0].mxu0
  %v5925 = vadd.f32 0.0, %v5924
  %v5926 = vpop.f32.mrb[0].mxu0
  %5927 = vmatprep.mubr.bf16.mxu0 0
  %5928 = vmatmul.mubr.bf16.gmra.mrb[0].mxu0 %v5865
  %v5929 = vpop.f32.mrb[0].mxu0
  %v5930 = vadd.f32 0.0, %v5929
  %v5931 = vpop.f32.mrb[0].mxu0
  %v5932 = vpop.f32.mrb[0].mxu0
  %v5933 = vadd.f32 0.0, %v5932
  %v5934 = vpop.f32.mrb[0].mxu0
  %5935 = vmatprep.mubr.bf16.mxu0 0
  %5936 = vmatmul.mubr.bf16.gmra.mrb[0].mxu0 %v5866
  %v5937 = vpop.f32.mrb[0].mxu0
  %v5938 = vadd.f32 0.0, %v5937
  %v5939 = vpop.f32.mrb[0].mxu0
  %v5940 = vpop.f32.mrb[0].mxu0
  %v5941 = vadd.f32 0.0, %v5940
  %v5942 = vpop.f32.mrb[0].mxu0
  %5943 = vmatprep.mubr.bf16.mxu0 0
  %5944 = vmatmul.mubr.bf16.gmra.mrb[0].mxu0 %v5867
  %v5945 = vpop.f32.mrb[0].mxu0
  %v5946 = vadd.f32 0.0, %v5945
  %v5947 = vpop.f32.mrb[0].mxu0
  %v5948 = vpop.f32.mrb[0].mxu0
  %v5949 = vadd.f32 0.0, %v5948
  %v5950 = vpop.f32.mrb[0].mxu0
  %5951 = vmatprep.mubr.bf16.mxu0 0
  %5952 = vmatmul.mubr.bf16.gmra.mrb[0].mxu0 %v5868
  %v5953 = vpop.f32.mrb[0].mxu0
  %v5954 = vadd.f32 0.0, %v5953
  %v5955 = vpop.f32.mrb[0].mxu0
  %v5956 = vpop.f32.mrb[0].mxu0
  %v5957 = vadd.f32 0.0, %v5956
  %v5958 = vpop.f32.mrb[0].mxu0
  %5959 = vmatprep.mubr.bf16.mxu0 0
  %5960 = vmatmul.mubr.bf16.gmra.mrb[0].mxu0 %v5869
  %v5961 = vpop.f32.mrb[0].mxu0
  %v5962 = vadd.f32 0.0, %v5961
  %v5963 = vpop.f32.mrb[0].mxu0
  %v5964 = vpop.f32.mrb[0].mxu0
  %v5965 = vadd.f32 0.0, %v5964
  %v5966 = vpop.f32.mrb[0].mxu0
  %5967 = vmatprep.mubr.bf16.mxu0 0
  %5968 = vmatmul.mubr.bf16.gmra.mrb[0].mxu0 %v5870
  %v5969 = vpop.f32.mrb[0].mxu0
  %v5970 = vadd.f32 0.0, %v5969
  %v5971 = vpop.f32.mrb[0].mxu0
  %v5972 = vpop.f32.mrb[0].mxu0
  %v5973 = vadd.f32 0.0, %v5972
  %v5974 = vpop.f32.mrb[0].mxu0
  %5975 = vdwg.mxu0
  %v5976 = vpack.c.bf16 %v5917, %v5914
  %v5977 = vpack.c.bf16 %v5925, %v5922
  %v5978 = vpack.c.bf16 %v5933, %v5930
  %v5979 = vpack.c.bf16 %v5941, %v5938
  %v5980 = vpack.c.bf16 %v5949, %v5946
  %v5981 = vpack.c.bf16 %v5957, %v5954
  %v5982 = vpack.c.bf16 %v5965, %v5962
  %v5983 = vpack.c.bf16 %v5973, %v5970
  %s5984 = scalar_lea.vmem %s16, 256
  %v5985 = vld [vmem:[%s5984] sm:$0xff]
  %v5986 = vld [vmem:[%s5984 + $0x8] sm:$0xff]
  %v5987 = vld [vmem:[%s5984 + $0x10] sm:$0xff]
  %v5988 = vld [vmem:[%s5984 + $0x18] sm:$0xff]
  %v5989 = vld [vmem:[%s5984 + $0x20] sm:$0xff]
  %v5990 = vld [vmem:[%s5984 + $0x28] sm:$0xff]
  %v5991 = vld [vmem:[%s5984 + $0x30] sm:$0xff]
  %v5992 = vld [vmem:[%s5984 + $0x38] sm:$0xff]
  %v5993 = vld [vmem:[%s5984 + $0x40] sm:$0xff]
  %v5994 = vld [vmem:[%s5984 + $0x48] sm:$0xff]
  %v5995 = vld [vmem:[%s5984 + $0x50] sm:$0xff]
  %v5996 = vld [vmem:[%s5984 + $0x58] sm:$0xff]
  %v5997 = vld [vmem:[%s5984 + $0x60] sm:$0xff]
  %v5998 = vld [vmem:[%s5984 + $0x68] sm:$0xff]
  %v5999 = vld [vmem:[%s5984 + $0x70] sm:$0xff]
  %v6000 = vld [vmem:[%s5984 + $0x78] sm:$0xff]
  %v6017 = vunpack.c.l.b16 %v5985
  %v6018 = vunpack.c.h.b16 %v5985
  %v6019 = vunpack.c.l.b16 %v5986
  %v6020 = vunpack.c.h.b16 %v5986
  %v6021 = vunpack.c.l.b16 %v5987
  %v6022 = vunpack.c.h.b16 %v5987
  %v6023 = vunpack.c.l.b16 %v5988
  %v6024 = vunpack.c.h.b16 %v5988
  %v6025 = vunpack.c.l.b16 %v5989
  %v6026 = vunpack.c.h.b16 %v5989
  %v6027 = vunpack.c.l.b16 %v5990
  %v6028 = vunpack.c.h.b16 %v5990
  %v6029 = vunpack.c.l.b16 %v5991
  %v6030 = vunpack.c.h.b16 %v5991
  %v6031 = vunpack.c.l.b16 %v5992
  %v6032 = vunpack.c.h.b16 %v5992
  %v6033 = vunpack.c.l.b16 %v5993
  %v6034 = vunpack.c.h.b16 %v5993
  %v6035 = vunpack.c.l.b16 %v5994
  %v6036 = vunpack.c.h.b16 %v5994
  %v6037 = vunpack.c.l.b16 %v5995
  %v6038 = vunpack.c.h.b16 %v5995
  %v6039 = vunpack.c.l.b16 %v5996
  %v6040 = vunpack.c.h.b16 %v5996
  %v6041 = vunpack.c.l.b16 %v5997
  %v6042 = vunpack.c.h.b16 %v5997
  %v6043 = vunpack.c.l.b16 %v5998
  %v6044 = vunpack.c.h.b16 %v5998
  %v6045 = vunpack.c.l.b16 %v5999
  %v6046 = vunpack.c.h.b16 %v5999
  %v6047 = vunpack.c.l.b16 %v6000
  %v6048 = vunpack.c.h.b16 %v6000
  %v6049 = vpack.c.b16 %v6019, %v6017
  %v6050 = vpack.c.b16 %v6020, %v6018
  %v6051 = vpack.c.b16 %v6023, %v6021
  %v6052 = vpack.c.b16 %v6024, %v6022
  %v6053 = vpack.c.b16 %v6027, %v6025
  %v6054 = vpack.c.b16 %v6028, %v6026
  %v6055 = vpack.c.b16 %v6031, %v6029
  %v6056 = vpack.c.b16 %v6032, %v6030
  %v6057 = vpack.c.b16 %v6035, %v6033
  %v6058 = vpack.c.b16 %v6036, %v6034
  %v6059 = vpack.c.b16 %v6039, %v6037
  %v6060 = vpack.c.b16 %v6040, %v6038
  %v6061 = vpack.c.b16 %v6043, %v6041
  %v6062 = vpack.c.b16 %v6044, %v6042
  %v6063 = vpack.c.b16 %v6047, %v6045
  %v6064 = vpack.c.b16 %v6048, %v6046
  %6081 = vmatprep.subr.bf16.mxu0 %v6050
  %6082 = vmatpush1.bf16.msra.mxu0 %v6049
  %6083 = vmatprep.subr.bf16.mxu0 %v6052
  %6084 = vmatpush1.bf16.msra.mxu0 %v6051
  %6085 = vmatprep.subr.bf16.mxu0 %v6054
  %6086 = vmatpush1.bf16.msra.mxu0 %v6053
  %6087 = vmatprep.subr.bf16.mxu0 %v6056
  %6088 = vmatpush1.bf16.msra.mxu0 %v6055
  %6089 = vmatprep.subr.bf16.mxu0 %v6058
  %6090 = vmatpush1.bf16.msra.mxu0 %v6057
  %6091 = vmatprep.subr.bf16.mxu0 %v6060
  %6092 = vmatpush1.bf16.msra.mxu0 %v6059
  %6093 = vmatprep.subr.bf16.mxu0 %v6062
  %6094 = vmatpush1.bf16.msra.mxu0 %v6061
  %6095 = vmatprep.subr.bf16.mxu0 %v6064
  %6096 = vmatpush1.bf16.msra.mxu0 %v6063
  %6097 = vmatprep.subr.bf16.mxu0 0
  %6098 = vmatpush1.bf16.msra.mxu0 0
  %6099 = vmatprep.subr.bf16.mxu0 0
  %6100 = vmatpush1.bf16.msra.mxu0 0
  %6101 = vmatprep.subr.bf16.mxu0 0
  %6102 = vmatpush1.bf16.msra.mxu0 0
  %6103 = vmatprep.subr.bf16.mxu0 0
  %6104 = vmatpush1.bf16.msra.mxu0 0
  %6105 = vmatprep.subr.bf16.mxu0 0
  %6106 = vmatpush1.bf16.msra.mxu0 0
  %6107 = vmatprep.subr.bf16.mxu0 0
  %6108 = vmatpush1.bf16.msra.mxu0 0
  %6109 = vmatprep.subr.bf16.mxu0 0
  %6110 = vmatpush1.bf16.msra.mxu0 0
  %6111 = vmatprep.subr.bf16.mxu0 0
  %6112 = vmatpush1.bf16.msra.mxu0 0
  %6113 = vmatprep.mubr.bf16.mxu0 0
  %6114 = vmatmul.mubr.bf16.gmra.mrb[0].mxu0 %v5976
  %v6115 = vpop.f32.mrb[0].mxu0
  %v6116 = vadd.f32 0.0, %v6115
  %v6117 = vpop.f32.mrb[0].mxu0
  %v6118 = vadd.f32 0.0, %v6117
  %v6119 = vpop.f32.mrb[0].mxu0
  %v6120 = vadd.f32 0.0, %v6119
  %v6121 = vpop.f32.mrb[0].mxu0
  %v6122 = vadd.f32 0.0, %v6121
  %6123 = vmatprep.mubr.bf16.mxu0 0
  %6124 = vmatmul.mubr.bf16.gmra.mrb[0].mxu0 %v5977
  %v6125 = vpop.f32.mrb[0].mxu0
  %v6126 = vadd.f32 0.0, %v6125
  %v6127 = vpop.f32.mrb[0].mxu0
  %v6128 = vadd.f32 0.0, %v6127
  %v6129 = vpop.f32.mrb[0].mxu0
  %v6130 = vadd.f32 0.0, %v6129
  %v6131 = vpop.f32.mrb[0].mxu0
  %v6132 = vadd.f32 0.0, %v6131
  %6133 = vmatprep.mubr.bf16.mxu0 0
  %6134 = vmatmul.mubr.bf16.gmra.mrb[0].mxu0 %v5978
  %v6135 = vpop.f32.mrb[0].mxu0
  %v6136 = vadd.f32 0.0, %v6135
  %v6137 = vpop.f32.mrb[0].mxu0
  %v6138 = vadd.f32 0.0, %v6137
  %v6139 = vpop.f32.mrb[0].mxu0
  %v6140 = vadd.f32 0.0, %v6139
  %v6141 = vpop.f32.mrb[0].mxu0
  %v6142 = vadd.f32 0.0, %v6141
  %6143 = vmatprep.mubr.bf16.mxu0 0
  %6144 = vmatmul.mubr.bf16.gmra.mrb[0].mxu0 %v5979
  %v6145 = vpop.f32.mrb[0].mxu0
  %v6146 = vadd.f32 0.0, %v6145
  %v6147 = vpop.f32.mrb[0].mxu0
  %v6148 = vadd.f32 0.0, %v6147
  %v6149 = vpop.f32.mrb[0].mxu0
  %v6150 = vadd.f32 0.0, %v6149
  %v6151 = vpop.f32.mrb[0].mxu0
  %v6152 = vadd.f32 0.0, %v6151
  %6153 = vmatprep.mubr.bf16.mxu0 0
  %6154 = vmatmul.mubr.bf16.gmra.mrb[0].mxu0 %v5980
  %v6155 = vpop.f32.mrb[0].mxu0
  %v6156 = vadd.f32 0.0, %v6155
  %v6157 = vpop.f32.mrb[0].mxu0
  %v6158 = vadd.f32 0.0, %v6157
  %v6159 = vpop.f32.mrb[0].mxu0
  %v6160 = vadd.f32 0.0, %v6159
  %v6161 = vpop.f32.mrb[0].mxu0
  %v6162 = vadd.f32 0.0, %v6161
  %6163 = vmatprep.mubr.bf16.mxu0 0
  %6164 = vmatmul.mubr.bf16.gmra.mrb[0].mxu0 %v5981
  %v6165 = vpop.f32.mrb[0].mxu0
  %v6166 = vadd.f32 0.0, %v6165
  %v6167 = vpop.f32.mrb[0].mxu0
  %v6168 = vadd.f32 0.0, %v6167
  %v6169 = vpop.f32.mrb[0].mxu0
  %v6170 = vadd.f32 0.0, %v6169
  %v6171 = vpop.f32.mrb[0].mxu0
  %v6172 = vadd.f32 0.0, %v6171
  %6173 = vmatprep.mubr.bf16.mxu0 0
  %6174 = vmatmul.mubr.bf16.gmra.mrb[0].mxu0 %v5982
  %v6175 = vpop.f32.mrb[0].mxu0
  %v6176 = vadd.f32 0.0, %v6175
  %v6177 = vpop.f32.mrb[0].mxu0
  %v6178 = vadd.f32 0.0, %v6177
  %v6179 = vpop.f32.mrb[0].mxu0
  %v6180 = vadd.f32 0.0, %v6179
  %v6181 = vpop.f32.mrb[0].mxu0
  %v6182 = vadd.f32 0.0, %v6181
  %6183 = vmatprep.mubr.bf16.mxu0 0
  %6184 = vmatmul.mubr.bf16.gmra.mrb[0].mxu0 %v5983
  %v6185 = vpop.f32.mrb[0].mxu0
  %v6186 = vadd.f32 0.0, %v6185
  %v6187 = vpop.f32.mrb[0].mxu0
  %v6188 = vadd.f32 0.0, %v6187
  %v6189 = vpop.f32.mrb[0].mxu0
  %v6190 = vadd.f32 0.0, %v6189
  %v6191 = vpop.f32.mrb[0].mxu0
  %v6192 = vadd.f32 0.0, %v6191
  %6193 = vdwg.mxu0
  %v6194 = vadd.f32 %v5736, %v6116
  %v6195 = vadd.f32 %v5738, %v6118
  %v6196 = vadd.f32 %v5740, %v6120
  %v6197 = vadd.f32 %v5742, %v6122
  %v6198 = vadd.f32 %v5746, %v6126
  %v6199 = vadd.f32 %v5748, %v6128
  %v6200 = vadd.f32 %v5750, %v6130
  %v6201 = vadd.f32 %v5752, %v6132
  %v6202 = vadd.f32 %v5756, %v6136
  %v6203 = vadd.f32 %v5758, %v6138
  %v6204 = vadd.f32 %v5760, %v6140
  %v6205 = vadd.f32 %v5762, %v6142
  %v6206 = vadd.f32 %v5766, %v6146
  %v6207 = vadd.f32 %v5768, %v6148
  %v6208 = vadd.f32 %v5770, %v6150
  %v6209 = vadd.f32 %v5772, %v6152
  %v6210 = vadd.f32 %v5776, %v6156
  %v6211 = vadd.f32 %v5778, %v6158
  %v6212 = vadd.f32 %v5780, %v6160
  %v6213 = vadd.f32 %v5782, %v6162
  %v6214 = vadd.f32 %v5786, %v6166
  %v6215 = vadd.f32 %v5788, %v6168
  %v6216 = vadd.f32 %v5790, %v6170
  %v6217 = vadd.f32 %v5792, %v6172
  %v6218 = vadd.f32 %v5796, %v6176
  %v6219 = vadd.f32 %v5798, %v6178
  %v6220 = vadd.f32 %v5800, %v6180
  %v6221 = vadd.f32 %v5802, %v6182
  %v6222 = vadd.f32 %v5806, %v6186
  %v6223 = vadd.f32 %v5808, %v6188
  %v6224 = vadd.f32 %v5810, %v6190
  %v6225 = vadd.f32 %v5812, %v6192
  %v6226 = vtanh.pop %v6194
  %v6227 = vtanh.pop %v6195
  %v6228 = vtanh.pop %v6196
  %v6229 = vtanh.pop %v6197
  %v6230 = vtanh.pop %v6198
  %v6231 = vtanh.pop %v6199
  %v6232 = vtanh.pop %v6200
  %v6233 = vtanh.pop %v6201
  %v6234 = vtanh.pop %v6202
  %v6235 = vtanh.pop %v6203
  %v6236 = vtanh.pop %v6204
  %v6237 = vtanh.pop %v6205
  %v6238 = vtanh.pop %v6206
  %v6239 = vtanh.pop %v6207
  %v6240 = vtanh.pop %v6208
  %v6241 = vtanh.pop %v6209
  %v6242 = vtanh.pop %v6210
  %v6243 = vtanh.pop %v6211
  %v6244 = vtanh.pop %v6212
  %v6245 = vtanh.pop %v6213
  %v6246 = vtanh.pop %v6214
  %v6247 = vtanh.pop %v6215
  %v6248 = vtanh.pop %v6216
  %v6249 = vtanh.pop %v6217
  %v6250 = vtanh.pop %v6218
  %v6251 = vtanh.pop %v6219
  %v6252 = vtanh.pop %v6220
  %v6253 = vtanh.pop %v6221
  %v6254 = vtanh.pop %v6222
  %v6255 = vtanh.pop %v6223
  %v6256 = vtanh.pop %v6224
  %v6257 = vtanh.pop %v6225
  %6258 = vst [vmem:[%s17] sm:$0xff] %v6226
  %6259 = vst.msk [vmem:[%s17 + $0x8] sm:$0xff] %vm3098, %v6227
  %6260 = vst [vmem:[%s17 + $0x10] sm:$0xff] %v6228
  %6261 = vst.msk [vmem:[%s17 + $0x18] sm:$0xff] %vm3098, %v6229
  %6262 = vst [vmem:[%s17 + $0x20] sm:$0xff] %v6230
  %6263 = vst.msk [vmem:[%s17 + $0x28] sm:$0xff] %vm3098, %v6231
  %6264 = vst [vmem:[%s17 + $0x30] sm:$0xff] %v6232
  %6265 = vst.msk [vmem:[%s17 + $0x38] sm:$0xff] %vm3098, %v6233
  %6266 = vst [vmem:[%s17 + $0x40] sm:$0xff] %v6234
  %6267 = vst.msk [vmem:[%s17 + $0x48] sm:$0xff] %vm3098, %v6235
  %6268 = vst [vmem:[%s17 + $0x50] sm:$0xff] %v6236
  %6269 = vst.msk [vmem:[%s17 + $0x58] sm:$0xff] %vm3098, %v6237
  %6270 = vst [vmem:[%s17 + $0x60] sm:$0xff] %v6238
  %6271 = vst.msk [vmem:[%s17 + $0x68] sm:$0xff] %vm3098, %v6239
  %6272 = vst [vmem:[%s17 + $0x70] sm:$0xff] %v6240
  %6273 = vst.msk [vmem:[%s17 + $0x78] sm:$0xff] %vm3098, %v6241
  %6274 = vst [vmem:[%s17 + $0x80] sm:$0xff] %v6242
  %6275 = vst.msk [vmem:[%s17 + $0x88] sm:$0xff] %vm3098, %v6243
  %6276 = vst [vmem:[%s17 + $0x90] sm:$0xff] %v6244
  %6277 = vst.msk [vmem:[%s17 + $0x98] sm:$0xff] %vm3098, %v6245
  %6278 = vst [vmem:[%s17 + $0xa0] sm:$0xff] %v6246
  %6279 = vst.msk [vmem:[%s17 + $0xa8] sm:$0xff] %vm3098, %v6247
  %6280 = vst [vmem:[%s17 + $0xb0] sm:$0xff] %v6248
  %6281 = vst.msk [vmem:[%s17 + $0xb8] sm:$0xff] %vm3098, %v6249
  %6282 = vst [vmem:[%s17 + $0xc0] sm:$0xff] %v6250
  %6283 = vst.msk [vmem:[%s17 + $0xc8] sm:$0xff] %vm3098, %v6251
  %6284 = vst [vmem:[%s17 + $0xd0] sm:$0xff] %v6252
  %6285 = vst.msk [vmem:[%s17 + $0xd8] sm:$0xff] %vm3098, %v6253
  %6286 = vst [vmem:[%s17 + $0xe0] sm:$0xff] %v6254
  %6287 = vst.msk [vmem:[%s17 + $0xe8] sm:$0xff] %vm3098, %v6255
  %6288 = vst [vmem:[%s17 + $0xf0] sm:$0xff] %v6256
  %6289 = vst.msk [vmem:[%s17 + $0xf8] sm:$0xff] %vm3098, %v6257
  // Predicated region
  $region70: #{stage1_generator_forward.1} parent=0 // pred_check
    _
  $region71: #{stage1_generator_forward.1} parent=0 // pred_check_branch
    %6291 = sbr.rel (0) target = $region73
  $region72: #{stage1_generator_forward.1} parent=0 // pred_region
    _
  $region73: #{stage1_generator_forward.1} parent=0 // pred_fallthru
    _
  // Predicated region
  $region74: #{stage1_generator_forward.1} parent=0 // pred_check
    _
  $region75: #{stage1_generator_forward.1} parent=0 // pred_check_branch
    %6293 = sbr.rel (0) target = $region77
  $region76: #{stage1_generator_forward.1} parent=0 // pred_region
    _
  $region77: #{stage1_generator_forward.1} parent=0 // pred_fallthru
    _
  // Predicated region
  $region78: #{stage1_generator_forward.1} parent=0 // pred_check
    _
  $region79: #{stage1_generator_forward.1} parent=0 // pred_check_branch
    %6295 = sbr.rel (0) target = $region81
  $region80: #{stage1_generator_forward.1} parent=0 // pred_region
    _
  $region81: #{stage1_generator_forward.1} parent=0 // pred_fallthru
    _
  // Predicated region
  $region82: #{stage1_generator_forward.1} parent=0 // pred_check
    _
  $region83: #{stage1_generator_forward.1} parent=0 // pred_check_branch
    %6297 = sbr.rel (0) target = $region85
  $region84: #{stage1_generator_forward.1} parent=0 // pred_region
    _
  $region85: #{stage1_generator_forward.1} parent=0 // pred_fallthru
    _

</llo_original>
